<compile_context>
chip_gen: v7x
topology: tpu7x:2x2x1
jax: 0.10.0
libtpu: 0.0.40
codegen_flags: <defaults>
</compile_context>

<pallas_src>
import functools

import jax
import jax.numpy as jnp
from jax import lax
from jax.experimental import pallas as pl
from jax.experimental.pallas import tpu as pltpu

NEG_SLOPE = 0.2


def _leaky(x, slope=NEG_SLOPE):
    return jnp.where(x >= 0, x, slope * x)


def _conv3(x, w_ref, b_ref):
    """k=3 / pad=1 conv over time as three accumulated MXU matmuls.

    x: (t, Cin) f32 time-major activation (channels on lanes).
    w_ref: (3, Cin, Cout) bf16 — tap k multiplies x_{t-1+k}.
    b_ref: (1, Cout) f32.
    Returns (t, Cout) f32 (bias added, no activation).
    """
    cin = x.shape[1]
    zero = jnp.zeros((1, cin), jnp.float32)
    xm1 = jnp.concatenate([zero, x[:-1, :]], axis=0)   # x_{t-1} (zero-padded row 0)
    xp1 = jnp.concatenate([x[1:, :], zero], axis=0)    # x_{t+1} (zero-padded last row)
    acc = jnp.dot(xm1.astype(jnp.bfloat16), w_ref[0],
                  preferred_element_type=jnp.float32)
    acc = acc + jnp.dot(x.astype(jnp.bfloat16), w_ref[1],
                        preferred_element_type=jnp.float32)
    acc = acc + jnp.dot(xp1.astype(jnp.bfloat16), w_ref[2],
                        preferred_element_type=jnp.float32)
    return acc + b_ref[...]


def _avg_pool2(y):
    """AvgPool1d(kernel=2, stride=2) over the time (sublane) axis.

    Implemented as a tiny (t/2, t) selection matmul built from 2-D iota compares:
    P[j, i] = 0.5 if i in {2j, 2j+1}.  No VMEM scratch store/readback and no
    sublane-splitting reshape; the MXU is otherwise idle at these shapes.
    """
    t, _ = y.shape
    t2 = t // 2
    out_idx = lax.broadcasted_iota(jnp.int32, (t2, t), 0)
    in_idx = lax.broadcasted_iota(jnp.int32, (t2, t), 1)
    sel = (in_idx == 2 * out_idx) | (in_idx == 2 * out_idx + 1)
    pool_mat = jnp.where(sel, 0.5, 0.0).astype(jnp.float32)
    return jnp.dot(pool_mat, y, preferred_element_type=jnp.float32)


def speaker_encoder_kernel(x_ref, eps_ref, w1_ref, b1_ref, *rest,
                           T, dim_spk, num_down):
    down_refs = rest[:2 * num_down]
    wmv_ref = rest[2 * num_down]
    bmv_ref = rest[2 * num_down + 1]
    out_ref = rest[2 * num_down + 2]

    # ---- conv_1 (k=3, p=1) + leaky_relu(0.2) -------------------------------
    # Input block is (1, T, 80) bf16, already time-major (channels on lanes).
    x = x_ref[0].astype(jnp.float32)                        # (T, 80) f32
    y = _leaky(_conv3(x, w1_ref, b1_ref))                   # (T, 32) f32

    # ---- 5 DownBlocks: conv(k=3,p=1) -> ReLU -> AvgPool1d(2,2) -------------
    # The outer leaky_relu(0.2) after each DownBlock is the identity on the
    # (>= 0) pooled ReLU output and is elided.
    for i in range(num_down):
        w_ref = down_refs[2 * i]
        b_ref = down_refs[2 * i + 1]
        y = jnp.maximum(_conv3(y, w_ref, b_ref), 0.0)       # (t, Cout) f32
        y = _avg_pool2(y)                                   # (t/2, Cout) f32

    # ---- head ---------------------------------------------------------------
    # AvgPool1d(kernel=frame_num/32, stride=2) over length frame_num/32 == mean
    # over the remaining time rows; then stacked conv_mean/conv_var (1x1) matmul,
    # leaky_relu on both branches, and eps * sigma + mu.
    tf = T // (2 ** num_down)                               # == frame_num // 32
    mean = jnp.sum(y, axis=0, keepdims=True) * (1.0 / tf)   # (1, 512) f32
    z = jnp.dot(mean.astype(jnp.bfloat16), wmv_ref[...],
                preferred_element_type=jnp.float32) + bmv_ref[...]
    z = _leaky(z)                                           # (1, 2*dim_spk)
    mu = z[:, :dim_spk]
    sigma = z[:, dim_spk:]
    out_ref[0] = (eps_ref[0] * sigma + mu).astype(out_ref.dtype)   # (1, dim_spk)


def speaker_encoder_forward(x, eps, params):
    """x: (B, 80, frame_num) NCT (PyTorch layout); eps: (B, dim_spk, 1) noise.

    Returns (B, dim_spk, 1), matching SpeakerEncoder.forward.
    """
    B, c_in, T = x.shape
    assert c_in == 80, "expected 80 mel channels"
    assert T % 32 == 0, "frame_num must be divisible by 32"
    num_down = len(params["down"])
    dim_spk = params["wmv"].shape[1] // 2

    # Layout + dtype change fused into one XLA op: NCT f32 -> NTC bf16, so the
    # kernel's input DMA moves half the bytes and channels land on the lane axis.
    # TODO(synk): for production frame_num, fold this transpose into the kernel
    # (channels-first layer 1 + in-VMEM transpose) to drop the extra HBM pass.
    x_tm = jnp.transpose(x, (0, 2, 1)).astype(jnp.bfloat16)          # (B, T, 80)
    eps3 = eps.astype(jnp.float32).reshape(B, 1, dim_spk)            # (B, 1, dim_spk)

    inputs = [x_tm, eps3, params["w1"], params["b1"]]
    in_specs = [
        pl.BlockSpec((1, T, 80), lambda b: (b, 0, 0)),               # per-batch input
        pl.BlockSpec((1, 1, dim_spk), lambda b: (b, 0, 0)),          # per-batch eps
        pl.BlockSpec(params["w1"].shape, lambda b: (0, 0, 0)),       # resident weights
        pl.BlockSpec(params["b1"].shape, lambda b: (0, 0)),
    ]
    for (w, bb) in params["down"]:
        inputs += [w, bb]
        in_specs += [pl.BlockSpec(w.shape, lambda b: (0, 0, 0)),
                     pl.BlockSpec(bb.shape, lambda b: (0, 0))]
    inputs += [params["wmv"], params["bmv"]]
    in_specs += [pl.BlockSpec(params["wmv"].shape, lambda b: (0, 0)),
                 pl.BlockSpec(params["bmv"].shape, lambda b: (0, 0))]

    # Explicit VMEM budget: resident weights (x2 for buffering) + double-buffered
    # per-batch input block + a generous allowance for activation temporaries.
    weight_bytes = sum(int(a.size) * a.dtype.itemsize for a in inputs[2:])
    input_block_bytes = 2 * (T * 80 * 2 + dim_spk * 4)
    act_bytes = 8 * T * 512 * 4
    vmem_limit = int(min(100 << 20,
                         max(32 << 20,
                             2 * weight_bytes + input_block_bytes + act_bytes)))

    out = pl.pallas_call(
        functools.partial(speaker_encoder_kernel, T=T, dim_spk=dim_spk,
                          num_down=num_down),
        grid=(B,),
        out_shape=jax.ShapeDtypeStruct((B, 1, dim_spk), jnp.float32),
        in_specs=in_specs,
        out_specs=pl.BlockSpec((1, 1, dim_spk), lambda b: (b, 0, 0)),
        compiler_params=pltpu.CompilerParams(
            dimension_semantics=("parallel",),
            vmem_limit_bytes=vmem_limit),
    )(*inputs)
    return out.reshape(B, dim_spk, 1)


# --------------------------------------------------------------------------
# Parameter construction
# --------------------------------------------------------------------------
def init_params(key, dim_spk, num_down=5):
    keys = jax.random.split(key, 16)
    ki = iter(keys)

    def conv_w(k, cin, cout):
        # (3, Cin, Cout): tap k multiplies x_{t-1+k}; equals a torch Conv1d weight
        # (Cout, Cin, 3) permuted to (3, Cin, Cout).  Stored bf16 (MXU operand).
        # weight_norm(v).weight == v at init; fold g*v/||v|| when loading checkpoints.
        w = jax.random.normal(k, (3, cin, cout), jnp.float32) * 0.05
        return w.astype(jnp.bfloat16)

    def bias(k, cout):
        return jax.random.normal(k, (1, cout), jnp.float32) * 0.05   # f32 (VPU side)

    params = {"w1": conv_w(next(ki), 80, 32), "b1": bias(next(ki), 32), "down": []}

    # downsamples: (32->64), (64->128), (128->256), (256->512), (512->512)
    for i in range(num_down):
        cin = 32 * 2 ** i
        cout = 512 if i == num_down - 1 else 32 * 2 ** (i + 1)
        params["down"].append((conv_w(next(ki), cin, cout), bias(next(ki), cout)))

    # conv_mean / conv_var (1x1, 512 -> dim_spk) stacked into one weight/bias.
    wm = jax.random.normal(next(ki), (512, dim_spk), jnp.float32) * 0.05
    bm = jax.random.normal(next(ki), (1, dim_spk), jnp.float32) * 0.05
    wv = jax.random.normal(next(ki), (512, dim_spk), jnp.float32) * 0.05
    bv = jax.random.normal(next(ki), (1, dim_spk), jnp.float32) * 0.05
    params["wmv"] = jnp.concatenate([wm, wv], axis=1).astype(jnp.bfloat16)  # (512, 2*dim_spk)
    params["bmv"] = jnp.concatenate([bm, bv], axis=1)                        # (1, 2*dim_spk)
    return params


if __name__ == "__main__":
    frame_num = 64          # must be divisible by 32
    dim_spk = 16
    B = 2

    key = jax.random.PRNGKey(0)
    k_param, k_x, k_eps = jax.random.split(key, 3)

    params = init_params(k_param, dim_spk)
    x = jax.random.normal(k_x, (B, 80, frame_num), jnp.float32)
    # reparameterization noise (torch.randn_like(sigma) equivalent), supplied as input
    eps = jax.random.normal(k_eps, (B, dim_spk, 1), jnp.float32)

    out = jax.jit(speaker_encoder_forward)(x, eps, params)
    jax.block_until_ready(out)
    assert out.shape == (B, dim_spk, 1)
    print("KERNEL_OK")
</pallas_src>

<mosaic_0001>
module attributes {stable_mosaic.version = 11 : i64} {
  func.func @speaker_encoder_kernel(%arg0: i32, %arg1: memref<1x64x80xbf16, #tpu.memory_space<vmem>>, %arg2: memref<1x1x16xf32, #tpu.memory_space<vmem>>, %arg3: memref<3x80x32xbf16, #tpu.memory_space<vmem>>, %arg4: memref<1x32xf32, #tpu.memory_space<vmem>>, %arg5: memref<3x32x64xbf16, #tpu.memory_space<vmem>>, %arg6: memref<1x64xf32, #tpu.memory_space<vmem>>, %arg7: memref<3x64x128xbf16, #tpu.memory_space<vmem>>, %arg8: memref<1x128xf32, #tpu.memory_space<vmem>>, %arg9: memref<3x128x256xbf16, #tpu.memory_space<vmem>>, %arg10: memref<1x256xf32, #tpu.memory_space<vmem>>, %arg11: memref<3x256x512xbf16, #tpu.memory_space<vmem>>, %arg12: memref<1x512xf32, #tpu.memory_space<vmem>>, %arg13: memref<3x512x512xbf16, #tpu.memory_space<vmem>>, %arg14: memref<1x512xf32, #tpu.memory_space<vmem>>, %arg15: memref<512x32xbf16, #tpu.memory_space<vmem>>, %arg16: memref<1x32xf32, #tpu.memory_space<vmem>>, %arg17: memref<1x1x16xf32, #tpu.memory_space<vmem>>) attributes {dimension_semantics = [#tpu.dimension_semantics<parallel>], iteration_bounds = array<i64: 2>, scalar_prefetch = 0 : i64, scratch_operands = 0 : i64, tpu.core_type = #tpu.core_type<tc>, window_params = [{transform_indices = @transform_0, window_bounds = array<i64: 1, 64, 80>}, {transform_indices = @transform_1, window_bounds = array<i64: 1, 1, 16>}, {pipeline_mode = #tpu.pipeline_mode<synchronous>, transform_indices = @transform_2, window_bounds = array<i64: 3, 80, 32>}, {pipeline_mode = #tpu.pipeline_mode<synchronous>, transform_indices = @transform_3, window_bounds = array<i64: 1, 32>}, {pipeline_mode = #tpu.pipeline_mode<synchronous>, transform_indices = @transform_4, window_bounds = array<i64: 3, 32, 64>}, {pipeline_mode = #tpu.pipeline_mode<synchronous>, transform_indices = @transform_5, window_bounds = array<i64: 1, 64>}, {pipeline_mode = #tpu.pipeline_mode<synchronous>, transform_indices = @transform_6, window_bounds = array<i64: 3, 64, 128>}, {pipeline_mode = #tpu.pipeline_mode<synchronous>, transform_indices = @transform_7, window_bounds = array<i64: 1, 128>}, {pipeline_mode = #tpu.pipeline_mode<synchronous>, transform_indices = @transform_8, window_bounds = array<i64: 3, 128, 256>}, {pipeline_mode = #tpu.pipeline_mode<synchronous>, transform_indices = @transform_9, window_bounds = array<i64: 1, 256>}, {pipeline_mode = #tpu.pipeline_mode<synchronous>, transform_indices = @transform_10, window_bounds = array<i64: 3, 256, 512>}, {pipeline_mode = #tpu.pipeline_mode<synchronous>, transform_indices = @transform_11, window_bounds = array<i64: 1, 512>}, {pipeline_mode = #tpu.pipeline_mode<synchronous>, transform_indices = @transform_12, window_bounds = array<i64: 3, 512, 512>}, {pipeline_mode = #tpu.pipeline_mode<synchronous>, transform_indices = @transform_13, window_bounds = array<i64: 1, 512>}, {pipeline_mode = #tpu.pipeline_mode<synchronous>, transform_indices = @transform_14, window_bounds = array<i64: 512, 32>}, {pipeline_mode = #tpu.pipeline_mode<synchronous>, transform_indices = @transform_15, window_bounds = array<i64: 1, 32>}, {transform_indices = @transform_16, window_bounds = array<i64: 1, 1, 16>}]} {
    %c0 = arith.constant 0 : index
    %c0_0 = arith.constant 0 : index
    %c0_1 = arith.constant 0 : index
    %0 = vector.load %arg1[%c0, %c0_0, %c0_1] : memref<1x64x80xbf16, #tpu.memory_space<vmem>>, vector<1x64x80xbf16>
    %1 = vector.shape_cast %0 : vector<1x64x80xbf16> to vector<64x80xbf16>
    %2 = arith.extf %1 : vector<64x80xbf16> to vector<64x80xf32>
    %cst = arith.constant 0.000000e+00 : f32
    %3 = vector.broadcast %cst : f32 to vector<1x80xf32>
    %4 = vector.extract_strided_slice %2 {offsets = [0, 0], sizes = [63, 80], strides = [1, 1]} : vector<64x80xf32> to vector<63x80xf32>
    %5 = tpu.concatenate %3, %4 in 0 : vector<1x80xf32>, vector<63x80xf32> -> vector<64x80xf32>
    %6 = vector.extract_strided_slice %2 {offsets = [1, 0], sizes = [63, 80], strides = [1, 1]} : vector<64x80xf32> to vector<63x80xf32>
    %7 = tpu.concatenate %6, %3 in 0 : vector<63x80xf32>, vector<1x80xf32> -> vector<64x80xf32>
    %8 = arith.truncf %5 : vector<64x80xf32> to vector<64x80xbf16>
    %c0_2 = arith.constant 0 : index
    %c0_3 = arith.constant 0 : index
    %c0_4 = arith.constant 0 : index
    %9 = vector.load %arg3[%c0_2, %c0_3, %c0_4] : memref<3x80x32xbf16, #tpu.memory_space<vmem>>, vector<1x80x32xbf16>
    %10 = vector.shape_cast %9 : vector<1x80x32xbf16> to vector<80x32xbf16>
    %cst_5 = arith.constant dense<0.000000e+00> : vector<64x32xf32>
    %11 = tpu.matmul %8, %10, %cst_5 {dimension_numbers = #tpu.dot_dimension_numbers<[1], [0], [0], [1], [0, 0, 1, 1], [], []>} : vector<64x80xbf16>, vector<80x32xbf16>, vector<64x32xf32> -> vector<64x32xf32>
    %12 = arith.truncf %2 : vector<64x80xf32> to vector<64x80xbf16>
    %c1 = arith.constant 1 : index
    %c0_6 = arith.constant 0 : index
    %c0_7 = arith.constant 0 : index
    %13 = vector.load %arg3[%c1, %c0_6, %c0_7] : memref<3x80x32xbf16, #tpu.memory_space<vmem>>, vector<1x80x32xbf16>
    %14 = vector.shape_cast %13 : vector<1x80x32xbf16> to vector<80x32xbf16>
    %cst_8 = arith.constant dense<0.000000e+00> : vector<64x32xf32>
    %15 = tpu.matmul %12, %14, %cst_8 {dimension_numbers = #tpu.dot_dimension_numbers<[1], [0], [0], [1], [0, 0, 1, 1], [], []>} : vector<64x80xbf16>, vector<80x32xbf16>, vector<64x32xf32> -> vector<64x32xf32>
    %16 = arith.addf %11, %15 : vector<64x32xf32>
    %17 = arith.truncf %7 : vector<64x80xf32> to vector<64x80xbf16>
    %c2 = arith.constant 2 : index
    %c0_9 = arith.constant 0 : index
    %c0_10 = arith.constant 0 : index
    %18 = vector.load %arg3[%c2, %c0_9, %c0_10] : memref<3x80x32xbf16, #tpu.memory_space<vmem>>, vector<1x80x32xbf16>
    %19 = vector.shape_cast %18 : vector<1x80x32xbf16> to vector<80x32xbf16>
    %cst_11 = arith.constant dense<0.000000e+00> : vector<64x32xf32>
    %20 = tpu.matmul %17, %19, %cst_11 {dimension_numbers = #tpu.dot_dimension_numbers<[1], [0], [0], [1], [0, 0, 1, 1], [], []>} : vector<64x80xbf16>, vector<80x32xbf16>, vector<64x32xf32> -> vector<64x32xf32>
    %21 = arith.addf %16, %20 : vector<64x32xf32>
    %c0_12 = arith.constant 0 : index
    %c0_13 = arith.constant 0 : index
    %22 = vector.load %arg4[%c0_12, %c0_13] : memref<1x32xf32, #tpu.memory_space<vmem>>, vector<1x32xf32>
    %23 = vector.broadcast %22 : vector<1x32xf32> to vector<64x32xf32>
    %24 = arith.addf %21, %23 : vector<64x32xf32>
    %cst_14 = arith.constant 0.000000e+00 : f32
    %25 = vector.broadcast %cst_14 : f32 to vector<64x32xf32>
    %26 = arith.cmpf oge, %24, %25 : vector<64x32xf32>
    %cst_15 = arith.constant 2.000000e-01 : f32
    %27 = vector.broadcast %cst_15 : f32 to vector<64x32xf32>
    %28 = arith.mulf %27, %24 : vector<64x32xf32>
    %29 = arith.select %26, %24, %28 : vector<64x32xi1>, vector<64x32xf32>
    %cst_16 = arith.constant 0.000000e+00 : f32
    %30 = vector.broadcast %cst_16 : f32 to vector<1x32xf32>
    %31 = vector.extract_strided_slice %29 {offsets = [0, 0], sizes = [63, 32], strides = [1, 1]} : vector<64x32xf32> to vector<63x32xf32>
    %32 = tpu.concatenate %30, %31 in 0 : vector<1x32xf32>, vector<63x32xf32> -> vector<64x32xf32>
    %33 = vector.extract_strided_slice %29 {offsets = [1, 0], sizes = [63, 32], strides = [1, 1]} : vector<64x32xf32> to vector<63x32xf32>
    %34 = tpu.concatenate %33, %30 in 0 : vector<63x32xf32>, vector<1x32xf32> -> vector<64x32xf32>
    %35 = arith.truncf %32 : vector<64x32xf32> to vector<64x32xbf16>
    %c0_17 = arith.constant 0 : index
    %c0_18 = arith.constant 0 : index
    %c0_19 = arith.constant 0 : index
    %36 = vector.load %arg5[%c0_17, %c0_18, %c0_19] : memref<3x32x64xbf16, #tpu.memory_space<vmem>>, vector<1x32x64xbf16>
    %37 = vector.shape_cast %36 : vector<1x32x64xbf16> to vector<32x64xbf16>
    %cst_20 = arith.constant dense<0.000000e+00> : vector<64x64xf32>
    %38 = tpu.matmul %35, %37, %cst_20 {dimension_numbers = #tpu.dot_dimension_numbers<[1], [0], [0], [1], [0, 0, 1, 1], [], []>} : vector<64x32xbf16>, vector<32x64xbf16>, vector<64x64xf32> -> vector<64x64xf32>
    %39 = arith.truncf %29 : vector<64x32xf32> to vector<64x32xbf16>
    %c1_21 = arith.constant 1 : index
    %c0_22 = arith.constant 0 : index
    %c0_23 = arith.constant 0 : index
    %40 = vector.load %arg5[%c1_21, %c0_22, %c0_23] : memref<3x32x64xbf16, #tpu.memory_space<vmem>>, vector<1x32x64xbf16>
    %41 = vector.shape_cast %40 : vector<1x32x64xbf16> to vector<32x64xbf16>
    %cst_24 = arith.constant dense<0.000000e+00> : vector<64x64xf32>
    %42 = tpu.matmul %39, %41, %cst_24 {dimension_numbers = #tpu.dot_dimension_numbers<[1], [0], [0], [1], [0, 0, 1, 1], [], []>} : vector<64x32xbf16>, vector<32x64xbf16>, vector<64x64xf32> -> vector<64x64xf32>
    %43 = arith.addf %38, %42 : vector<64x64xf32>
    %44 = arith.truncf %34 : vector<64x32xf32> to vector<64x32xbf16>
    %c2_25 = arith.constant 2 : index
    %c0_26 = arith.constant 0 : index
    %c0_27 = arith.constant 0 : index
    %45 = vector.load %arg5[%c2_25, %c0_26, %c0_27] : memref<3x32x64xbf16, #tpu.memory_space<vmem>>, vector<1x32x64xbf16>
    %46 = vector.shape_cast %45 : vector<1x32x64xbf16> to vector<32x64xbf16>
    %cst_28 = arith.constant dense<0.000000e+00> : vector<64x64xf32>
    %47 = tpu.matmul %44, %46, %cst_28 {dimension_numbers = #tpu.dot_dimension_numbers<[1], [0], [0], [1], [0, 0, 1, 1], [], []>} : vector<64x32xbf16>, vector<32x64xbf16>, vector<64x64xf32> -> vector<64x64xf32>
    %48 = arith.addf %43, %47 : vector<64x64xf32>
    %c0_29 = arith.constant 0 : index
    %c0_30 = arith.constant 0 : index
    %49 = vector.load %arg6[%c0_29, %c0_30] : memref<1x64xf32, #tpu.memory_space<vmem>>, vector<1x64xf32>
    %50 = vector.broadcast %49 : vector<1x64xf32> to vector<64x64xf32>
    %51 = arith.addf %48, %50 : vector<64x64xf32>
    %cst_31 = arith.constant 0.000000e+00 : f32
    %52 = vector.broadcast %cst_31 : f32 to vector<64x64xf32>
    %53 = arith.maximumf %51, %52 : vector<64x64xf32>
    %54 = tpu.iota {dimensions = array<i32: 0>} : vector<32x64xi32>
    %55 = tpu.iota {dimensions = array<i32: 1>} : vector<32x64xi32>
    %c2_i32 = arith.constant 2 : i32
    %56 = vector.broadcast %c2_i32 : i32 to vector<32x64xi32>
    %57 = arith.muli %56, %54 : vector<32x64xi32>
    %58 = arith.cmpi eq, %55, %57 : vector<32x64xi32>
    %c2_i32_32 = arith.constant 2 : i32
    %59 = vector.broadcast %c2_i32_32 : i32 to vector<32x64xi32>
    %60 = arith.muli %59, %54 : vector<32x64xi32>
    %c1_i32 = arith.constant 1 : i32
    %61 = vector.broadcast %c1_i32 : i32 to vector<32x64xi32>
    %62 = arith.addi %60, %61 : vector<32x64xi32>
    %63 = arith.cmpi eq, %55, %62 : vector<32x64xi32>
    %64 = arith.ori %58, %63 : vector<32x64xi1>
    %cst_33 = arith.constant 5.000000e-01 : f32
    %cst_34 = arith.constant 0.000000e+00 : f32
    %65 = vector.broadcast %cst_33 : f32 to vector<32x64xf32>
    %66 = vector.broadcast %cst_34 : f32 to vector<32x64xf32>
    %67 = arith.select %64, %65, %66 : vector<32x64xi1>, vector<32x64xf32>
    %cst_35 = arith.constant dense<0.000000e+00> : vector<32x64xf32>
    %68 = tpu.matmul %67, %53, %cst_35 {dimension_numbers = #tpu.dot_dimension_numbers<[1], [0], [0], [1], [0, 0, 1, 1], [], []>} : vector<32x64xf32>, vector<64x64xf32>, vector<32x64xf32> -> vector<32x64xf32>
    %cst_36 = arith.constant 0.000000e+00 : f32
    %69 = vector.broadcast %cst_36 : f32 to vector<1x64xf32>
    %70 = vector.extract_strided_slice %68 {offsets = [0, 0], sizes = [31, 64], strides = [1, 1]} : vector<32x64xf32> to vector<31x64xf32>
    %71 = tpu.concatenate %69, %70 in 0 : vector<1x64xf32>, vector<31x64xf32> -> vector<32x64xf32>
    %72 = vector.extract_strided_slice %68 {offsets = [1, 0], sizes = [31, 64], strides = [1, 1]} : vector<32x64xf32> to vector<31x64xf32>
    %73 = tpu.concatenate %72, %69 in 0 : vector<31x64xf32>, vector<1x64xf32> -> vector<32x64xf32>
    %74 = arith.truncf %71 : vector<32x64xf32> to vector<32x64xbf16>
    %c0_37 = arith.constant 0 : index
    %c0_38 = arith.constant 0 : index
    %c0_39 = arith.constant 0 : index
    %75 = vector.load %arg7[%c0_37, %c0_38, %c0_39] : memref<3x64x128xbf16, #tpu.memory_space<vmem>>, vector<1x64x128xbf16>
    %76 = vector.shape_cast %75 : vector<1x64x128xbf16> to vector<64x128xbf16>
    %cst_40 = arith.constant dense<0.000000e+00> : vector<32x128xf32>
    %77 = tpu.matmul %74, %76, %cst_40 {dimension_numbers = #tpu.dot_dimension_numbers<[1], [0], [0], [1], [0, 0, 1, 1], [], []>} : vector<32x64xbf16>, vector<64x128xbf16>, vector<32x128xf32> -> vector<32x128xf32>
    %78 = arith.truncf %68 : vector<32x64xf32> to vector<32x64xbf16>
    %c1_41 = arith.constant 1 : index
    %c0_42 = arith.constant 0 : index
    %c0_43 = arith.constant 0 : index
    %79 = vector.load %arg7[%c1_41, %c0_42, %c0_43] : memref<3x64x128xbf16, #tpu.memory_space<vmem>>, vector<1x64x128xbf16>
    %80 = vector.shape_cast %79 : vector<1x64x128xbf16> to vector<64x128xbf16>
    %cst_44 = arith.constant dense<0.000000e+00> : vector<32x128xf32>
    %81 = tpu.matmul %78, %80, %cst_44 {dimension_numbers = #tpu.dot_dimension_numbers<[1], [0], [0], [1], [0, 0, 1, 1], [], []>} : vector<32x64xbf16>, vector<64x128xbf16>, vector<32x128xf32> -> vector<32x128xf32>
    %82 = arith.addf %77, %81 : vector<32x128xf32>
    %83 = arith.truncf %73 : vector<32x64xf32> to vector<32x64xbf16>
    %c2_45 = arith.constant 2 : index
    %c0_46 = arith.constant 0 : index
    %c0_47 = arith.constant 0 : index
    %84 = vector.load %arg7[%c2_45, %c0_46, %c0_47] : memref<3x64x128xbf16, #tpu.memory_space<vmem>>, vector<1x64x128xbf16>
    %85 = vector.shape_cast %84 : vector<1x64x128xbf16> to vector<64x128xbf16>
    %cst_48 = arith.constant dense<0.000000e+00> : vector<32x128xf32>
    %86 = tpu.matmul %83, %85, %cst_48 {dimension_numbers = #tpu.dot_dimension_numbers<[1], [0], [0], [1], [0, 0, 1, 1], [], []>} : vector<32x64xbf16>, vector<64x128xbf16>, vector<32x128xf32> -> vector<32x128xf32>
    %87 = arith.addf %82, %86 : vector<32x128xf32>
    %c0_49 = arith.constant 0 : index
    %c0_50 = arith.constant 0 : index
    %88 = vector.load %arg8[%c0_49, %c0_50] : memref<1x128xf32, #tpu.memory_space<vmem>>, vector<1x128xf32>
    %89 = vector.broadcast %88 : vector<1x128xf32> to vector<32x128xf32>
    %90 = arith.addf %87, %89 : vector<32x128xf32>
    %cst_51 = arith.constant 0.000000e+00 : f32
    %91 = vector.broadcast %cst_51 : f32 to vector<32x128xf32>
    %92 = arith.maximumf %90, %91 : vector<32x128xf32>
    %93 = tpu.iota {dimensions = array<i32: 0>} : vector<16x32xi32>
    %94 = tpu.iota {dimensions = array<i32: 1>} : vector<16x32xi32>
    %c2_i32_52 = arith.constant 2 : i32
    %95 = vector.broadcast %c2_i32_52 : i32 to vector<16x32xi32>
    %96 = arith.muli %95, %93 : vector<16x32xi32>
    %97 = arith.cmpi eq, %94, %96 : vector<16x32xi32>
    %c2_i32_53 = arith.constant 2 : i32
    %98 = vector.broadcast %c2_i32_53 : i32 to vector<16x32xi32>
    %99 = arith.muli %98, %93 : vector<16x32xi32>
    %c1_i32_54 = arith.constant 1 : i32
    %100 = vector.broadcast %c1_i32_54 : i32 to vector<16x32xi32>
    %101 = arith.addi %99, %100 : vector<16x32xi32>
    %102 = arith.cmpi eq, %94, %101 : vector<16x32xi32>
    %103 = arith.ori %97, %102 : vector<16x32xi1>
    %cst_55 = arith.constant 5.000000e-01 : f32
    %cst_56 = arith.constant 0.000000e+00 : f32
    %104 = vector.broadcast %cst_55 : f32 to vector<16x32xf32>
    %105 = vector.broadcast %cst_56 : f32 to vector<16x32xf32>
    %106 = arith.select %103, %104, %105 : vector<16x32xi1>, vector<16x32xf32>
    %cst_57 = arith.constant dense<0.000000e+00> : vector<16x128xf32>
    %107 = tpu.matmul %106, %92, %cst_57 {dimension_numbers = #tpu.dot_dimension_numbers<[1], [0], [0], [1], [0, 0, 1, 1], [], []>} : vector<16x32xf32>, vector<32x128xf32>, vector<16x128xf32> -> vector<16x128xf32>
    %cst_58 = arith.constant 0.000000e+00 : f32
    %108 = vector.broadcast %cst_58 : f32 to vector<1x128xf32>
    %109 = vector.extract_strided_slice %107 {offsets = [0, 0], sizes = [15, 128], strides = [1, 1]} : vector<16x128xf32> to vector<15x128xf32>
    %110 = tpu.concatenate %108, %109 in 0 : vector<1x128xf32>, vector<15x128xf32> -> vector<16x128xf32>
    %111 = vector.extract_strided_slice %107 {offsets = [1, 0], sizes = [15, 128], strides = [1, 1]} : vector<16x128xf32> to vector<15x128xf32>
    %112 = tpu.concatenate %111, %108 in 0 : vector<15x128xf32>, vector<1x128xf32> -> vector<16x128xf32>
    %113 = arith.truncf %110 : vector<16x128xf32> to vector<16x128xbf16>
    %c0_59 = arith.constant 0 : index
    %c0_60 = arith.constant 0 : index
    %c0_61 = arith.constant 0 : index
    %114 = vector.load %arg9[%c0_59, %c0_60, %c0_61] : memref<3x128x256xbf16, #tpu.memory_space<vmem>>, vector<1x128x256xbf16>
    %115 = vector.shape_cast %114 : vector<1x128x256xbf16> to vector<128x256xbf16>
    %cst_62 = arith.constant dense<0.000000e+00> : vector<16x256xf32>
    %116 = tpu.matmul %113, %115, %cst_62 {dimension_numbers = #tpu.dot_dimension_numbers<[1], [0], [0], [1], [0, 0, 1, 1], [], []>} : vector<16x128xbf16>, vector<128x256xbf16>, vector<16x256xf32> -> vector<16x256xf32>
    %117 = arith.truncf %107 : vector<16x128xf32> to vector<16x128xbf16>
    %c1_63 = arith.constant 1 : index
    %c0_64 = arith.constant 0 : index
    %c0_65 = arith.constant 0 : index
    %118 = vector.load %arg9[%c1_63, %c0_64, %c0_65] : memref<3x128x256xbf16, #tpu.memory_space<vmem>>, vector<1x128x256xbf16>
    %119 = vector.shape_cast %118 : vector<1x128x256xbf16> to vector<128x256xbf16>
    %cst_66 = arith.constant dense<0.000000e+00> : vector<16x256xf32>
    %120 = tpu.matmul %117, %119, %cst_66 {dimension_numbers = #tpu.dot_dimension_numbers<[1], [0], [0], [1], [0, 0, 1, 1], [], []>} : vector<16x128xbf16>, vector<128x256xbf16>, vector<16x256xf32> -> vector<16x256xf32>
    %121 = arith.addf %116, %120 : vector<16x256xf32>
    %122 = arith.truncf %112 : vector<16x128xf32> to vector<16x128xbf16>
    %c2_67 = arith.constant 2 : index
    %c0_68 = arith.constant 0 : index
    %c0_69 = arith.constant 0 : index
    %123 = vector.load %arg9[%c2_67, %c0_68, %c0_69] : memref<3x128x256xbf16, #tpu.memory_space<vmem>>, vector<1x128x256xbf16>
    %124 = vector.shape_cast %123 : vector<1x128x256xbf16> to vector<128x256xbf16>
    %cst_70 = arith.constant dense<0.000000e+00> : vector<16x256xf32>
    %125 = tpu.matmul %122, %124, %cst_70 {dimension_numbers = #tpu.dot_dimension_numbers<[1], [0], [0], [1], [0, 0, 1, 1], [], []>} : vector<16x128xbf16>, vector<128x256xbf16>, vector<16x256xf32> -> vector<16x256xf32>
    %126 = arith.addf %121, %125 : vector<16x256xf32>
    %c0_71 = arith.constant 0 : index
    %c0_72 = arith.constant 0 : index
    %127 = vector.load %arg10[%c0_71, %c0_72] : memref<1x256xf32, #tpu.memory_space<vmem>>, vector<1x256xf32>
    %128 = vector.broadcast %127 : vector<1x256xf32> to vector<16x256xf32>
    %129 = arith.addf %126, %128 : vector<16x256xf32>
    %cst_73 = arith.constant 0.000000e+00 : f32
    %130 = vector.broadcast %cst_73 : f32 to vector<16x256xf32>
    %131 = arith.maximumf %129, %130 : vector<16x256xf32>
    %132 = tpu.iota {dimensions = array<i32: 0>} : vector<8x16xi32>
    %133 = tpu.iota {dimensions = array<i32: 1>} : vector<8x16xi32>
    %c2_i32_74 = arith.constant 2 : i32
    %134 = vector.broadcast %c2_i32_74 : i32 to vector<8x16xi32>
    %135 = arith.muli %134, %132 : vector<8x16xi32>
    %136 = arith.cmpi eq, %133, %135 : vector<8x16xi32>
    %c2_i32_75 = arith.constant 2 : i32
    %137 = vector.broadcast %c2_i32_75 : i32 to vector<8x16xi32>
    %138 = arith.muli %137, %132 : vector<8x16xi32>
    %c1_i32_76 = arith.constant 1 : i32
    %139 = vector.broadcast %c1_i32_76 : i32 to vector<8x16xi32>
    %140 = arith.addi %138, %139 : vector<8x16xi32>
    %141 = arith.cmpi eq, %133, %140 : vector<8x16xi32>
    %142 = arith.ori %136, %141 : vector<8x16xi1>
    %cst_77 = arith.constant 5.000000e-01 : f32
    %cst_78 = arith.constant 0.000000e+00 : f32
    %143 = vector.broadcast %cst_77 : f32 to vector<8x16xf32>
    %144 = vector.broadcast %cst_78 : f32 to vector<8x16xf32>
    %145 = arith.select %142, %143, %144 : vector<8x16xi1>, vector<8x16xf32>
    %cst_79 = arith.constant dense<0.000000e+00> : vector<8x256xf32>
    %146 = tpu.matmul %145, %131, %cst_79 {dimension_numbers = #tpu.dot_dimension_numbers<[1], [0], [0], [1], [0, 0, 1, 1], [], []>} : vector<8x16xf32>, vector<16x256xf32>, vector<8x256xf32> -> vector<8x256xf32>
    %cst_80 = arith.constant 0.000000e+00 : f32
    %147 = vector.broadcast %cst_80 : f32 to vector<1x256xf32>
    %148 = vector.extract_strided_slice %146 {offsets = [0, 0], sizes = [7, 256], strides = [1, 1]} : vector<8x256xf32> to vector<7x256xf32>
    %149 = tpu.concatenate %147, %148 in 0 : vector<1x256xf32>, vector<7x256xf32> -> vector<8x256xf32>
    %150 = vector.extract_strided_slice %146 {offsets = [1, 0], sizes = [7, 256], strides = [1, 1]} : vector<8x256xf32> to vector<7x256xf32>
    %151 = tpu.concatenate %150, %147 in 0 : vector<7x256xf32>, vector<1x256xf32> -> vector<8x256xf32>
    %152 = arith.truncf %149 : vector<8x256xf32> to vector<8x256xbf16>
    %c0_81 = arith.constant 0 : index
    %c0_82 = arith.constant 0 : index
    %c0_83 = arith.constant 0 : index
    %153 = vector.load %arg11[%c0_81, %c0_82, %c0_83] : memref<3x256x512xbf16, #tpu.memory_space<vmem>>, vector<1x256x512xbf16>
    %154 = vector.shape_cast %153 : vector<1x256x512xbf16> to vector<256x512xbf16>
    %cst_84 = arith.constant dense<0.000000e+00> : vector<8x512xf32>
    %155 = tpu.matmul %152, %154, %cst_84 {dimension_numbers = #tpu.dot_dimension_numbers<[1], [0], [0], [1], [0, 0, 1, 1], [], []>} : vector<8x256xbf16>, vector<256x512xbf16>, vector<8x512xf32> -> vector<8x512xf32>
    %156 = arith.truncf %146 : vector<8x256xf32> to vector<8x256xbf16>
    %c1_85 = arith.constant 1 : index
    %c0_86 = arith.constant 0 : index
    %c0_87 = arith.constant 0 : index
    %157 = vector.load %arg11[%c1_85, %c0_86, %c0_87] : memref<3x256x512xbf16, #tpu.memory_space<vmem>>, vector<1x256x512xbf16>
    %158 = vector.shape_cast %157 : vector<1x256x512xbf16> to vector<256x512xbf16>
    %cst_88 = arith.constant dense<0.000000e+00> : vector<8x512xf32>
    %159 = tpu.matmul %156, %158, %cst_88 {dimension_numbers = #tpu.dot_dimension_numbers<[1], [0], [0], [1], [0, 0, 1, 1], [], []>} : vector<8x256xbf16>, vector<256x512xbf16>, vector<8x512xf32> -> vector<8x512xf32>
    %160 = arith.addf %155, %159 : vector<8x512xf32>
    %161 = arith.truncf %151 : vector<8x256xf32> to vector<8x256xbf16>
    %c2_89 = arith.constant 2 : index
    %c0_90 = arith.constant 0 : index
    %c0_91 = arith.constant 0 : index
    %162 = vector.load %arg11[%c2_89, %c0_90, %c0_91] : memref<3x256x512xbf16, #tpu.memory_space<vmem>>, vector<1x256x512xbf16>
    %163 = vector.shape_cast %162 : vector<1x256x512xbf16> to vector<256x512xbf16>
    %cst_92 = arith.constant dense<0.000000e+00> : vector<8x512xf32>
    %164 = tpu.matmul %161, %163, %cst_92 {dimension_numbers = #tpu.dot_dimension_numbers<[1], [0], [0], [1], [0, 0, 1, 1], [], []>} : vector<8x256xbf16>, vector<256x512xbf16>, vector<8x512xf32> -> vector<8x512xf32>
    %165 = arith.addf %160, %164 : vector<8x512xf32>
    %c0_93 = arith.constant 0 : index
    %c0_94 = arith.constant 0 : index
    %166 = vector.load %arg12[%c0_93, %c0_94] : memref<1x512xf32, #tpu.memory_space<vmem>>, vector<1x512xf32>
    %167 = vector.broadcast %166 : vector<1x512xf32> to vector<8x512xf32>
    %168 = arith.addf %165, %167 : vector<8x512xf32>
    %cst_95 = arith.constant 0.000000e+00 : f32
    %169 = vector.broadcast %cst_95 : f32 to vector<8x512xf32>
    %170 = arith.maximumf %168, %169 : vector<8x512xf32>
    %171 = tpu.iota {dimensions = array<i32: 0>} : vector<4x8xi32>
    %172 = tpu.iota {dimensions = array<i32: 1>} : vector<4x8xi32>
    %c2_i32_96 = arith.constant 2 : i32
    %173 = vector.broadcast %c2_i32_96 : i32 to vector<4x8xi32>
    %174 = arith.muli %173, %171 : vector<4x8xi32>
    %175 = arith.cmpi eq, %172, %174 : vector<4x8xi32>
    %c2_i32_97 = arith.constant 2 : i32
    %176 = vector.broadcast %c2_i32_97 : i32 to vector<4x8xi32>
    %177 = arith.muli %176, %171 : vector<4x8xi32>
    %c1_i32_98 = arith.constant 1 : i32
    %178 = vector.broadcast %c1_i32_98 : i32 to vector<4x8xi32>
    %179 = arith.addi %177, %178 : vector<4x8xi32>
    %180 = arith.cmpi eq, %172, %179 : vector<4x8xi32>
    %181 = arith.ori %175, %180 : vector<4x8xi1>
    %cst_99 = arith.constant 5.000000e-01 : f32
    %cst_100 = arith.constant 0.000000e+00 : f32
    %182 = vector.broadcast %cst_99 : f32 to vector<4x8xf32>
    %183 = vector.broadcast %cst_100 : f32 to vector<4x8xf32>
    %184 = arith.select %181, %182, %183 : vector<4x8xi1>, vector<4x8xf32>
    %cst_101 = arith.constant dense<0.000000e+00> : vector<4x512xf32>
    %185 = tpu.matmul %184, %170, %cst_101 {dimension_numbers = #tpu.dot_dimension_numbers<[1], [0], [0], [1], [0, 0, 1, 1], [], []>} : vector<4x8xf32>, vector<8x512xf32>, vector<4x512xf32> -> vector<4x512xf32>
    %cst_102 = arith.constant 0.000000e+00 : f32
    %186 = vector.broadcast %cst_102 : f32 to vector<1x512xf32>
    %187 = vector.extract_strided_slice %185 {offsets = [0, 0], sizes = [3, 512], strides = [1, 1]} : vector<4x512xf32> to vector<3x512xf32>
    %188 = tpu.concatenate %186, %187 in 0 : vector<1x512xf32>, vector<3x512xf32> -> vector<4x512xf32>
    %189 = vector.extract_strided_slice %185 {offsets = [1, 0], sizes = [3, 512], strides = [1, 1]} : vector<4x512xf32> to vector<3x512xf32>
    %190 = tpu.concatenate %189, %186 in 0 : vector<3x512xf32>, vector<1x512xf32> -> vector<4x512xf32>
    %191 = arith.truncf %188 : vector<4x512xf32> to vector<4x512xbf16>
    %c0_103 = arith.constant 0 : index
    %c0_104 = arith.constant 0 : index
    %c0_105 = arith.constant 0 : index
    %192 = vector.load %arg13[%c0_103, %c0_104, %c0_105] : memref<3x512x512xbf16, #tpu.memory_space<vmem>>, vector<1x512x512xbf16>
    %193 = vector.shape_cast %192 : vector<1x512x512xbf16> to vector<512x512xbf16>
    %cst_106 = arith.constant dense<0.000000e+00> : vector<4x512xf32>
    %194 = tpu.matmul %191, %193, %cst_106 {dimension_numbers = #tpu.dot_dimension_numbers<[1], [0], [0], [1], [0, 0, 1, 1], [], []>} : vector<4x512xbf16>, vector<512x512xbf16>, vector<4x512xf32> -> vector<4x512xf32>
    %195 = arith.truncf %185 : vector<4x512xf32> to vector<4x512xbf16>
    %c1_107 = arith.constant 1 : index
    %c0_108 = arith.constant 0 : index
    %c0_109 = arith.constant 0 : index
    %196 = vector.load %arg13[%c1_107, %c0_108, %c0_109] : memref<3x512x512xbf16, #tpu.memory_space<vmem>>, vector<1x512x512xbf16>
    %197 = vector.shape_cast %196 : vector<1x512x512xbf16> to vector<512x512xbf16>
    %cst_110 = arith.constant dense<0.000000e+00> : vector<4x512xf32>
    %198 = tpu.matmul %195, %197, %cst_110 {dimension_numbers = #tpu.dot_dimension_numbers<[1], [0], [0], [1], [0, 0, 1, 1], [], []>} : vector<4x512xbf16>, vector<512x512xbf16>, vector<4x512xf32> -> vector<4x512xf32>
    %199 = arith.addf %194, %198 : vector<4x512xf32>
    %200 = arith.truncf %190 : vector<4x512xf32> to vector<4x512xbf16>
    %c2_111 = arith.constant 2 : index
    %c0_112 = arith.constant 0 : index
    %c0_113 = arith.constant 0 : index
    %201 = vector.load %arg13[%c2_111, %c0_112, %c0_113] : memref<3x512x512xbf16, #tpu.memory_space<vmem>>, vector<1x512x512xbf16>
    %202 = vector.shape_cast %201 : vector<1x512x512xbf16> to vector<512x512xbf16>
    %cst_114 = arith.constant dense<0.000000e+00> : vector<4x512xf32>
    %203 = tpu.matmul %200, %202, %cst_114 {dimension_numbers = #tpu.dot_dimension_numbers<[1], [0], [0], [1], [0, 0, 1, 1], [], []>} : vector<4x512xbf16>, vector<512x512xbf16>, vector<4x512xf32> -> vector<4x512xf32>
    %204 = arith.addf %199, %203 : vector<4x512xf32>
    %c0_115 = arith.constant 0 : index
    %c0_116 = arith.constant 0 : index
    %205 = vector.load %arg14[%c0_115, %c0_116] : memref<1x512xf32, #tpu.memory_space<vmem>>, vector<1x512xf32>
    %206 = vector.broadcast %205 : vector<1x512xf32> to vector<4x512xf32>
    %207 = arith.addf %204, %206 : vector<4x512xf32>
    %cst_117 = arith.constant 0.000000e+00 : f32
    %208 = vector.broadcast %cst_117 : f32 to vector<4x512xf32>
    %209 = arith.maximumf %207, %208 : vector<4x512xf32>
    %210 = tpu.iota {dimensions = array<i32: 0>} : vector<2x4xi32>
    %211 = tpu.iota {dimensions = array<i32: 1>} : vector<2x4xi32>
    %c2_i32_118 = arith.constant 2 : i32
    %212 = vector.broadcast %c2_i32_118 : i32 to vector<2x4xi32>
    %213 = arith.muli %212, %210 : vector<2x4xi32>
    %214 = arith.cmpi eq, %211, %213 : vector<2x4xi32>
    %c2_i32_119 = arith.constant 2 : i32
    %215 = vector.broadcast %c2_i32_119 : i32 to vector<2x4xi32>
    %216 = arith.muli %215, %210 : vector<2x4xi32>
    %c1_i32_120 = arith.constant 1 : i32
    %217 = vector.broadcast %c1_i32_120 : i32 to vector<2x4xi32>
    %218 = arith.addi %216, %217 : vector<2x4xi32>
    %219 = arith.cmpi eq, %211, %218 : vector<2x4xi32>
    %220 = arith.ori %214, %219 : vector<2x4xi1>
    %cst_121 = arith.constant 5.000000e-01 : f32
    %cst_122 = arith.constant 0.000000e+00 : f32
    %221 = vector.broadcast %cst_121 : f32 to vector<2x4xf32>
    %222 = vector.broadcast %cst_122 : f32 to vector<2x4xf32>
    %223 = arith.select %220, %221, %222 : vector<2x4xi1>, vector<2x4xf32>
    %cst_123 = arith.constant dense<0.000000e+00> : vector<2x512xf32>
    %224 = tpu.matmul %223, %209, %cst_123 {dimension_numbers = #tpu.dot_dimension_numbers<[1], [0], [0], [1], [0, 0, 1, 1], [], []>} : vector<2x4xf32>, vector<4x512xf32>, vector<2x512xf32> -> vector<2x512xf32>
    %cst_124 = arith.constant dense<0.000000e+00> : vector<512xf32>
    %225 = vector.multi_reduction <add>, %224, %cst_124 [0] : vector<2x512xf32> to vector<512xf32>
    %226 = vector.shape_cast %225 : vector<512xf32> to vector<1x512xf32>
    %cst_125 = arith.constant 5.000000e-01 : f32
    %227 = vector.broadcast %cst_125 : f32 to vector<1x512xf32>
    %228 = arith.mulf %226, %227 : vector<1x512xf32>
    %229 = arith.truncf %228 : vector<1x512xf32> to vector<1x512xbf16>
    %c0_126 = arith.constant 0 : index
    %c0_127 = arith.constant 0 : index
    %230 = vector.load %arg15[%c0_126, %c0_127] : memref<512x32xbf16, #tpu.memory_space<vmem>>, vector<512x32xbf16>
    %cst_128 = arith.constant dense<0.000000e+00> : vector<1x32xf32>
    %231 = tpu.matmul %229, %230, %cst_128 {dimension_numbers = #tpu.dot_dimension_numbers<[1], [0], [0], [1], [0, 0, 1, 1], [], []>} : vector<1x512xbf16>, vector<512x32xbf16>, vector<1x32xf32> -> vector<1x32xf32>
    %c0_129 = arith.constant 0 : index
    %c0_130 = arith.constant 0 : index
    %232 = vector.load %arg16[%c0_129, %c0_130] : memref<1x32xf32, #tpu.memory_space<vmem>>, vector<1x32xf32>
    %233 = arith.addf %231, %232 : vector<1x32xf32>
    %cst_131 = arith.constant 0.000000e+00 : f32
    %234 = vector.broadcast %cst_131 : f32 to vector<1x32xf32>
    %235 = arith.cmpf oge, %233, %234 : vector<1x32xf32>
    %cst_132 = arith.constant 2.000000e-01 : f32
    %236 = vector.broadcast %cst_132 : f32 to vector<1x32xf32>
    %237 = arith.mulf %236, %233 : vector<1x32xf32>
    %238 = arith.select %235, %233, %237 : vector<1x32xi1>, vector<1x32xf32>
    %239 = vector.extract_strided_slice %238 {offsets = [0, 0], sizes = [1, 16], strides = [1, 1]} : vector<1x32xf32> to vector<1x16xf32>
    %240 = vector.extract_strided_slice %238 {offsets = [0, 16], sizes = [1, 16], strides = [1, 1]} : vector<1x32xf32> to vector<1x16xf32>
    %c0_133 = arith.constant 0 : index
    %c0_134 = arith.constant 0 : index
    %c0_135 = arith.constant 0 : index
    %241 = vector.load %arg2[%c0_133, %c0_134, %c0_135] : memref<1x1x16xf32, #tpu.memory_space<vmem>>, vector<1x1x16xf32>
    %242 = vector.shape_cast %241 : vector<1x1x16xf32> to vector<1x16xf32>
    %243 = arith.mulf %242, %240 : vector<1x16xf32>
    %244 = arith.addf %243, %239 : vector<1x16xf32>
    %c0_136 = arith.constant 0 : index
    %c0_137 = arith.constant 0 : index
    %c0_138 = arith.constant 0 : index
    %245 = vector.load %arg17[%c0_136, %c0_137, %c0_138] : memref<1x1x16xf32, #tpu.memory_space<vmem>>, vector<1x1x16xf32>
    %246 = vector.shape_cast %245 : vector<1x1x16xf32> to vector<1x16xf32>
    %247 = vector.shape_cast %244 : vector<1x16xf32> to vector<1x1x16xf32>
    tpu.vector_store %arg17[%c0_136, %c0_137, %c0_138], %247 {strides = array<i32>} : memref<1x1x16xf32, #tpu.memory_space<vmem>>, vector<1x1x16xf32>,
    return
  }
  func.func @transform_0(%arg0: i32) -> (i32, i32, i32) {
    %c0_i32 = arith.constant 0 : i32
    %c0_i32_0 = arith.constant 0 : i32
    %c0_i32_1 = arith.constant 0 : i32
    return %arg0, %c0_i32, %c0_i32_0 : i32, i32, i32
  }
  func.func @transform_1(%arg0: i32) -> (i32, i32, i32) {
    %c0_i32 = arith.constant 0 : i32
    %c0_i32_0 = arith.constant 0 : i32
    %c0_i32_1 = arith.constant 0 : i32
    return %arg0, %c0_i32, %c0_i32_0 : i32, i32, i32
  }
  func.func @transform_2(%arg0: i32) -> (i32, i32, i32) {
    %c0_i32 = arith.constant 0 : i32
    %c0_i32_0 = arith.constant 0 : i32
    %c0_i32_1 = arith.constant 0 : i32
    %c0_i32_2 = arith.constant 0 : i32
    return %c0_i32, %c0_i32_0, %c0_i32_1 : i32, i32, i32
  }
  func.func @transform_3(%arg0: i32) -> (i32, i32) {
    %c0_i32 = arith.constant 0 : i32
    %c0_i32_0 = arith.constant 0 : i32
    %c0_i32_1 = arith.constant 0 : i32
    return %c0_i32, %c0_i32_0 : i32, i32
  }
  func.func @transform_4(%arg0: i32) -> (i32, i32, i32) {
    %c0_i32 = arith.constant 0 : i32
    %c0_i32_0 = arith.constant 0 : i32
    %c0_i32_1 = arith.constant 0 : i32
    %c0_i32_2 = arith.constant 0 : i32
    return %c0_i32, %c0_i32_0, %c0_i32_1 : i32, i32, i32
  }
  func.func @transform_5(%arg0: i32) -> (i32, i32) {
    %c0_i32 = arith.constant 0 : i32
    %c0_i32_0 = arith.constant 0 : i32
    %c0_i32_1 = arith.constant 0 : i32
    return %c0_i32, %c0_i32_0 : i32, i32
  }
  func.func @transform_6(%arg0: i32) -> (i32, i32, i32) {
    %c0_i32 = arith.constant 0 : i32
    %c0_i32_0 = arith.constant 0 : i32
    %c0_i32_1 = arith.constant 0 : i32
    %c0_i32_2 = arith.constant 0 : i32
    return %c0_i32, %c0_i32_0, %c0_i32_1 : i32, i32, i32
  }
  func.func @transform_7(%arg0: i32) -> (i32, i32) {
    %c0_i32 = arith.constant 0 : i32
    %c0_i32_0 = arith.constant 0 : i32
    %c0_i32_1 = arith.constant 0 : i32
    return %c0_i32, %c0_i32_0 : i32, i32
  }
  func.func @transform_8(%arg0: i32) -> (i32, i32, i32) {
    %c0_i32 = arith.constant 0 : i32
    %c0_i32_0 = arith.constant 0 : i32
    %c0_i32_1 = arith.constant 0 : i32
    %c0_i32_2 = arith.constant 0 : i32
    return %c0_i32, %c0_i32_0, %c0_i32_1 : i32, i32, i32
  }
  func.func @transform_9(%arg0: i32) -> (i32, i32) {
    %c0_i32 = arith.constant 0 : i32
    %c0_i32_0 = arith.constant 0 : i32
    %c0_i32_1 = arith.constant 0 : i32
    return %c0_i32, %c0_i32_0 : i32, i32
  }
  func.func @transform_10(%arg0: i32) -> (i32, i32, i32) {
    %c0_i32 = arith.constant 0 : i32
    %c0_i32_0 = arith.constant 0 : i32
    %c0_i32_1 = arith.constant 0 : i32
    %c0_i32_2 = arith.constant 0 : i32
    return %c0_i32, %c0_i32_0, %c0_i32_1 : i32, i32, i32
  }
  func.func @transform_11(%arg0: i32) -> (i32, i32) {
    %c0_i32 = arith.constant 0 : i32
    %c0_i32_0 = arith.constant 0 : i32
    %c0_i32_1 = arith.constant 0 : i32
    return %c0_i32, %c0_i32_0 : i32, i32
  }
  func.func @transform_12(%arg0: i32) -> (i32, i32, i32) {
    %c0_i32 = arith.constant 0 : i32
    %c0_i32_0 = arith.constant 0 : i32
    %c0_i32_1 = arith.constant 0 : i32
    %c0_i32_2 = arith.constant 0 : i32
    return %c0_i32, %c0_i32_0, %c0_i32_1 : i32, i32, i32
  }
  func.func @transform_13(%arg0: i32) -> (i32, i32) {
    %c0_i32 = arith.constant 0 : i32
    %c0_i32_0 = arith.constant 0 : i32
    %c0_i32_1 = arith.constant 0 : i32
    return %c0_i32, %c0_i32_0 : i32, i32
  }
  func.func @transform_14(%arg0: i32) -> (i32, i32) {
    %c0_i32 = arith.constant 0 : i32
    %c0_i32_0 = arith.constant 0 : i32
    %c0_i32_1 = arith.constant 0 : i32
    return %c0_i32, %c0_i32_0 : i32, i32
  }
  func.func @transform_15(%arg0: i32) -> (i32, i32) {
    %c0_i32 = arith.constant 0 : i32
    %c0_i32_0 = arith.constant 0 : i32
    %c0_i32_1 = arith.constant 0 : i32
    return %c0_i32, %c0_i32_0 : i32, i32
  }
  func.func @transform_16(%arg0: i32) -> (i32, i32, i32) {
    %c0_i32 = arith.constant 0 : i32
    %c0_i32_0 = arith.constant 0 : i32
    %c0_i32_1 = arith.constant 0 : i32
    return %arg0, %c0_i32, %c0_i32_0 : i32, i32, i32
  }
}

</mosaic_0001>

<llo_original>
// kernel: speaker_encoder_forward.1
$region0: #{speaker_encoder_forward.1}
  #allocation0 [shape = 'u32[]', space=smem, size = 0x4, offset = 0x4, fixed_abs, tag = 'smem constant byte address 0x4 - core index']
  #allocation1 [shape = 'u32[144,128]{1,0:T(1,128)}', space=vmem, size = 0x12000, scoped, tag = 'internal scratch']
  %s0 = inlined_call_operand.vmem [shape: bf16[2,64,80], index: 0, kind: input, shape index: {}]
  %s1 = inlined_call_operand.hbm [shape: f32[2,1,16], index: 1, kind: input, shape index: {}]
  %s2 = inlined_call_operand.vmem [shape: bf16[3,80,32], index: 2, kind: input, shape index: {}]
  %s3 = inlined_call_operand.hbm [shape: f32[1,32], index: 3, kind: input, shape index: {}]
  %s4 = inlined_call_operand.hbm [shape: bf16[3,32,64], index: 4, kind: input, shape index: {}]
  %s5 = inlined_call_operand.hbm [shape: f32[1,64], index: 5, kind: input, shape index: {}]
  %s6 = inlined_call_operand.hbm [shape: bf16[3,64,128], index: 6, kind: input, shape index: {}]
  %s7 = inlined_call_operand.hbm [shape: f32[1,128], index: 7, kind: input, shape index: {}]
  %s8 = inlined_call_operand.hbm [shape: bf16[3,128,256], index: 8, kind: input, shape index: {}]
  %s9 = inlined_call_operand.hbm [shape: f32[1,256], index: 9, kind: input, shape index: {}]
  %s10 = inlined_call_operand.hbm [shape: bf16[3,256,512], index: 10, kind: input, shape index: {}]
  %s11 = inlined_call_operand.hbm [shape: f32[1,512], index: 11, kind: input, shape index: {}]
  %s12 = inlined_call_operand.hbm [shape: bf16[3,512,512], index: 12, kind: input, shape index: {}]
  %s13 = inlined_call_operand.hbm [shape: f32[1,512], index: 13, kind: input, shape index: {}]
  %s14 = inlined_call_operand.vmem [shape: bf16[512,32], index: 14, kind: input, shape index: {}]
  %s15 = inlined_call_operand.hbm [shape: f32[1,32], index: 15, kind: input, shape index: {}]
  %s16 = inlined_call_operand.hbm [shape: f32[2,1,16], index: 16, kind: output, shape index: {}]
  %s17 = sld [smem:[#allocation0]]
  $region149: #{speaker_encoder_forward.1} parent=0
    _
  %s19 = ssub.s32 1, %s17
  %s20 = scalar_select 0, %s19, %s17
  $region1: #{speaker_encoder_forward.1} parent=0
    #allocation2 [shape = 'u8[1024]{0}', space=vmem, size = 0x400, scoped, tag = 'input window, operand 1']
    #allocation3 [shape = 's32[2]{0}', space=sflag, size = 0x8, scoped, tag = 'scoped memory for speaker_encoder_forward.1']
    #allocation4 [shape = 's32[2]{0}', space=sflag, size = 0x8, scoped, tag = 'scoped memory for speaker_encoder_forward.1']
    #allocation5 [shape = 'u8[512]{0}', space=vmem, size = 0x400, scoped, tag = 'input window, operand 3, single buffered']
    #allocation6 [shape = 's32[1]{0}', space=sflag, size = 0x4, scoped, tag = 'scoped memory for speaker_encoder_forward.1']
    #allocation7 [shape = 'u8[24576]{0}', space=vmem, size = 0x6000, scoped, tag = 'input window, operand 4, single buffered']
    #allocation8 [shape = 'u8[512]{0}', space=vmem, size = 0x400, scoped, tag = 'input window, operand 5, single buffered']
    #allocation9 [shape = 's32[1]{0}', space=sflag, size = 0x4, scoped, tag = 'scoped memory for speaker_encoder_forward.1']
    #allocation10 [shape = 'u8[49152]{0}', space=vmem, size = 0xc000, scoped, tag = 'input window, operand 6, single buffered']
    #allocation11 [shape = 'u8[512]{0}', space=vmem, size = 0x400, scoped, tag = 'input window, operand 7, single buffered']
    #allocation12 [shape = 's32[1]{0}', space=sflag, size = 0x4, scoped, tag = 'scoped memory for speaker_encoder_forward.1']
    #allocation13 [shape = 'u8[196608]{0}', space=vmem, size = 0x30000, scoped, tag = 'input window, operand 8, single buffered']
    #allocation14 [shape = 'u8[1024]{0}', space=vmem, size = 0x400, scoped, tag = 'input window, operand 9, single buffered']
    #allocation15 [shape = 's32[1]{0}', space=sflag, size = 0x4, scoped, tag = 'scoped memory for speaker_encoder_forward.1']
    #allocation16 [shape = 'u8[786432]{0}', space=vmem, size = 0xc0000, scoped, tag = 'input window, operand 10, single buffered']
    #allocation17 [shape = 'u8[2048]{0}', space=vmem, size = 0x800, scoped, tag = 'input window, operand 11, single buffered']
    #allocation18 [shape = 's32[1]{0}', space=sflag, size = 0x4, scoped, tag = 'scoped memory for speaker_encoder_forward.1']
    #allocation19 [shape = 'u8[1572864]{0}', space=vmem, size = 0x180000, scoped, tag = 'input window, operand 12, single buffered']
    #allocation20 [shape = 'u8[2048]{0}', space=vmem, size = 0x800, scoped, tag = 'input window, operand 13, single buffered']
    #allocation21 [shape = 's32[1]{0}', space=sflag, size = 0x4, scoped, tag = 'scoped memory for speaker_encoder_forward.1']
    #allocation22 [shape = 'u8[512]{0}', space=vmem, size = 0x400, scoped, tag = 'input window, operand 15, single buffered']
    #allocation23 [shape = 'u8[1024]{0}', space=vmem, size = 0x400, scoped, tag = 'output window, operand 0']
    %21 = vsyncpa [#allocation3], 0
    %s22 = scalar_lea.sflag [#allocation3], 1
    %23 = vsyncpa %s22, 0
    %24 = vsyncpa [#allocation6], 0
    %25 = vsyncpa [#allocation9], 0
    %26 = vsyncpa [#allocation12], 0
    %27 = vsyncpa [#allocation15], 0
    %28 = vsyncpa [#allocation18], 0
    %29 = vsyncpa [#allocation21], 0
    %30 = vsyncpa [#allocation4], 0
    %s31 = scalar_lea.sflag [#allocation4], 1
    %32 = vsyncpa %s31, 0
    loop: start=0, step=1, limit=4
    $region2: #{speaker_encoder_forward.1} parent=1 // loop_pre_header
      _
    $region3: #{speaker_encoder_forward.1} parent=1 // loop_header
      %s34 = sphi 0, %s38
      %p35 = scmp.ge.s32.totalorder %s34, 4
      %s44 = sphi 0, %s46
      %s47 = sphi 0, %s44
      %s48 = sphi 0, %s47
      %s64 = sphi 0, %s48
      %s70 = sphi 0, %s72
      %s73 = sphi 0, %s70
      %s74 = sphi 0, %s73
      %s90 = sphi 0, %s74
      %s94 = sphi 0, %s94
      %s96 = sphi 0, %s94
      %s97 = sphi 0, %s96
      %s111 = sphi 0, %s97
      %s115 = sphi 0, %s115
      %s117 = sphi 0, %s115
      %s118 = sphi 0, %s117
      %s132 = sphi 0, %s118
      %s136 = sphi 0, %s136
      %s138 = sphi 0, %s136
      %s139 = sphi 0, %s138
      %s153 = sphi 0, %s139
      %s157 = sphi 0, %s157
      %s159 = sphi 0, %s157
      %s160 = sphi 0, %s159
      %s174 = sphi 0, %s160
      %s178 = sphi 0, %s178
      %s180 = sphi 0, %s178
      %s181 = sphi 0, %s180
      %s195 = sphi 0, %s181
      %s199 = sphi 0, %s199
      %s201 = sphi 0, %s199
      %s202 = sphi 0, %s201
      %s216 = sphi 0, %s202
      %s220 = sphi 0, %s220
      %s222 = sphi 0, %s220
      %s223 = sphi 0, %s222
      %s237 = sphi 0, %s223
      %s241 = sphi 0, %s241
      %s243 = sphi 0, %s241
      %s244 = sphi 0, %s243
      %s258 = sphi 0, %s244
      %s262 = sphi 0, %s262
      %s264 = sphi 0, %s262
      %s265 = sphi 0, %s264
      %s279 = sphi 0, %s265
      %s283 = sphi 0, %s283
      %s285 = sphi 0, %s283
      %s286 = sphi 0, %s285
      %s300 = sphi 0, %s286
      %s304 = sphi 0, %s304
      %s306 = sphi 0, %s304
      %s307 = sphi 0, %s306
      %s321 = sphi 0, %s307
      %s325 = sphi 0, %s325
      %s327 = sphi 0, %s325
      %s328 = sphi 0, %s327
      %s342 = sphi 0, %s328
      %s346 = sphi 0, %s346
      %s348 = sphi 0, %s346
      %s349 = sphi 0, %s348
      %s363 = sphi 0, %s349
      %s367 = sphi 0, %s367
      %s369 = sphi 0, %s367
      %s370 = sphi 0, %s369
      %s384 = sphi 0, %s370
      %s390 = sphi 0, %s392
      %s393 = sphi 0, %s390
      %s394 = sphi 0, %s393
      %s410 = sphi 0, %s394
    $region4: #{speaker_encoder_forward.1} parent=1 // loop_header_branch
      %37 = sbr.rel (%p35) target = $region8
    $region5: #{speaker_encoder_forward.1} parent=1 // loop_body
      %s39 = ssub.s32 %s34, 1
      %s40 = ssub.s32 %s34, 2
      %s41 = sadd.s32 %s34, 1
      %s42 = ssub.s32 %s34, %s41
      %p43 = scmp.eq.s32.totalorder %s42, 0
      %s45 = sadd.s32 %s44, 1
      %s46 = scalar_select %p43, %s44, %s45
      %p49 = pneg %p43
      %p50 = scmp.eq.s32.totalorder %s34, 1
      %p51 = por %p49, %p50
      %p52 = scmp.ne.s32.totalorder %s44, %s47
      %p53 = scmp.eq.s32.totalorder %s34, 0
      %p54 = por %p52, %p53
      %p55 = scmp.ne.s32.totalorder %s44, %s47
      %p56 = scmp.eq.s32.totalorder %s39, 1
      %p57 = por %p55, %p56
      %p58 = scmp.ne.s32.totalorder %s47, %s48
      %p59 = scmp.eq.s32.totalorder %s39, 0
      %p60 = por %p58, %p59
      %p61 = scmp.ne.s32.totalorder %s47, %s48
      %p62 = scmp.eq.s32.totalorder %s40, 1
      %p63 = por %p61, %p62
      %p65 = scmp.ne.s32.totalorder %s48, %s64
      %p66 = scmp.eq.s32.totalorder %s40, 0
      %p67 = por %p65, %p66
      %s68 = ssub.s32 %s34, %s41
      %p69 = scmp.eq.s32.totalorder %s68, 0
      %s71 = sadd.s32 %s70, 1
      %s72 = scalar_select %p69, %s70, %s71
      %p75 = pneg %p69
      %p76 = scmp.eq.s32.totalorder %s34, 1
      %p77 = por %p75, %p76
      %p78 = scmp.ne.s32.totalorder %s70, %s73
      %p79 = scmp.eq.s32.totalorder %s34, 0
      %p80 = por %p78, %p79
      %p81 = scmp.ne.s32.totalorder %s70, %s73
      %p82 = scmp.eq.s32.totalorder %s39, 1
      %p83 = por %p81, %p82
      %p84 = scmp.ne.s32.totalorder %s73, %s74
      %p85 = scmp.eq.s32.totalorder %s39, 0
      %p86 = por %p84, %p85
      %p87 = scmp.ne.s32.totalorder %s73, %s74
      %p88 = scmp.eq.s32.totalorder %s40, 1
      %p89 = por %p87, %p88
      %p91 = scmp.ne.s32.totalorder %s74, %s90
      %p92 = scmp.eq.s32.totalorder %s40, 0
      %p93 = por %p91, %p92
      %s95 = sadd.s32 %s94, 1
      %p98 = scmp.eq.s32.totalorder %s34, 1
      %p99 = scmp.ne.s32.totalorder %s94, %s96
      %p100 = scmp.eq.s32.totalorder %s34, 0
      %p101 = por %p99, %p100
      %p102 = scmp.ne.s32.totalorder %s94, %s96
      %p103 = scmp.eq.s32.totalorder %s39, 1
      %p104 = por %p102, %p103
      %p105 = scmp.ne.s32.totalorder %s96, %s97
      %p106 = scmp.eq.s32.totalorder %s39, 0
      %p107 = por %p105, %p106
      %p108 = scmp.ne.s32.totalorder %s96, %s97
      %p109 = scmp.eq.s32.totalorder %s40, 1
      %p110 = por %p108, %p109
      %p112 = scmp.ne.s32.totalorder %s97, %s111
      %p113 = scmp.eq.s32.totalorder %s40, 0
      %p114 = por %p112, %p113
      %s116 = sadd.s32 %s115, 1
      %p119 = scmp.eq.s32.totalorder %s34, 1
      %p120 = scmp.ne.s32.totalorder %s115, %s117
      %p121 = scmp.eq.s32.totalorder %s34, 0
      %p122 = por %p120, %p121
      %p123 = scmp.ne.s32.totalorder %s115, %s117
      %p124 = scmp.eq.s32.totalorder %s39, 1
      %p125 = por %p123, %p124
      %p126 = scmp.ne.s32.totalorder %s117, %s118
      %p127 = scmp.eq.s32.totalorder %s39, 0
      %p128 = por %p126, %p127
      %p129 = scmp.ne.s32.totalorder %s117, %s118
      %p130 = scmp.eq.s32.totalorder %s40, 1
      %p131 = por %p129, %p130
      %p133 = scmp.ne.s32.totalorder %s118, %s132
      %p134 = scmp.eq.s32.totalorder %s40, 0
      %p135 = por %p133, %p134
      %s137 = sadd.s32 %s136, 1
      %p140 = scmp.eq.s32.totalorder %s34, 1
      %p141 = scmp.ne.s32.totalorder %s136, %s138
      %p142 = scmp.eq.s32.totalorder %s34, 0
      %p143 = por %p141, %p142
      %p144 = scmp.ne.s32.totalorder %s136, %s138
      %p145 = scmp.eq.s32.totalorder %s39, 1
      %p146 = por %p144, %p145
      %p147 = scmp.ne.s32.totalorder %s138, %s139
      %p148 = scmp.eq.s32.totalorder %s39, 0
      %p149 = por %p147, %p148
      %p150 = scmp.ne.s32.totalorder %s138, %s139
      %p151 = scmp.eq.s32.totalorder %s40, 1
      %p152 = por %p150, %p151
      %p154 = scmp.ne.s32.totalorder %s139, %s153
      %p155 = scmp.eq.s32.totalorder %s40, 0
      %p156 = por %p154, %p155
      %s158 = sadd.s32 %s157, 1
      %p161 = scmp.eq.s32.totalorder %s34, 1
      %p162 = scmp.ne.s32.totalorder %s157, %s159
      %p163 = scmp.eq.s32.totalorder %s34, 0
      %p164 = por %p162, %p163
      %p165 = scmp.ne.s32.totalorder %s157, %s159
      %p166 = scmp.eq.s32.totalorder %s39, 1
      %p167 = por %p165, %p166
      %p168 = scmp.ne.s32.totalorder %s159, %s160
      %p169 = scmp.eq.s32.totalorder %s39, 0
      %p170 = por %p168, %p169
      %p171 = scmp.ne.s32.totalorder %s159, %s160
      %p172 = scmp.eq.s32.totalorder %s40, 1
      %p173 = por %p171, %p172
      %p175 = scmp.ne.s32.totalorder %s160, %s174
      %p176 = scmp.eq.s32.totalorder %s40, 0
      %p177 = por %p175, %p176
      %s179 = sadd.s32 %s178, 1
      %p182 = scmp.eq.s32.totalorder %s34, 1
      %p183 = scmp.ne.s32.totalorder %s178, %s180
      %p184 = scmp.eq.s32.totalorder %s34, 0
      %p185 = por %p183, %p184
      %p186 = scmp.ne.s32.totalorder %s178, %s180
      %p187 = scmp.eq.s32.totalorder %s39, 1
      %p188 = por %p186, %p187
      %p189 = scmp.ne.s32.totalorder %s180, %s181
      %p190 = scmp.eq.s32.totalorder %s39, 0
      %p191 = por %p189, %p190
      %p192 = scmp.ne.s32.totalorder %s180, %s181
      %p193 = scmp.eq.s32.totalorder %s40, 1
      %p194 = por %p192, %p193
      %p196 = scmp.ne.s32.totalorder %s181, %s195
      %p197 = scmp.eq.s32.totalorder %s40, 0
      %p198 = por %p196, %p197
      %s200 = sadd.s32 %s199, 1
      %p203 = scmp.eq.s32.totalorder %s34, 1
      %p204 = scmp.ne.s32.totalorder %s199, %s201
      %p205 = scmp.eq.s32.totalorder %s34, 0
      %p206 = por %p204, %p205
      %p207 = scmp.ne.s32.totalorder %s199, %s201
      %p208 = scmp.eq.s32.totalorder %s39, 1
      %p209 = por %p207, %p208
      %p210 = scmp.ne.s32.totalorder %s201, %s202
      %p211 = scmp.eq.s32.totalorder %s39, 0
      %p212 = por %p210, %p211
      %p213 = scmp.ne.s32.totalorder %s201, %s202
      %p214 = scmp.eq.s32.totalorder %s40, 1
      %p215 = por %p213, %p214
      %p217 = scmp.ne.s32.totalorder %s202, %s216
      %p218 = scmp.eq.s32.totalorder %s40, 0
      %p219 = por %p217, %p218
      %s221 = sadd.s32 %s220, 1
      %p224 = scmp.eq.s32.totalorder %s34, 1
      %p225 = scmp.ne.s32.totalorder %s220, %s222
      %p226 = scmp.eq.s32.totalorder %s34, 0
      %p227 = por %p225, %p226
      %p228 = scmp.ne.s32.totalorder %s220, %s222
      %p229 = scmp.eq.s32.totalorder %s39, 1
      %p230 = por %p228, %p229
      %p231 = scmp.ne.s32.totalorder %s222, %s223
      %p232 = scmp.eq.s32.totalorder %s39, 0
      %p233 = por %p231, %p232
      %p234 = scmp.ne.s32.totalorder %s222, %s223
      %p235 = scmp.eq.s32.totalorder %s40, 1
      %p236 = por %p234, %p235
      %p238 = scmp.ne.s32.totalorder %s223, %s237
      %p239 = scmp.eq.s32.totalorder %s40, 0
      %p240 = por %p238, %p239
      %s242 = sadd.s32 %s241, 1
      %p245 = scmp.eq.s32.totalorder %s34, 1
      %p246 = scmp.ne.s32.totalorder %s241, %s243
      %p247 = scmp.eq.s32.totalorder %s34, 0
      %p248 = por %p246, %p247
      %p249 = scmp.ne.s32.totalorder %s241, %s243
      %p250 = scmp.eq.s32.totalorder %s39, 1
      %p251 = por %p249, %p250
      %p252 = scmp.ne.s32.totalorder %s243, %s244
      %p253 = scmp.eq.s32.totalorder %s39, 0
      %p254 = por %p252, %p253
      %p255 = scmp.ne.s32.totalorder %s243, %s244
      %p256 = scmp.eq.s32.totalorder %s40, 1
      %p257 = por %p255, %p256
      %p259 = scmp.ne.s32.totalorder %s244, %s258
      %p260 = scmp.eq.s32.totalorder %s40, 0
      %p261 = por %p259, %p260
      %s263 = sadd.s32 %s262, 1
      %p266 = scmp.eq.s32.totalorder %s34, 1
      %p267 = scmp.ne.s32.totalorder %s262, %s264
      %p268 = scmp.eq.s32.totalorder %s34, 0
      %p269 = por %p267, %p268
      %p270 = scmp.ne.s32.totalorder %s262, %s264
      %p271 = scmp.eq.s32.totalorder %s39, 1
      %p272 = por %p270, %p271
      %p273 = scmp.ne.s32.totalorder %s264, %s265
      %p274 = scmp.eq.s32.totalorder %s39, 0
      %p275 = por %p273, %p274
      %p276 = scmp.ne.s32.totalorder %s264, %s265
      %p277 = scmp.eq.s32.totalorder %s40, 1
      %p278 = por %p276, %p277
      %p280 = scmp.ne.s32.totalorder %s265, %s279
      %p281 = scmp.eq.s32.totalorder %s40, 0
      %p282 = por %p280, %p281
      %s284 = sadd.s32 %s283, 1
      %p287 = scmp.eq.s32.totalorder %s34, 1
      %p288 = scmp.ne.s32.totalorder %s283, %s285
      %p289 = scmp.eq.s32.totalorder %s34, 0
      %p290 = por %p288, %p289
      %p291 = scmp.ne.s32.totalorder %s283, %s285
      %p292 = scmp.eq.s32.totalorder %s39, 1
      %p293 = por %p291, %p292
      %p294 = scmp.ne.s32.totalorder %s285, %s286
      %p295 = scmp.eq.s32.totalorder %s39, 0
      %p296 = por %p294, %p295
      %p297 = scmp.ne.s32.totalorder %s285, %s286
      %p298 = scmp.eq.s32.totalorder %s40, 1
      %p299 = por %p297, %p298
      %p301 = scmp.ne.s32.totalorder %s286, %s300
      %p302 = scmp.eq.s32.totalorder %s40, 0
      %p303 = por %p301, %p302
      %s305 = sadd.s32 %s304, 1
      %p308 = scmp.eq.s32.totalorder %s34, 1
      %p309 = scmp.ne.s32.totalorder %s304, %s306
      %p310 = scmp.eq.s32.totalorder %s34, 0
      %p311 = por %p309, %p310
      %p312 = scmp.ne.s32.totalorder %s304, %s306
      %p313 = scmp.eq.s32.totalorder %s39, 1
      %p314 = por %p312, %p313
      %p315 = scmp.ne.s32.totalorder %s306, %s307
      %p316 = scmp.eq.s32.totalorder %s39, 0
      %p317 = por %p315, %p316
      %p318 = scmp.ne.s32.totalorder %s306, %s307
      %p319 = scmp.eq.s32.totalorder %s40, 1
      %p320 = por %p318, %p319
      %p322 = scmp.ne.s32.totalorder %s307, %s321
      %p323 = scmp.eq.s32.totalorder %s40, 0
      %p324 = por %p322, %p323
      %s326 = sadd.s32 %s325, 1
      %p329 = scmp.eq.s32.totalorder %s34, 1
      %p330 = scmp.ne.s32.totalorder %s325, %s327
      %p331 = scmp.eq.s32.totalorder %s34, 0
      %p332 = por %p330, %p331
      %p333 = scmp.ne.s32.totalorder %s325, %s327
      %p334 = scmp.eq.s32.totalorder %s39, 1
      %p335 = por %p333, %p334
      %p336 = scmp.ne.s32.totalorder %s327, %s328
      %p337 = scmp.eq.s32.totalorder %s39, 0
      %p338 = por %p336, %p337
      %p339 = scmp.ne.s32.totalorder %s327, %s328
      %p340 = scmp.eq.s32.totalorder %s40, 1
      %p341 = por %p339, %p340
      %p343 = scmp.ne.s32.totalorder %s328, %s342
      %p344 = scmp.eq.s32.totalorder %s40, 0
      %p345 = por %p343, %p344
      %s347 = sadd.s32 %s346, 1
      %p350 = scmp.eq.s32.totalorder %s34, 1
      %p351 = scmp.ne.s32.totalorder %s346, %s348
      %p352 = scmp.eq.s32.totalorder %s34, 0
      %p353 = por %p351, %p352
      %p354 = scmp.ne.s32.totalorder %s346, %s348
      %p355 = scmp.eq.s32.totalorder %s39, 1
      %p356 = por %p354, %p355
      %p357 = scmp.ne.s32.totalorder %s348, %s349
      %p358 = scmp.eq.s32.totalorder %s39, 0
      %p359 = por %p357, %p358
      %p360 = scmp.ne.s32.totalorder %s348, %s349
      %p361 = scmp.eq.s32.totalorder %s40, 1
      %p362 = por %p360, %p361
      %p364 = scmp.ne.s32.totalorder %s349, %s363
      %p365 = scmp.eq.s32.totalorder %s40, 0
      %p366 = por %p364, %p365
      %s368 = sadd.s32 %s367, 1
      %p371 = scmp.eq.s32.totalorder %s34, 1
      %p372 = scmp.ne.s32.totalorder %s367, %s369
      %p373 = scmp.eq.s32.totalorder %s34, 0
      %p374 = por %p372, %p373
      %p375 = scmp.ne.s32.totalorder %s367, %s369
      %p376 = scmp.eq.s32.totalorder %s39, 1
      %p377 = por %p375, %p376
      %p378 = scmp.ne.s32.totalorder %s369, %s370
      %p379 = scmp.eq.s32.totalorder %s39, 0
      %p380 = por %p378, %p379
      %p381 = scmp.ne.s32.totalorder %s369, %s370
      %p382 = scmp.eq.s32.totalorder %s40, 1
      %p383 = por %p381, %p382
      %p385 = scmp.ne.s32.totalorder %s370, %s384
      %p386 = scmp.eq.s32.totalorder %s40, 0
      %p387 = por %p385, %p386
      %s388 = ssub.s32 %s34, %s41
      %p389 = scmp.eq.s32.totalorder %s388, 0
      %s391 = sadd.s32 %s390, 1
      %s392 = scalar_select %p389, %s390, %s391
      %p395 = pneg %p389
      %p396 = scmp.eq.s32.totalorder %s34, 1
      %p397 = por %p395, %p396
      %p398 = scmp.ne.s32.totalorder %s390, %s393
      %p399 = scmp.eq.s32.totalorder %s34, 0
      %p400 = por %p398, %p399
      %p401 = scmp.ne.s32.totalorder %s390, %s393
      %p402 = scmp.eq.s32.totalorder %s39, 1
      %p403 = por %p401, %p402
      %p404 = scmp.ne.s32.totalorder %s393, %s394
      %p405 = scmp.eq.s32.totalorder %s39, 0
      %p406 = por %p404, %p405
      %p407 = scmp.ne.s32.totalorder %s393, %s394
      %p408 = scmp.eq.s32.totalorder %s40, 1
      %p409 = por %p407, %p408
      %p411 = scmp.ne.s32.totalorder %s394, %s410
      %p412 = scmp.eq.s32.totalorder %s40, 0
      %p413 = por %p411, %p412
      %p414 = scmp.le.s32.totalorder 1, %s34
      %p415 = scmp.lt.s32.totalorder %s34, 3
      %p416 = pnand %p414, %p415
      %p417 = pneg %p416
      // Predicated region
      $region9: #{speaker_encoder_forward.1} parent=5 // pred_check
        _
      $region10: #{speaker_encoder_forward.1} parent=5 // pred_check_branch
        %419 = sbr.rel (%p416) target = $region12
      $region11: #{speaker_encoder_forward.1} parent=5 // pred_region
        %s420 = ssub.s32 %s34, 1
        // Predicated region
        $region13: #{speaker_encoder_forward.1} parent=11 // pred_check
          %p421 = pneg %p107
        $region14: #{speaker_encoder_forward.1} parent=11 // pred_check_branch
          %423 = sbr.rel (%p421) target = $region16
        $region15: #{speaker_encoder_forward.1} parent=11 // pred_region
          _
        $region16: #{speaker_encoder_forward.1} parent=11 // pred_fallthru
          _
        // Predicated region
        $region17: #{speaker_encoder_forward.1} parent=11 // pred_check
          %p424 = pneg %p128
        $region18: #{speaker_encoder_forward.1} parent=11 // pred_check_branch
          %426 = sbr.rel (%p424) target = $region20
        $region19: #{speaker_encoder_forward.1} parent=11 // pred_region
          %s428 = ssub.s32 16, 16
          %429 = vsyncadd [#allocation6], %s428
          %s431 = sshll.u32 [#allocation5], 4
          %s432 = int_to_ptr.vmem [resolvable:$true] %s431
          %434 = dma.hbm_to_vmem [thread:$0]  %s3, 16, %s432, [#allocation6]
        $region20: #{speaker_encoder_forward.1} parent=11 // pred_fallthru
          _
        // Predicated region
        $region21: #{speaker_encoder_forward.1} parent=11 // pred_check
          %p435 = pneg %p149
        $region22: #{speaker_encoder_forward.1} parent=11 // pred_check_branch
          %437 = sbr.rel (%p435) target = $region24
        $region23: #{speaker_encoder_forward.1} parent=11 // pred_region
          %s439 = ssub.s32 768, 768
          %440 = vsyncadd [#allocation6], %s439
          %s441 = sshll.u32 [#allocation7], 4
          %s442 = int_to_ptr.vmem [resolvable:$true] %s441
          %447 = dma.hbm_to_vmem [thread:$0]  %s4, 768, %s442, [#allocation6], 64, 64, 4
        $region24: #{speaker_encoder_forward.1} parent=11 // pred_fallthru
          _
        // Predicated region
        $region25: #{speaker_encoder_forward.1} parent=11 // pred_check
          %p448 = pneg %p170
        $region26: #{speaker_encoder_forward.1} parent=11 // pred_check_branch
          %450 = sbr.rel (%p448) target = $region28
        $region27: #{speaker_encoder_forward.1} parent=11 // pred_region
          %s452 = ssub.s32 16, 16
          %453 = vsyncadd [#allocation9], %s452
          %s455 = sshll.u32 [#allocation8], 4
          %s456 = int_to_ptr.vmem [resolvable:$true] %s455
          %458 = dma.hbm_to_vmem [thread:$0]  %s5, 16, %s456, [#allocation9]
        $region28: #{speaker_encoder_forward.1} parent=11 // pred_fallthru
          _
        // Predicated region
        $region29: #{speaker_encoder_forward.1} parent=11 // pred_check
          %p459 = pneg %p191
        $region30: #{speaker_encoder_forward.1} parent=11 // pred_check_branch
          %461 = sbr.rel (%p459) target = $region32
        $region31: #{speaker_encoder_forward.1} parent=11 // pred_region
          %s463 = ssub.s32 1536, 1536
          %464 = vsyncadd [#allocation9], %s463
          %s465 = sshll.u32 [#allocation10], 4
          %s466 = int_to_ptr.vmem [resolvable:$true] %s465
          %471 = dma.hbm_to_vmem [thread:$0]  %s6, 1536, %s466, [#allocation9], 64, 64, 4
        $region32: #{speaker_encoder_forward.1} parent=11 // pred_fallthru
          _
        // Predicated region
        $region33: #{speaker_encoder_forward.1} parent=11 // pred_check
          %p472 = pneg %p212
        $region34: #{speaker_encoder_forward.1} parent=11 // pred_check_branch
          %474 = sbr.rel (%p472) target = $region36
        $region35: #{speaker_encoder_forward.1} parent=11 // pred_region
          %s476 = ssub.s32 16, 16
          %477 = vsyncadd [#allocation12], %s476
          %s479 = sshll.u32 [#allocation11], 4
          %s480 = int_to_ptr.vmem [resolvable:$true] %s479
          %482 = dma.hbm_to_vmem [thread:$0]  %s7, 16, %s480, [#allocation12]
        $region36: #{speaker_encoder_forward.1} parent=11 // pred_fallthru
          _
        // Predicated region
        $region37: #{speaker_encoder_forward.1} parent=11 // pred_check
          %p483 = pneg %p233
        $region38: #{speaker_encoder_forward.1} parent=11 // pred_check_branch
          %485 = sbr.rel (%p483) target = $region40
        $region39: #{speaker_encoder_forward.1} parent=11 // pred_region
          %s487 = ssub.s32 6144, 6144
          %488 = vsyncadd [#allocation12], %s487
          %s489 = sshll.u32 [#allocation13], 4
          %s490 = int_to_ptr.vmem [resolvable:$true] %s489
          %495 = dma.hbm_to_vmem [thread:$0]  %s8, 6144, %s490, [#allocation12], 128, 128, 8
        $region40: #{speaker_encoder_forward.1} parent=11 // pred_fallthru
          _
        // Predicated region
        $region41: #{speaker_encoder_forward.1} parent=11 // pred_check
          %p496 = pneg %p254
        $region42: #{speaker_encoder_forward.1} parent=11 // pred_check_branch
          %498 = sbr.rel (%p496) target = $region44
        $region43: #{speaker_encoder_forward.1} parent=11 // pred_region
          %s500 = ssub.s32 32, 32
          %501 = vsyncadd [#allocation15], %s500
          %s503 = sshll.u32 [#allocation14], 4
          %s504 = int_to_ptr.vmem [resolvable:$true] %s503
          %506 = dma.hbm_to_vmem [thread:$0]  %s9, 32, %s504, [#allocation15]
        $region44: #{speaker_encoder_forward.1} parent=11 // pred_fallthru
          _
        // Predicated region
        $region45: #{speaker_encoder_forward.1} parent=11 // pred_check
          %p507 = pneg %p275
        $region46: #{speaker_encoder_forward.1} parent=11 // pred_check_branch
          %509 = sbr.rel (%p507) target = $region48
        $region47: #{speaker_encoder_forward.1} parent=11 // pred_region
          %s511 = ssub.s32 24576, 24576
          %512 = vsyncadd [#allocation15], %s511
          %s513 = sshll.u32 [#allocation16], 4
          %s514 = int_to_ptr.vmem [resolvable:$true] %s513
          %519 = dma.hbm_to_vmem [thread:$0]  %s10, 24576, %s514, [#allocation15], 256, 256, 16
        $region48: #{speaker_encoder_forward.1} parent=11 // pred_fallthru
          _
        // Predicated region
        $region49: #{speaker_encoder_forward.1} parent=11 // pred_check
          %p520 = pneg %p296
        $region50: #{speaker_encoder_forward.1} parent=11 // pred_check_branch
          %522 = sbr.rel (%p520) target = $region52
        $region51: #{speaker_encoder_forward.1} parent=11 // pred_region
          %s524 = ssub.s32 64, 64
          %525 = vsyncadd [#allocation18], %s524
          %s527 = sshll.u32 [#allocation17], 4
          %s528 = int_to_ptr.vmem [resolvable:$true] %s527
          %530 = dma.hbm_to_vmem [thread:$0]  %s11, 64, %s528, [#allocation18]
        $region52: #{speaker_encoder_forward.1} parent=11 // pred_fallthru
          _
        // Predicated region
        $region53: #{speaker_encoder_forward.1} parent=11 // pred_check
          %p531 = pneg %p317
        $region54: #{speaker_encoder_forward.1} parent=11 // pred_check_branch
          %533 = sbr.rel (%p531) target = $region56
        $region55: #{speaker_encoder_forward.1} parent=11 // pred_region
          %s535 = ssub.s32 49152, 49152
          %536 = vsyncadd [#allocation18], %s535
          %s537 = sshll.u32 [#allocation19], 4
          %s538 = int_to_ptr.vmem [resolvable:$true] %s537
          %543 = dma.hbm_to_vmem [thread:$0]  %s12, 49152, %s538, [#allocation18], 256, 256, 16
        $region56: #{speaker_encoder_forward.1} parent=11 // pred_fallthru
          _
        // Predicated region
        $region57: #{speaker_encoder_forward.1} parent=11 // pred_check
          %p544 = pneg %p338
        $region58: #{speaker_encoder_forward.1} parent=11 // pred_check_branch
          %546 = sbr.rel (%p544) target = $region60
        $region59: #{speaker_encoder_forward.1} parent=11 // pred_region
          %s548 = ssub.s32 64, 64
          %549 = vsyncadd [#allocation21], %s548
          %s551 = sshll.u32 [#allocation20], 4
          %s552 = int_to_ptr.vmem [resolvable:$true] %s551
          %554 = dma.hbm_to_vmem [thread:$0]  %s13, 64, %s552, [#allocation21]
        $region60: #{speaker_encoder_forward.1} parent=11 // pred_fallthru
          _
        // Predicated region
        $region61: #{speaker_encoder_forward.1} parent=11 // pred_check
          %p555 = pneg %p359
        $region62: #{speaker_encoder_forward.1} parent=11 // pred_check_branch
          %557 = sbr.rel (%p555) target = $region64
        $region63: #{speaker_encoder_forward.1} parent=11 // pred_region
          _
        $region64: #{speaker_encoder_forward.1} parent=11 // pred_fallthru
          _
        // Predicated region
        $region65: #{speaker_encoder_forward.1} parent=11 // pred_check
          %p558 = pneg %p380
        $region66: #{speaker_encoder_forward.1} parent=11 // pred_check_branch
          %560 = sbr.rel (%p558) target = $region68
        $region67: #{speaker_encoder_forward.1} parent=11 // pred_region
          %s562 = ssub.s32 16, 16
          %563 = vsyncadd [#allocation21], %s562
          %s565 = sshll.u32 [#allocation22], 4
          %s566 = int_to_ptr.vmem [resolvable:$true] %s565
          %568 = dma.hbm_to_vmem [thread:$0]  %s15, 16, %s566, [#allocation21]
        $region68: #{speaker_encoder_forward.1} parent=11 // pred_fallthru
          _
      $region12: #{speaker_encoder_forward.1} parent=5 // pred_fallthru
        _
      %p569 = scmp.lt.s32.totalorder %s34, 2
      // Predicated region
      $region69: #{speaker_encoder_forward.1} parent=5 // pred_check
        %p570 = pneg %p569
      $region70: #{speaker_encoder_forward.1} parent=5 // pred_check_branch
        %572 = sbr.rel (%p570) target = $region72
      $region71: #{speaker_encoder_forward.1} parent=5 // pred_region
        // Predicated region
        $region73: #{speaker_encoder_forward.1} parent=71 // pred_check
          %p573 = pneg %p54
        $region74: #{speaker_encoder_forward.1} parent=71 // pred_check_branch
          %575 = sbr.rel (%p573) target = $region76
        $region75: #{speaker_encoder_forward.1} parent=71 // pred_region
          %p576 = scmp.lt.s32.totalorder %s34, 1
          %s577 = scalar_select %p576, %s34, 1
          %s578 = smul.addr %s577, 8
          %s579 = smul.addr %s578, 4
          %s580 = scalar_lea.vmem %s0, %s579
        $region76: #{speaker_encoder_forward.1} parent=71 // pred_fallthru
          _
        // Predicated region
        $region77: #{speaker_encoder_forward.1} parent=71 // pred_check
          %p581 = pneg %p80
        $region78: #{speaker_encoder_forward.1} parent=71 // pred_check_branch
          %583 = sbr.rel (%p581) target = $region80
        $region79: #{speaker_encoder_forward.1} parent=71 // pred_region
          %s584 = sand.u32 %s70, 1
          %s585 = scalar_lea.sflag [#allocation3], %s584
          %s586 = sand.u32 %s70, 1
          %s587 = scalar_lea.vmem [#allocation2], %s586
          %s589 = ssub.s32 16, 16
          %590 = vsyncadd %s585, %s589
          %s591 = smul.addr %s34, 16
          %s592 = scalar_lea.hbm %s1, %s591
          %s594 = sshll.u32 %s587, 4
          %s595 = int_to_ptr.vmem [resolvable:$true] %s594
          %597 = dma.hbm_to_vmem [thread:$0]  %s592, 16, %s595, %s585
        $region80: #{speaker_encoder_forward.1} parent=71 // pred_fallthru
          _
      $region72: #{speaker_encoder_forward.1} parent=5 // pred_fallthru
        _
      %p598 = scmp.le.s32.totalorder 1, %s34
      %p599 = scmp.lt.s32.totalorder %s34, 3
      %p600 = pnand %p598, %p599
      %p601 = pneg %p600
      // Predicated region
      $region81: #{speaker_encoder_forward.1} parent=5 // pred_check
        _
      $region82: #{speaker_encoder_forward.1} parent=5 // pred_check_branch
        %603 = sbr.rel (%p600) target = $region84
      $region83: #{speaker_encoder_forward.1} parent=5 // pred_region
        %s604 = ssub.s32 %s34, 1
        %s605 = sand.u32 %s73, 1
        %s606 = scalar_lea.sflag [#allocation3], %s605
        %s607 = sand.u32 %s73, 1
        %s608 = scalar_lea.vmem [#allocation2], %s607
        // Predicated region
        $region85: #{speaker_encoder_forward.1} parent=83 // pred_check
          %p609 = pneg %p86
        $region86: #{speaker_encoder_forward.1} parent=83 // pred_check_branch
          %611 = sbr.rel (%p609) target = $region88
        $region87: #{speaker_encoder_forward.1} parent=83 // pred_region
          %612 = dma.done %s606, 16
        $region88: #{speaker_encoder_forward.1} parent=83 // pred_fallthru
          _
        // Predicated region
        $region89: #{speaker_encoder_forward.1} parent=83 // pred_check
          %p613 = pneg %p128
        $region90: #{speaker_encoder_forward.1} parent=83 // pred_check_branch
          %615 = sbr.rel (%p613) target = $region92
        $region91: #{speaker_encoder_forward.1} parent=83 // pred_region
          %616 = dma.done [#allocation6], 16
        $region92: #{speaker_encoder_forward.1} parent=83 // pred_fallthru
          _
        // Predicated region
        $region93: #{speaker_encoder_forward.1} parent=83 // pred_check
          %p617 = pneg %p149
        $region94: #{speaker_encoder_forward.1} parent=83 // pred_check_branch
          %619 = sbr.rel (%p617) target = $region96
        $region95: #{speaker_encoder_forward.1} parent=83 // pred_region
          %620 = dma.done [#allocation6], 768
        $region96: #{speaker_encoder_forward.1} parent=83 // pred_fallthru
          _
        // Predicated region
        $region97: #{speaker_encoder_forward.1} parent=83 // pred_check
          %p621 = pneg %p170
        $region98: #{speaker_encoder_forward.1} parent=83 // pred_check_branch
          %623 = sbr.rel (%p621) target = $region100
        $region99: #{speaker_encoder_forward.1} parent=83 // pred_region
          %624 = dma.done [#allocation9], 16
        $region100: #{speaker_encoder_forward.1} parent=83 // pred_fallthru
          _
        // Predicated region
        $region101: #{speaker_encoder_forward.1} parent=83 // pred_check
          %p625 = pneg %p191
        $region102: #{speaker_encoder_forward.1} parent=83 // pred_check_branch
          %627 = sbr.rel (%p625) target = $region104
        $region103: #{speaker_encoder_forward.1} parent=83 // pred_region
          %628 = dma.done [#allocation9], 1536
        $region104: #{speaker_encoder_forward.1} parent=83 // pred_fallthru
          _
        // Predicated region
        $region105: #{speaker_encoder_forward.1} parent=83 // pred_check
          %p629 = pneg %p212
        $region106: #{speaker_encoder_forward.1} parent=83 // pred_check_branch
          %631 = sbr.rel (%p629) target = $region108
        $region107: #{speaker_encoder_forward.1} parent=83 // pred_region
          %632 = dma.done [#allocation12], 16
        $region108: #{speaker_encoder_forward.1} parent=83 // pred_fallthru
          _
        // Predicated region
        $region109: #{speaker_encoder_forward.1} parent=83 // pred_check
          %p633 = pneg %p233
        $region110: #{speaker_encoder_forward.1} parent=83 // pred_check_branch
          %635 = sbr.rel (%p633) target = $region112
        $region111: #{speaker_encoder_forward.1} parent=83 // pred_region
          %636 = dma.done [#allocation12], 6144
        $region112: #{speaker_encoder_forward.1} parent=83 // pred_fallthru
          _
        // Predicated region
        $region113: #{speaker_encoder_forward.1} parent=83 // pred_check
          %p637 = pneg %p254
        $region114: #{speaker_encoder_forward.1} parent=83 // pred_check_branch
          %639 = sbr.rel (%p637) target = $region116
        $region115: #{speaker_encoder_forward.1} parent=83 // pred_region
          %640 = dma.done [#allocation15], 32
        $region116: #{speaker_encoder_forward.1} parent=83 // pred_fallthru
          _
        // Predicated region
        $region117: #{speaker_encoder_forward.1} parent=83 // pred_check
          %p641 = pneg %p275
        $region118: #{speaker_encoder_forward.1} parent=83 // pred_check_branch
          %643 = sbr.rel (%p641) target = $region120
        $region119: #{speaker_encoder_forward.1} parent=83 // pred_region
          %644 = dma.done [#allocation15], 24576
        $region120: #{speaker_encoder_forward.1} parent=83 // pred_fallthru
          _
        // Predicated region
        $region121: #{speaker_encoder_forward.1} parent=83 // pred_check
          %p645 = pneg %p296
        $region122: #{speaker_encoder_forward.1} parent=83 // pred_check_branch
          %647 = sbr.rel (%p645) target = $region124
        $region123: #{speaker_encoder_forward.1} parent=83 // pred_region
          %648 = dma.done [#allocation18], 64
        $region124: #{speaker_encoder_forward.1} parent=83 // pred_fallthru
          _
        // Predicated region
        $region125: #{speaker_encoder_forward.1} parent=83 // pred_check
          %p649 = pneg %p317
        $region126: #{speaker_encoder_forward.1} parent=83 // pred_check_branch
          %651 = sbr.rel (%p649) target = $region128
        $region127: #{speaker_encoder_forward.1} parent=83 // pred_region
          %652 = dma.done [#allocation18], 49152
        $region128: #{speaker_encoder_forward.1} parent=83 // pred_fallthru
          _
        // Predicated region
        $region129: #{speaker_encoder_forward.1} parent=83 // pred_check
          %p653 = pneg %p338
        $region130: #{speaker_encoder_forward.1} parent=83 // pred_check_branch
          %655 = sbr.rel (%p653) target = $region132
        $region131: #{speaker_encoder_forward.1} parent=83 // pred_region
          %656 = dma.done [#allocation21], 64
        $region132: #{speaker_encoder_forward.1} parent=83 // pred_fallthru
          _
        // Predicated region
        $region133: #{speaker_encoder_forward.1} parent=83 // pred_check
          %p657 = pneg %p380
        $region134: #{speaker_encoder_forward.1} parent=83 // pred_check_branch
          %659 = sbr.rel (%p657) target = $region136
        $region135: #{speaker_encoder_forward.1} parent=83 // pred_region
          %660 = dma.done [#allocation21], 16
        $region136: #{speaker_encoder_forward.1} parent=83 // pred_fallthru
          _
        %p661 = scmp.lt.s32.totalorder %s39, 1
        %s662 = scalar_select %p661, %s39, 1
        %s663 = smul.addr %s662, 8
        %s664 = smul.addr %s663, 4
        %s665 = scalar_lea.vmem %s0, %s664
        %p666 = pneg %p60
        %p667 = pneg %p57
        %s668 = sand.u32 %s73, 1
        %s669 = scalar_lea.sflag [#allocation3], %s668
        %s670 = sand.u32 %s73, 1
        %s671 = scalar_lea.vmem [#allocation2], %s670
        %p672 = pneg %p86
        %p673 = pneg %p83
        %p674 = pneg %p107
        %p675 = pneg %p104
        %p676 = pneg %p128
        %p677 = pneg %p125
        %p678 = pneg %p149
        %p679 = pneg %p146
        %p680 = pneg %p170
        %p681 = pneg %p167
        %p682 = pneg %p191
        %p683 = pneg %p188
        %p684 = pneg %p212
        %p685 = pneg %p209
        %p686 = pneg %p233
        %p687 = pneg %p230
        %p688 = pneg %p254
        %p689 = pneg %p251
        %p690 = pneg %p275
        %p691 = pneg %p272
        %p692 = pneg %p296
        %p693 = pneg %p293
        %p694 = pneg %p317
        %p695 = pneg %p314
        %p696 = pneg %p338
        %p697 = pneg %p335
        %p698 = pneg %p359
        %p699 = pneg %p356
        %p700 = pneg %p380
        %p701 = pneg %p377
        %p702 = pneg %p406
        %p703 = pneg %p403
        %s704 = sand.u32 %s393, 1
        %s705 = scalar_lea.sflag [#allocation4], %s704
        %s706 = sand.u32 %s393, 1
        %s707 = scalar_lea.vmem [#allocation23], %s706
        %p708 = scmp.lt.s32.totalorder %s39, 1
        %s709 = scalar_select %p708, %s39, 1
        %s710 = smul.addr %s709, 8
        %s711 = smul.addr %s710, 4
        %s712 = scalar_lea.vmem %s0, %s711
        %v714 = vld [vmem:[%s712] sm:$0xf]
        %v715 = vld [vmem:[%s712 + $0x4] sm:$0xf]
        %v716 = vld [vmem:[%s712 + $0x8] sm:$0xf]
        %v717 = vld [vmem:[%s712 + $0xc] sm:$0xf]
        %v718 = vld [vmem:[%s712 + $0x10] sm:$0xf]
        %v719 = vld [vmem:[%s712 + $0x14] sm:$0xf]
        %v720 = vld [vmem:[%s712 + $0x18] sm:$0xf]
        %v721 = vld [vmem:[%s712 + $0x1c] sm:$0xf]
        %v722 = vunpack.c.l.bf16 %v714
        %v723 = vunpack.c.l.bf16 %v715
        %v724 = vunpack.c.l.bf16 %v716
        %v725 = vunpack.c.l.bf16 %v717
        %v726 = vunpack.c.l.bf16 %v718
        %v727 = vunpack.c.l.bf16 %v719
        %v728 = vunpack.c.l.bf16 %v720
        %v729 = vunpack.c.l.bf16 %v721
        %vm738 = vcmask 1040384
        %v739 = vrot.slane %v722, 7
        %v740 = vrot.slane %v723, 7
        %v741 = vsel %vm738, %v739, %v740
        %v742 = vrot.slane %v724, 7
        %v743 = vsel %vm738, %v740, %v742
        %v744 = vrot.slane %v725, 7
        %v745 = vsel %vm738, %v742, %v744
        %v746 = vrot.slane %v726, 7
        %v747 = vsel %vm738, %v744, %v746
        %v748 = vrot.slane %v727, 7
        %v749 = vsel %vm738, %v746, %v748
        %v750 = vrot.slane %v728, 7
        %v751 = vsel %vm738, %v748, %v750
        %v752 = vrot.slane %v729, 7
        %v753 = vsel %vm738, %v750, %v752
        %v762 = vsel %vm738, 0.0, %v739
        %vm763 = vcmask 1046528
        %v764 = vrot.slane %v722, 1
        %v765 = vrot.slane %v723, 1
        %v766 = vsel %vm763, %v764, %v765
        %v767 = vrot.slane %v724, 1
        %v768 = vsel %vm763, %v765, %v767
        %v769 = vrot.slane %v725, 1
        %v770 = vsel %vm763, %v767, %v769
        %v771 = vrot.slane %v726, 1
        %v772 = vsel %vm763, %v769, %v771
        %v773 = vrot.slane %v727, 1
        %v774 = vsel %vm763, %v771, %v773
        %v775 = vrot.slane %v728, 1
        %v776 = vsel %vm763, %v773, %v775
        %v777 = vrot.slane %v729, 1
        %v778 = vsel %vm763, %v775, %v777
        %v787 = vsel %vm763, %v777, 0.0
        %v788 = vpack.c.bf16 %v741, %v762
        %v789 = vpack.c.bf16 %v745, %v743
        %v790 = vpack.c.bf16 %v749, %v747
        %v791 = vpack.c.bf16 %v753, %v751
        %v792 = vld [vmem:[%s2] sm:$0xf]
        %v793 = vld [vmem:[%s2 + $0x4] sm:$0xf]
        %v794 = vld [vmem:[%s2 + $0x8] sm:$0xf]
        %v795 = vld [vmem:[%s2 + $0xc] sm:$0xf]
        %v796 = vld [vmem:[%s2 + $0x10] sm:$0xf]
        %v797 = vld [vmem:[%s2 + $0x14] sm:$0xf]
        %v798 = vld [vmem:[%s2 + $0x18] sm:$0xf]
        %v799 = vld [vmem:[%s2 + $0x1c] sm:$0xf]
        %v800 = vld [vmem:[%s2 + $0x20] sm:$0xf]
        %v801 = vld [vmem:[%s2 + $0x24] sm:$0xf]
        %s802 = scalar_lea.vmem %s2, 40
        %v803 = vld [vmem:[%s802] sm:$0xf]
        %v804 = vld [vmem:[%s802 + $0x4] sm:$0xf]
        %v805 = vld [vmem:[%s802 + $0x8] sm:$0xf]
        %v806 = vld [vmem:[%s802 + $0xc] sm:$0xf]
        %v807 = vld [vmem:[%s802 + $0x10] sm:$0xf]
        %v808 = vld [vmem:[%s802 + $0x14] sm:$0xf]
        %v809 = vld [vmem:[%s802 + $0x18] sm:$0xf]
        %v810 = vld [vmem:[%s802 + $0x1c] sm:$0xf]
        %v811 = vld [vmem:[%s802 + $0x20] sm:$0xf]
        %v812 = vld [vmem:[%s802 + $0x24] sm:$0xf]
        %v821 = vunpack.c.l.b16 %v714
        %v822 = vunpack.c.l.b16 %v715
        %v823 = vunpack.c.l.b16 %v716
        %v824 = vunpack.c.l.b16 %v717
        %v825 = vunpack.c.l.b16 %v718
        %v826 = vunpack.c.l.b16 %v719
        %v827 = vunpack.c.l.b16 %v720
        %v828 = vunpack.c.l.b16 %v721
        %v829 = vpack.c.b16 %v822, %v821
        %v830 = vpack.c.b16 %v824, %v823
        %v831 = vpack.c.b16 %v826, %v825
        %v832 = vpack.c.b16 %v828, %v827
        %v843 = vunpack.c.l.b16 %v803
        %v844 = vunpack.c.l.b16 %v804
        %v845 = vunpack.c.l.b16 %v805
        %v846 = vunpack.c.l.b16 %v806
        %v847 = vunpack.c.l.b16 %v807
        %v848 = vunpack.c.l.b16 %v808
        %v849 = vunpack.c.l.b16 %v809
        %v850 = vunpack.c.l.b16 %v810
        %v851 = vunpack.c.l.b16 %v811
        %v852 = vunpack.c.l.b16 %v812
        %v853 = vpack.c.b16 %v844, %v843
        %v854 = vpack.c.b16 %v846, %v845
        %v855 = vpack.c.b16 %v848, %v847
        %v856 = vpack.c.b16 %v850, %v849
        %v857 = vpack.c.b16 %v852, %v851
        %vm863 = vcmask 654336
        %v865 = vsel %vm863, %v829, 0
        %v868 = vsel %vm863, %v830, 0
        %v871 = vsel %vm863, %v831, 0
        %v874 = vsel %vm863, %v832, 0
        %876 = vmatprep.subr.bf16.mxu0 0
        %877 = vmatpush1.bf16.msra.mxu0 %v853
        %878 = vmatprep.subr.bf16.mxu0 0
        %879 = vmatpush1.bf16.msra.mxu0 %v854
        %880 = vmatprep.subr.bf16.mxu0 0
        %881 = vmatpush1.bf16.msra.mxu0 %v855
        %882 = vmatprep.subr.bf16.mxu0 0
        %883 = vmatpush1.bf16.msra.mxu0 %v856
        %884 = vmatprep.subr.bf16.mxu0 0
        %885 = vmatpush1.bf16.msra.mxu0 %v857
        %886 = vmatprep.subr.bf16.mxu0 0
        %887 = vmatpush1.bf16.msra.mxu0 0
        %888 = vmatprep.subr.bf16.mxu0 0
        %889 = vmatpush1.bf16.msra.mxu0 0
        %890 = vmatprep.subr.bf16.mxu0 0
        %891 = vmatpush1.bf16.msra.mxu0 0
        %892 = vmatprep.subr.bf16.mxu0 0
        %893 = vmatpush1.bf16.msra.mxu0 0
        %894 = vmatprep.subr.bf16.mxu0 0
        %895 = vmatpush1.bf16.msra.mxu0 0
        %896 = vmatprep.subr.bf16.mxu0 0
        %897 = vmatpush1.bf16.msra.mxu0 0
        %898 = vmatprep.subr.bf16.mxu0 0
        %899 = vmatpush1.bf16.msra.mxu0 0
        %900 = vmatprep.subr.bf16.mxu0 0
        %901 = vmatpush1.bf16.msra.mxu0 0
        %902 = vmatprep.subr.bf16.mxu0 0
        %903 = vmatpush1.bf16.msra.mxu0 0
        %904 = vmatprep.subr.bf16.mxu0 0
        %905 = vmatpush1.bf16.msra.mxu0 0
        %906 = vmatprep.subr.bf16.mxu0 0
        %907 = vmatpush1.bf16.msra.mxu0 0
        %908 = vmatprep.mubr.bf16.mxu0 0
        %909 = vmatmul.mubr.bf16.gmra.mrb[0].mxu0 %v865
        %v910 = vpop.f32.mrb[0].mxu0
        %v911 = vadd.f32 0.0, %v910
        %v912 = vpop.f32.mrb[0].mxu0
        %v913 = vpop.f32.mrb[0].mxu0
        %v914 = vadd.f32 0.0, %v913
        %v915 = vpop.f32.mrb[0].mxu0
        %916 = vmatprep.mubr.bf16.mxu0 0
        %917 = vmatmul.mubr.bf16.gmra.mrb[0].mxu0 %v868
        %v918 = vpop.f32.mrb[0].mxu0
        %v919 = vadd.f32 0.0, %v918
        %v920 = vpop.f32.mrb[0].mxu0
        %v921 = vpop.f32.mrb[0].mxu0
        %v922 = vadd.f32 0.0, %v921
        %v923 = vpop.f32.mrb[0].mxu0
        %924 = vmatprep.mubr.bf16.mxu0 0
        %925 = vmatmul.mubr.bf16.gmra.mrb[0].mxu0 %v871
        %v926 = vpop.f32.mrb[0].mxu0
        %v927 = vadd.f32 0.0, %v926
        %v928 = vpop.f32.mrb[0].mxu0
        %v929 = vpop.f32.mrb[0].mxu0
        %v930 = vadd.f32 0.0, %v929
        %v931 = vpop.f32.mrb[0].mxu0
        %932 = vmatprep.mubr.bf16.mxu0 0
        %933 = vmatmul.mubr.bf16.gmra.mrb[0].mxu0 %v874
        %v934 = vpop.f32.mrb[0].mxu0
        %v935 = vadd.f32 0.0, %v934
        %v936 = vpop.f32.mrb[0].mxu0
        %v937 = vpop.f32.mrb[0].mxu0
        %v938 = vadd.f32 0.0, %v937
        %v939 = vpop.f32.mrb[0].mxu0
        %940 = vdwg.mxu0
        %v951 = vunpack.c.l.b16 %v792
        %v952 = vunpack.c.l.b16 %v793
        %v953 = vunpack.c.l.b16 %v794
        %v954 = vunpack.c.l.b16 %v795
        %v955 = vunpack.c.l.b16 %v796
        %v956 = vunpack.c.l.b16 %v797
        %v957 = vunpack.c.l.b16 %v798
        %v958 = vunpack.c.l.b16 %v799
        %v959 = vunpack.c.l.b16 %v800
        %v960 = vunpack.c.l.b16 %v801
        %v961 = vpack.c.b16 %v952, %v951
        %v962 = vpack.c.b16 %v954, %v953
        %v963 = vpack.c.b16 %v956, %v955
        %v964 = vpack.c.b16 %v958, %v957
        %v965 = vpack.c.b16 %v960, %v959
        %v972 = vsel %vm863, %v788, 0
        %v975 = vsel %vm863, %v789, 0
        %v978 = vsel %vm863, %v790, 0
        %v981 = vsel %vm863, %v791, 0
        %983 = vmatprep.subr.bf16.mxu0 0
        %984 = vmatpush1.bf16.msra.mxu0 %v961
        %985 = vmatprep.subr.bf16.mxu0 0
        %986 = vmatpush1.bf16.msra.mxu0 %v962
        %987 = vmatprep.subr.bf16.mxu0 0
        %988 = vmatpush1.bf16.msra.mxu0 %v963
        %989 = vmatprep.subr.bf16.mxu0 0
        %990 = vmatpush1.bf16.msra.mxu0 %v964
        %991 = vmatprep.subr.bf16.mxu0 0
        %992 = vmatpush1.bf16.msra.mxu0 %v965
        %993 = vmatprep.subr.bf16.mxu0 0
        %994 = vmatpush1.bf16.msra.mxu0 0
        %995 = vmatprep.subr.bf16.mxu0 0
        %996 = vmatpush1.bf16.msra.mxu0 0
        %997 = vmatprep.subr.bf16.mxu0 0
        %998 = vmatpush1.bf16.msra.mxu0 0
        %999 = vmatprep.subr.bf16.mxu0 0
        %1000 = vmatpush1.bf16.msra.mxu0 0
        %1001 = vmatprep.subr.bf16.mxu0 0
        %1002 = vmatpush1.bf16.msra.mxu0 0
        %1003 = vmatprep.subr.bf16.mxu0 0
        %1004 = vmatpush1.bf16.msra.mxu0 0
        %1005 = vmatprep.subr.bf16.mxu0 0
        %1006 = vmatpush1.bf16.msra.mxu0 0
        %1007 = vmatprep.subr.bf16.mxu0 0
        %1008 = vmatpush1.bf16.msra.mxu0 0
        %1009 = vmatprep.subr.bf16.mxu0 0
        %1010 = vmatpush1.bf16.msra.mxu0 0
        %1011 = vmatprep.subr.bf16.mxu0 0
        %1012 = vmatpush1.bf16.msra.mxu0 0
        %1013 = vmatprep.subr.bf16.mxu0 0
        %1014 = vmatpush1.bf16.msra.mxu0 0
        %1015 = vmatprep.mubr.bf16.mxu0 0
        %1016 = vmatmul.mubr.bf16.gmra.mrb[0].mxu0 %v972
        %v1017 = vpop.f32.mrb[0].mxu0
        %v1018 = vadd.f32 %v911, %v1017
        %v1019 = vpop.f32.mrb[0].mxu0
        %v1020 = vpop.f32.mrb[0].mxu0
        %v1021 = vadd.f32 %v914, %v1020
        %v1022 = vpop.f32.mrb[0].mxu0
        %1023 = vmatprep.mubr.bf16.mxu0 0
        %1024 = vmatmul.mubr.bf16.gmra.mrb[0].mxu0 %v975
        %v1025 = vpop.f32.mrb[0].mxu0
        %v1026 = vadd.f32 %v919, %v1025
        %v1027 = vpop.f32.mrb[0].mxu0
        %v1028 = vpop.f32.mrb[0].mxu0
        %v1029 = vadd.f32 %v922, %v1028
        %v1030 = vpop.f32.mrb[0].mxu0
        %1031 = vmatprep.mubr.bf16.mxu0 0
        %1032 = vmatmul.mubr.bf16.gmra.mrb[0].mxu0 %v978
        %v1033 = vpop.f32.mrb[0].mxu0
        %v1034 = vadd.f32 %v927, %v1033
        %v1035 = vpop.f32.mrb[0].mxu0
        %v1036 = vpop.f32.mrb[0].mxu0
        %v1037 = vadd.f32 %v930, %v1036
        %v1038 = vpop.f32.mrb[0].mxu0
        %1039 = vmatprep.mubr.bf16.mxu0 0
        %1040 = vmatmul.mubr.bf16.gmra.mrb[0].mxu0 %v981
        %v1041 = vpop.f32.mrb[0].mxu0
        %v1042 = vadd.f32 %v935, %v1041
        %v1043 = vpop.f32.mrb[0].mxu0
        %v1044 = vpop.f32.mrb[0].mxu0
        %v1045 = vadd.f32 %v938, %v1044
        %v1046 = vpop.f32.mrb[0].mxu0
        %1047 = vdwg.mxu0
        %v1048 = vpack.c.bf16 %v768, %v766
        %v1049 = vpack.c.bf16 %v772, %v770
        %v1050 = vpack.c.bf16 %v776, %v774
        %v1051 = vpack.c.bf16 %v787, %v778
        %s1052 = scalar_lea.vmem %s2, 80
        %v1053 = vld [vmem:[%s1052] sm:$0xf]
        %v1054 = vld [vmem:[%s1052 + $0x4] sm:$0xf]
        %v1055 = vld [vmem:[%s1052 + $0x8] sm:$0xf]
        %v1056 = vld [vmem:[%s1052 + $0xc] sm:$0xf]
        %v1057 = vld [vmem:[%s1052 + $0x10] sm:$0xf]
        %v1058 = vld [vmem:[%s1052 + $0x14] sm:$0xf]
        %v1059 = vld [vmem:[%s1052 + $0x18] sm:$0xf]
        %v1060 = vld [vmem:[%s1052 + $0x1c] sm:$0xf]
        %v1061 = vld [vmem:[%s1052 + $0x20] sm:$0xf]
        %v1062 = vld [vmem:[%s1052 + $0x24] sm:$0xf]
        %v1073 = vunpack.c.l.b16 %v1053
        %v1074 = vunpack.c.l.b16 %v1054
        %v1075 = vunpack.c.l.b16 %v1055
        %v1076 = vunpack.c.l.b16 %v1056
        %v1077 = vunpack.c.l.b16 %v1057
        %v1078 = vunpack.c.l.b16 %v1058
        %v1079 = vunpack.c.l.b16 %v1059
        %v1080 = vunpack.c.l.b16 %v1060
        %v1081 = vunpack.c.l.b16 %v1061
        %v1082 = vunpack.c.l.b16 %v1062
        %v1083 = vpack.c.b16 %v1074, %v1073
        %v1084 = vpack.c.b16 %v1076, %v1075
        %v1085 = vpack.c.b16 %v1078, %v1077
        %v1086 = vpack.c.b16 %v1080, %v1079
        %v1087 = vpack.c.b16 %v1082, %v1081
        %v1094 = vsel %vm863, %v1048, 0
        %v1097 = vsel %vm863, %v1049, 0
        %v1100 = vsel %vm863, %v1050, 0
        %v1103 = vsel %vm863, %v1051, 0
        %1105 = vmatprep.subr.bf16.mxu0 0
        %1106 = vmatpush1.bf16.msra.mxu0 %v1083
        %1107 = vmatprep.subr.bf16.mxu0 0
        %1108 = vmatpush1.bf16.msra.mxu0 %v1084
        %1109 = vmatprep.subr.bf16.mxu0 0
        %1110 = vmatpush1.bf16.msra.mxu0 %v1085
        %1111 = vmatprep.subr.bf16.mxu0 0
        %1112 = vmatpush1.bf16.msra.mxu0 %v1086
        %1113 = vmatprep.subr.bf16.mxu0 0
        %1114 = vmatpush1.bf16.msra.mxu0 %v1087
        %1115 = vmatprep.subr.bf16.mxu0 0
        %1116 = vmatpush1.bf16.msra.mxu0 0
        %1117 = vmatprep.subr.bf16.mxu0 0
        %1118 = vmatpush1.bf16.msra.mxu0 0
        %1119 = vmatprep.subr.bf16.mxu0 0
        %1120 = vmatpush1.bf16.msra.mxu0 0
        %1121 = vmatprep.subr.bf16.mxu0 0
        %1122 = vmatpush1.bf16.msra.mxu0 0
        %1123 = vmatprep.subr.bf16.mxu0 0
        %1124 = vmatpush1.bf16.msra.mxu0 0
        %1125 = vmatprep.subr.bf16.mxu0 0
        %1126 = vmatpush1.bf16.msra.mxu0 0
        %1127 = vmatprep.subr.bf16.mxu0 0
        %1128 = vmatpush1.bf16.msra.mxu0 0
        %1129 = vmatprep.subr.bf16.mxu0 0
        %1130 = vmatpush1.bf16.msra.mxu0 0
        %1131 = vmatprep.subr.bf16.mxu0 0
        %1132 = vmatpush1.bf16.msra.mxu0 0
        %1133 = vmatprep.subr.bf16.mxu0 0
        %1134 = vmatpush1.bf16.msra.mxu0 0
        %1135 = vmatprep.subr.bf16.mxu0 0
        %1136 = vmatpush1.bf16.msra.mxu0 0
        %1137 = vmatprep.mubr.bf16.mxu0 0
        %1138 = vmatmul.mubr.bf16.gmra.mrb[0].mxu0 %v1094
        %v1139 = vpop.f32.mrb[0].mxu0
        %v1140 = vadd.f32 0.0, %v1139
        %v1141 = vpop.f32.mrb[0].mxu0
        %v1142 = vpop.f32.mrb[0].mxu0
        %v1143 = vadd.f32 0.0, %v1142
        %v1144 = vpop.f32.mrb[0].mxu0
        %1145 = vmatprep.mubr.bf16.mxu0 0
        %1146 = vmatmul.mubr.bf16.gmra.mrb[0].mxu0 %v1097
        %v1147 = vpop.f32.mrb[0].mxu0
        %v1148 = vadd.f32 0.0, %v1147
        %v1149 = vpop.f32.mrb[0].mxu0
        %v1150 = vpop.f32.mrb[0].mxu0
        %v1151 = vadd.f32 0.0, %v1150
        %v1152 = vpop.f32.mrb[0].mxu0
        %1153 = vmatprep.mubr.bf16.mxu0 0
        %1154 = vmatmul.mubr.bf16.gmra.mrb[0].mxu0 %v1100
        %v1155 = vpop.f32.mrb[0].mxu0
        %v1156 = vadd.f32 0.0, %v1155
        %v1157 = vpop.f32.mrb[0].mxu0
        %v1158 = vpop.f32.mrb[0].mxu0
        %v1159 = vadd.f32 0.0, %v1158
        %v1160 = vpop.f32.mrb[0].mxu0
        %1161 = vmatprep.mubr.bf16.mxu0 0
        %1162 = vmatmul.mubr.bf16.gmra.mrb[0].mxu0 %v1103
        %v1163 = vpop.f32.mrb[0].mxu0
        %v1164 = vadd.f32 0.0, %v1163
        %v1165 = vpop.f32.mrb[0].mxu0
        %v1166 = vpop.f32.mrb[0].mxu0
        %v1167 = vadd.f32 0.0, %v1166
        %v1168 = vpop.f32.mrb[0].mxu0
        %1169 = vdwg.mxu0
        %v1170 = vadd.f32 %v1018, %v1140
        %v1171 = vadd.f32 %v1021, %v1143
        %v1172 = vadd.f32 %v1026, %v1148
        %v1173 = vadd.f32 %v1029, %v1151
        %v1174 = vadd.f32 %v1034, %v1156
        %v1175 = vadd.f32 %v1037, %v1159
        %v1176 = vadd.f32 %v1042, %v1164
        %v1177 = vadd.f32 %v1045, %v1167
        %v1178 = vld [vmem:[#allocation5] sm:$0x1]
        %v1180 = vlaneseq
        %v1181 = vshrl.u32 %v1180, 7
        %v1182 = vsub.s32 0, %v1181
        %v1183 = vrot.slane %v1178, %v1182
        %v1185 = vadd.f32 %v1170, %v1183
        %v1186 = vadd.f32 %v1171, %v1183
        %v1187 = vadd.f32 %v1172, %v1183
        %v1188 = vadd.f32 %v1173, %v1183
        %v1189 = vadd.f32 %v1174, %v1183
        %v1190 = vadd.f32 %v1175, %v1183
        %v1191 = vadd.f32 %v1176, %v1183
        %v1192 = vadd.f32 %v1177, %v1183
        %vm1193 = vcmp.ge.f32.partialorder %v1185, 0.0
        %vm1194 = vcmp.ge.f32.partialorder %v1186, 0.0
        %vm1195 = vcmp.ge.f32.partialorder %v1187, 0.0
        %vm1196 = vcmp.ge.f32.partialorder %v1188, 0.0
        %vm1197 = vcmp.ge.f32.partialorder %v1189, 0.0
        %vm1198 = vcmp.ge.f32.partialorder %v1190, 0.0
        %vm1199 = vcmp.ge.f32.partialorder %v1191, 0.0
        %vm1200 = vcmp.ge.f32.partialorder %v1192, 0.0
        %v1201 = vmul.f32 %v1185, 0.2
        %v1202 = vmul.f32 %v1186, 0.2
        %v1203 = vmul.f32 %v1187, 0.2
        %v1204 = vmul.f32 %v1188, 0.2
        %v1205 = vmul.f32 %v1189, 0.2
        %v1206 = vmul.f32 %v1190, 0.2
        %v1207 = vmul.f32 %v1191, 0.2
        %v1208 = vmul.f32 %v1192, 0.2
        %v1209 = vsel %vm1193, %v1185, %v1201
        %v1210 = vsel %vm1194, %v1186, %v1202
        %v1211 = vsel %vm1195, %v1187, %v1203
        %v1212 = vsel %vm1196, %v1188, %v1204
        %v1213 = vsel %vm1197, %v1189, %v1205
        %v1214 = vsel %vm1198, %v1190, %v1206
        %v1215 = vsel %vm1199, %v1191, %v1207
        %v1216 = vsel %vm1200, %v1192, %v1208
        %v1225 = vrot.slane %v1209, 7
        %v1226 = vrot.slane %v1210, 7
        %v1227 = vsel %vm738, %v1225, %v1226
        %v1228 = vrot.slane %v1211, 7
        %v1229 = vsel %vm738, %v1226, %v1228
        %v1230 = vrot.slane %v1212, 7
        %v1231 = vsel %vm738, %v1228, %v1230
        %v1232 = vrot.slane %v1213, 7
        %v1233 = vsel %vm738, %v1230, %v1232
        %v1234 = vrot.slane %v1214, 7
        %v1235 = vsel %vm738, %v1232, %v1234
        %v1236 = vrot.slane %v1215, 7
        %v1237 = vsel %vm738, %v1234, %v1236
        %v1238 = vrot.slane %v1216, 7
        %v1239 = vsel %vm738, %v1236, %v1238
        %v1248 = vsel %vm738, 0.0, %v1225
        %v1249 = vrot.slane %v1209, 1
        %v1250 = vrot.slane %v1210, 1
        %v1251 = vsel %vm763, %v1249, %v1250
        %v1252 = vrot.slane %v1211, 1
        %v1253 = vsel %vm763, %v1250, %v1252
        %v1254 = vrot.slane %v1212, 1
        %v1255 = vsel %vm763, %v1252, %v1254
        %v1256 = vrot.slane %v1213, 1
        %v1257 = vsel %vm763, %v1254, %v1256
        %v1258 = vrot.slane %v1214, 1
        %v1259 = vsel %vm763, %v1256, %v1258
        %v1260 = vrot.slane %v1215, 1
        %v1261 = vsel %vm763, %v1258, %v1260
        %v1262 = vrot.slane %v1216, 1
        %v1263 = vsel %vm763, %v1260, %v1262
        %v1272 = vsel %vm763, %v1262, 0.0
        %v1273 = vpack.c.bf16 %v1227, %v1248
        %v1274 = vpack.c.bf16 %v1231, %v1229
        %v1275 = vpack.c.bf16 %v1235, %v1233
        %v1276 = vpack.c.bf16 %v1239, %v1237
        %v1277 = vld [vmem:[#allocation7] sm:$0xf]
        %v1278 = vld [vmem:[#allocation7 + $0x4] sm:$0xf]
        %v1279 = vld [vmem:[#allocation7 + $0x8] sm:$0xf]
        %v1280 = vld [vmem:[#allocation7 + $0xc] sm:$0xf]
        %v1281 = vpack.c.bf16 %v1210, %v1209
        %v1282 = vpack.c.bf16 %v1212, %v1211
        %v1283 = vpack.c.bf16 %v1214, %v1213
        %v1284 = vpack.c.bf16 %v1216, %v1215
        %s1285 = scalar_lea.vmem [#allocation7], 16
        %v1286 = vld [vmem:[%s1285] sm:$0xf]
        %v1287 = vld [vmem:[%s1285 + $0x4] sm:$0xf]
        %v1288 = vld [vmem:[%s1285 + $0x8] sm:$0xf]
        %v1289 = vld [vmem:[%s1285 + $0xc] sm:$0xf]
        %v1294 = vunpack.c.l.b16 %v1286
        %v1295 = vunpack.c.l.b16 %v1287
        %v1296 = vunpack.c.l.b16 %v1288
        %v1297 = vunpack.c.l.b16 %v1289
        %v1298 = vpack.c.b16 %v1295, %v1294
        %v1299 = vpack.c.b16 %v1297, %v1296
        %vm1302 = vcmask 261120
        %v1304 = vsel %vm1302, %v1281, 0
        %v1307 = vsel %vm1302, %v1282, 0
        %v1310 = vsel %vm1302, %v1283, 0
        %v1313 = vsel %vm1302, %v1284, 0
        %1315 = vmatprep.subr.bf16.mxu0 0
        %1316 = vmatpush1.bf16.msra.mxu0 %v1298
        %1317 = vmatprep.subr.bf16.mxu0 0
        %1318 = vmatpush1.bf16.msra.mxu0 %v1299
        %1319 = vmatprep.subr.bf16.mxu0 0
        %1320 = vmatpush1.bf16.msra.mxu0 0
        %1321 = vmatprep.subr.bf16.mxu0 0
        %1322 = vmatpush1.bf16.msra.mxu0 0
        %1323 = vmatprep.subr.bf16.mxu0 0
        %1324 = vmatpush1.bf16.msra.mxu0 0
        %1325 = vmatprep.subr.bf16.mxu0 0
        %1326 = vmatpush1.bf16.msra.mxu0 0
        %1327 = vmatprep.subr.bf16.mxu0 0
        %1328 = vmatpush1.bf16.msra.mxu0 0
        %1329 = vmatprep.subr.bf16.mxu0 0
        %1330 = vmatpush1.bf16.msra.mxu0 0
        %1331 = vmatprep.subr.bf16.mxu0 0
        %1332 = vmatpush1.bf16.msra.mxu0 0
        %1333 = vmatprep.subr.bf16.mxu0 0
        %1334 = vmatpush1.bf16.msra.mxu0 0
        %1335 = vmatprep.subr.bf16.mxu0 0
        %1336 = vmatpush1.bf16.msra.mxu0 0
        %1337 = vmatprep.subr.bf16.mxu0 0
        %1338 = vmatpush1.bf16.msra.mxu0 0
        %1339 = vmatprep.subr.bf16.mxu0 0
        %1340 = vmatpush1.bf16.msra.mxu0 0
        %1341 = vmatprep.subr.bf16.mxu0 0
        %1342 = vmatpush1.bf16.msra.mxu0 0
        %1343 = vmatprep.subr.bf16.mxu0 0
        %1344 = vmatpush1.bf16.msra.mxu0 0
        %1345 = vmatprep.subr.bf16.mxu0 0
        %1346 = vmatpush1.bf16.msra.mxu0 0
        %1347 = vmatprep.mubr.bf16.mxu0 0
        %1348 = vmatmul.mubr.bf16.gmra.mrb[0].mxu0 %v1304
        %v1349 = vpop.f32.mrb[0].mxu0
        %v1350 = vadd.f32 0.0, %v1349
        %v1351 = vpop.f32.mrb[0].mxu0
        %v1352 = vpop.f32.mrb[0].mxu0
        %v1353 = vadd.f32 0.0, %v1352
        %v1354 = vpop.f32.mrb[0].mxu0
        %1355 = vmatprep.mubr.bf16.mxu0 0
        %1356 = vmatmul.mubr.bf16.gmra.mrb[0].mxu0 %v1307
        %v1357 = vpop.f32.mrb[0].mxu0
        %v1358 = vadd.f32 0.0, %v1357
        %v1359 = vpop.f32.mrb[0].mxu0
        %v1360 = vpop.f32.mrb[0].mxu0
        %v1361 = vadd.f32 0.0, %v1360
        %v1362 = vpop.f32.mrb[0].mxu0
        %1363 = vmatprep.mubr.bf16.mxu0 0
        %1364 = vmatmul.mubr.bf16.gmra.mrb[0].mxu0 %v1310
        %v1365 = vpop.f32.mrb[0].mxu0
        %v1366 = vadd.f32 0.0, %v1365
        %v1367 = vpop.f32.mrb[0].mxu0
        %v1368 = vpop.f32.mrb[0].mxu0
        %v1369 = vadd.f32 0.0, %v1368
        %v1370 = vpop.f32.mrb[0].mxu0
        %1371 = vmatprep.mubr.bf16.mxu0 0
        %1372 = vmatmul.mubr.bf16.gmra.mrb[0].mxu0 %v1313
        %v1373 = vpop.f32.mrb[0].mxu0
        %v1374 = vadd.f32 0.0, %v1373
        %v1375 = vpop.f32.mrb[0].mxu0
        %v1376 = vpop.f32.mrb[0].mxu0
        %v1377 = vadd.f32 0.0, %v1376
        %v1378 = vpop.f32.mrb[0].mxu0
        %1379 = vdwg.mxu0
        %v1384 = vunpack.c.l.b16 %v1277
        %v1385 = vunpack.c.l.b16 %v1278
        %v1386 = vunpack.c.l.b16 %v1279
        %v1387 = vunpack.c.l.b16 %v1280
        %v1388 = vpack.c.b16 %v1385, %v1384
        %v1389 = vpack.c.b16 %v1387, %v1386
        %v1393 = vsel %vm1302, %v1273, 0
        %v1396 = vsel %vm1302, %v1274, 0
        %v1399 = vsel %vm1302, %v1275, 0
        %v1402 = vsel %vm1302, %v1276, 0
        %1404 = vmatprep.subr.bf16.mxu0 0
        %1405 = vmatpush1.bf16.msra.mxu0 %v1388
        %1406 = vmatprep.subr.bf16.mxu0 0
        %1407 = vmatpush1.bf16.msra.mxu0 %v1389
        %1408 = vmatprep.subr.bf16.mxu0 0
        %1409 = vmatpush1.bf16.msra.mxu0 0
        %1410 = vmatprep.subr.bf16.mxu0 0
        %1411 = vmatpush1.bf16.msra.mxu0 0
        %1412 = vmatprep.subr.bf16.mxu0 0
        %1413 = vmatpush1.bf16.msra.mxu0 0
        %1414 = vmatprep.subr.bf16.mxu0 0
        %1415 = vmatpush1.bf16.msra.mxu0 0
        %1416 = vmatprep.subr.bf16.mxu0 0
        %1417 = vmatpush1.bf16.msra.mxu0 0
        %1418 = vmatprep.subr.bf16.mxu0 0
        %1419 = vmatpush1.bf16.msra.mxu0 0
        %1420 = vmatprep.subr.bf16.mxu0 0
        %1421 = vmatpush1.bf16.msra.mxu0 0
        %1422 = vmatprep.subr.bf16.mxu0 0
        %1423 = vmatpush1.bf16.msra.mxu0 0
        %1424 = vmatprep.subr.bf16.mxu0 0
        %1425 = vmatpush1.bf16.msra.mxu0 0
        %1426 = vmatprep.subr.bf16.mxu0 0
        %1427 = vmatpush1.bf16.msra.mxu0 0
        %1428 = vmatprep.subr.bf16.mxu0 0
        %1429 = vmatpush1.bf16.msra.mxu0 0
        %1430 = vmatprep.subr.bf16.mxu0 0
        %1431 = vmatpush1.bf16.msra.mxu0 0
        %1432 = vmatprep.subr.bf16.mxu0 0
        %1433 = vmatpush1.bf16.msra.mxu0 0
        %1434 = vmatprep.subr.bf16.mxu0 0
        %1435 = vmatpush1.bf16.msra.mxu0 0
        %1436 = vmatprep.mubr.bf16.mxu0 0
        %1437 = vmatmul.mubr.bf16.gmra.mrb[0].mxu0 %v1393
        %v1438 = vpop.f32.mrb[0].mxu0
        %v1439 = vadd.f32 %v1350, %v1438
        %v1440 = vpop.f32.mrb[0].mxu0
        %v1441 = vpop.f32.mrb[0].mxu0
        %v1442 = vadd.f32 %v1353, %v1441
        %v1443 = vpop.f32.mrb[0].mxu0
        %1444 = vmatprep.mubr.bf16.mxu0 0
        %1445 = vmatmul.mubr.bf16.gmra.mrb[0].mxu0 %v1396
        %v1446 = vpop.f32.mrb[0].mxu0
        %v1447 = vadd.f32 %v1358, %v1446
        %v1448 = vpop.f32.mrb[0].mxu0
        %v1449 = vpop.f32.mrb[0].mxu0
        %v1450 = vadd.f32 %v1361, %v1449
        %v1451 = vpop.f32.mrb[0].mxu0
        %1452 = vmatprep.mubr.bf16.mxu0 0
        %1453 = vmatmul.mubr.bf16.gmra.mrb[0].mxu0 %v1399
        %v1454 = vpop.f32.mrb[0].mxu0
        %v1455 = vadd.f32 %v1366, %v1454
        %v1456 = vpop.f32.mrb[0].mxu0
        %v1457 = vpop.f32.mrb[0].mxu0
        %v1458 = vadd.f32 %v1369, %v1457
        %v1459 = vpop.f32.mrb[0].mxu0
        %1460 = vmatprep.mubr.bf16.mxu0 0
        %1461 = vmatmul.mubr.bf16.gmra.mrb[0].mxu0 %v1402
        %v1462 = vpop.f32.mrb[0].mxu0
        %v1463 = vadd.f32 %v1374, %v1462
        %v1464 = vpop.f32.mrb[0].mxu0
        %v1465 = vpop.f32.mrb[0].mxu0
        %v1466 = vadd.f32 %v1377, %v1465
        %v1467 = vpop.f32.mrb[0].mxu0
        %1468 = vdwg.mxu0
        %v1469 = vpack.c.bf16 %v1253, %v1251
        %v1470 = vpack.c.bf16 %v1257, %v1255
        %v1471 = vpack.c.bf16 %v1261, %v1259
        %v1472 = vpack.c.bf16 %v1272, %v1263
        %s1473 = scalar_lea.vmem [#allocation7], 32
        %v1474 = vld [vmem:[%s1473] sm:$0xf]
        %v1475 = vld [vmem:[%s1473 + $0x4] sm:$0xf]
        %v1476 = vld [vmem:[%s1473 + $0x8] sm:$0xf]
        %v1477 = vld [vmem:[%s1473 + $0xc] sm:$0xf]
        %v1482 = vunpack.c.l.b16 %v1474
        %v1483 = vunpack.c.l.b16 %v1475
        %v1484 = vunpack.c.l.b16 %v1476
        %v1485 = vunpack.c.l.b16 %v1477
        %v1486 = vpack.c.b16 %v1483, %v1482
        %v1487 = vpack.c.b16 %v1485, %v1484
        %v1491 = vsel %vm1302, %v1469, 0
        %v1494 = vsel %vm1302, %v1470, 0
        %v1497 = vsel %vm1302, %v1471, 0
        %v1500 = vsel %vm1302, %v1472, 0
        %1502 = vmatprep.subr.bf16.mxu0 0
        %1503 = vmatpush1.bf16.msra.mxu0 %v1486
        %1504 = vmatprep.subr.bf16.mxu0 0
        %1505 = vmatpush1.bf16.msra.mxu0 %v1487
        %1506 = vmatprep.subr.bf16.mxu0 0
        %1507 = vmatpush1.bf16.msra.mxu0 0
        %1508 = vmatprep.subr.bf16.mxu0 0
        %1509 = vmatpush1.bf16.msra.mxu0 0
        %1510 = vmatprep.subr.bf16.mxu0 0
        %1511 = vmatpush1.bf16.msra.mxu0 0
        %1512 = vmatprep.subr.bf16.mxu0 0
        %1513 = vmatpush1.bf16.msra.mxu0 0
        %1514 = vmatprep.subr.bf16.mxu0 0
        %1515 = vmatpush1.bf16.msra.mxu0 0
        %1516 = vmatprep.subr.bf16.mxu0 0
        %1517 = vmatpush1.bf16.msra.mxu0 0
        %1518 = vmatprep.subr.bf16.mxu0 0
        %1519 = vmatpush1.bf16.msra.mxu0 0
        %1520 = vmatprep.subr.bf16.mxu0 0
        %1521 = vmatpush1.bf16.msra.mxu0 0
        %1522 = vmatprep.subr.bf16.mxu0 0
        %1523 = vmatpush1.bf16.msra.mxu0 0
        %1524 = vmatprep.subr.bf16.mxu0 0
        %1525 = vmatpush1.bf16.msra.mxu0 0
        %1526 = vmatprep.subr.bf16.mxu0 0
        %1527 = vmatpush1.bf16.msra.mxu0 0
        %1528 = vmatprep.subr.bf16.mxu0 0
        %1529 = vmatpush1.bf16.msra.mxu0 0
        %1530 = vmatprep.subr.bf16.mxu0 0
        %1531 = vmatpush1.bf16.msra.mxu0 0
        %1532 = vmatprep.subr.bf16.mxu0 0
        %1533 = vmatpush1.bf16.msra.mxu0 0
        %1534 = vmatprep.mubr.bf16.mxu0 0
        %1535 = vmatmul.mubr.bf16.gmra.mrb[0].mxu0 %v1491
        %v1536 = vpop.f32.mrb[0].mxu0
        %v1537 = vadd.f32 0.0, %v1536
        %v1538 = vpop.f32.mrb[0].mxu0
        %v1539 = vpop.f32.mrb[0].mxu0
        %v1540 = vadd.f32 0.0, %v1539
        %v1541 = vpop.f32.mrb[0].mxu0
        %1542 = vmatprep.mubr.bf16.mxu0 0
        %1543 = vmatmul.mubr.bf16.gmra.mrb[0].mxu0 %v1494
        %v1544 = vpop.f32.mrb[0].mxu0
        %v1545 = vadd.f32 0.0, %v1544
        %v1546 = vpop.f32.mrb[0].mxu0
        %v1547 = vpop.f32.mrb[0].mxu0
        %v1548 = vadd.f32 0.0, %v1547
        %v1549 = vpop.f32.mrb[0].mxu0
        %1550 = vmatprep.mubr.bf16.mxu0 0
        %1551 = vmatmul.mubr.bf16.gmra.mrb[0].mxu0 %v1497
        %v1552 = vpop.f32.mrb[0].mxu0
        %v1553 = vadd.f32 0.0, %v1552
        %v1554 = vpop.f32.mrb[0].mxu0
        %v1555 = vpop.f32.mrb[0].mxu0
        %v1556 = vadd.f32 0.0, %v1555
        %v1557 = vpop.f32.mrb[0].mxu0
        %1558 = vmatprep.mubr.bf16.mxu0 0
        %1559 = vmatmul.mubr.bf16.gmra.mrb[0].mxu0 %v1500
        %v1560 = vpop.f32.mrb[0].mxu0
        %v1561 = vadd.f32 0.0, %v1560
        %v1562 = vpop.f32.mrb[0].mxu0
        %v1563 = vpop.f32.mrb[0].mxu0
        %v1564 = vadd.f32 0.0, %v1563
        %v1565 = vpop.f32.mrb[0].mxu0
        %1566 = vdwg.mxu0
        %v1567 = vadd.f32 %v1439, %v1537
        %v1568 = vadd.f32 %v1442, %v1540
        %v1569 = vadd.f32 %v1447, %v1545
        %v1570 = vadd.f32 %v1450, %v1548
        %v1571 = vadd.f32 %v1455, %v1553
        %v1572 = vadd.f32 %v1458, %v1556
        %v1573 = vadd.f32 %v1463, %v1561
        %v1574 = vadd.f32 %v1466, %v1564
        %v1575 = vld [vmem:[#allocation8] sm:$0x1]
        %v1577 = vlaneseq
        %v1578 = vshrl.u32 %v1577, 7
        %v1579 = vsub.s32 0, %v1578
        %v1580 = vrot.slane %v1575, %v1579
        %v1582 = vadd.f32 %v1567, %v1580
        %v1583 = vadd.f32 %v1568, %v1580
        %v1584 = vadd.f32 %v1569, %v1580
        %v1585 = vadd.f32 %v1570, %v1580
        %v1586 = vadd.f32 %v1571, %v1580
        %v1587 = vadd.f32 %v1572, %v1580
        %v1588 = vadd.f32 %v1573, %v1580
        %v1589 = vadd.f32 %v1574, %v1580
        %v1590 = vmax.f32 %v1582, 0.0
        %v1591 = vmax.f32 %v1583, 0.0
        %v1592 = vmax.f32 %v1584, 0.0
        %v1593 = vmax.f32 %v1585, 0.0
        %v1594 = vmax.f32 %v1586, 0.0
        %v1595 = vmax.f32 %v1587, 0.0
        %v1596 = vmax.f32 %v1588, 0.0
        %v1597 = vmax.f32 %v1589, 0.0
        %v1598 = vlaneseq
        %v1599 = vshrl.u32 %v1598, 7
        %v1600 = vadd.s32 %v1599, 8
        %v1601 = vadd.s32 %v1599, 16
        %v1602 = vadd.s32 %v1599, 24
        %v1603 = vlaneseq
        %v1604 = vand.u32 %v1603, 127
        %v1605 = vmul.u32 %v1599, 2
        %v1606 = vmul.u32 %v1600, 2
        %v1607 = vmul.u32 %v1601, 2
        %v1608 = vmul.u32 %v1602, 2
        %vm1609 = vcmp.eq.s32.totalorder %v1604, %v1605
        %vm1610 = vcmp.eq.s32.totalorder %v1604, %v1606
        %vm1611 = vcmp.eq.s32.totalorder %v1604, %v1607
        %vm1612 = vcmp.eq.s32.totalorder %v1604, %v1608
        %v1613 = vadd.s32 %v1605, 1
        %v1614 = vadd.s32 %v1606, 1
        %v1615 = vadd.s32 %v1607, 1
        %v1616 = vadd.s32 %v1608, 1
        %vm1617 = vcmp.eq.s32.totalorder %v1604, %v1613
        %vm1618 = vcmp.eq.s32.totalorder %v1604, %v1614
        %vm1619 = vcmp.eq.s32.totalorder %v1604, %v1615
        %vm1620 = vcmp.eq.s32.totalorder %v1604, %v1616
        %vm1621 = vmor %vm1609, %vm1617
        %vm1622 = vmor %vm1610, %vm1618
        %vm1623 = vmor %vm1611, %vm1619
        %vm1624 = vmor %vm1612, %vm1620
        %v1625 = vsel %vm1621, 0.5, 0.0
        %v1626 = vsel %vm1622, 0.5, 0.0
        %v1627 = vsel %vm1623, 0.5, 0.0
        %v1628 = vsel %vm1624, 0.5, 0.0
        %vm1629 = vcmask 523264
        %v1631 = vsel %vm1629, %v1625, 0
        %v1634 = vsel %vm1629, %v1626, 0
        %v1637 = vsel %vm1629, %v1627, 0
        %v1640 = vsel %vm1629, %v1628, 0
        %1642 = vmatprep.subr.mxu0 0.0
        %1643 = vmatpush1.msra.mxu0 %v1590
        %1644 = vmatprep.subr.mxu0 0.0
        %1645 = vmatpush1.msra.mxu0 %v1591
        %1646 = vmatprep.subr.mxu0 0.0
        %1647 = vmatpush1.msra.mxu0 %v1592
        %1648 = vmatprep.subr.mxu0 0.0
        %1649 = vmatpush1.msra.mxu0 %v1593
        %1650 = vmatprep.subr.mxu0 0.0
        %1651 = vmatpush1.msra.mxu0 %v1594
        %1652 = vmatprep.subr.mxu0 0.0
        %1653 = vmatpush1.msra.mxu0 %v1595
        %1654 = vmatprep.subr.mxu0 0.0
        %1655 = vmatpush1.msra.mxu0 %v1596
        %1656 = vmatprep.subr.mxu0 0.0
        %1657 = vmatpush1.msra.mxu0 %v1597
        %1658 = vmatprep.subr.mxu0 0.0
        %1659 = vmatpush1.msra.mxu0 0.0
        %1660 = vmatprep.subr.mxu0 0.0
        %1661 = vmatpush1.msra.mxu0 0.0
        %1662 = vmatprep.subr.mxu0 0.0
        %1663 = vmatpush1.msra.mxu0 0.0
        %1664 = vmatprep.subr.mxu0 0.0
        %1665 = vmatpush1.msra.mxu0 0.0
        %1666 = vmatprep.subr.mxu0 0.0
        %1667 = vmatpush1.msra.mxu0 0.0
        %1668 = vmatprep.subr.mxu0 0.0
        %1669 = vmatpush1.msra.mxu0 0.0
        %1670 = vmatprep.subr.mxu0 0.0
        %1671 = vmatpush1.msra.mxu0 0.0
        %1672 = vmatprep.subr.mxu0 0.0
        %1673 = vmatpush1.msra.mxu0 0.0
        %1674 = vmatprep.subr.mxu0 0.0
        %1675 = vmatpush1.msra.mxu0 0.0
        %1676 = vmatprep.subr.mxu0 0.0
        %1677 = vmatpush1.msra.mxu0 0.0
        %1678 = vmatprep.subr.mxu0 0.0
        %1679 = vmatpush1.msra.mxu0 0.0
        %1680 = vmatprep.subr.mxu0 0.0
        %1681 = vmatpush1.msra.mxu0 0.0
        %1682 = vmatprep.subr.mxu0 0.0
        %1683 = vmatpush1.msra.mxu0 0.0
        %1684 = vmatprep.subr.mxu0 0.0
        %1685 = vmatpush1.msra.mxu0 0.0
        %1686 = vmatprep.subr.mxu0 0.0
        %1687 = vmatpush1.msra.mxu0 0.0
        %1688 = vmatprep.subr.mxu0 0.0
        %1689 = vmatpush1.msra.mxu0 0.0
        %1690 = vmatprep.subr.mxu0 0.0
        %1691 = vmatpush1.msra.mxu0 0.0
        %1692 = vmatprep.subr.mxu0 0.0
        %1693 = vmatpush1.msra.mxu0 0.0
        %1694 = vmatprep.subr.mxu0 0.0
        %1695 = vmatpush1.msra.mxu0 0.0
        %1696 = vmatprep.subr.mxu0 0.0
        %1697 = vmatpush1.msra.mxu0 0.0
        %1698 = vmatprep.subr.mxu0 0.0
        %1699 = vmatpush1.msra.mxu0 0.0
        %1700 = vmatprep.subr.mxu0 0.0
        %1701 = vmatpush1.msra.mxu0 0.0
        %1702 = vmatprep.subr.mxu0 0.0
        %1703 = vmatpush1.msra.mxu0 0.0
        %1704 = vmatprep.subr.mxu0 0.0
        %1705 = vmatpush1.msra.mxu0 0.0
        %1706 = vmatprep.mubr.f32.mxu0 0.0
        %1707 = vmatmul.mubr.f32.gmra.mrb[0].mxu0 %v1631
        %v1708 = vpop.f32.mrb[0].mxu0
        %v1709 = vadd.f32 0.0, %v1708
        %v1710 = vpop.f32.mrb[0].mxu0
        %1711 = vmatprep.mubr.f32.mxu0 0.0
        %1712 = vmatmul.mubr.f32.gmra.mrb[0].mxu0 %v1634
        %v1713 = vpop.f32.mrb[0].mxu0
        %v1714 = vadd.f32 0.0, %v1713
        %v1715 = vpop.f32.mrb[0].mxu0
        %1716 = vmatprep.mubr.f32.mxu0 0.0
        %1717 = vmatmul.mubr.f32.gmra.mrb[0].mxu0 %v1637
        %v1718 = vpop.f32.mrb[0].mxu0
        %v1719 = vadd.f32 0.0, %v1718
        %v1720 = vpop.f32.mrb[0].mxu0
        %1721 = vmatprep.mubr.f32.mxu0 0.0
        %1722 = vmatmul.mubr.f32.gmra.mrb[0].mxu0 %v1640
        %v1723 = vpop.f32.mrb[0].mxu0
        %v1724 = vadd.f32 0.0, %v1723
        %v1725 = vpop.f32.mrb[0].mxu0
        %1726 = vdwg.mxu0
        %v1731 = vrot.slane %v1709, 7
        %v1732 = vrot.slane %v1714, 7
        %v1733 = vsel %vm738, %v1731, %v1732
        %v1734 = vrot.slane %v1719, 7
        %v1735 = vsel %vm738, %v1732, %v1734
        %v1736 = vrot.slane %v1724, 7
        %v1737 = vsel %vm738, %v1734, %v1736
        %v1742 = vsel %vm738, 0.0, %v1731
        %v1743 = vrot.slane %v1709, 1
        %v1744 = vrot.slane %v1714, 1
        %v1745 = vsel %vm763, %v1743, %v1744
        %v1746 = vrot.slane %v1719, 1
        %v1747 = vsel %vm763, %v1744, %v1746
        %v1748 = vrot.slane %v1724, 1
        %v1749 = vsel %vm763, %v1746, %v1748
        %v1754 = vsel %vm763, %v1748, 0.0
        %v1755 = vpack.c.bf16 %v1733, %v1742
        %v1756 = vpack.c.bf16 %v1737, %v1735
        %v1757 = vld [vmem:[#allocation10] sm:$0xf]
        %v1758 = vld [vmem:[#allocation10 + $0x4] sm:$0xf]
        %v1759 = vld [vmem:[#allocation10 + $0x8] sm:$0xf]
        %v1760 = vld [vmem:[#allocation10 + $0xc] sm:$0xf]
        %v1761 = vld [vmem:[#allocation10 + $0x10] sm:$0xf]
        %v1762 = vld [vmem:[#allocation10 + $0x14] sm:$0xf]
        %v1763 = vld [vmem:[#allocation10 + $0x18] sm:$0xf]
        %v1764 = vld [vmem:[#allocation10 + $0x1c] sm:$0xf]
        %v1765 = vpack.c.bf16 %v1714, %v1709
        %v1766 = vpack.c.bf16 %v1724, %v1719
        %s1767 = scalar_lea.vmem [#allocation10], 32
        %v1768 = vld [vmem:[%s1767] sm:$0xf]
        %v1769 = vld [vmem:[%s1767 + $0x4] sm:$0xf]
        %v1770 = vld [vmem:[%s1767 + $0x8] sm:$0xf]
        %v1771 = vld [vmem:[%s1767 + $0xc] sm:$0xf]
        %v1772 = vld [vmem:[%s1767 + $0x10] sm:$0xf]
        %v1773 = vld [vmem:[%s1767 + $0x14] sm:$0xf]
        %v1774 = vld [vmem:[%s1767 + $0x18] sm:$0xf]
        %v1775 = vld [vmem:[%s1767 + $0x1c] sm:$0xf]
        %v1784 = vunpack.c.l.b16 %v1768
        %v1785 = vunpack.c.l.b16 %v1769
        %v1786 = vunpack.c.l.b16 %v1770
        %v1787 = vunpack.c.l.b16 %v1771
        %v1788 = vunpack.c.l.b16 %v1772
        %v1789 = vunpack.c.l.b16 %v1773
        %v1790 = vunpack.c.l.b16 %v1774
        %v1791 = vunpack.c.l.b16 %v1775
        %v1792 = vpack.c.b16 %v1785, %v1784
        %v1793 = vpack.c.b16 %v1787, %v1786
        %v1794 = vpack.c.b16 %v1789, %v1788
        %v1795 = vpack.c.b16 %v1791, %v1790
        %v1801 = vsel %vm1629, %v1765, 0
        %v1804 = vsel %vm1629, %v1766, 0
        %1806 = vmatprep.subr.bf16.mxu0 0
        %1807 = vmatpush1.bf16.msra.mxu0 %v1792
        %1808 = vmatprep.subr.bf16.mxu0 0
        %1809 = vmatpush1.bf16.msra.mxu0 %v1793
        %1810 = vmatprep.subr.bf16.mxu0 0
        %1811 = vmatpush1.bf16.msra.mxu0 %v1794
        %1812 = vmatprep.subr.bf16.mxu0 0
        %1813 = vmatpush1.bf16.msra.mxu0 %v1795
        %1814 = vmatprep.subr.bf16.mxu0 0
        %1815 = vmatpush1.bf16.msra.mxu0 0
        %1816 = vmatprep.subr.bf16.mxu0 0
        %1817 = vmatpush1.bf16.msra.mxu0 0
        %1818 = vmatprep.subr.bf16.mxu0 0
        %1819 = vmatpush1.bf16.msra.mxu0 0
        %1820 = vmatprep.subr.bf16.mxu0 0
        %1821 = vmatpush1.bf16.msra.mxu0 0
        %1822 = vmatprep.subr.bf16.mxu0 0
        %1823 = vmatpush1.bf16.msra.mxu0 0
        %1824 = vmatprep.subr.bf16.mxu0 0
        %1825 = vmatpush1.bf16.msra.mxu0 0
        %1826 = vmatprep.subr.bf16.mxu0 0
        %1827 = vmatpush1.bf16.msra.mxu0 0
        %1828 = vmatprep.subr.bf16.mxu0 0
        %1829 = vmatpush1.bf16.msra.mxu0 0
        %1830 = vmatprep.subr.bf16.mxu0 0
        %1831 = vmatpush1.bf16.msra.mxu0 0
        %1832 = vmatprep.subr.bf16.mxu0 0
        %1833 = vmatpush1.bf16.msra.mxu0 0
        %1834 = vmatprep.subr.bf16.mxu0 0
        %1835 = vmatpush1.bf16.msra.mxu0 0
        %1836 = vmatprep.subr.bf16.mxu0 0
        %1837 = vmatpush1.bf16.msra.mxu0 0
        %1838 = vmatprep.mubr.bf16.mxu0 0
        %1839 = vmatmul.mubr.bf16.gmra.mrb[0].mxu0 %v1801
        %v1840 = vpop.f32.mrb[0].mxu0
        %v1841 = vadd.f32 0.0, %v1840
        %v1842 = vpop.f32.mrb[0].mxu0
        %v1843 = vpop.f32.mrb[0].mxu0
        %v1844 = vadd.f32 0.0, %v1843
        %v1845 = vpop.f32.mrb[0].mxu0
        %1846 = vmatprep.mubr.bf16.mxu0 0
        %1847 = vmatmul.mubr.bf16.gmra.mrb[0].mxu0 %v1804
        %v1848 = vpop.f32.mrb[0].mxu0
        %v1849 = vadd.f32 0.0, %v1848
        %v1850 = vpop.f32.mrb[0].mxu0
        %v1851 = vpop.f32.mrb[0].mxu0
        %v1852 = vadd.f32 0.0, %v1851
        %v1853 = vpop.f32.mrb[0].mxu0
        %1854 = vdwg.mxu0
        %v1863 = vunpack.c.l.b16 %v1757
        %v1864 = vunpack.c.l.b16 %v1758
        %v1865 = vunpack.c.l.b16 %v1759
        %v1866 = vunpack.c.l.b16 %v1760
        %v1867 = vunpack.c.l.b16 %v1761
        %v1868 = vunpack.c.l.b16 %v1762
        %v1869 = vunpack.c.l.b16 %v1763
        %v1870 = vunpack.c.l.b16 %v1764
        %v1871 = vpack.c.b16 %v1864, %v1863
        %v1872 = vpack.c.b16 %v1866, %v1865
        %v1873 = vpack.c.b16 %v1868, %v1867
        %v1874 = vpack.c.b16 %v1870, %v1869
        %v1880 = vsel %vm1629, %v1755, 0
        %v1883 = vsel %vm1629, %v1756, 0
        %1885 = vmatprep.subr.bf16.mxu0 0
        %1886 = vmatpush1.bf16.msra.mxu0 %v1871
        %1887 = vmatprep.subr.bf16.mxu0 0
        %1888 = vmatpush1.bf16.msra.mxu0 %v1872
        %1889 = vmatprep.subr.bf16.mxu0 0
        %1890 = vmatpush1.bf16.msra.mxu0 %v1873
        %1891 = vmatprep.subr.bf16.mxu0 0
        %1892 = vmatpush1.bf16.msra.mxu0 %v1874
        %1893 = vmatprep.subr.bf16.mxu0 0
        %1894 = vmatpush1.bf16.msra.mxu0 0
        %1895 = vmatprep.subr.bf16.mxu0 0
        %1896 = vmatpush1.bf16.msra.mxu0 0
        %1897 = vmatprep.subr.bf16.mxu0 0
        %1898 = vmatpush1.bf16.msra.mxu0 0
        %1899 = vmatprep.subr.bf16.mxu0 0
        %1900 = vmatpush1.bf16.msra.mxu0 0
        %1901 = vmatprep.subr.bf16.mxu0 0
        %1902 = vmatpush1.bf16.msra.mxu0 0
        %1903 = vmatprep.subr.bf16.mxu0 0
        %1904 = vmatpush1.bf16.msra.mxu0 0
        %1905 = vmatprep.subr.bf16.mxu0 0
        %1906 = vmatpush1.bf16.msra.mxu0 0
        %1907 = vmatprep.subr.bf16.mxu0 0
        %1908 = vmatpush1.bf16.msra.mxu0 0
        %1909 = vmatprep.subr.bf16.mxu0 0
        %1910 = vmatpush1.bf16.msra.mxu0 0
        %1911 = vmatprep.subr.bf16.mxu0 0
        %1912 = vmatpush1.bf16.msra.mxu0 0
        %1913 = vmatprep.subr.bf16.mxu0 0
        %1914 = vmatpush1.bf16.msra.mxu0 0
        %1915 = vmatprep.subr.bf16.mxu0 0
        %1916 = vmatpush1.bf16.msra.mxu0 0
        %1917 = vmatprep.mubr.bf16.mxu0 0
        %1918 = vmatmul.mubr.bf16.gmra.mrb[0].mxu0 %v1880
        %v1919 = vpop.f32.mrb[0].mxu0
        %v1920 = vadd.f32 %v1841, %v1919
        %v1921 = vpop.f32.mrb[0].mxu0
        %v1922 = vpop.f32.mrb[0].mxu0
        %v1923 = vadd.f32 %v1844, %v1922
        %v1924 = vpop.f32.mrb[0].mxu0
        %1925 = vmatprep.mubr.bf16.mxu0 0
        %1926 = vmatmul.mubr.bf16.gmra.mrb[0].mxu0 %v1883
        %v1927 = vpop.f32.mrb[0].mxu0
        %v1928 = vadd.f32 %v1849, %v1927
        %v1929 = vpop.f32.mrb[0].mxu0
        %v1930 = vpop.f32.mrb[0].mxu0
        %v1931 = vadd.f32 %v1852, %v1930
        %v1932 = vpop.f32.mrb[0].mxu0
        %1933 = vdwg.mxu0
        %v1934 = vpack.c.bf16 %v1747, %v1745
        %v1935 = vpack.c.bf16 %v1754, %v1749
        %s1936 = scalar_lea.vmem [#allocation10], 64
        %v1937 = vld [vmem:[%s1936] sm:$0xf]
        %v1938 = vld [vmem:[%s1936 + $0x4] sm:$0xf]
        %v1939 = vld [vmem:[%s1936 + $0x8] sm:$0xf]
        %v1940 = vld [vmem:[%s1936 + $0xc] sm:$0xf]
        %v1941 = vld [vmem:[%s1936 + $0x10] sm:$0xf]
        %v1942 = vld [vmem:[%s1936 + $0x14] sm:$0xf]
        %v1943 = vld [vmem:[%s1936 + $0x18] sm:$0xf]
        %v1944 = vld [vmem:[%s1936 + $0x1c] sm:$0xf]
        %v1953 = vunpack.c.l.b16 %v1937
        %v1954 = vunpack.c.l.b16 %v1938
        %v1955 = vunpack.c.l.b16 %v1939
        %v1956 = vunpack.c.l.b16 %v1940
        %v1957 = vunpack.c.l.b16 %v1941
        %v1958 = vunpack.c.l.b16 %v1942
        %v1959 = vunpack.c.l.b16 %v1943
        %v1960 = vunpack.c.l.b16 %v1944
        %v1961 = vpack.c.b16 %v1954, %v1953
        %v1962 = vpack.c.b16 %v1956, %v1955
        %v1963 = vpack.c.b16 %v1958, %v1957
        %v1964 = vpack.c.b16 %v1960, %v1959
        %v1970 = vsel %vm1629, %v1934, 0
        %v1973 = vsel %vm1629, %v1935, 0
        %1975 = vmatprep.subr.bf16.mxu0 0
        %1976 = vmatpush1.bf16.msra.mxu0 %v1961
        %1977 = vmatprep.subr.bf16.mxu0 0
        %1978 = vmatpush1.bf16.msra.mxu0 %v1962
        %1979 = vmatprep.subr.bf16.mxu0 0
        %1980 = vmatpush1.bf16.msra.mxu0 %v1963
        %1981 = vmatprep.subr.bf16.mxu0 0
        %1982 = vmatpush1.bf16.msra.mxu0 %v1964
        %1983 = vmatprep.subr.bf16.mxu0 0
        %1984 = vmatpush1.bf16.msra.mxu0 0
        %1985 = vmatprep.subr.bf16.mxu0 0
        %1986 = vmatpush1.bf16.msra.mxu0 0
        %1987 = vmatprep.subr.bf16.mxu0 0
        %1988 = vmatpush1.bf16.msra.mxu0 0
        %1989 = vmatprep.subr.bf16.mxu0 0
        %1990 = vmatpush1.bf16.msra.mxu0 0
        %1991 = vmatprep.subr.bf16.mxu0 0
        %1992 = vmatpush1.bf16.msra.mxu0 0
        %1993 = vmatprep.subr.bf16.mxu0 0
        %1994 = vmatpush1.bf16.msra.mxu0 0
        %1995 = vmatprep.subr.bf16.mxu0 0
        %1996 = vmatpush1.bf16.msra.mxu0 0
        %1997 = vmatprep.subr.bf16.mxu0 0
        %1998 = vmatpush1.bf16.msra.mxu0 0
        %1999 = vmatprep.subr.bf16.mxu0 0
        %2000 = vmatpush1.bf16.msra.mxu0 0
        %2001 = vmatprep.subr.bf16.mxu0 0
        %2002 = vmatpush1.bf16.msra.mxu0 0
        %2003 = vmatprep.subr.bf16.mxu0 0
        %2004 = vmatpush1.bf16.msra.mxu0 0
        %2005 = vmatprep.subr.bf16.mxu0 0
        %2006 = vmatpush1.bf16.msra.mxu0 0
        %2007 = vmatprep.mubr.bf16.mxu0 0
        %2008 = vmatmul.mubr.bf16.gmra.mrb[0].mxu0 %v1970
        %v2009 = vpop.f32.mrb[0].mxu0
        %v2010 = vadd.f32 0.0, %v2009
        %v2011 = vpop.f32.mrb[0].mxu0
        %v2012 = vpop.f32.mrb[0].mxu0
        %v2013 = vadd.f32 0.0, %v2012
        %v2014 = vpop.f32.mrb[0].mxu0
        %2015 = vmatprep.mubr.bf16.mxu0 0
        %2016 = vmatmul.mubr.bf16.gmra.mrb[0].mxu0 %v1973
        %v2017 = vpop.f32.mrb[0].mxu0
        %v2018 = vadd.f32 0.0, %v2017
        %v2019 = vpop.f32.mrb[0].mxu0
        %v2020 = vpop.f32.mrb[0].mxu0
        %v2021 = vadd.f32 0.0, %v2020
        %v2022 = vpop.f32.mrb[0].mxu0
        %2023 = vdwg.mxu0
        %v2024 = vadd.f32 %v1920, %v2010
        %v2025 = vadd.f32 %v1923, %v2013
        %v2026 = vadd.f32 %v1928, %v2018
        %v2027 = vadd.f32 %v1931, %v2021
        %v2028 = vld [vmem:[#allocation11] sm:$0x1]
        %v2030 = vlaneseq
        %v2031 = vshrl.u32 %v2030, 7
        %v2032 = vsub.s32 0, %v2031
        %v2033 = vrot.slane %v2028, %v2032
        %v2035 = vadd.f32 %v2024, %v2033
        %v2036 = vadd.f32 %v2025, %v2033
        %v2037 = vadd.f32 %v2026, %v2033
        %v2038 = vadd.f32 %v2027, %v2033
        %v2039 = vmax.f32 %v2035, 0.0
        %v2040 = vmax.f32 %v2036, 0.0
        %v2041 = vmax.f32 %v2037, 0.0
        %v2042 = vmax.f32 %v2038, 0.0
        %v2043 = vsel %vm1302, %v1625, 0
        %v2045 = vsel %vm1302, %v1626, 0
        %2047 = vmatprep.subr.mxu0 0.0
        %2048 = vmatpush1.msra.mxu0 %v2039
        %2049 = vmatprep.subr.mxu0 0.0
        %2050 = vmatpush1.msra.mxu0 %v2040
        %2051 = vmatprep.subr.mxu0 0.0
        %2052 = vmatpush1.msra.mxu0 %v2041
        %2053 = vmatprep.subr.mxu0 0.0
        %2054 = vmatpush1.msra.mxu0 %v2042
        %2055 = vmatprep.subr.mxu0 0.0
        %2056 = vmatpush1.msra.mxu0 0.0
        %2057 = vmatprep.subr.mxu0 0.0
        %2058 = vmatpush1.msra.mxu0 0.0
        %2059 = vmatprep.subr.mxu0 0.0
        %2060 = vmatpush1.msra.mxu0 0.0
        %2061 = vmatprep.subr.mxu0 0.0
        %2062 = vmatpush1.msra.mxu0 0.0
        %2063 = vmatprep.subr.mxu0 0.0
        %2064 = vmatpush1.msra.mxu0 0.0
        %2065 = vmatprep.subr.mxu0 0.0
        %2066 = vmatpush1.msra.mxu0 0.0
        %2067 = vmatprep.subr.mxu0 0.0
        %2068 = vmatpush1.msra.mxu0 0.0
        %2069 = vmatprep.subr.mxu0 0.0
        %2070 = vmatpush1.msra.mxu0 0.0
        %2071 = vmatprep.subr.mxu0 0.0
        %2072 = vmatpush1.msra.mxu0 0.0
        %2073 = vmatprep.subr.mxu0 0.0
        %2074 = vmatpush1.msra.mxu0 0.0
        %2075 = vmatprep.subr.mxu0 0.0
        %2076 = vmatpush1.msra.mxu0 0.0
        %2077 = vmatprep.subr.mxu0 0.0
        %2078 = vmatpush1.msra.mxu0 0.0
        %2079 = vmatprep.subr.mxu0 0.0
        %2080 = vmatpush1.msra.mxu0 0.0
        %2081 = vmatprep.subr.mxu0 0.0
        %2082 = vmatpush1.msra.mxu0 0.0
        %2083 = vmatprep.subr.mxu0 0.0
        %2084 = vmatpush1.msra.mxu0 0.0
        %2085 = vmatprep.subr.mxu0 0.0
        %2086 = vmatpush1.msra.mxu0 0.0
        %2087 = vmatprep.subr.mxu0 0.0
        %2088 = vmatpush1.msra.mxu0 0.0
        %2089 = vmatprep.subr.mxu0 0.0
        %2090 = vmatpush1.msra.mxu0 0.0
        %2091 = vmatprep.subr.mxu0 0.0
        %2092 = vmatpush1.msra.mxu0 0.0
        %2093 = vmatprep.subr.mxu0 0.0
        %2094 = vmatpush1.msra.mxu0 0.0
        %2095 = vmatprep.subr.mxu0 0.0
        %2096 = vmatpush1.msra.mxu0 0.0
        %2097 = vmatprep.subr.mxu0 0.0
        %2098 = vmatpush1.msra.mxu0 0.0
        %2099 = vmatprep.subr.mxu0 0.0
        %2100 = vmatpush1.msra.mxu0 0.0
        %2101 = vmatprep.subr.mxu0 0.0
        %2102 = vmatpush1.msra.mxu0 0.0
        %2103 = vmatprep.subr.mxu0 0.0
        %2104 = vmatpush1.msra.mxu0 0.0
        %2105 = vmatprep.subr.mxu0 0.0
        %2106 = vmatpush1.msra.mxu0 0.0
        %2107 = vmatprep.subr.mxu0 0.0
        %2108 = vmatpush1.msra.mxu0 0.0
        %2109 = vmatprep.subr.mxu0 0.0
        %2110 = vmatpush1.msra.mxu0 0.0
        %2111 = vmatprep.mubr.f32.mxu0 0.0
        %2112 = vmatmul.mubr.f32.gmra.mrb[0].mxu0 %v2043
        %v2113 = vpop.f32.mrb[0].mxu0
        %v2114 = vadd.f32 0.0, %v2113
        %v2115 = vpop.f32.mrb[0].mxu0
        %2116 = vmatprep.mubr.f32.mxu0 0.0
        %2117 = vmatmul.mubr.f32.gmra.mrb[0].mxu0 %v2045
        %v2118 = vpop.f32.mrb[0].mxu0
        %v2119 = vadd.f32 0.0, %v2118
        %v2120 = vpop.f32.mrb[0].mxu0
        %2121 = vdwg.mxu0
        %v2124 = vrot.slane %v2114, 7
        %v2125 = vrot.slane %v2119, 7
        %v2126 = vsel %vm738, %v2124, %v2125
        %v2129 = vsel %vm738, 0.0, %v2124
        %v2130 = vrot.slane %v2114, 1
        %v2131 = vrot.slane %v2119, 1
        %v2132 = vsel %vm763, %v2130, %v2131
        %v2135 = vsel %vm763, %v2131, 0.0
        %v2136 = vpack.c.bf16 %v2126, %v2129
        %v2137 = vld [vmem:[#allocation13] sm:$0xff]
        %v2138 = vld [vmem:[#allocation13 + $0x8] sm:$0xff]
        %v2139 = vld [vmem:[#allocation13 + $0x10] sm:$0xff]
        %v2140 = vld [vmem:[#allocation13 + $0x18] sm:$0xff]
        %v2141 = vld [vmem:[#allocation13 + $0x20] sm:$0xff]
        %v2142 = vld [vmem:[#allocation13 + $0x28] sm:$0xff]
        %v2143 = vld [vmem:[#allocation13 + $0x30] sm:$0xff]
        %v2144 = vld [vmem:[#allocation13 + $0x38] sm:$0xff]
        %v2145 = vld [vmem:[#allocation13 + $0x40] sm:$0xff]
        %v2146 = vld [vmem:[#allocation13 + $0x48] sm:$0xff]
        %v2147 = vld [vmem:[#allocation13 + $0x50] sm:$0xff]
        %v2148 = vld [vmem:[#allocation13 + $0x58] sm:$0xff]
        %v2149 = vld [vmem:[#allocation13 + $0x60] sm:$0xff]
        %v2150 = vld [vmem:[#allocation13 + $0x68] sm:$0xff]
        %v2151 = vld [vmem:[#allocation13 + $0x70] sm:$0xff]
        %v2152 = vld [vmem:[#allocation13 + $0x78] sm:$0xff]
        %v2153 = vpack.c.bf16 %v2119, %v2114
        %s2154 = scalar_lea.vmem [#allocation13], 128
        %v2155 = vld [vmem:[%s2154] sm:$0xff]
        %v2156 = vld [vmem:[%s2154 + $0x8] sm:$0xff]
        %v2157 = vld [vmem:[%s2154 + $0x10] sm:$0xff]
        %v2158 = vld [vmem:[%s2154 + $0x18] sm:$0xff]
        %v2159 = vld [vmem:[%s2154 + $0x20] sm:$0xff]
        %v2160 = vld [vmem:[%s2154 + $0x28] sm:$0xff]
        %v2161 = vld [vmem:[%s2154 + $0x30] sm:$0xff]
        %v2162 = vld [vmem:[%s2154 + $0x38] sm:$0xff]
        %v2163 = vld [vmem:[%s2154 + $0x40] sm:$0xff]
        %v2164 = vld [vmem:[%s2154 + $0x48] sm:$0xff]
        %v2165 = vld [vmem:[%s2154 + $0x50] sm:$0xff]
        %v2166 = vld [vmem:[%s2154 + $0x58] sm:$0xff]
        %v2167 = vld [vmem:[%s2154 + $0x60] sm:$0xff]
        %v2168 = vld [vmem:[%s2154 + $0x68] sm:$0xff]
        %v2169 = vld [vmem:[%s2154 + $0x70] sm:$0xff]
        %v2170 = vld [vmem:[%s2154 + $0x78] sm:$0xff]
        %v2187 = vunpack.c.l.b16 %v2155
        %v2188 = vunpack.c.h.b16 %v2155
        %v2189 = vunpack.c.l.b16 %v2156
        %v2190 = vunpack.c.h.b16 %v2156
        %v2191 = vunpack.c.l.b16 %v2157
        %v2192 = vunpack.c.h.b16 %v2157
        %v2193 = vunpack.c.l.b16 %v2158
        %v2194 = vunpack.c.h.b16 %v2158
        %v2195 = vunpack.c.l.b16 %v2159
        %v2196 = vunpack.c.h.b16 %v2159
        %v2197 = vunpack.c.l.b16 %v2160
        %v2198 = vunpack.c.h.b16 %v2160
        %v2199 = vunpack.c.l.b16 %v2161
        %v2200 = vunpack.c.h.b16 %v2161
        %v2201 = vunpack.c.l.b16 %v2162
        %v2202 = vunpack.c.h.b16 %v2162
        %v2203 = vunpack.c.l.b16 %v2163
        %v2204 = vunpack.c.h.b16 %v2163
        %v2205 = vunpack.c.l.b16 %v2164
        %v2206 = vunpack.c.h.b16 %v2164
        %v2207 = vunpack.c.l.b16 %v2165
        %v2208 = vunpack.c.h.b16 %v2165
        %v2209 = vunpack.c.l.b16 %v2166
        %v2210 = vunpack.c.h.b16 %v2166
        %v2211 = vunpack.c.l.b16 %v2167
        %v2212 = vunpack.c.h.b16 %v2167
        %v2213 = vunpack.c.l.b16 %v2168
        %v2214 = vunpack.c.h.b16 %v2168
        %v2215 = vunpack.c.l.b16 %v2169
        %v2216 = vunpack.c.h.b16 %v2169
        %v2217 = vunpack.c.l.b16 %v2170
        %v2218 = vunpack.c.h.b16 %v2170
        %v2219 = vpack.c.b16 %v2189, %v2187
        %v2220 = vpack.c.b16 %v2190, %v2188
        %v2221 = vpack.c.b16 %v2193, %v2191
        %v2222 = vpack.c.b16 %v2194, %v2192
        %v2223 = vpack.c.b16 %v2197, %v2195
        %v2224 = vpack.c.b16 %v2198, %v2196
        %v2225 = vpack.c.b16 %v2201, %v2199
        %v2226 = vpack.c.b16 %v2202, %v2200
        %v2227 = vpack.c.b16 %v2205, %v2203
        %v2228 = vpack.c.b16 %v2206, %v2204
        %v2229 = vpack.c.b16 %v2209, %v2207
        %v2230 = vpack.c.b16 %v2210, %v2208
        %v2231 = vpack.c.b16 %v2213, %v2211
        %v2232 = vpack.c.b16 %v2214, %v2212
        %v2233 = vpack.c.b16 %v2217, %v2215
        %v2234 = vpack.c.b16 %v2218, %v2216
        %2251 = vmatprep.subr.bf16.mxu0 %v2220
        %2252 = vmatpush1.bf16.msra.mxu0 %v2219
        %2253 = vmatprep.subr.bf16.mxu0 %v2222
        %2254 = vmatpush1.bf16.msra.mxu0 %v2221
        %2255 = vmatprep.subr.bf16.mxu0 %v2224
        %2256 = vmatpush1.bf16.msra.mxu0 %v2223
        %2257 = vmatprep.subr.bf16.mxu0 %v2226
        %2258 = vmatpush1.bf16.msra.mxu0 %v2225
        %2259 = vmatprep.subr.bf16.mxu0 %v2228
        %2260 = vmatpush1.bf16.msra.mxu0 %v2227
        %2261 = vmatprep.subr.bf16.mxu0 %v2230
        %2262 = vmatpush1.bf16.msra.mxu0 %v2229
        %2263 = vmatprep.subr.bf16.mxu0 %v2232
        %2264 = vmatpush1.bf16.msra.mxu0 %v2231
        %2265 = vmatprep.subr.bf16.mxu0 %v2234
        %2266 = vmatpush1.bf16.msra.mxu0 %v2233
        %2267 = vmatprep.subr.bf16.mxu0 0
        %2268 = vmatpush1.bf16.msra.mxu0 0
        %2269 = vmatprep.subr.bf16.mxu0 0
        %2270 = vmatpush1.bf16.msra.mxu0 0
        %2271 = vmatprep.subr.bf16.mxu0 0
        %2272 = vmatpush1.bf16.msra.mxu0 0
        %2273 = vmatprep.subr.bf16.mxu0 0
        %2274 = vmatpush1.bf16.msra.mxu0 0
        %2275 = vmatprep.subr.bf16.mxu0 0
        %2276 = vmatpush1.bf16.msra.mxu0 0
        %2277 = vmatprep.subr.bf16.mxu0 0
        %2278 = vmatpush1.bf16.msra.mxu0 0
        %2279 = vmatprep.subr.bf16.mxu0 0
        %2280 = vmatpush1.bf16.msra.mxu0 0
        %2281 = vmatprep.subr.bf16.mxu0 0
        %2282 = vmatpush1.bf16.msra.mxu0 0
        %2283 = vmatprep.mubr.bf16.mxu0 0
        %2284 = vmatmul.mubr.bf16.gmra.mrb[0].mxu0 %v2153
        %v2285 = vpop.f32.mrb[0].mxu0
        %v2286 = vadd.f32 0.0, %v2285
        %v2287 = vpop.f32.mrb[0].mxu0
        %v2288 = vadd.f32 0.0, %v2287
        %v2289 = vpop.f32.mrb[0].mxu0
        %v2290 = vadd.f32 0.0, %v2289
        %v2291 = vpop.f32.mrb[0].mxu0
        %v2292 = vadd.f32 0.0, %v2291
        %2293 = vdwg.mxu0
        %v2310 = vunpack.c.l.b16 %v2137
        %v2311 = vunpack.c.h.b16 %v2137
        %v2312 = vunpack.c.l.b16 %v2138
        %v2313 = vunpack.c.h.b16 %v2138
        %v2314 = vunpack.c.l.b16 %v2139
        %v2315 = vunpack.c.h.b16 %v2139
        %v2316 = vunpack.c.l.b16 %v2140
        %v2317 = vunpack.c.h.b16 %v2140
        %v2318 = vunpack.c.l.b16 %v2141
        %v2319 = vunpack.c.h.b16 %v2141
        %v2320 = vunpack.c.l.b16 %v2142
        %v2321 = vunpack.c.h.b16 %v2142
        %v2322 = vunpack.c.l.b16 %v2143
        %v2323 = vunpack.c.h.b16 %v2143
        %v2324 = vunpack.c.l.b16 %v2144
        %v2325 = vunpack.c.h.b16 %v2144
        %v2326 = vunpack.c.l.b16 %v2145
        %v2327 = vunpack.c.h.b16 %v2145
        %v2328 = vunpack.c.l.b16 %v2146
        %v2329 = vunpack.c.h.b16 %v2146
        %v2330 = vunpack.c.l.b16 %v2147
        %v2331 = vunpack.c.h.b16 %v2147
        %v2332 = vunpack.c.l.b16 %v2148
        %v2333 = vunpack.c.h.b16 %v2148
        %v2334 = vunpack.c.l.b16 %v2149
        %v2335 = vunpack.c.h.b16 %v2149
        %v2336 = vunpack.c.l.b16 %v2150
        %v2337 = vunpack.c.h.b16 %v2150
        %v2338 = vunpack.c.l.b16 %v2151
        %v2339 = vunpack.c.h.b16 %v2151
        %v2340 = vunpack.c.l.b16 %v2152
        %v2341 = vunpack.c.h.b16 %v2152
        %v2342 = vpack.c.b16 %v2312, %v2310
        %v2343 = vpack.c.b16 %v2313, %v2311
        %v2344 = vpack.c.b16 %v2316, %v2314
        %v2345 = vpack.c.b16 %v2317, %v2315
        %v2346 = vpack.c.b16 %v2320, %v2318
        %v2347 = vpack.c.b16 %v2321, %v2319
        %v2348 = vpack.c.b16 %v2324, %v2322
        %v2349 = vpack.c.b16 %v2325, %v2323
        %v2350 = vpack.c.b16 %v2328, %v2326
        %v2351 = vpack.c.b16 %v2329, %v2327
        %v2352 = vpack.c.b16 %v2332, %v2330
        %v2353 = vpack.c.b16 %v2333, %v2331
        %v2354 = vpack.c.b16 %v2336, %v2334
        %v2355 = vpack.c.b16 %v2337, %v2335
        %v2356 = vpack.c.b16 %v2340, %v2338
        %v2357 = vpack.c.b16 %v2341, %v2339
        %2374 = vmatprep.subr.bf16.mxu0 %v2343
        %2375 = vmatpush1.bf16.msra.mxu0 %v2342
        %2376 = vmatprep.subr.bf16.mxu0 %v2345
        %2377 = vmatpush1.bf16.msra.mxu0 %v2344
        %2378 = vmatprep.subr.bf16.mxu0 %v2347
        %2379 = vmatpush1.bf16.msra.mxu0 %v2346
        %2380 = vmatprep.subr.bf16.mxu0 %v2349
        %2381 = vmatpush1.bf16.msra.mxu0 %v2348
        %2382 = vmatprep.subr.bf16.mxu0 %v2351
        %2383 = vmatpush1.bf16.msra.mxu0 %v2350
        %2384 = vmatprep.subr.bf16.mxu0 %v2353
        %2385 = vmatpush1.bf16.msra.mxu0 %v2352
        %2386 = vmatprep.subr.bf16.mxu0 %v2355
        %2387 = vmatpush1.bf16.msra.mxu0 %v2354
        %2388 = vmatprep.subr.bf16.mxu0 %v2357
        %2389 = vmatpush1.bf16.msra.mxu0 %v2356
        %2390 = vmatprep.subr.bf16.mxu0 0
        %2391 = vmatpush1.bf16.msra.mxu0 0
        %2392 = vmatprep.subr.bf16.mxu0 0
        %2393 = vmatpush1.bf16.msra.mxu0 0
        %2394 = vmatprep.subr.bf16.mxu0 0
        %2395 = vmatpush1.bf16.msra.mxu0 0
        %2396 = vmatprep.subr.bf16.mxu0 0
        %2397 = vmatpush1.bf16.msra.mxu0 0
        %2398 = vmatprep.subr.bf16.mxu0 0
        %2399 = vmatpush1.bf16.msra.mxu0 0
        %2400 = vmatprep.subr.bf16.mxu0 0
        %2401 = vmatpush1.bf16.msra.mxu0 0
        %2402 = vmatprep.subr.bf16.mxu0 0
        %2403 = vmatpush1.bf16.msra.mxu0 0
        %2404 = vmatprep.subr.bf16.mxu0 0
        %2405 = vmatpush1.bf16.msra.mxu0 0
        %2406 = vmatprep.mubr.bf16.mxu0 0
        %2407 = vmatmul.mubr.bf16.gmra.mrb[0].mxu0 %v2136
        %v2408 = vpop.f32.mrb[0].mxu0
        %v2409 = vadd.f32 %v2286, %v2408
        %v2410 = vpop.f32.mrb[0].mxu0
        %v2411 = vadd.f32 %v2288, %v2410
        %v2412 = vpop.f32.mrb[0].mxu0
        %v2413 = vadd.f32 %v2290, %v2412
        %v2414 = vpop.f32.mrb[0].mxu0
        %v2415 = vadd.f32 %v2292, %v2414
        %2416 = vdwg.mxu0
        %v2417 = vpack.c.bf16 %v2135, %v2132
        %s2418 = scalar_lea.vmem [#allocation13], 256
        %v2419 = vld [vmem:[%s2418] sm:$0xff]
        %v2420 = vld [vmem:[%s2418 + $0x8] sm:$0xff]
        %v2421 = vld [vmem:[%s2418 + $0x10] sm:$0xff]
        %v2422 = vld [vmem:[%s2418 + $0x18] sm:$0xff]
        %v2423 = vld [vmem:[%s2418 + $0x20] sm:$0xff]
        %v2424 = vld [vmem:[%s2418 + $0x28] sm:$0xff]
        %v2425 = vld [vmem:[%s2418 + $0x30] sm:$0xff]
        %v2426 = vld [vmem:[%s2418 + $0x38] sm:$0xff]
        %v2427 = vld [vmem:[%s2418 + $0x40] sm:$0xff]
        %v2428 = vld [vmem:[%s2418 + $0x48] sm:$0xff]
        %v2429 = vld [vmem:[%s2418 + $0x50] sm:$0xff]
        %v2430 = vld [vmem:[%s2418 + $0x58] sm:$0xff]
        %v2431 = vld [vmem:[%s2418 + $0x60] sm:$0xff]
        %v2432 = vld [vmem:[%s2418 + $0x68] sm:$0xff]
        %v2433 = vld [vmem:[%s2418 + $0x70] sm:$0xff]
        %v2434 = vld [vmem:[%s2418 + $0x78] sm:$0xff]
        %v2451 = vunpack.c.l.b16 %v2419
        %v2452 = vunpack.c.h.b16 %v2419
        %v2453 = vunpack.c.l.b16 %v2420
        %v2454 = vunpack.c.h.b16 %v2420
        %v2455 = vunpack.c.l.b16 %v2421
        %v2456 = vunpack.c.h.b16 %v2421
        %v2457 = vunpack.c.l.b16 %v2422
        %v2458 = vunpack.c.h.b16 %v2422
        %v2459 = vunpack.c.l.b16 %v2423
        %v2460 = vunpack.c.h.b16 %v2423
        %v2461 = vunpack.c.l.b16 %v2424
        %v2462 = vunpack.c.h.b16 %v2424
        %v2463 = vunpack.c.l.b16 %v2425
        %v2464 = vunpack.c.h.b16 %v2425
        %v2465 = vunpack.c.l.b16 %v2426
        %v2466 = vunpack.c.h.b16 %v2426
        %v2467 = vunpack.c.l.b16 %v2427
        %v2468 = vunpack.c.h.b16 %v2427
        %v2469 = vunpack.c.l.b16 %v2428
        %v2470 = vunpack.c.h.b16 %v2428
        %v2471 = vunpack.c.l.b16 %v2429
        %v2472 = vunpack.c.h.b16 %v2429
        %v2473 = vunpack.c.l.b16 %v2430
        %v2474 = vunpack.c.h.b16 %v2430
        %v2475 = vunpack.c.l.b16 %v2431
        %v2476 = vunpack.c.h.b16 %v2431
        %v2477 = vunpack.c.l.b16 %v2432
        %v2478 = vunpack.c.h.b16 %v2432
        %v2479 = vunpack.c.l.b16 %v2433
        %v2480 = vunpack.c.h.b16 %v2433
        %v2481 = vunpack.c.l.b16 %v2434
        %v2482 = vunpack.c.h.b16 %v2434
        %v2483 = vpack.c.b16 %v2453, %v2451
        %v2484 = vpack.c.b16 %v2454, %v2452
        %v2485 = vpack.c.b16 %v2457, %v2455
        %v2486 = vpack.c.b16 %v2458, %v2456
        %v2487 = vpack.c.b16 %v2461, %v2459
        %v2488 = vpack.c.b16 %v2462, %v2460
        %v2489 = vpack.c.b16 %v2465, %v2463
        %v2490 = vpack.c.b16 %v2466, %v2464
        %v2491 = vpack.c.b16 %v2469, %v2467
        %v2492 = vpack.c.b16 %v2470, %v2468
        %v2493 = vpack.c.b16 %v2473, %v2471
        %v2494 = vpack.c.b16 %v2474, %v2472
        %v2495 = vpack.c.b16 %v2477, %v2475
        %v2496 = vpack.c.b16 %v2478, %v2476
        %v2497 = vpack.c.b16 %v2481, %v2479
        %v2498 = vpack.c.b16 %v2482, %v2480
        %2515 = vmatprep.subr.bf16.mxu0 %v2484
        %2516 = vmatpush1.bf16.msra.mxu0 %v2483
        %2517 = vmatprep.subr.bf16.mxu0 %v2486
        %2518 = vmatpush1.bf16.msra.mxu0 %v2485
        %2519 = vmatprep.subr.bf16.mxu0 %v2488
        %2520 = vmatpush1.bf16.msra.mxu0 %v2487
        %2521 = vmatprep.subr.bf16.mxu0 %v2490
        %2522 = vmatpush1.bf16.msra.mxu0 %v2489
        %2523 = vmatprep.subr.bf16.mxu0 %v2492
        %2524 = vmatpush1.bf16.msra.mxu0 %v2491
        %2525 = vmatprep.subr.bf16.mxu0 %v2494
        %2526 = vmatpush1.bf16.msra.mxu0 %v2493
        %2527 = vmatprep.subr.bf16.mxu0 %v2496
        %2528 = vmatpush1.bf16.msra.mxu0 %v2495
        %2529 = vmatprep.subr.bf16.mxu0 %v2498
        %2530 = vmatpush1.bf16.msra.mxu0 %v2497
        %2531 = vmatprep.subr.bf16.mxu0 0
        %2532 = vmatpush1.bf16.msra.mxu0 0
        %2533 = vmatprep.subr.bf16.mxu0 0
        %2534 = vmatpush1.bf16.msra.mxu0 0
        %2535 = vmatprep.subr.bf16.mxu0 0
        %2536 = vmatpush1.bf16.msra.mxu0 0
        %2537 = vmatprep.subr.bf16.mxu0 0
        %2538 = vmatpush1.bf16.msra.mxu0 0
        %2539 = vmatprep.subr.bf16.mxu0 0
        %2540 = vmatpush1.bf16.msra.mxu0 0
        %2541 = vmatprep.subr.bf16.mxu0 0
        %2542 = vmatpush1.bf16.msra.mxu0 0
        %2543 = vmatprep.subr.bf16.mxu0 0
        %2544 = vmatpush1.bf16.msra.mxu0 0
        %2545 = vmatprep.subr.bf16.mxu0 0
        %2546 = vmatpush1.bf16.msra.mxu0 0
        %2547 = vmatprep.mubr.bf16.mxu0 0
        %2548 = vmatmul.mubr.bf16.gmra.mrb[0].mxu0 %v2417
        %v2549 = vpop.f32.mrb[0].mxu0
        %v2550 = vadd.f32 0.0, %v2549
        %v2551 = vpop.f32.mrb[0].mxu0
        %v2552 = vadd.f32 0.0, %v2551
        %v2553 = vpop.f32.mrb[0].mxu0
        %v2554 = vadd.f32 0.0, %v2553
        %v2555 = vpop.f32.mrb[0].mxu0
        %v2556 = vadd.f32 0.0, %v2555
        %2557 = vdwg.mxu0
        %v2558 = vadd.f32 %v2409, %v2550
        %v2559 = vadd.f32 %v2411, %v2552
        %v2560 = vadd.f32 %v2413, %v2554
        %v2561 = vadd.f32 %v2415, %v2556
        %v2562 = vld [vmem:[#allocation14] sm:$0x3]
        %v2564 = vlaneseq
        %v2565 = vshrl.u32 %v2564, 7
        %v2566 = vsub.s32 0, %v2565
        %v2567 = vrot.slane %v2562, %v2566
        %v2568 = vlaneseq
        %v2569 = vshrl.u32 %v2568, 7
        %v2570 = vsub.s32 1, %v2569
        %v2571 = vrot.slane %v2562, %v2570
        %v2574 = vadd.f32 %v2558, %v2567
        %v2575 = vadd.f32 %v2559, %v2571
        %v2576 = vadd.f32 %v2560, %v2567
        %v2577 = vadd.f32 %v2561, %v2571
        %v2578 = vmax.f32 %v2574, 0.0
        %v2579 = vmax.f32 %v2575, 0.0
        %v2580 = vmax.f32 %v2576, 0.0
        %v2581 = vmax.f32 %v2577, 0.0
        %vm2582 = vcmask 130048
        %v2583 = vsel %vm2582, %v1625, 0
        %2585 = vmatprep.subr.mxu0 %v2579
        %2586 = vmatpush1.msra.mxu0 %v2578
        %2587 = vmatprep.subr.mxu0 %v2581
        %2588 = vmatpush1.msra.mxu0 %v2580
        %2589 = vmatprep.subr.mxu0 0.0
        %2590 = vmatpush1.msra.mxu0 0.0
        %2591 = vmatprep.subr.mxu0 0.0
        %2592 = vmatpush1.msra.mxu0 0.0
        %2593 = vmatprep.subr.mxu0 0.0
        %2594 = vmatpush1.msra.mxu0 0.0
        %2595 = vmatprep.subr.mxu0 0.0
        %2596 = vmatpush1.msra.mxu0 0.0
        %2597 = vmatprep.subr.mxu0 0.0
        %2598 = vmatpush1.msra.mxu0 0.0
        %2599 = vmatprep.subr.mxu0 0.0
        %2600 = vmatpush1.msra.mxu0 0.0
        %2601 = vmatprep.subr.mxu0 0.0
        %2602 = vmatpush1.msra.mxu0 0.0
        %2603 = vmatprep.subr.mxu0 0.0
        %2604 = vmatpush1.msra.mxu0 0.0
        %2605 = vmatprep.subr.mxu0 0.0
        %2606 = vmatpush1.msra.mxu0 0.0
        %2607 = vmatprep.subr.mxu0 0.0
        %2608 = vmatpush1.msra.mxu0 0.0
        %2609 = vmatprep.subr.mxu0 0.0
        %2610 = vmatpush1.msra.mxu0 0.0
        %2611 = vmatprep.subr.mxu0 0.0
        %2612 = vmatpush1.msra.mxu0 0.0
        %2613 = vmatprep.subr.mxu0 0.0
        %2614 = vmatpush1.msra.mxu0 0.0
        %2615 = vmatprep.subr.mxu0 0.0
        %2616 = vmatpush1.msra.mxu0 0.0
        %2617 = vmatprep.subr.mxu0 0.0
        %2618 = vmatpush1.msra.mxu0 0.0
        %2619 = vmatprep.subr.mxu0 0.0
        %2620 = vmatpush1.msra.mxu0 0.0
        %2621 = vmatprep.subr.mxu0 0.0
        %2622 = vmatpush1.msra.mxu0 0.0
        %2623 = vmatprep.subr.mxu0 0.0
        %2624 = vmatpush1.msra.mxu0 0.0
        %2625 = vmatprep.subr.mxu0 0.0
        %2626 = vmatpush1.msra.mxu0 0.0
        %2627 = vmatprep.subr.mxu0 0.0
        %2628 = vmatpush1.msra.mxu0 0.0
        %2629 = vmatprep.subr.mxu0 0.0
        %2630 = vmatpush1.msra.mxu0 0.0
        %2631 = vmatprep.subr.mxu0 0.0
        %2632 = vmatpush1.msra.mxu0 0.0
        %2633 = vmatprep.subr.mxu0 0.0
        %2634 = vmatpush1.msra.mxu0 0.0
        %2635 = vmatprep.subr.mxu0 0.0
        %2636 = vmatpush1.msra.mxu0 0.0
        %2637 = vmatprep.subr.mxu0 0.0
        %2638 = vmatpush1.msra.mxu0 0.0
        %2639 = vmatprep.subr.mxu0 0.0
        %2640 = vmatpush1.msra.mxu0 0.0
        %2641 = vmatprep.subr.mxu0 0.0
        %2642 = vmatpush1.msra.mxu0 0.0
        %2643 = vmatprep.subr.mxu0 0.0
        %2644 = vmatpush1.msra.mxu0 0.0
        %2645 = vmatprep.subr.mxu0 0.0
        %2646 = vmatpush1.msra.mxu0 0.0
        %2647 = vmatprep.subr.mxu0 0.0
        %2648 = vmatpush1.msra.mxu0 0.0
        %2649 = vmatprep.mubr.f32.mxu0 0.0
        %2650 = vmatmul.mubr.f32.gmra.mrb[0].mxu0 %v2583
        %v2651 = vpop.f32.mrb[0].mxu0
        %v2652 = vadd.f32 0.0, %v2651
        %v2653 = vpop.f32.mrb[0].mxu0
        %v2654 = vadd.f32 0.0, %v2653
        %2655 = vdwg.mxu0
        %v2658 = vrot.slane %v2652, 7
        %v2659 = vrot.slane %v2654, 7
        %v2662 = vsel %vm738, 0.0, %v2658
        %v2663 = vsel %vm738, 0.0, %v2659
        %v2664 = vrot.slane %v2652, 1
        %v2665 = vrot.slane %v2654, 1
        %v2668 = vsel %vm763, %v2664, 0.0
        %v2669 = vsel %vm763, %v2665, 0.0
        %v2670 = vpack.c.bf16 %v2662, %v2662
        %v2671 = vpack.c.bf16 %v2663, %v2663
        %v2672 = vld [vmem:[#allocation16] sm:$0xff]
        %v2673 = vld [vmem:[#allocation16 + $0x8] sm:$0xff]
        %v2674 = vld [vmem:[#allocation16 + $0x10] sm:$0xff]
        %v2675 = vld [vmem:[#allocation16 + $0x18] sm:$0xff]
        %v2676 = vld [vmem:[#allocation16 + $0x20] sm:$0xff]
        %v2677 = vld [vmem:[#allocation16 + $0x28] sm:$0xff]
        %v2678 = vld [vmem:[#allocation16 + $0x30] sm:$0xff]
        %v2679 = vld [vmem:[#allocation16 + $0x38] sm:$0xff]
        %v2680 = vld [vmem:[#allocation16 + $0x40] sm:$0xff]
        %v2681 = vld [vmem:[#allocation16 + $0x48] sm:$0xff]
        %v2682 = vld [vmem:[#allocation16 + $0x50] sm:$0xff]
        %v2683 = vld [vmem:[#allocation16 + $0x58] sm:$0xff]
        %v2684 = vld [vmem:[#allocation16 + $0x60] sm:$0xff]
        %v2685 = vld [vmem:[#allocation16 + $0x68] sm:$0xff]
        %v2686 = vld [vmem:[#allocation16 + $0x70] sm:$0xff]
        %v2687 = vld [vmem:[#allocation16 + $0x78] sm:$0xff]
        %v2688 = vld [vmem:[#allocation16 + $0x80] sm:$0xff]
        %v2689 = vld [vmem:[#allocation16 + $0x88] sm:$0xff]
        %v2690 = vld [vmem:[#allocation16 + $0x90] sm:$0xff]
        %v2691 = vld [vmem:[#allocation16 + $0x98] sm:$0xff]
        %v2692 = vld [vmem:[#allocation16 + $0xa0] sm:$0xff]
        %v2693 = vld [vmem:[#allocation16 + $0xa8] sm:$0xff]
        %v2694 = vld [vmem:[#allocation16 + $0xb0] sm:$0xff]
        %v2695 = vld [vmem:[#allocation16 + $0xb8] sm:$0xff]
        %v2696 = vld [vmem:[#allocation16 + $0xc0] sm:$0xff]
        %v2697 = vld [vmem:[#allocation16 + $0xc8] sm:$0xff]
        %v2698 = vld [vmem:[#allocation16 + $0xd0] sm:$0xff]
        %v2699 = vld [vmem:[#allocation16 + $0xd8] sm:$0xff]
        %v2700 = vld [vmem:[#allocation16 + $0xe0] sm:$0xff]
        %v2701 = vld [vmem:[#allocation16 + $0xe8] sm:$0xff]
        %v2702 = vld [vmem:[#allocation16 + $0xf0] sm:$0xff]
        %v2703 = vld [vmem:[#allocation16 + $0xf8] sm:$0xff]
        %v2704 = vld [vmem:[#allocation16 + $0x100] sm:$0xff]
        %v2705 = vld [vmem:[#allocation16 + $0x108] sm:$0xff]
        %v2706 = vld [vmem:[#allocation16 + $0x110] sm:$0xff]
        %v2707 = vld [vmem:[#allocation16 + $0x118] sm:$0xff]
        %v2708 = vld [vmem:[#allocation16 + $0x120] sm:$0xff]
        %v2709 = vld [vmem:[#allocation16 + $0x128] sm:$0xff]
        %v2710 = vld [vmem:[#allocation16 + $0x130] sm:$0xff]
        %v2711 = vld [vmem:[#allocation16 + $0x138] sm:$0xff]
        %v2712 = vld [vmem:[#allocation16 + $0x140] sm:$0xff]
        %v2713 = vld [vmem:[#allocation16 + $0x148] sm:$0xff]
        %v2714 = vld [vmem:[#allocation16 + $0x150] sm:$0xff]
        %v2715 = vld [vmem:[#allocation16 + $0x158] sm:$0xff]
        %v2716 = vld [vmem:[#allocation16 + $0x160] sm:$0xff]
        %v2717 = vld [vmem:[#allocation16 + $0x168] sm:$0xff]
        %v2718 = vld [vmem:[#allocation16 + $0x170] sm:$0xff]
        %v2719 = vld [vmem:[#allocation16 + $0x178] sm:$0xff]
        %v2720 = vld [vmem:[#allocation16 + $0x180] sm:$0xff]
        %v2721 = vld [vmem:[#allocation16 + $0x188] sm:$0xff]
        %v2722 = vld [vmem:[#allocation16 + $0x190] sm:$0xff]
        %v2723 = vld [vmem:[#allocation16 + $0x198] sm:$0xff]
        %v2724 = vld [vmem:[#allocation16 + $0x1a0] sm:$0xff]
        %v2725 = vld [vmem:[#allocation16 + $0x1a8] sm:$0xff]
        %v2726 = vld [vmem:[#allocation16 + $0x1b0] sm:$0xff]
        %v2727 = vld [vmem:[#allocation16 + $0x1b8] sm:$0xff]
        %v2728 = vld [vmem:[#allocation16 + $0x1c0] sm:$0xff]
        %v2729 = vld [vmem:[#allocation16 + $0x1c8] sm:$0xff]
        %v2730 = vld [vmem:[#allocation16 + $0x1d0] sm:$0xff]
        %v2731 = vld [vmem:[#allocation16 + $0x1d8] sm:$0xff]
        %v2732 = vld [vmem:[#allocation16 + $0x1e0] sm:$0xff]
        %v2733 = vld [vmem:[#allocation16 + $0x1e8] sm:$0xff]
        %v2734 = vld [vmem:[#allocation16 + $0x1f0] sm:$0xff]
        %v2735 = vld [vmem:[#allocation16 + $0x1f8] sm:$0xff]
        %v2736 = vpack.c.bf16 %v2652, %v2652
        %v2737 = vpack.c.bf16 %v2654, %v2654
        %s2738 = scalar_lea.vmem [#allocation16], 512
        %v2739 = vld [vmem:[%s2738] sm:$0xff]
        %v2740 = vld [vmem:[%s2738 + $0x8] sm:$0xff]
        %v2741 = vld [vmem:[%s2738 + $0x10] sm:$0xff]
        %v2742 = vld [vmem:[%s2738 + $0x18] sm:$0xff]
        %v2743 = vld [vmem:[%s2738 + $0x20] sm:$0xff]
        %v2744 = vld [vmem:[%s2738 + $0x28] sm:$0xff]
        %v2745 = vld [vmem:[%s2738 + $0x30] sm:$0xff]
        %v2746 = vld [vmem:[%s2738 + $0x38] sm:$0xff]
        %v2747 = vld [vmem:[%s2738 + $0x40] sm:$0xff]
        %v2748 = vld [vmem:[%s2738 + $0x48] sm:$0xff]
        %v2749 = vld [vmem:[%s2738 + $0x50] sm:$0xff]
        %v2750 = vld [vmem:[%s2738 + $0x58] sm:$0xff]
        %v2751 = vld [vmem:[%s2738 + $0x60] sm:$0xff]
        %v2752 = vld [vmem:[%s2738 + $0x68] sm:$0xff]
        %v2753 = vld [vmem:[%s2738 + $0x70] sm:$0xff]
        %v2754 = vld [vmem:[%s2738 + $0x78] sm:$0xff]
        %v2755 = vld [vmem:[%s2738 + $0x80] sm:$0xff]
        %v2756 = vld [vmem:[%s2738 + $0x88] sm:$0xff]
        %v2757 = vld [vmem:[%s2738 + $0x90] sm:$0xff]
        %v2758 = vld [vmem:[%s2738 + $0x98] sm:$0xff]
        %v2759 = vld [vmem:[%s2738 + $0xa0] sm:$0xff]
        %v2760 = vld [vmem:[%s2738 + $0xa8] sm:$0xff]
        %v2761 = vld [vmem:[%s2738 + $0xb0] sm:$0xff]
        %v2762 = vld [vmem:[%s2738 + $0xb8] sm:$0xff]
        %v2763 = vld [vmem:[%s2738 + $0xc0] sm:$0xff]
        %v2764 = vld [vmem:[%s2738 + $0xc8] sm:$0xff]
        %v2765 = vld [vmem:[%s2738 + $0xd0] sm:$0xff]
        %v2766 = vld [vmem:[%s2738 + $0xd8] sm:$0xff]
        %v2767 = vld [vmem:[%s2738 + $0xe0] sm:$0xff]
        %v2768 = vld [vmem:[%s2738 + $0xe8] sm:$0xff]
        %v2769 = vld [vmem:[%s2738 + $0xf0] sm:$0xff]
        %v2770 = vld [vmem:[%s2738 + $0xf8] sm:$0xff]
        %v2771 = vld [vmem:[%s2738 + $0x100] sm:$0xff]
        %v2772 = vld [vmem:[%s2738 + $0x108] sm:$0xff]
        %v2773 = vld [vmem:[%s2738 + $0x110] sm:$0xff]
        %v2774 = vld [vmem:[%s2738 + $0x118] sm:$0xff]
        %v2775 = vld [vmem:[%s2738 + $0x120] sm:$0xff]
        %v2776 = vld [vmem:[%s2738 + $0x128] sm:$0xff]
        %v2777 = vld [vmem:[%s2738 + $0x130] sm:$0xff]
        %v2778 = vld [vmem:[%s2738 + $0x138] sm:$0xff]
        %v2779 = vld [vmem:[%s2738 + $0x140] sm:$0xff]
        %v2780 = vld [vmem:[%s2738 + $0x148] sm:$0xff]
        %v2781 = vld [vmem:[%s2738 + $0x150] sm:$0xff]
        %v2782 = vld [vmem:[%s2738 + $0x158] sm:$0xff]
        %v2783 = vld [vmem:[%s2738 + $0x160] sm:$0xff]
        %v2784 = vld [vmem:[%s2738 + $0x168] sm:$0xff]
        %v2785 = vld [vmem:[%s2738 + $0x170] sm:$0xff]
        %v2786 = vld [vmem:[%s2738 + $0x178] sm:$0xff]
        %v2787 = vld [vmem:[%s2738 + $0x180] sm:$0xff]
        %v2788 = vld [vmem:[%s2738 + $0x188] sm:$0xff]
        %v2789 = vld [vmem:[%s2738 + $0x190] sm:$0xff]
        %v2790 = vld [vmem:[%s2738 + $0x198] sm:$0xff]
        %v2791 = vld [vmem:[%s2738 + $0x1a0] sm:$0xff]
        %v2792 = vld [vmem:[%s2738 + $0x1a8] sm:$0xff]
        %v2793 = vld [vmem:[%s2738 + $0x1b0] sm:$0xff]
        %v2794 = vld [vmem:[%s2738 + $0x1b8] sm:$0xff]
        %v2795 = vld [vmem:[%s2738 + $0x1c0] sm:$0xff]
        %v2796 = vld [vmem:[%s2738 + $0x1c8] sm:$0xff]
        %v2797 = vld [vmem:[%s2738 + $0x1d0] sm:$0xff]
        %v2798 = vld [vmem:[%s2738 + $0x1d8] sm:$0xff]
        %v2799 = vld [vmem:[%s2738 + $0x1e0] sm:$0xff]
        %v2800 = vld [vmem:[%s2738 + $0x1e8] sm:$0xff]
        %v2801 = vld [vmem:[%s2738 + $0x1f0] sm:$0xff]
        %v2802 = vld [vmem:[%s2738 + $0x1f8] sm:$0xff]
        %v2867 = vunpack.c.l.b16 %v2739
        %v2868 = vunpack.c.h.b16 %v2739
        %v2869 = vunpack.c.l.b16 %v2740
        %v2870 = vunpack.c.h.b16 %v2740
        %v2871 = vunpack.c.l.b16 %v2741
        %v2872 = vunpack.c.h.b16 %v2741
        %v2873 = vunpack.c.l.b16 %v2742
        %v2874 = vunpack.c.h.b16 %v2742
        %v2875 = vunpack.c.l.b16 %v2743
        %v2876 = vunpack.c.h.b16 %v2743
        %v2877 = vunpack.c.l.b16 %v2744
        %v2878 = vunpack.c.h.b16 %v2744
        %v2879 = vunpack.c.l.b16 %v2745
        %v2880 = vunpack.c.h.b16 %v2745
        %v2881 = vunpack.c.l.b16 %v2746
        %v2882 = vunpack.c.h.b16 %v2746
        %v2883 = vunpack.c.l.b16 %v2747
        %v2884 = vunpack.c.h.b16 %v2747
        %v2885 = vunpack.c.l.b16 %v2748
        %v2886 = vunpack.c.h.b16 %v2748
        %v2887 = vunpack.c.l.b16 %v2749
        %v2888 = vunpack.c.h.b16 %v2749
        %v2889 = vunpack.c.l.b16 %v2750
        %v2890 = vunpack.c.h.b16 %v2750
        %v2891 = vunpack.c.l.b16 %v2751
        %v2892 = vunpack.c.h.b16 %v2751
        %v2893 = vunpack.c.l.b16 %v2752
        %v2894 = vunpack.c.h.b16 %v2752
        %v2895 = vunpack.c.l.b16 %v2753
        %v2896 = vunpack.c.h.b16 %v2753
        %v2897 = vunpack.c.l.b16 %v2754
        %v2898 = vunpack.c.h.b16 %v2754
        %v2899 = vunpack.c.l.b16 %v2755
        %v2900 = vunpack.c.h.b16 %v2755
        %v2901 = vunpack.c.l.b16 %v2756
        %v2902 = vunpack.c.h.b16 %v2756
        %v2903 = vunpack.c.l.b16 %v2757
        %v2904 = vunpack.c.h.b16 %v2757
        %v2905 = vunpack.c.l.b16 %v2758
        %v2906 = vunpack.c.h.b16 %v2758
        %v2907 = vunpack.c.l.b16 %v2759
        %v2908 = vunpack.c.h.b16 %v2759
        %v2909 = vunpack.c.l.b16 %v2760
        %v2910 = vunpack.c.h.b16 %v2760
        %v2911 = vunpack.c.l.b16 %v2761
        %v2912 = vunpack.c.h.b16 %v2761
        %v2913 = vunpack.c.l.b16 %v2762
        %v2914 = vunpack.c.h.b16 %v2762
        %v2915 = vunpack.c.l.b16 %v2763
        %v2916 = vunpack.c.h.b16 %v2763
        %v2917 = vunpack.c.l.b16 %v2764
        %v2918 = vunpack.c.h.b16 %v2764
        %v2919 = vunpack.c.l.b16 %v2765
        %v2920 = vunpack.c.h.b16 %v2765
        %v2921 = vunpack.c.l.b16 %v2766
        %v2922 = vunpack.c.h.b16 %v2766
        %v2923 = vunpack.c.l.b16 %v2767
        %v2924 = vunpack.c.h.b16 %v2767
        %v2925 = vunpack.c.l.b16 %v2768
        %v2926 = vunpack.c.h.b16 %v2768
        %v2927 = vunpack.c.l.b16 %v2769
        %v2928 = vunpack.c.h.b16 %v2769
        %v2929 = vunpack.c.l.b16 %v2770
        %v2930 = vunpack.c.h.b16 %v2770
        %v2931 = vunpack.c.l.b16 %v2771
        %v2932 = vunpack.c.h.b16 %v2771
        %v2933 = vunpack.c.l.b16 %v2772
        %v2934 = vunpack.c.h.b16 %v2772
        %v2935 = vunpack.c.l.b16 %v2773
        %v2936 = vunpack.c.h.b16 %v2773
        %v2937 = vunpack.c.l.b16 %v2774
        %v2938 = vunpack.c.h.b16 %v2774
        %v2939 = vunpack.c.l.b16 %v2775
        %v2940 = vunpack.c.h.b16 %v2775
        %v2941 = vunpack.c.l.b16 %v2776
        %v2942 = vunpack.c.h.b16 %v2776
        %v2943 = vunpack.c.l.b16 %v2777
        %v2944 = vunpack.c.h.b16 %v2777
        %v2945 = vunpack.c.l.b16 %v2778
        %v2946 = vunpack.c.h.b16 %v2778
        %v2947 = vunpack.c.l.b16 %v2779
        %v2948 = vunpack.c.h.b16 %v2779
        %v2949 = vunpack.c.l.b16 %v2780
        %v2950 = vunpack.c.h.b16 %v2780
        %v2951 = vunpack.c.l.b16 %v2781
        %v2952 = vunpack.c.h.b16 %v2781
        %v2953 = vunpack.c.l.b16 %v2782
        %v2954 = vunpack.c.h.b16 %v2782
        %v2955 = vunpack.c.l.b16 %v2783
        %v2956 = vunpack.c.h.b16 %v2783
        %v2957 = vunpack.c.l.b16 %v2784
        %v2958 = vunpack.c.h.b16 %v2784
        %v2959 = vunpack.c.l.b16 %v2785
        %v2960 = vunpack.c.h.b16 %v2785
        %v2961 = vunpack.c.l.b16 %v2786
        %v2962 = vunpack.c.h.b16 %v2786
        %v2963 = vunpack.c.l.b16 %v2787
        %v2964 = vunpack.c.h.b16 %v2787
        %v2965 = vunpack.c.l.b16 %v2788
        %v2966 = vunpack.c.h.b16 %v2788
        %v2967 = vunpack.c.l.b16 %v2789
        %v2968 = vunpack.c.h.b16 %v2789
        %v2969 = vunpack.c.l.b16 %v2790
        %v2970 = vunpack.c.h.b16 %v2790
        %v2971 = vunpack.c.l.b16 %v2791
        %v2972 = vunpack.c.h.b16 %v2791
        %v2973 = vunpack.c.l.b16 %v2792
        %v2974 = vunpack.c.h.b16 %v2792
        %v2975 = vunpack.c.l.b16 %v2793
        %v2976 = vunpack.c.h.b16 %v2793
        %v2977 = vunpack.c.l.b16 %v2794
        %v2978 = vunpack.c.h.b16 %v2794
        %v2979 = vunpack.c.l.b16 %v2795
        %v2980 = vunpack.c.h.b16 %v2795
        %v2981 = vunpack.c.l.b16 %v2796
        %v2982 = vunpack.c.h.b16 %v2796
        %v2983 = vunpack.c.l.b16 %v2797
        %v2984 = vunpack.c.h.b16 %v2797
        %v2985 = vunpack.c.l.b16 %v2798
        %v2986 = vunpack.c.h.b16 %v2798
        %v2987 = vunpack.c.l.b16 %v2799
        %v2988 = vunpack.c.h.b16 %v2799
        %v2989 = vunpack.c.l.b16 %v2800
        %v2990 = vunpack.c.h.b16 %v2800
        %v2991 = vunpack.c.l.b16 %v2801
        %v2992 = vunpack.c.h.b16 %v2801
        %v2993 = vunpack.c.l.b16 %v2802
        %v2994 = vunpack.c.h.b16 %v2802
        %v2995 = vpack.c.b16 %v2871, %v2867
        %v2996 = vpack.c.b16 %v2872, %v2868
        %v2997 = vpack.c.b16 %v2873, %v2869
        %v2998 = vpack.c.b16 %v2874, %v2870
        %v2999 = vpack.c.b16 %v2879, %v2875
        %v3000 = vpack.c.b16 %v2880, %v2876
        %v3001 = vpack.c.b16 %v2881, %v2877
        %v3002 = vpack.c.b16 %v2882, %v2878
        %v3003 = vpack.c.b16 %v2887, %v2883
        %v3004 = vpack.c.b16 %v2888, %v2884
        %v3005 = vpack.c.b16 %v2889, %v2885
        %v3006 = vpack.c.b16 %v2890, %v2886
        %v3007 = vpack.c.b16 %v2895, %v2891
        %v3008 = vpack.c.b16 %v2896, %v2892
        %v3009 = vpack.c.b16 %v2897, %v2893
        %v3010 = vpack.c.b16 %v2898, %v2894
        %v3011 = vpack.c.b16 %v2903, %v2899
        %v3012 = vpack.c.b16 %v2904, %v2900
        %v3013 = vpack.c.b16 %v2905, %v2901
        %v3014 = vpack.c.b16 %v2906, %v2902
        %v3015 = vpack.c.b16 %v2911, %v2907
        %v3016 = vpack.c.b16 %v2912, %v2908
        %v3017 = vpack.c.b16 %v2913, %v2909
        %v3018 = vpack.c.b16 %v2914, %v2910
        %v3019 = vpack.c.b16 %v2919, %v2915
        %v3020 = vpack.c.b16 %v2920, %v2916
        %v3021 = vpack.c.b16 %v2921, %v2917
        %v3022 = vpack.c.b16 %v2922, %v2918
        %v3023 = vpack.c.b16 %v2927, %v2923
        %v3024 = vpack.c.b16 %v2928, %v2924
        %v3025 = vpack.c.b16 %v2929, %v2925
        %v3026 = vpack.c.b16 %v2930, %v2926
        %v3027 = vpack.c.b16 %v2935, %v2931
        %v3028 = vpack.c.b16 %v2936, %v2932
        %v3029 = vpack.c.b16 %v2937, %v2933
        %v3030 = vpack.c.b16 %v2938, %v2934
        %v3031 = vpack.c.b16 %v2943, %v2939
        %v3032 = vpack.c.b16 %v2944, %v2940
        %v3033 = vpack.c.b16 %v2945, %v2941
        %v3034 = vpack.c.b16 %v2946, %v2942
        %v3035 = vpack.c.b16 %v2951, %v2947
        %v3036 = vpack.c.b16 %v2952, %v2948
        %v3037 = vpack.c.b16 %v2953, %v2949
        %v3038 = vpack.c.b16 %v2954, %v2950
        %v3039 = vpack.c.b16 %v2959, %v2955
        %v3040 = vpack.c.b16 %v2960, %v2956
        %v3041 = vpack.c.b16 %v2961, %v2957
        %v3042 = vpack.c.b16 %v2962, %v2958
        %v3043 = vpack.c.b16 %v2967, %v2963
        %v3044 = vpack.c.b16 %v2968, %v2964
        %v3045 = vpack.c.b16 %v2969, %v2965
        %v3046 = vpack.c.b16 %v2970, %v2966
        %v3047 = vpack.c.b16 %v2975, %v2971
        %v3048 = vpack.c.b16 %v2976, %v2972
        %v3049 = vpack.c.b16 %v2977, %v2973
        %v3050 = vpack.c.b16 %v2978, %v2974
        %v3051 = vpack.c.b16 %v2983, %v2979
        %v3052 = vpack.c.b16 %v2984, %v2980
        %v3053 = vpack.c.b16 %v2985, %v2981
        %v3054 = vpack.c.b16 %v2986, %v2982
        %v3055 = vpack.c.b16 %v2991, %v2987
        %v3056 = vpack.c.b16 %v2992, %v2988
        %v3057 = vpack.c.b16 %v2993, %v2989
        %v3058 = vpack.c.b16 %v2994, %v2990
        %3123 = vmatprep.subr.bf16.mxu0 %v2996
        %3124 = vmatpush1.bf16.msra.mxu0 %v2995
        %3125 = vmatprep.subr.bf16.mxu0 %v3000
        %3126 = vmatpush1.bf16.msra.mxu0 %v2999
        %3127 = vmatprep.subr.bf16.mxu0 %v3004
        %3128 = vmatpush1.bf16.msra.mxu0 %v3003
        %3129 = vmatprep.subr.bf16.mxu0 %v3008
        %3130 = vmatpush1.bf16.msra.mxu0 %v3007
        %3131 = vmatprep.subr.bf16.mxu0 %v3012
        %3132 = vmatpush1.bf16.msra.mxu0 %v3011
        %3133 = vmatprep.subr.bf16.mxu0 %v3016
        %3134 = vmatpush1.bf16.msra.mxu0 %v3015
        %3135 = vmatprep.subr.bf16.mxu0 %v3020
        %3136 = vmatpush1.bf16.msra.mxu0 %v3019
        %3137 = vmatprep.subr.bf16.mxu0 %v3024
        %3138 = vmatpush1.bf16.msra.mxu0 %v3023
        %3139 = vmatprep.subr.bf16.mxu0 %v3028
        %3140 = vmatpush1.bf16.msra.mxu0 %v3027
        %3141 = vmatprep.subr.bf16.mxu0 %v3032
        %3142 = vmatpush1.bf16.msra.mxu0 %v3031
        %3143 = vmatprep.subr.bf16.mxu0 %v3036
        %3144 = vmatpush1.bf16.msra.mxu0 %v3035
        %3145 = vmatprep.subr.bf16.mxu0 %v3040
        %3146 = vmatpush1.bf16.msra.mxu0 %v3039
        %3147 = vmatprep.subr.bf16.mxu0 %v3044
        %3148 = vmatpush1.bf16.msra.mxu0 %v3043
        %3149 = vmatprep.subr.bf16.mxu0 %v3048
        %3150 = vmatpush1.bf16.msra.mxu0 %v3047
        %3151 = vmatprep.subr.bf16.mxu0 %v3052
        %3152 = vmatpush1.bf16.msra.mxu0 %v3051
        %3153 = vmatprep.subr.bf16.mxu0 %v3056
        %3154 = vmatpush1.bf16.msra.mxu0 %v3055
        %3155 = vmatprep.mubr.bf16.mxu0 %v2737
        %3156 = vmatmul.mubr.bf16.gmra.mrb[0].mxu0 %v2736
        %v3157 = vpop.f32.mrb[0].mxu0
        %v3158 = vadd.f32 0.0, %v3157
        %v3159 = vpop.f32.mrb[0].mxu0
        %v3160 = vadd.f32 0.0, %v3159
        %v3161 = vpop.f32.mrb[0].mxu0
        %v3162 = vpop.f32.mrb[0].mxu0
        %3163 = vdwg.mxu0
        %3164 = vmatprep.subr.bf16.mxu0 %v2998
        %3165 = vmatpush1.bf16.msra.mxu0 %v2997
        %3166 = vmatprep.subr.bf16.mxu0 %v3002
        %3167 = vmatpush1.bf16.msra.mxu0 %v3001
        %3168 = vmatprep.subr.bf16.mxu0 %v3006
        %3169 = vmatpush1.bf16.msra.mxu0 %v3005
        %3170 = vmatprep.subr.bf16.mxu0 %v3010
        %3171 = vmatpush1.bf16.msra.mxu0 %v3009
        %3172 = vmatprep.subr.bf16.mxu0 %v3014
        %3173 = vmatpush1.bf16.msra.mxu0 %v3013
        %3174 = vmatprep.subr.bf16.mxu0 %v3018
        %3175 = vmatpush1.bf16.msra.mxu0 %v3017
        %3176 = vmatprep.subr.bf16.mxu0 %v3022
        %3177 = vmatpush1.bf16.msra.mxu0 %v3021
        %3178 = vmatprep.subr.bf16.mxu0 %v3026
        %3179 = vmatpush1.bf16.msra.mxu0 %v3025
        %3180 = vmatprep.subr.bf16.mxu0 %v3030
        %3181 = vmatpush1.bf16.msra.mxu0 %v3029
        %3182 = vmatprep.subr.bf16.mxu0 %v3034
        %3183 = vmatpush1.bf16.msra.mxu0 %v3033
        %3184 = vmatprep.subr.bf16.mxu0 %v3038
        %3185 = vmatpush1.bf16.msra.mxu0 %v3037
        %3186 = vmatprep.subr.bf16.mxu0 %v3042
        %3187 = vmatpush1.bf16.msra.mxu0 %v3041
        %3188 = vmatprep.subr.bf16.mxu0 %v3046
        %3189 = vmatpush1.bf16.msra.mxu0 %v3045
        %3190 = vmatprep.subr.bf16.mxu0 %v3050
        %3191 = vmatpush1.bf16.msra.mxu0 %v3049
        %3192 = vmatprep.subr.bf16.mxu0 %v3054
        %3193 = vmatpush1.bf16.msra.mxu0 %v3053
        %3194 = vmatprep.subr.bf16.mxu0 %v3058
        %3195 = vmatpush1.bf16.msra.mxu0 %v3057
        %3196 = vmatprep.mubr.bf16.mxu0 %v2737
        %3197 = vmatmul.mubr.bf16.gmra.mrb[0].mxu0 %v2736
        %v3198 = vpop.f32.mrb[0].mxu0
        %v3199 = vadd.f32 0.0, %v3198
        %v3200 = vpop.f32.mrb[0].mxu0
        %v3201 = vadd.f32 0.0, %v3200
        %v3202 = vpop.f32.mrb[0].mxu0
        %v3203 = vpop.f32.mrb[0].mxu0
        %3204 = vdwg.mxu0
        %v3269 = vunpack.c.l.b16 %v2672
        %v3270 = vunpack.c.h.b16 %v2672
        %v3271 = vunpack.c.l.b16 %v2673
        %v3272 = vunpack.c.h.b16 %v2673
        %v3273 = vunpack.c.l.b16 %v2674
        %v3274 = vunpack.c.h.b16 %v2674
        %v3275 = vunpack.c.l.b16 %v2675
        %v3276 = vunpack.c.h.b16 %v2675
        %v3277 = vunpack.c.l.b16 %v2676
        %v3278 = vunpack.c.h.b16 %v2676
        %v3279 = vunpack.c.l.b16 %v2677
        %v3280 = vunpack.c.h.b16 %v2677
        %v3281 = vunpack.c.l.b16 %v2678
        %v3282 = vunpack.c.h.b16 %v2678
        %v3283 = vunpack.c.l.b16 %v2679
        %v3284 = vunpack.c.h.b16 %v2679
        %v3285 = vunpack.c.l.b16 %v2680
        %v3286 = vunpack.c.h.b16 %v2680
        %v3287 = vunpack.c.l.b16 %v2681
        %v3288 = vunpack.c.h.b16 %v2681
        %v3289 = vunpack.c.l.b16 %v2682
        %v3290 = vunpack.c.h.b16 %v2682
        %v3291 = vunpack.c.l.b16 %v2683
        %v3292 = vunpack.c.h.b16 %v2683
        %v3293 = vunpack.c.l.b16 %v2684
        %v3294 = vunpack.c.h.b16 %v2684
        %v3295 = vunpack.c.l.b16 %v2685
        %v3296 = vunpack.c.h.b16 %v2685
        %v3297 = vunpack.c.l.b16 %v2686
        %v3298 = vunpack.c.h.b16 %v2686
        %v3299 = vunpack.c.l.b16 %v2687
        %v3300 = vunpack.c.h.b16 %v2687
        %v3301 = vunpack.c.l.b16 %v2688
        %v3302 = vunpack.c.h.b16 %v2688
        %v3303 = vunpack.c.l.b16 %v2689
        %v3304 = vunpack.c.h.b16 %v2689
        %v3305 = vunpack.c.l.b16 %v2690
        %v3306 = vunpack.c.h.b16 %v2690
        %v3307 = vunpack.c.l.b16 %v2691
        %v3308 = vunpack.c.h.b16 %v2691
        %v3309 = vunpack.c.l.b16 %v2692
        %v3310 = vunpack.c.h.b16 %v2692
        %v3311 = vunpack.c.l.b16 %v2693
        %v3312 = vunpack.c.h.b16 %v2693
        %v3313 = vunpack.c.l.b16 %v2694
        %v3314 = vunpack.c.h.b16 %v2694
        %v3315 = vunpack.c.l.b16 %v2695
        %v3316 = vunpack.c.h.b16 %v2695
        %v3317 = vunpack.c.l.b16 %v2696
        %v3318 = vunpack.c.h.b16 %v2696
        %v3319 = vunpack.c.l.b16 %v2697
        %v3320 = vunpack.c.h.b16 %v2697
        %v3321 = vunpack.c.l.b16 %v2698
        %v3322 = vunpack.c.h.b16 %v2698
        %v3323 = vunpack.c.l.b16 %v2699
        %v3324 = vunpack.c.h.b16 %v2699
        %v3325 = vunpack.c.l.b16 %v2700
        %v3326 = vunpack.c.h.b16 %v2700
        %v3327 = vunpack.c.l.b16 %v2701
        %v3328 = vunpack.c.h.b16 %v2701
        %v3329 = vunpack.c.l.b16 %v2702
        %v3330 = vunpack.c.h.b16 %v2702
        %v3331 = vunpack.c.l.b16 %v2703
        %v3332 = vunpack.c.h.b16 %v2703
        %v3333 = vunpack.c.l.b16 %v2704
        %v3334 = vunpack.c.h.b16 %v2704
        %v3335 = vunpack.c.l.b16 %v2705
        %v3336 = vunpack.c.h.b16 %v2705
        %v3337 = vunpack.c.l.b16 %v2706
        %v3338 = vunpack.c.h.b16 %v2706
        %v3339 = vunpack.c.l.b16 %v2707
        %v3340 = vunpack.c.h.b16 %v2707
        %v3341 = vunpack.c.l.b16 %v2708
        %v3342 = vunpack.c.h.b16 %v2708
        %v3343 = vunpack.c.l.b16 %v2709
        %v3344 = vunpack.c.h.b16 %v2709
        %v3345 = vunpack.c.l.b16 %v2710
        %v3346 = vunpack.c.h.b16 %v2710
        %v3347 = vunpack.c.l.b16 %v2711
        %v3348 = vunpack.c.h.b16 %v2711
        %v3349 = vunpack.c.l.b16 %v2712
        %v3350 = vunpack.c.h.b16 %v2712
        %v3351 = vunpack.c.l.b16 %v2713
        %v3352 = vunpack.c.h.b16 %v2713
        %v3353 = vunpack.c.l.b16 %v2714
        %v3354 = vunpack.c.h.b16 %v2714
        %v3355 = vunpack.c.l.b16 %v2715
        %v3356 = vunpack.c.h.b16 %v2715
        %v3357 = vunpack.c.l.b16 %v2716
        %v3358 = vunpack.c.h.b16 %v2716
        %v3359 = vunpack.c.l.b16 %v2717
        %v3360 = vunpack.c.h.b16 %v2717
        %v3361 = vunpack.c.l.b16 %v2718
        %v3362 = vunpack.c.h.b16 %v2718
        %v3363 = vunpack.c.l.b16 %v2719
        %v3364 = vunpack.c.h.b16 %v2719
        %v3365 = vunpack.c.l.b16 %v2720
        %v3366 = vunpack.c.h.b16 %v2720
        %v3367 = vunpack.c.l.b16 %v2721
        %v3368 = vunpack.c.h.b16 %v2721
        %v3369 = vunpack.c.l.b16 %v2722
        %v3370 = vunpack.c.h.b16 %v2722
        %v3371 = vunpack.c.l.b16 %v2723
        %v3372 = vunpack.c.h.b16 %v2723
        %v3373 = vunpack.c.l.b16 %v2724
        %v3374 = vunpack.c.h.b16 %v2724
        %v3375 = vunpack.c.l.b16 %v2725
        %v3376 = vunpack.c.h.b16 %v2725
        %v3377 = vunpack.c.l.b16 %v2726
        %v3378 = vunpack.c.h.b16 %v2726
        %v3379 = vunpack.c.l.b16 %v2727
        %v3380 = vunpack.c.h.b16 %v2727
        %v3381 = vunpack.c.l.b16 %v2728
        %v3382 = vunpack.c.h.b16 %v2728
        %v3383 = vunpack.c.l.b16 %v2729
        %v3384 = vunpack.c.h.b16 %v2729
        %v3385 = vunpack.c.l.b16 %v2730
        %v3386 = vunpack.c.h.b16 %v2730
        %v3387 = vunpack.c.l.b16 %v2731
        %v3388 = vunpack.c.h.b16 %v2731
        %v3389 = vunpack.c.l.b16 %v2732
        %v3390 = vunpack.c.h.b16 %v2732
        %v3391 = vunpack.c.l.b16 %v2733
        %v3392 = vunpack.c.h.b16 %v2733
        %v3393 = vunpack.c.l.b16 %v2734
        %v3394 = vunpack.c.h.b16 %v2734
        %v3395 = vunpack.c.l.b16 %v2735
        %v3396 = vunpack.c.h.b16 %v2735
        %v3397 = vpack.c.b16 %v3273, %v3269
        %v3398 = vpack.c.b16 %v3274, %v3270
        %v3399 = vpack.c.b16 %v3275, %v3271
        %v3400 = vpack.c.b16 %v3276, %v3272
        %v3401 = vpack.c.b16 %v3281, %v3277
        %v3402 = vpack.c.b16 %v3282, %v3278
        %v3403 = vpack.c.b16 %v3283, %v3279
        %v3404 = vpack.c.b16 %v3284, %v3280
        %v3405 = vpack.c.b16 %v3289, %v3285
        %v3406 = vpack.c.b16 %v3290, %v3286
        %v3407 = vpack.c.b16 %v3291, %v3287
        %v3408 = vpack.c.b16 %v3292, %v3288
        %v3409 = vpack.c.b16 %v3297, %v3293
        %v3410 = vpack.c.b16 %v3298, %v3294
        %v3411 = vpack.c.b16 %v3299, %v3295
        %v3412 = vpack.c.b16 %v3300, %v3296
        %v3413 = vpack.c.b16 %v3305, %v3301
        %v3414 = vpack.c.b16 %v3306, %v3302
        %v3415 = vpack.c.b16 %v3307, %v3303
        %v3416 = vpack.c.b16 %v3308, %v3304
        %v3417 = vpack.c.b16 %v3313, %v3309
        %v3418 = vpack.c.b16 %v3314, %v3310
        %v3419 = vpack.c.b16 %v3315, %v3311
        %v3420 = vpack.c.b16 %v3316, %v3312
        %v3421 = vpack.c.b16 %v3321, %v3317
        %v3422 = vpack.c.b16 %v3322, %v3318
        %v3423 = vpack.c.b16 %v3323, %v3319
        %v3424 = vpack.c.b16 %v3324, %v3320
        %v3425 = vpack.c.b16 %v3329, %v3325
        %v3426 = vpack.c.b16 %v3330, %v3326
        %v3427 = vpack.c.b16 %v3331, %v3327
        %v3428 = vpack.c.b16 %v3332, %v3328
        %v3429 = vpack.c.b16 %v3337, %v3333
        %v3430 = vpack.c.b16 %v3338, %v3334
        %v3431 = vpack.c.b16 %v3339, %v3335
        %v3432 = vpack.c.b16 %v3340, %v3336
        %v3433 = vpack.c.b16 %v3345, %v3341
        %v3434 = vpack.c.b16 %v3346, %v3342
        %v3435 = vpack.c.b16 %v3347, %v3343
        %v3436 = vpack.c.b16 %v3348, %v3344
        %v3437 = vpack.c.b16 %v3353, %v3349
        %v3438 = vpack.c.b16 %v3354, %v3350
        %v3439 = vpack.c.b16 %v3355, %v3351
        %v3440 = vpack.c.b16 %v3356, %v3352
        %v3441 = vpack.c.b16 %v3361, %v3357
        %v3442 = vpack.c.b16 %v3362, %v3358
        %v3443 = vpack.c.b16 %v3363, %v3359
        %v3444 = vpack.c.b16 %v3364, %v3360
        %v3445 = vpack.c.b16 %v3369, %v3365
        %v3446 = vpack.c.b16 %v3370, %v3366
        %v3447 = vpack.c.b16 %v3371, %v3367
        %v3448 = vpack.c.b16 %v3372, %v3368
        %v3449 = vpack.c.b16 %v3377, %v3373
        %v3450 = vpack.c.b16 %v3378, %v3374
        %v3451 = vpack.c.b16 %v3379, %v3375
        %v3452 = vpack.c.b16 %v3380, %v3376
        %v3453 = vpack.c.b16 %v3385, %v3381
        %v3454 = vpack.c.b16 %v3386, %v3382
        %v3455 = vpack.c.b16 %v3387, %v3383
        %v3456 = vpack.c.b16 %v3388, %v3384
        %v3457 = vpack.c.b16 %v3393, %v3389
        %v3458 = vpack.c.b16 %v3394, %v3390
        %v3459 = vpack.c.b16 %v3395, %v3391
        %v3460 = vpack.c.b16 %v3396, %v3392
        %3525 = vmatprep.subr.bf16.mxu0 %v3398
        %3526 = vmatpush1.bf16.msra.mxu0 %v3397
        %3527 = vmatprep.subr.bf16.mxu0 %v3402
        %3528 = vmatpush1.bf16.msra.mxu0 %v3401
        %3529 = vmatprep.subr.bf16.mxu0 %v3406
        %3530 = vmatpush1.bf16.msra.mxu0 %v3405
        %3531 = vmatprep.subr.bf16.mxu0 %v3410
        %3532 = vmatpush1.bf16.msra.mxu0 %v3409
        %3533 = vmatprep.subr.bf16.mxu0 %v3414
        %3534 = vmatpush1.bf16.msra.mxu0 %v3413
        %3535 = vmatprep.subr.bf16.mxu0 %v3418
        %3536 = vmatpush1.bf16.msra.mxu0 %v3417
        %3537 = vmatprep.subr.bf16.mxu0 %v3422
        %3538 = vmatpush1.bf16.msra.mxu0 %v3421
        %3539 = vmatprep.subr.bf16.mxu0 %v3426
        %3540 = vmatpush1.bf16.msra.mxu0 %v3425
        %3541 = vmatprep.subr.bf16.mxu0 %v3430
        %3542 = vmatpush1.bf16.msra.mxu0 %v3429
        %3543 = vmatprep.subr.bf16.mxu0 %v3434
        %3544 = vmatpush1.bf16.msra.mxu0 %v3433
        %3545 = vmatprep.subr.bf16.mxu0 %v3438
        %3546 = vmatpush1.bf16.msra.mxu0 %v3437
        %3547 = vmatprep.subr.bf16.mxu0 %v3442
        %3548 = vmatpush1.bf16.msra.mxu0 %v3441
        %3549 = vmatprep.subr.bf16.mxu0 %v3446
        %3550 = vmatpush1.bf16.msra.mxu0 %v3445
        %3551 = vmatprep.subr.bf16.mxu0 %v3450
        %3552 = vmatpush1.bf16.msra.mxu0 %v3449
        %3553 = vmatprep.subr.bf16.mxu0 %v3454
        %3554 = vmatpush1.bf16.msra.mxu0 %v3453
        %3555 = vmatprep.subr.bf16.mxu0 %v3458
        %3556 = vmatpush1.bf16.msra.mxu0 %v3457
        %3557 = vmatprep.mubr.bf16.mxu0 %v2671
        %3558 = vmatmul.mubr.bf16.gmra.mrb[0].mxu0 %v2670
        %v3559 = vpop.f32.mrb[0].mxu0
        %v3560 = vadd.f32 %v3158, %v3559
        %v3561 = vpop.f32.mrb[0].mxu0
        %v3562 = vadd.f32 %v3160, %v3561
        %v3563 = vpop.f32.mrb[0].mxu0
        %v3564 = vpop.f32.mrb[0].mxu0
        %3565 = vdwg.mxu0
        %3566 = vmatprep.subr.bf16.mxu0 %v3400
        %3567 = vmatpush1.bf16.msra.mxu0 %v3399
        %3568 = vmatprep.subr.bf16.mxu0 %v3404
        %3569 = vmatpush1.bf16.msra.mxu0 %v3403
        %3570 = vmatprep.subr.bf16.mxu0 %v3408
        %3571 = vmatpush1.bf16.msra.mxu0 %v3407
        %3572 = vmatprep.subr.bf16.mxu0 %v3412
        %3573 = vmatpush1.bf16.msra.mxu0 %v3411
        %3574 = vmatprep.subr.bf16.mxu0 %v3416
        %3575 = vmatpush1.bf16.msra.mxu0 %v3415
        %3576 = vmatprep.subr.bf16.mxu0 %v3420
        %3577 = vmatpush1.bf16.msra.mxu0 %v3419
        %3578 = vmatprep.subr.bf16.mxu0 %v3424
        %3579 = vmatpush1.bf16.msra.mxu0 %v3423
        %3580 = vmatprep.subr.bf16.mxu0 %v3428
        %3581 = vmatpush1.bf16.msra.mxu0 %v3427
        %3582 = vmatprep.subr.bf16.mxu0 %v3432
        %3583 = vmatpush1.bf16.msra.mxu0 %v3431
        %3584 = vmatprep.subr.bf16.mxu0 %v3436
        %3585 = vmatpush1.bf16.msra.mxu0 %v3435
        %3586 = vmatprep.subr.bf16.mxu0 %v3440
        %3587 = vmatpush1.bf16.msra.mxu0 %v3439
        %3588 = vmatprep.subr.bf16.mxu0 %v3444
        %3589 = vmatpush1.bf16.msra.mxu0 %v3443
        %3590 = vmatprep.subr.bf16.mxu0 %v3448
        %3591 = vmatpush1.bf16.msra.mxu0 %v3447
        %3592 = vmatprep.subr.bf16.mxu0 %v3452
        %3593 = vmatpush1.bf16.msra.mxu0 %v3451
        %3594 = vmatprep.subr.bf16.mxu0 %v3456
        %3595 = vmatpush1.bf16.msra.mxu0 %v3455
        %3596 = vmatprep.subr.bf16.mxu0 %v3460
        %3597 = vmatpush1.bf16.msra.mxu0 %v3459
        %3598 = vmatprep.mubr.bf16.mxu0 %v2671
        %3599 = vmatmul.mubr.bf16.gmra.mrb[0].mxu0 %v2670
        %v3600 = vpop.f32.mrb[0].mxu0
        %v3601 = vadd.f32 %v3199, %v3600
        %v3602 = vpop.f32.mrb[0].mxu0
        %v3603 = vadd.f32 %v3201, %v3602
        %v3604 = vpop.f32.mrb[0].mxu0
        %v3605 = vpop.f32.mrb[0].mxu0
        %3606 = vdwg.mxu0
        %v3607 = vpack.c.bf16 %v2668, %v2668
        %v3608 = vpack.c.bf16 %v2669, %v2669
        %s3609 = scalar_lea.vmem [#allocation16], 1024
        %v3610 = vld [vmem:[%s3609] sm:$0xff]
        %v3611 = vld [vmem:[%s3609 + $0x8] sm:$0xff]
        %v3612 = vld [vmem:[%s3609 + $0x10] sm:$0xff]
        %v3613 = vld [vmem:[%s3609 + $0x18] sm:$0xff]
        %v3614 = vld [vmem:[%s3609 + $0x20] sm:$0xff]
        %v3615 = vld [vmem:[%s3609 + $0x28] sm:$0xff]
        %v3616 = vld [vmem:[%s3609 + $0x30] sm:$0xff]
        %v3617 = vld [vmem:[%s3609 + $0x38] sm:$0xff]
        %v3618 = vld [vmem:[%s3609 + $0x40] sm:$0xff]
        %v3619 = vld [vmem:[%s3609 + $0x48] sm:$0xff]
        %v3620 = vld [vmem:[%s3609 + $0x50] sm:$0xff]
        %v3621 = vld [vmem:[%s3609 + $0x58] sm:$0xff]
        %v3622 = vld [vmem:[%s3609 + $0x60] sm:$0xff]
        %v3623 = vld [vmem:[%s3609 + $0x68] sm:$0xff]
        %v3624 = vld [vmem:[%s3609 + $0x70] sm:$0xff]
        %v3625 = vld [vmem:[%s3609 + $0x78] sm:$0xff]
        %v3626 = vld [vmem:[%s3609 + $0x80] sm:$0xff]
        %v3627 = vld [vmem:[%s3609 + $0x88] sm:$0xff]
        %v3628 = vld [vmem:[%s3609 + $0x90] sm:$0xff]
        %v3629 = vld [vmem:[%s3609 + $0x98] sm:$0xff]
        %v3630 = vld [vmem:[%s3609 + $0xa0] sm:$0xff]
        %v3631 = vld [vmem:[%s3609 + $0xa8] sm:$0xff]
        %v3632 = vld [vmem:[%s3609 + $0xb0] sm:$0xff]
        %v3633 = vld [vmem:[%s3609 + $0xb8] sm:$0xff]
        %v3634 = vld [vmem:[%s3609 + $0xc0] sm:$0xff]
        %v3635 = vld [vmem:[%s3609 + $0xc8] sm:$0xff]
        %v3636 = vld [vmem:[%s3609 + $0xd0] sm:$0xff]
        %v3637 = vld [vmem:[%s3609 + $0xd8] sm:$0xff]
        %v3638 = vld [vmem:[%s3609 + $0xe0] sm:$0xff]
        %v3639 = vld [vmem:[%s3609 + $0xe8] sm:$0xff]
        %v3640 = vld [vmem:[%s3609 + $0xf0] sm:$0xff]
        %v3641 = vld [vmem:[%s3609 + $0xf8] sm:$0xff]
        %v3642 = vld [vmem:[%s3609 + $0x100] sm:$0xff]
        %v3643 = vld [vmem:[%s3609 + $0x108] sm:$0xff]
        %v3644 = vld [vmem:[%s3609 + $0x110] sm:$0xff]
        %v3645 = vld [vmem:[%s3609 + $0x118] sm:$0xff]
        %v3646 = vld [vmem:[%s3609 + $0x120] sm:$0xff]
        %v3647 = vld [vmem:[%s3609 + $0x128] sm:$0xff]
        %v3648 = vld [vmem:[%s3609 + $0x130] sm:$0xff]
        %v3649 = vld [vmem:[%s3609 + $0x138] sm:$0xff]
        %v3650 = vld [vmem:[%s3609 + $0x140] sm:$0xff]
        %v3651 = vld [vmem:[%s3609 + $0x148] sm:$0xff]
        %v3652 = vld [vmem:[%s3609 + $0x150] sm:$0xff]
        %v3653 = vld [vmem:[%s3609 + $0x158] sm:$0xff]
        %v3654 = vld [vmem:[%s3609 + $0x160] sm:$0xff]
        %v3655 = vld [vmem:[%s3609 + $0x168] sm:$0xff]
        %v3656 = vld [vmem:[%s3609 + $0x170] sm:$0xff]
        %v3657 = vld [vmem:[%s3609 + $0x178] sm:$0xff]
        %v3658 = vld [vmem:[%s3609 + $0x180] sm:$0xff]
        %v3659 = vld [vmem:[%s3609 + $0x188] sm:$0xff]
        %v3660 = vld [vmem:[%s3609 + $0x190] sm:$0xff]
        %v3661 = vld [vmem:[%s3609 + $0x198] sm:$0xff]
        %v3662 = vld [vmem:[%s3609 + $0x1a0] sm:$0xff]
        %v3663 = vld [vmem:[%s3609 + $0x1a8] sm:$0xff]
        %v3664 = vld [vmem:[%s3609 + $0x1b0] sm:$0xff]
        %v3665 = vld [vmem:[%s3609 + $0x1b8] sm:$0xff]
        %v3666 = vld [vmem:[%s3609 + $0x1c0] sm:$0xff]
        %v3667 = vld [vmem:[%s3609 + $0x1c8] sm:$0xff]
        %v3668 = vld [vmem:[%s3609 + $0x1d0] sm:$0xff]
        %v3669 = vld [vmem:[%s3609 + $0x1d8] sm:$0xff]
        %v3670 = vld [vmem:[%s3609 + $0x1e0] sm:$0xff]
        %v3671 = vld [vmem:[%s3609 + $0x1e8] sm:$0xff]
        %v3672 = vld [vmem:[%s3609 + $0x1f0] sm:$0xff]
        %v3673 = vld [vmem:[%s3609 + $0x1f8] sm:$0xff]
        %v3738 = vunpack.c.l.b16 %v3610
        %v3739 = vunpack.c.h.b16 %v3610
        %v3740 = vunpack.c.l.b16 %v3611
        %v3741 = vunpack.c.h.b16 %v3611
        %v3742 = vunpack.c.l.b16 %v3612
        %v3743 = vunpack.c.h.b16 %v3612
        %v3744 = vunpack.c.l.b16 %v3613
        %v3745 = vunpack.c.h.b16 %v3613
        %v3746 = vunpack.c.l.b16 %v3614
        %v3747 = vunpack.c.h.b16 %v3614
        %v3748 = vunpack.c.l.b16 %v3615
        %v3749 = vunpack.c.h.b16 %v3615
        %v3750 = vunpack.c.l.b16 %v3616
        %v3751 = vunpack.c.h.b16 %v3616
        %v3752 = vunpack.c.l.b16 %v3617
        %v3753 = vunpack.c.h.b16 %v3617
        %v3754 = vunpack.c.l.b16 %v3618
        %v3755 = vunpack.c.h.b16 %v3618
        %v3756 = vunpack.c.l.b16 %v3619
        %v3757 = vunpack.c.h.b16 %v3619
        %v3758 = vunpack.c.l.b16 %v3620
        %v3759 = vunpack.c.h.b16 %v3620
        %v3760 = vunpack.c.l.b16 %v3621
        %v3761 = vunpack.c.h.b16 %v3621
        %v3762 = vunpack.c.l.b16 %v3622
        %v3763 = vunpack.c.h.b16 %v3622
        %v3764 = vunpack.c.l.b16 %v3623
        %v3765 = vunpack.c.h.b16 %v3623
        %v3766 = vunpack.c.l.b16 %v3624
        %v3767 = vunpack.c.h.b16 %v3624
        %v3768 = vunpack.c.l.b16 %v3625
        %v3769 = vunpack.c.h.b16 %v3625
        %v3770 = vunpack.c.l.b16 %v3626
        %v3771 = vunpack.c.h.b16 %v3626
        %v3772 = vunpack.c.l.b16 %v3627
        %v3773 = vunpack.c.h.b16 %v3627
        %v3774 = vunpack.c.l.b16 %v3628
        %v3775 = vunpack.c.h.b16 %v3628
        %v3776 = vunpack.c.l.b16 %v3629
        %v3777 = vunpack.c.h.b16 %v3629
        %v3778 = vunpack.c.l.b16 %v3630
        %v3779 = vunpack.c.h.b16 %v3630
        %v3780 = vunpack.c.l.b16 %v3631
        %v3781 = vunpack.c.h.b16 %v3631
        %v3782 = vunpack.c.l.b16 %v3632
        %v3783 = vunpack.c.h.b16 %v3632
        %v3784 = vunpack.c.l.b16 %v3633
        %v3785 = vunpack.c.h.b16 %v3633
        %v3786 = vunpack.c.l.b16 %v3634
        %v3787 = vunpack.c.h.b16 %v3634
        %v3788 = vunpack.c.l.b16 %v3635
        %v3789 = vunpack.c.h.b16 %v3635
        %v3790 = vunpack.c.l.b16 %v3636
        %v3791 = vunpack.c.h.b16 %v3636
        %v3792 = vunpack.c.l.b16 %v3637
        %v3793 = vunpack.c.h.b16 %v3637
        %v3794 = vunpack.c.l.b16 %v3638
        %v3795 = vunpack.c.h.b16 %v3638
        %v3796 = vunpack.c.l.b16 %v3639
        %v3797 = vunpack.c.h.b16 %v3639
        %v3798 = vunpack.c.l.b16 %v3640
        %v3799 = vunpack.c.h.b16 %v3640
        %v3800 = vunpack.c.l.b16 %v3641
        %v3801 = vunpack.c.h.b16 %v3641
        %v3802 = vunpack.c.l.b16 %v3642
        %v3803 = vunpack.c.h.b16 %v3642
        %v3804 = vunpack.c.l.b16 %v3643
        %v3805 = vunpack.c.h.b16 %v3643
        %v3806 = vunpack.c.l.b16 %v3644
        %v3807 = vunpack.c.h.b16 %v3644
        %v3808 = vunpack.c.l.b16 %v3645
        %v3809 = vunpack.c.h.b16 %v3645
        %v3810 = vunpack.c.l.b16 %v3646
        %v3811 = vunpack.c.h.b16 %v3646
        %v3812 = vunpack.c.l.b16 %v3647
        %v3813 = vunpack.c.h.b16 %v3647
        %v3814 = vunpack.c.l.b16 %v3648
        %v3815 = vunpack.c.h.b16 %v3648
        %v3816 = vunpack.c.l.b16 %v3649
        %v3817 = vunpack.c.h.b16 %v3649
        %v3818 = vunpack.c.l.b16 %v3650
        %v3819 = vunpack.c.h.b16 %v3650
        %v3820 = vunpack.c.l.b16 %v3651
        %v3821 = vunpack.c.h.b16 %v3651
        %v3822 = vunpack.c.l.b16 %v3652
        %v3823 = vunpack.c.h.b16 %v3652
        %v3824 = vunpack.c.l.b16 %v3653
        %v3825 = vunpack.c.h.b16 %v3653
        %v3826 = vunpack.c.l.b16 %v3654
        %v3827 = vunpack.c.h.b16 %v3654
        %v3828 = vunpack.c.l.b16 %v3655
        %v3829 = vunpack.c.h.b16 %v3655
        %v3830 = vunpack.c.l.b16 %v3656
        %v3831 = vunpack.c.h.b16 %v3656
        %v3832 = vunpack.c.l.b16 %v3657
        %v3833 = vunpack.c.h.b16 %v3657
        %v3834 = vunpack.c.l.b16 %v3658
        %v3835 = vunpack.c.h.b16 %v3658
        %v3836 = vunpack.c.l.b16 %v3659
        %v3837 = vunpack.c.h.b16 %v3659
        %v3838 = vunpack.c.l.b16 %v3660
        %v3839 = vunpack.c.h.b16 %v3660
        %v3840 = vunpack.c.l.b16 %v3661
        %v3841 = vunpack.c.h.b16 %v3661
        %v3842 = vunpack.c.l.b16 %v3662
        %v3843 = vunpack.c.h.b16 %v3662
        %v3844 = vunpack.c.l.b16 %v3663
        %v3845 = vunpack.c.h.b16 %v3663
        %v3846 = vunpack.c.l.b16 %v3664
        %v3847 = vunpack.c.h.b16 %v3664
        %v3848 = vunpack.c.l.b16 %v3665
        %v3849 = vunpack.c.h.b16 %v3665
        %v3850 = vunpack.c.l.b16 %v3666
        %v3851 = vunpack.c.h.b16 %v3666
        %v3852 = vunpack.c.l.b16 %v3667
        %v3853 = vunpack.c.h.b16 %v3667
        %v3854 = vunpack.c.l.b16 %v3668
        %v3855 = vunpack.c.h.b16 %v3668
        %v3856 = vunpack.c.l.b16 %v3669
        %v3857 = vunpack.c.h.b16 %v3669
        %v3858 = vunpack.c.l.b16 %v3670
        %v3859 = vunpack.c.h.b16 %v3670
        %v3860 = vunpack.c.l.b16 %v3671
        %v3861 = vunpack.c.h.b16 %v3671
        %v3862 = vunpack.c.l.b16 %v3672
        %v3863 = vunpack.c.h.b16 %v3672
        %v3864 = vunpack.c.l.b16 %v3673
        %v3865 = vunpack.c.h.b16 %v3673
        %v3866 = vpack.c.b16 %v3742, %v3738
        %v3867 = vpack.c.b16 %v3743, %v3739
        %v3868 = vpack.c.b16 %v3744, %v3740
        %v3869 = vpack.c.b16 %v3745, %v3741
        %v3870 = vpack.c.b16 %v3750, %v3746
        %v3871 = vpack.c.b16 %v3751, %v3747
        %v3872 = vpack.c.b16 %v3752, %v3748
        %v3873 = vpack.c.b16 %v3753, %v3749
        %v3874 = vpack.c.b16 %v3758, %v3754
        %v3875 = vpack.c.b16 %v3759, %v3755
        %v3876 = vpack.c.b16 %v3760, %v3756
        %v3877 = vpack.c.b16 %v3761, %v3757
        %v3878 = vpack.c.b16 %v3766, %v3762
        %v3879 = vpack.c.b16 %v3767, %v3763
        %v3880 = vpack.c.b16 %v3768, %v3764
        %v3881 = vpack.c.b16 %v3769, %v3765
        %v3882 = vpack.c.b16 %v3774, %v3770
        %v3883 = vpack.c.b16 %v3775, %v3771
        %v3884 = vpack.c.b16 %v3776, %v3772
        %v3885 = vpack.c.b16 %v3777, %v3773
        %v3886 = vpack.c.b16 %v3782, %v3778
        %v3887 = vpack.c.b16 %v3783, %v3779
        %v3888 = vpack.c.b16 %v3784, %v3780
        %v3889 = vpack.c.b16 %v3785, %v3781
        %v3890 = vpack.c.b16 %v3790, %v3786
        %v3891 = vpack.c.b16 %v3791, %v3787
        %v3892 = vpack.c.b16 %v3792, %v3788
        %v3893 = vpack.c.b16 %v3793, %v3789
        %v3894 = vpack.c.b16 %v3798, %v3794
        %v3895 = vpack.c.b16 %v3799, %v3795
        %v3896 = vpack.c.b16 %v3800, %v3796
        %v3897 = vpack.c.b16 %v3801, %v3797
        %v3898 = vpack.c.b16 %v3806, %v3802
        %v3899 = vpack.c.b16 %v3807, %v3803
        %v3900 = vpack.c.b16 %v3808, %v3804
        %v3901 = vpack.c.b16 %v3809, %v3805
        %v3902 = vpack.c.b16 %v3814, %v3810
        %v3903 = vpack.c.b16 %v3815, %v3811
        %v3904 = vpack.c.b16 %v3816, %v3812
        %v3905 = vpack.c.b16 %v3817, %v3813
        %v3906 = vpack.c.b16 %v3822, %v3818
        %v3907 = vpack.c.b16 %v3823, %v3819
        %v3908 = vpack.c.b16 %v3824, %v3820
        %v3909 = vpack.c.b16 %v3825, %v3821
        %v3910 = vpack.c.b16 %v3830, %v3826
        %v3911 = vpack.c.b16 %v3831, %v3827
        %v3912 = vpack.c.b16 %v3832, %v3828
        %v3913 = vpack.c.b16 %v3833, %v3829
        %v3914 = vpack.c.b16 %v3838, %v3834
        %v3915 = vpack.c.b16 %v3839, %v3835
        %v3916 = vpack.c.b16 %v3840, %v3836
        %v3917 = vpack.c.b16 %v3841, %v3837
        %v3918 = vpack.c.b16 %v3846, %v3842
        %v3919 = vpack.c.b16 %v3847, %v3843
        %v3920 = vpack.c.b16 %v3848, %v3844
        %v3921 = vpack.c.b16 %v3849, %v3845
        %v3922 = vpack.c.b16 %v3854, %v3850
        %v3923 = vpack.c.b16 %v3855, %v3851
        %v3924 = vpack.c.b16 %v3856, %v3852
        %v3925 = vpack.c.b16 %v3857, %v3853
        %v3926 = vpack.c.b16 %v3862, %v3858
        %v3927 = vpack.c.b16 %v3863, %v3859
        %v3928 = vpack.c.b16 %v3864, %v3860
        %v3929 = vpack.c.b16 %v3865, %v3861
        %3994 = vmatprep.subr.bf16.mxu0 %v3867
        %3995 = vmatpush1.bf16.msra.mxu0 %v3866
        %3996 = vmatprep.subr.bf16.mxu0 %v3871
        %3997 = vmatpush1.bf16.msra.mxu0 %v3870
        %3998 = vmatprep.subr.bf16.mxu0 %v3875
        %3999 = vmatpush1.bf16.msra.mxu0 %v3874
        %4000 = vmatprep.subr.bf16.mxu0 %v3879
        %4001 = vmatpush1.bf16.msra.mxu0 %v3878
        %4002 = vmatprep.subr.bf16.mxu0 %v3883
        %4003 = vmatpush1.bf16.msra.mxu0 %v3882
        %4004 = vmatprep.subr.bf16.mxu0 %v3887
        %4005 = vmatpush1.bf16.msra.mxu0 %v3886
        %4006 = vmatprep.subr.bf16.mxu0 %v3891
        %4007 = vmatpush1.bf16.msra.mxu0 %v3890
        %4008 = vmatprep.subr.bf16.mxu0 %v3895
        %4009 = vmatpush1.bf16.msra.mxu0 %v3894
        %4010 = vmatprep.subr.bf16.mxu0 %v3899
        %4011 = vmatpush1.bf16.msra.mxu0 %v3898
        %4012 = vmatprep.subr.bf16.mxu0 %v3903
        %4013 = vmatpush1.bf16.msra.mxu0 %v3902
        %4014 = vmatprep.subr.bf16.mxu0 %v3907
        %4015 = vmatpush1.bf16.msra.mxu0 %v3906
        %4016 = vmatprep.subr.bf16.mxu0 %v3911
        %4017 = vmatpush1.bf16.msra.mxu0 %v3910
        %4018 = vmatprep.subr.bf16.mxu0 %v3915
        %4019 = vmatpush1.bf16.msra.mxu0 %v3914
        %4020 = vmatprep.subr.bf16.mxu0 %v3919
        %4021 = vmatpush1.bf16.msra.mxu0 %v3918
        %4022 = vmatprep.subr.bf16.mxu0 %v3923
        %4023 = vmatpush1.bf16.msra.mxu0 %v3922
        %4024 = vmatprep.subr.bf16.mxu0 %v3927
        %4025 = vmatpush1.bf16.msra.mxu0 %v3926
        %4026 = vmatprep.mubr.bf16.mxu0 %v3608
        %4027 = vmatmul.mubr.bf16.gmra.mrb[0].mxu0 %v3607
        %v4028 = vpop.f32.mrb[0].mxu0
        %v4029 = vadd.f32 0.0, %v4028
        %v4030 = vpop.f32.mrb[0].mxu0
        %v4031 = vadd.f32 0.0, %v4030
        %v4032 = vpop.f32.mrb[0].mxu0
        %v4033 = vpop.f32.mrb[0].mxu0
        %4034 = vdwg.mxu0
        %4035 = vmatprep.subr.bf16.mxu0 %v3869
        %4036 = vmatpush1.bf16.msra.mxu0 %v3868
        %4037 = vmatprep.subr.bf16.mxu0 %v3873
        %4038 = vmatpush1.bf16.msra.mxu0 %v3872
        %4039 = vmatprep.subr.bf16.mxu0 %v3877
        %4040 = vmatpush1.bf16.msra.mxu0 %v3876
        %4041 = vmatprep.subr.bf16.mxu0 %v3881
        %4042 = vmatpush1.bf16.msra.mxu0 %v3880
        %4043 = vmatprep.subr.bf16.mxu0 %v3885
        %4044 = vmatpush1.bf16.msra.mxu0 %v3884
        %4045 = vmatprep.subr.bf16.mxu0 %v3889
        %4046 = vmatpush1.bf16.msra.mxu0 %v3888
        %4047 = vmatprep.subr.bf16.mxu0 %v3893
        %4048 = vmatpush1.bf16.msra.mxu0 %v3892
        %4049 = vmatprep.subr.bf16.mxu0 %v3897
        %4050 = vmatpush1.bf16.msra.mxu0 %v3896
        %4051 = vmatprep.subr.bf16.mxu0 %v3901
        %4052 = vmatpush1.bf16.msra.mxu0 %v3900
        %4053 = vmatprep.subr.bf16.mxu0 %v3905
        %4054 = vmatpush1.bf16.msra.mxu0 %v3904
        %4055 = vmatprep.subr.bf16.mxu0 %v3909
        %4056 = vmatpush1.bf16.msra.mxu0 %v3908
        %4057 = vmatprep.subr.bf16.mxu0 %v3913
        %4058 = vmatpush1.bf16.msra.mxu0 %v3912
        %4059 = vmatprep.subr.bf16.mxu0 %v3917
        %4060 = vmatpush1.bf16.msra.mxu0 %v3916
        %4061 = vmatprep.subr.bf16.mxu0 %v3921
        %4062 = vmatpush1.bf16.msra.mxu0 %v3920
        %4063 = vmatprep.subr.bf16.mxu0 %v3925
        %4064 = vmatpush1.bf16.msra.mxu0 %v3924
        %4065 = vmatprep.subr.bf16.mxu0 %v3929
        %4066 = vmatpush1.bf16.msra.mxu0 %v3928
        %4067 = vmatprep.mubr.bf16.mxu0 %v3608
        %4068 = vmatmul.mubr.bf16.gmra.mrb[0].mxu0 %v3607
        %v4069 = vpop.f32.mrb[0].mxu0
        %v4070 = vadd.f32 0.0, %v4069
        %v4071 = vpop.f32.mrb[0].mxu0
        %v4072 = vadd.f32 0.0, %v4071
        %v4073 = vpop.f32.mrb[0].mxu0
        %v4074 = vpop.f32.mrb[0].mxu0
        %4075 = vdwg.mxu0
        %v4076 = vadd.f32 %v3560, %v4029
        %v4077 = vadd.f32 %v3562, %v4031
        %v4078 = vadd.f32 %v3601, %v4070
        %v4079 = vadd.f32 %v3603, %v4072
        %v4080 = vld [vmem:[#allocation17] sm:$0xf]
        %v4082 = vlaneseq
        %v4083 = vshrl.u32 %v4082, 7
        %v4084 = vsub.s32 0, %v4083
        %v4085 = vrot.slane %v4080, %v4084
        %v4086 = vlaneseq
        %v4087 = vshrl.u32 %v4086, 7
        %v4088 = vsub.s32 1, %v4087
        %v4089 = vrot.slane %v4080, %v4088
        %v4090 = vlaneseq
        %v4091 = vshrl.u32 %v4090, 7
        %v4092 = vsub.s32 2, %v4091
        %v4093 = vrot.slane %v4080, %v4092
        %v4094 = vlaneseq
        %v4095 = vshrl.u32 %v4094, 7
        %v4096 = vsub.s32 3, %v4095
        %v4097 = vrot.slane %v4080, %v4096
        %v4102 = vadd.f32 %v4076, %v4085
        %v4103 = vadd.f32 %v4077, %v4089
        %v4104 = vadd.f32 %v4078, %v4093
        %v4105 = vadd.f32 %v4079, %v4097
        %v4106 = vmax.f32 %v4102, 0.0
        %v4107 = vmax.f32 %v4103, 0.0
        %v4108 = vmax.f32 %v4104, 0.0
        %v4109 = vmax.f32 %v4105, 0.0
        %vm4110 = vcmask 64512
        %v4111 = vsel %vm4110, %v1625, 0
        %4113 = vmatprep.subr.mxu0 %v4107
        %4114 = vmatpush1.msra.mxu0 %v4106
        %4115 = vmatprep.subr.mxu0 0.0
        %4116 = vmatpush1.msra.mxu0 0.0
        %4117 = vmatprep.subr.mxu0 0.0
        %4118 = vmatpush1.msra.mxu0 0.0
        %4119 = vmatprep.subr.mxu0 0.0
        %4120 = vmatpush1.msra.mxu0 0.0
        %4121 = vmatprep.subr.mxu0 0.0
        %4122 = vmatpush1.msra.mxu0 0.0
        %4123 = vmatprep.subr.mxu0 0.0
        %4124 = vmatpush1.msra.mxu0 0.0
        %4125 = vmatprep.subr.mxu0 0.0
        %4126 = vmatpush1.msra.mxu0 0.0
        %4127 = vmatprep.subr.mxu0 0.0
        %4128 = vmatpush1.msra.mxu0 0.0
        %4129 = vmatprep.subr.mxu0 0.0
        %4130 = vmatpush1.msra.mxu0 0.0
        %4131 = vmatprep.subr.mxu0 0.0
        %4132 = vmatpush1.msra.mxu0 0.0
        %4133 = vmatprep.subr.mxu0 0.0
        %4134 = vmatpush1.msra.mxu0 0.0
        %4135 = vmatprep.subr.mxu0 0.0
        %4136 = vmatpush1.msra.mxu0 0.0
        %4137 = vmatprep.subr.mxu0 0.0
        %4138 = vmatpush1.msra.mxu0 0.0
        %4139 = vmatprep.subr.mxu0 0.0
        %4140 = vmatpush1.msra.mxu0 0.0
        %4141 = vmatprep.subr.mxu0 0.0
        %4142 = vmatpush1.msra.mxu0 0.0
        %4143 = vmatprep.subr.mxu0 0.0
        %4144 = vmatpush1.msra.mxu0 0.0
        %4145 = vmatprep.subr.mxu0 0.0
        %4146 = vmatpush1.msra.mxu0 0.0
        %4147 = vmatprep.subr.mxu0 0.0
        %4148 = vmatpush1.msra.mxu0 0.0
        %4149 = vmatprep.subr.mxu0 0.0
        %4150 = vmatpush1.msra.mxu0 0.0
        %4151 = vmatprep.subr.mxu0 0.0
        %4152 = vmatpush1.msra.mxu0 0.0
        %4153 = vmatprep.subr.mxu0 0.0
        %4154 = vmatpush1.msra.mxu0 0.0
        %4155 = vmatprep.subr.mxu0 0.0
        %4156 = vmatpush1.msra.mxu0 0.0
        %4157 = vmatprep.subr.mxu0 0.0
        %4158 = vmatpush1.msra.mxu0 0.0
        %4159 = vmatprep.subr.mxu0 0.0
        %4160 = vmatpush1.msra.mxu0 0.0
        %4161 = vmatprep.subr.mxu0 0.0
        %4162 = vmatpush1.msra.mxu0 0.0
        %4163 = vmatprep.subr.mxu0 0.0
        %4164 = vmatpush1.msra.mxu0 0.0
        %4165 = vmatprep.subr.mxu0 0.0
        %4166 = vmatpush1.msra.mxu0 0.0
        %4167 = vmatprep.subr.mxu0 0.0
        %4168 = vmatpush1.msra.mxu0 0.0
        %4169 = vmatprep.subr.mxu0 0.0
        %4170 = vmatpush1.msra.mxu0 0.0
        %4171 = vmatprep.subr.mxu0 0.0
        %4172 = vmatpush1.msra.mxu0 0.0
        %4173 = vmatprep.subr.mxu0 0.0
        %4174 = vmatpush1.msra.mxu0 0.0
        %4175 = vmatprep.subr.mxu0 0.0
        %4176 = vmatpush1.msra.mxu0 0.0
        %4177 = vmatprep.mubr.f32.mxu0 0.0
        %4178 = vmatmul.mubr.f32.gmra.mrb[0].mxu0 %v4111
        %v4179 = vpop.f32.mrb[0].mxu0
        %v4180 = vadd.f32 0.0, %v4179
        %v4181 = vpop.f32.mrb[0].mxu0
        %v4182 = vadd.f32 0.0, %v4181
        %4183 = vdwg.mxu0
        %4184 = vmatprep.subr.mxu0 %v4109
        %4185 = vmatpush1.msra.mxu0 %v4108
        %4186 = vmatprep.subr.mxu0 0.0
        %4187 = vmatpush1.msra.mxu0 0.0
        %4188 = vmatprep.subr.mxu0 0.0
        %4189 = vmatpush1.msra.mxu0 0.0
        %4190 = vmatprep.subr.mxu0 0.0
        %4191 = vmatpush1.msra.mxu0 0.0
        %4192 = vmatprep.subr.mxu0 0.0
        %4193 = vmatpush1.msra.mxu0 0.0
        %4194 = vmatprep.subr.mxu0 0.0
        %4195 = vmatpush1.msra.mxu0 0.0
        %4196 = vmatprep.subr.mxu0 0.0
        %4197 = vmatpush1.msra.mxu0 0.0
        %4198 = vmatprep.subr.mxu0 0.0
        %4199 = vmatpush1.msra.mxu0 0.0
        %4200 = vmatprep.subr.mxu0 0.0
        %4201 = vmatpush1.msra.mxu0 0.0
        %4202 = vmatprep.subr.mxu0 0.0
        %4203 = vmatpush1.msra.mxu0 0.0
        %4204 = vmatprep.subr.mxu0 0.0
        %4205 = vmatpush1.msra.mxu0 0.0
        %4206 = vmatprep.subr.mxu0 0.0
        %4207 = vmatpush1.msra.mxu0 0.0
        %4208 = vmatprep.subr.mxu0 0.0
        %4209 = vmatpush1.msra.mxu0 0.0
        %4210 = vmatprep.subr.mxu0 0.0
        %4211 = vmatpush1.msra.mxu0 0.0
        %4212 = vmatprep.subr.mxu0 0.0
        %4213 = vmatpush1.msra.mxu0 0.0
        %4214 = vmatprep.subr.mxu0 0.0
        %4215 = vmatpush1.msra.mxu0 0.0
        %4216 = vmatprep.subr.mxu0 0.0
        %4217 = vmatpush1.msra.mxu0 0.0
        %4218 = vmatprep.subr.mxu0 0.0
        %4219 = vmatpush1.msra.mxu0 0.0
        %4220 = vmatprep.subr.mxu0 0.0
        %4221 = vmatpush1.msra.mxu0 0.0
        %4222 = vmatprep.subr.mxu0 0.0
        %4223 = vmatpush1.msra.mxu0 0.0
        %4224 = vmatprep.subr.mxu0 0.0
        %4225 = vmatpush1.msra.mxu0 0.0
        %4226 = vmatprep.subr.mxu0 0.0
        %4227 = vmatpush1.msra.mxu0 0.0
        %4228 = vmatprep.subr.mxu0 0.0
        %4229 = vmatpush1.msra.mxu0 0.0
        %4230 = vmatprep.subr.mxu0 0.0
        %4231 = vmatpush1.msra.mxu0 0.0
        %4232 = vmatprep.subr.mxu0 0.0
        %4233 = vmatpush1.msra.mxu0 0.0
        %4234 = vmatprep.subr.mxu0 0.0
        %4235 = vmatpush1.msra.mxu0 0.0
        %4236 = vmatprep.subr.mxu0 0.0
        %4237 = vmatpush1.msra.mxu0 0.0
        %4238 = vmatprep.subr.mxu0 0.0
        %4239 = vmatpush1.msra.mxu0 0.0
        %4240 = vmatprep.subr.mxu0 0.0
        %4241 = vmatpush1.msra.mxu0 0.0
        %4242 = vmatprep.subr.mxu0 0.0
        %4243 = vmatpush1.msra.mxu0 0.0
        %4244 = vmatprep.subr.mxu0 0.0
        %4245 = vmatpush1.msra.mxu0 0.0
        %4246 = vmatprep.subr.mxu0 0.0
        %4247 = vmatpush1.msra.mxu0 0.0
        %4248 = vmatprep.mubr.f32.mxu0 0.0
        %4249 = vmatmul.mubr.f32.gmra.mrb[0].mxu0 %v4111
        %v4250 = vpop.f32.mrb[0].mxu0
        %v4251 = vadd.f32 0.0, %v4250
        %v4252 = vpop.f32.mrb[0].mxu0
        %v4253 = vadd.f32 0.0, %v4252
        %4254 = vdwg.mxu0
        %v4259 = vrot.slane %v4180, 7
        %v4260 = vrot.slane %v4182, 7
        %v4261 = vrot.slane %v4251, 7
        %v4262 = vrot.slane %v4253, 7
        %v4267 = vsel %vm738, 0.0, %v4259
        %v4268 = vsel %vm738, 0.0, %v4260
        %v4269 = vsel %vm738, 0.0, %v4261
        %v4270 = vsel %vm738, 0.0, %v4262
        %v4271 = vrot.slane %v4180, 1
        %v4272 = vrot.slane %v4182, 1
        %v4273 = vrot.slane %v4251, 1
        %v4274 = vrot.slane %v4253, 1
        %vm4279 = vcmask 1042432
        %v4280 = vsel %vm4279, %v4271, 0.0
        %v4281 = vsel %vm4279, %v4272, 0.0
        %v4282 = vsel %vm4279, %v4273, 0.0
        %v4283 = vsel %vm4279, %v4274, 0.0
        %v4284 = vpack.c.bf16 %v4267, %v4267
        %v4285 = vpack.c.bf16 %v4268, %v4268
        %v4286 = vpack.c.bf16 %v4269, %v4269
        %v4287 = vpack.c.bf16 %v4270, %v4270
        %v4288 = vld [vmem:[#allocation19] sm:$0xff]
        %v4289 = vld [vmem:[#allocation19 + $0x8] sm:$0xff]
        %v4290 = vld [vmem:[#allocation19 + $0x10] sm:$0xff]
        %v4291 = vld [vmem:[#allocation19 + $0x18] sm:$0xff]
        %v4292 = vld [vmem:[#allocation19 + $0x20] sm:$0xff]
        %v4293 = vld [vmem:[#allocation19 + $0x28] sm:$0xff]
        %v4294 = vld [vmem:[#allocation19 + $0x30] sm:$0xff]
        %v4295 = vld [vmem:[#allocation19 + $0x38] sm:$0xff]
        %v4296 = vld [vmem:[#allocation19 + $0x40] sm:$0xff]
        %v4297 = vld [vmem:[#allocation19 + $0x48] sm:$0xff]
        %v4298 = vld [vmem:[#allocation19 + $0x50] sm:$0xff]
        %v4299 = vld [vmem:[#allocation19 + $0x58] sm:$0xff]
        %v4300 = vld [vmem:[#allocation19 + $0x60] sm:$0xff]
        %v4301 = vld [vmem:[#allocation19 + $0x68] sm:$0xff]
        %v4302 = vld [vmem:[#allocation19 + $0x70] sm:$0xff]
        %v4303 = vld [vmem:[#allocation19 + $0x78] sm:$0xff]
        %v4304 = vld [vmem:[#allocation19 + $0x80] sm:$0xff]
        %v4305 = vld [vmem:[#allocation19 + $0x88] sm:$0xff]
        %v4306 = vld [vmem:[#allocation19 + $0x90] sm:$0xff]
        %v4307 = vld [vmem:[#allocation19 + $0x98] sm:$0xff]
        %v4308 = vld [vmem:[#allocation19 + $0xa0] sm:$0xff]
        %v4309 = vld [vmem:[#allocation19 + $0xa8] sm:$0xff]
        %v4310 = vld [vmem:[#allocation19 + $0xb0] sm:$0xff]
        %v4311 = vld [vmem:[#allocation19 + $0xb8] sm:$0xff]
        %v4312 = vld [vmem:[#allocation19 + $0xc0] sm:$0xff]
        %v4313 = vld [vmem:[#allocation19 + $0xc8] sm:$0xff]
        %v4314 = vld [vmem:[#allocation19 + $0xd0] sm:$0xff]
        %v4315 = vld [vmem:[#allocation19 + $0xd8] sm:$0xff]
        %v4316 = vld [vmem:[#allocation19 + $0xe0] sm:$0xff]
        %v4317 = vld [vmem:[#allocation19 + $0xe8] sm:$0xff]
        %v4318 = vld [vmem:[#allocation19 + $0xf0] sm:$0xff]
        %v4319 = vld [vmem:[#allocation19 + $0xf8] sm:$0xff]
        %v4320 = vld [vmem:[#allocation19 + $0x100] sm:$0xff]
        %v4321 = vld [vmem:[#allocation19 + $0x108] sm:$0xff]
        %v4322 = vld [vmem:[#allocation19 + $0x110] sm:$0xff]
        %v4323 = vld [vmem:[#allocation19 + $0x118] sm:$0xff]
        %v4324 = vld [vmem:[#allocation19 + $0x120] sm:$0xff]
        %v4325 = vld [vmem:[#allocation19 + $0x128] sm:$0xff]
        %v4326 = vld [vmem:[#allocation19 + $0x130] sm:$0xff]
        %v4327 = vld [vmem:[#allocation19 + $0x138] sm:$0xff]
        %v4328 = vld [vmem:[#allocation19 + $0x140] sm:$0xff]
        %v4329 = vld [vmem:[#allocation19 + $0x148] sm:$0xff]
        %v4330 = vld [vmem:[#allocation19 + $0x150] sm:$0xff]
        %v4331 = vld [vmem:[#allocation19 + $0x158] sm:$0xff]
        %v4332 = vld [vmem:[#allocation19 + $0x160] sm:$0xff]
        %v4333 = vld [vmem:[#allocation19 + $0x168] sm:$0xff]
        %v4334 = vld [vmem:[#allocation19 + $0x170] sm:$0xff]
        %v4335 = vld [vmem:[#allocation19 + $0x178] sm:$0xff]
        %v4336 = vld [vmem:[#allocation19 + $0x180] sm:$0xff]
        %v4337 = vld [vmem:[#allocation19 + $0x188] sm:$0xff]
        %v4338 = vld [vmem:[#allocation19 + $0x190] sm:$0xff]
        %v4339 = vld [vmem:[#allocation19 + $0x198] sm:$0xff]
        %v4340 = vld [vmem:[#allocation19 + $0x1a0] sm:$0xff]
        %v4341 = vld [vmem:[#allocation19 + $0x1a8] sm:$0xff]
        %v4342 = vld [vmem:[#allocation19 + $0x1b0] sm:$0xff]
        %v4343 = vld [vmem:[#allocation19 + $0x1b8] sm:$0xff]
        %v4344 = vld [vmem:[#allocation19 + $0x1c0] sm:$0xff]
        %v4345 = vld [vmem:[#allocation19 + $0x1c8] sm:$0xff]
        %v4346 = vld [vmem:[#allocation19 + $0x1d0] sm:$0xff]
        %v4347 = vld [vmem:[#allocation19 + $0x1d8] sm:$0xff]
        %v4348 = vld [vmem:[#allocation19 + $0x1e0] sm:$0xff]
        %v4349 = vld [vmem:[#allocation19 + $0x1e8] sm:$0xff]
        %v4350 = vld [vmem:[#allocation19 + $0x1f0] sm:$0xff]
        %v4351 = vld [vmem:[#allocation19 + $0x1f8] sm:$0xff]
        %v4352 = vld [vmem:[#allocation19 + $0x200] sm:$0xff]
        %v4353 = vld [vmem:[#allocation19 + $0x208] sm:$0xff]
        %v4354 = vld [vmem:[#allocation19 + $0x210] sm:$0xff]
        %v4355 = vld [vmem:[#allocation19 + $0x218] sm:$0xff]
        %v4356 = vld [vmem:[#allocation19 + $0x220] sm:$0xff]
        %v4357 = vld [vmem:[#allocation19 + $0x228] sm:$0xff]
        %v4358 = vld [vmem:[#allocation19 + $0x230] sm:$0xff]
        %v4359 = vld [vmem:[#allocation19 + $0x238] sm:$0xff]
        %v4360 = vld [vmem:[#allocation19 + $0x240] sm:$0xff]
        %v4361 = vld [vmem:[#allocation19 + $0x248] sm:$0xff]
        %v4362 = vld [vmem:[#allocation19 + $0x250] sm:$0xff]
        %v4363 = vld [vmem:[#allocation19 + $0x258] sm:$0xff]
        %v4364 = vld [vmem:[#allocation19 + $0x260] sm:$0xff]
        %v4365 = vld [vmem:[#allocation19 + $0x268] sm:$0xff]
        %v4366 = vld [vmem:[#allocation19 + $0x270] sm:$0xff]
        %v4367 = vld [vmem:[#allocation19 + $0x278] sm:$0xff]
        %v4368 = vld [vmem:[#allocation19 + $0x280] sm:$0xff]
        %v4369 = vld [vmem:[#allocation19 + $0x288] sm:$0xff]
        %v4370 = vld [vmem:[#allocation19 + $0x290] sm:$0xff]
        %v4371 = vld [vmem:[#allocation19 + $0x298] sm:$0xff]
        %v4372 = vld [vmem:[#allocation19 + $0x2a0] sm:$0xff]
        %v4373 = vld [vmem:[#allocation19 + $0x2a8] sm:$0xff]
        %v4374 = vld [vmem:[#allocation19 + $0x2b0] sm:$0xff]
        %v4375 = vld [vmem:[#allocation19 + $0x2b8] sm:$0xff]
        %v4376 = vld [vmem:[#allocation19 + $0x2c0] sm:$0xff]
        %v4377 = vld [vmem:[#allocation19 + $0x2c8] sm:$0xff]
        %v4378 = vld [vmem:[#allocation19 + $0x2d0] sm:$0xff]
        %v4379 = vld [vmem:[#allocation19 + $0x2d8] sm:$0xff]
        %v4380 = vld [vmem:[#allocation19 + $0x2e0] sm:$0xff]
        %v4381 = vld [vmem:[#allocation19 + $0x2e8] sm:$0xff]
        %v4382 = vld [vmem:[#allocation19 + $0x2f0] sm:$0xff]
        %v4383 = vld [vmem:[#allocation19 + $0x2f8] sm:$0xff]
        %v4384 = vld [vmem:[#allocation19 + $0x300] sm:$0xff]
        %v4385 = vld [vmem:[#allocation19 + $0x308] sm:$0xff]
        %v4386 = vld [vmem:[#allocation19 + $0x310] sm:$0xff]
        %v4387 = vld [vmem:[#allocation19 + $0x318] sm:$0xff]
        %v4388 = vld [vmem:[#allocation19 + $0x320] sm:$0xff]
        %v4389 = vld [vmem:[#allocation19 + $0x328] sm:$0xff]
        %v4390 = vld [vmem:[#allocation19 + $0x330] sm:$0xff]
        %v4391 = vld [vmem:[#allocation19 + $0x338] sm:$0xff]
        %v4392 = vld [vmem:[#allocation19 + $0x340] sm:$0xff]
        %v4393 = vld [vmem:[#allocation19 + $0x348] sm:$0xff]
        %v4394 = vld [vmem:[#allocation19 + $0x350] sm:$0xff]
        %v4395 = vld [vmem:[#allocation19 + $0x358] sm:$0xff]
        %v4396 = vld [vmem:[#allocation19 + $0x360] sm:$0xff]
        %v4397 = vld [vmem:[#allocation19 + $0x368] sm:$0xff]
        %v4398 = vld [vmem:[#allocation19 + $0x370] sm:$0xff]
        %v4399 = vld [vmem:[#allocation19 + $0x378] sm:$0xff]
        %v4400 = vld [vmem:[#allocation19 + $0x380] sm:$0xff]
        %v4401 = vld [vmem:[#allocation19 + $0x388] sm:$0xff]
        %v4402 = vld [vmem:[#allocation19 + $0x390] sm:$0xff]
        %v4403 = vld [vmem:[#allocation19 + $0x398] sm:$0xff]
        %v4404 = vld [vmem:[#allocation19 + $0x3a0] sm:$0xff]
        %v4405 = vld [vmem:[#allocation19 + $0x3a8] sm:$0xff]
        %v4406 = vld [vmem:[#allocation19 + $0x3b0] sm:$0xff]
        %v4407 = vld [vmem:[#allocation19 + $0x3b8] sm:$0xff]
        %v4408 = vld [vmem:[#allocation19 + $0x3c0] sm:$0xff]
        %v4409 = vld [vmem:[#allocation19 + $0x3c8] sm:$0xff]
        %v4410 = vld [vmem:[#allocation19 + $0x3d0] sm:$0xff]
        %v4411 = vld [vmem:[#allocation19 + $0x3d8] sm:$0xff]
        %v4412 = vld [vmem:[#allocation19 + $0x3e0] sm:$0xff]
        %v4413 = vld [vmem:[#allocation19 + $0x3e8] sm:$0xff]
        %v4414 = vld [vmem:[#allocation19 + $0x3f0] sm:$0xff]
        %v4415 = vld [vmem:[#allocation19 + $0x3f8] sm:$0xff]
        %v4416 = vpack.c.bf16 %v4180, %v4180
        %v4417 = vpack.c.bf16 %v4182, %v4182
        %v4418 = vpack.c.bf16 %v4251, %v4251
        %v4419 = vpack.c.bf16 %v4253, %v4253
        %s4420 = scalar_lea.vmem [#allocation19], 1024
        %v4421 = vld [vmem:[%s4420] sm:$0xff]
        %v4422 = vld [vmem:[%s4420 + $0x8] sm:$0xff]
        %v4423 = vld [vmem:[%s4420 + $0x10] sm:$0xff]
        %v4424 = vld [vmem:[%s4420 + $0x18] sm:$0xff]
        %v4425 = vld [vmem:[%s4420 + $0x20] sm:$0xff]
        %v4426 = vld [vmem:[%s4420 + $0x28] sm:$0xff]
        %v4427 = vld [vmem:[%s4420 + $0x30] sm:$0xff]
        %v4428 = vld [vmem:[%s4420 + $0x38] sm:$0xff]
        %v4429 = vld [vmem:[%s4420 + $0x40] sm:$0xff]
        %v4430 = vld [vmem:[%s4420 + $0x48] sm:$0xff]
        %v4431 = vld [vmem:[%s4420 + $0x50] sm:$0xff]
        %v4432 = vld [vmem:[%s4420 + $0x58] sm:$0xff]
        %v4433 = vld [vmem:[%s4420 + $0x60] sm:$0xff]
        %v4434 = vld [vmem:[%s4420 + $0x68] sm:$0xff]
        %v4435 = vld [vmem:[%s4420 + $0x70] sm:$0xff]
        %v4436 = vld [vmem:[%s4420 + $0x78] sm:$0xff]
        %v4437 = vld [vmem:[%s4420 + $0x80] sm:$0xff]
        %v4438 = vld [vmem:[%s4420 + $0x88] sm:$0xff]
        %v4439 = vld [vmem:[%s4420 + $0x90] sm:$0xff]
        %v4440 = vld [vmem:[%s4420 + $0x98] sm:$0xff]
        %v4441 = vld [vmem:[%s4420 + $0xa0] sm:$0xff]
        %v4442 = vld [vmem:[%s4420 + $0xa8] sm:$0xff]
        %v4443 = vld [vmem:[%s4420 + $0xb0] sm:$0xff]
        %v4444 = vld [vmem:[%s4420 + $0xb8] sm:$0xff]
        %v4445 = vld [vmem:[%s4420 + $0xc0] sm:$0xff]
        %v4446 = vld [vmem:[%s4420 + $0xc8] sm:$0xff]
        %v4447 = vld [vmem:[%s4420 + $0xd0] sm:$0xff]
        %v4448 = vld [vmem:[%s4420 + $0xd8] sm:$0xff]
        %v4449 = vld [vmem:[%s4420 + $0xe0] sm:$0xff]
        %v4450 = vld [vmem:[%s4420 + $0xe8] sm:$0xff]
        %v4451 = vld [vmem:[%s4420 + $0xf0] sm:$0xff]
        %v4452 = vld [vmem:[%s4420 + $0xf8] sm:$0xff]
        %v4453 = vld [vmem:[%s4420 + $0x100] sm:$0xff]
        %v4454 = vld [vmem:[%s4420 + $0x108] sm:$0xff]
        %v4455 = vld [vmem:[%s4420 + $0x110] sm:$0xff]
        %v4456 = vld [vmem:[%s4420 + $0x118] sm:$0xff]
        %v4457 = vld [vmem:[%s4420 + $0x120] sm:$0xff]
        %v4458 = vld [vmem:[%s4420 + $0x128] sm:$0xff]
        %v4459 = vld [vmem:[%s4420 + $0x130] sm:$0xff]
        %v4460 = vld [vmem:[%s4420 + $0x138] sm:$0xff]
        %v4461 = vld [vmem:[%s4420 + $0x140] sm:$0xff]
        %v4462 = vld [vmem:[%s4420 + $0x148] sm:$0xff]
        %v4463 = vld [vmem:[%s4420 + $0x150] sm:$0xff]
        %v4464 = vld [vmem:[%s4420 + $0x158] sm:$0xff]
        %v4465 = vld [vmem:[%s4420 + $0x160] sm:$0xff]
        %v4466 = vld [vmem:[%s4420 + $0x168] sm:$0xff]
        %v4467 = vld [vmem:[%s4420 + $0x170] sm:$0xff]
        %v4468 = vld [vmem:[%s4420 + $0x178] sm:$0xff]
        %v4469 = vld [vmem:[%s4420 + $0x180] sm:$0xff]
        %v4470 = vld [vmem:[%s4420 + $0x188] sm:$0xff]
        %v4471 = vld [vmem:[%s4420 + $0x190] sm:$0xff]
        %v4472 = vld [vmem:[%s4420 + $0x198] sm:$0xff]
        %v4473 = vld [vmem:[%s4420 + $0x1a0] sm:$0xff]
        %v4474 = vld [vmem:[%s4420 + $0x1a8] sm:$0xff]
        %v4475 = vld [vmem:[%s4420 + $0x1b0] sm:$0xff]
        %v4476 = vld [vmem:[%s4420 + $0x1b8] sm:$0xff]
        %v4477 = vld [vmem:[%s4420 + $0x1c0] sm:$0xff]
        %v4478 = vld [vmem:[%s4420 + $0x1c8] sm:$0xff]
        %v4479 = vld [vmem:[%s4420 + $0x1d0] sm:$0xff]
        %v4480 = vld [vmem:[%s4420 + $0x1d8] sm:$0xff]
        %v4481 = vld [vmem:[%s4420 + $0x1e0] sm:$0xff]
        %v4482 = vld [vmem:[%s4420 + $0x1e8] sm:$0xff]
        %v4483 = vld [vmem:[%s4420 + $0x1f0] sm:$0xff]
        %v4484 = vld [vmem:[%s4420 + $0x1f8] sm:$0xff]
        %v4485 = vld [vmem:[%s4420 + $0x200] sm:$0xff]
        %v4486 = vld [vmem:[%s4420 + $0x208] sm:$0xff]
        %v4487 = vld [vmem:[%s4420 + $0x210] sm:$0xff]
        %v4488 = vld [vmem:[%s4420 + $0x218] sm:$0xff]
        %v4489 = vld [vmem:[%s4420 + $0x220] sm:$0xff]
        %v4490 = vld [vmem:[%s4420 + $0x228] sm:$0xff]
        %v4491 = vld [vmem:[%s4420 + $0x230] sm:$0xff]
        %v4492 = vld [vmem:[%s4420 + $0x238] sm:$0xff]
        %v4493 = vld [vmem:[%s4420 + $0x240] sm:$0xff]
        %v4494 = vld [vmem:[%s4420 + $0x248] sm:$0xff]
        %v4495 = vld [vmem:[%s4420 + $0x250] sm:$0xff]
        %v4496 = vld [vmem:[%s4420 + $0x258] sm:$0xff]
        %v4497 = vld [vmem:[%s4420 + $0x260] sm:$0xff]
        %v4498 = vld [vmem:[%s4420 + $0x268] sm:$0xff]
        %v4499 = vld [vmem:[%s4420 + $0x270] sm:$0xff]
        %v4500 = vld [vmem:[%s4420 + $0x278] sm:$0xff]
        %v4501 = vld [vmem:[%s4420 + $0x280] sm:$0xff]
        %v4502 = vld [vmem:[%s4420 + $0x288] sm:$0xff]
        %v4503 = vld [vmem:[%s4420 + $0x290] sm:$0xff]
        %v4504 = vld [vmem:[%s4420 + $0x298] sm:$0xff]
        %v4505 = vld [vmem:[%s4420 + $0x2a0] sm:$0xff]
        %v4506 = vld [vmem:[%s4420 + $0x2a8] sm:$0xff]
        %v4507 = vld [vmem:[%s4420 + $0x2b0] sm:$0xff]
        %v4508 = vld [vmem:[%s4420 + $0x2b8] sm:$0xff]
        %v4509 = vld [vmem:[%s4420 + $0x2c0] sm:$0xff]
        %v4510 = vld [vmem:[%s4420 + $0x2c8] sm:$0xff]
        %v4511 = vld [vmem:[%s4420 + $0x2d0] sm:$0xff]
        %v4512 = vld [vmem:[%s4420 + $0x2d8] sm:$0xff]
        %v4513 = vld [vmem:[%s4420 + $0x2e0] sm:$0xff]
        %v4514 = vld [vmem:[%s4420 + $0x2e8] sm:$0xff]
        %v4515 = vld [vmem:[%s4420 + $0x2f0] sm:$0xff]
        %v4516 = vld [vmem:[%s4420 + $0x2f8] sm:$0xff]
        %v4517 = vld [vmem:[%s4420 + $0x300] sm:$0xff]
        %v4518 = vld [vmem:[%s4420 + $0x308] sm:$0xff]
        %v4519 = vld [vmem:[%s4420 + $0x310] sm:$0xff]
        %v4520 = vld [vmem:[%s4420 + $0x318] sm:$0xff]
        %v4521 = vld [vmem:[%s4420 + $0x320] sm:$0xff]
        %v4522 = vld [vmem:[%s4420 + $0x328] sm:$0xff]
        %v4523 = vld [vmem:[%s4420 + $0x330] sm:$0xff]
        %v4524 = vld [vmem:[%s4420 + $0x338] sm:$0xff]
        %v4525 = vld [vmem:[%s4420 + $0x340] sm:$0xff]
        %v4526 = vld [vmem:[%s4420 + $0x348] sm:$0xff]
        %v4527 = vld [vmem:[%s4420 + $0x350] sm:$0xff]
        %v4528 = vld [vmem:[%s4420 + $0x358] sm:$0xff]
        %v4529 = vld [vmem:[%s4420 + $0x360] sm:$0xff]
        %v4530 = vld [vmem:[%s4420 + $0x368] sm:$0xff]
        %v4531 = vld [vmem:[%s4420 + $0x370] sm:$0xff]
        %v4532 = vld [vmem:[%s4420 + $0x378] sm:$0xff]
        %v4533 = vld [vmem:[%s4420 + $0x380] sm:$0xff]
        %v4534 = vld [vmem:[%s4420 + $0x388] sm:$0xff]
        %v4535 = vld [vmem:[%s4420 + $0x390] sm:$0xff]
        %v4536 = vld [vmem:[%s4420 + $0x398] sm:$0xff]
        %v4537 = vld [vmem:[%s4420 + $0x3a0] sm:$0xff]
        %v4538 = vld [vmem:[%s4420 + $0x3a8] sm:$0xff]
        %v4539 = vld [vmem:[%s4420 + $0x3b0] sm:$0xff]
        %v4540 = vld [vmem:[%s4420 + $0x3b8] sm:$0xff]
        %v4541 = vld [vmem:[%s4420 + $0x3c0] sm:$0xff]
        %v4542 = vld [vmem:[%s4420 + $0x3c8] sm:$0xff]
        %v4543 = vld [vmem:[%s4420 + $0x3d0] sm:$0xff]
        %v4544 = vld [vmem:[%s4420 + $0x3d8] sm:$0xff]
        %v4545 = vld [vmem:[%s4420 + $0x3e0] sm:$0xff]
        %v4546 = vld [vmem:[%s4420 + $0x3e8] sm:$0xff]
        %v4547 = vld [vmem:[%s4420 + $0x3f0] sm:$0xff]
        %v4548 = vld [vmem:[%s4420 + $0x3f8] sm:$0xff]
        %v4677 = vunpack.c.l.b16 %v4421
        %v4678 = vunpack.c.h.b16 %v4421
        %v4679 = vunpack.c.l.b16 %v4422
        %v4680 = vunpack.c.h.b16 %v4422
        %v4681 = vunpack.c.l.b16 %v4423
        %v4682 = vunpack.c.h.b16 %v4423
        %v4683 = vunpack.c.l.b16 %v4424
        %v4684 = vunpack.c.h.b16 %v4424
        %v4685 = vunpack.c.l.b16 %v4425
        %v4686 = vunpack.c.h.b16 %v4425
        %v4687 = vunpack.c.l.b16 %v4426
        %v4688 = vunpack.c.h.b16 %v4426
        %v4689 = vunpack.c.l.b16 %v4427
        %v4690 = vunpack.c.h.b16 %v4427
        %v4691 = vunpack.c.l.b16 %v4428
        %v4692 = vunpack.c.h.b16 %v4428
        %v4693 = vunpack.c.l.b16 %v4429
        %v4694 = vunpack.c.h.b16 %v4429
        %v4695 = vunpack.c.l.b16 %v4430
        %v4696 = vunpack.c.h.b16 %v4430
        %v4697 = vunpack.c.l.b16 %v4431
        %v4698 = vunpack.c.h.b16 %v4431
        %v4699 = vunpack.c.l.b16 %v4432
        %v4700 = vunpack.c.h.b16 %v4432
        %v4701 = vunpack.c.l.b16 %v4433
        %v4702 = vunpack.c.h.b16 %v4433
        %v4703 = vunpack.c.l.b16 %v4434
        %v4704 = vunpack.c.h.b16 %v4434
        %v4705 = vunpack.c.l.b16 %v4435
        %v4706 = vunpack.c.h.b16 %v4435
        %v4707 = vunpack.c.l.b16 %v4436
        %v4708 = vunpack.c.h.b16 %v4436
        %v4709 = vunpack.c.l.b16 %v4437
        %v4710 = vunpack.c.h.b16 %v4437
        %v4711 = vunpack.c.l.b16 %v4438
        %v4712 = vunpack.c.h.b16 %v4438
        %v4713 = vunpack.c.l.b16 %v4439
        %v4714 = vunpack.c.h.b16 %v4439
        %v4715 = vunpack.c.l.b16 %v4440
        %v4716 = vunpack.c.h.b16 %v4440
        %v4717 = vunpack.c.l.b16 %v4441
        %v4718 = vunpack.c.h.b16 %v4441
        %v4719 = vunpack.c.l.b16 %v4442
        %v4720 = vunpack.c.h.b16 %v4442
        %v4721 = vunpack.c.l.b16 %v4443
        %v4722 = vunpack.c.h.b16 %v4443
        %v4723 = vunpack.c.l.b16 %v4444
        %v4724 = vunpack.c.h.b16 %v4444
        %v4725 = vunpack.c.l.b16 %v4445
        %v4726 = vunpack.c.h.b16 %v4445
        %v4727 = vunpack.c.l.b16 %v4446
        %v4728 = vunpack.c.h.b16 %v4446
        %v4729 = vunpack.c.l.b16 %v4447
        %v4730 = vunpack.c.h.b16 %v4447
        %v4731 = vunpack.c.l.b16 %v4448
        %v4732 = vunpack.c.h.b16 %v4448
        %v4733 = vunpack.c.l.b16 %v4449
        %v4734 = vunpack.c.h.b16 %v4449
        %v4735 = vunpack.c.l.b16 %v4450
        %v4736 = vunpack.c.h.b16 %v4450
        %v4737 = vunpack.c.l.b16 %v4451
        %v4738 = vunpack.c.h.b16 %v4451
        %v4739 = vunpack.c.l.b16 %v4452
        %v4740 = vunpack.c.h.b16 %v4452
        %v4741 = vunpack.c.l.b16 %v4453
        %v4742 = vunpack.c.h.b16 %v4453
        %v4743 = vunpack.c.l.b16 %v4454
        %v4744 = vunpack.c.h.b16 %v4454
        %v4745 = vunpack.c.l.b16 %v4455
        %v4746 = vunpack.c.h.b16 %v4455
        %v4747 = vunpack.c.l.b16 %v4456
        %v4748 = vunpack.c.h.b16 %v4456
        %v4749 = vunpack.c.l.b16 %v4457
        %v4750 = vunpack.c.h.b16 %v4457
        %v4751 = vunpack.c.l.b16 %v4458
        %v4752 = vunpack.c.h.b16 %v4458
        %v4753 = vunpack.c.l.b16 %v4459
        %v4754 = vunpack.c.h.b16 %v4459
        %v4755 = vunpack.c.l.b16 %v4460
        %v4756 = vunpack.c.h.b16 %v4460
        %v4757 = vunpack.c.l.b16 %v4461
        %v4758 = vunpack.c.h.b16 %v4461
        %v4759 = vunpack.c.l.b16 %v4462
        %v4760 = vunpack.c.h.b16 %v4462
        %v4761 = vunpack.c.l.b16 %v4463
        %v4762 = vunpack.c.h.b16 %v4463
        %v4763 = vunpack.c.l.b16 %v4464
        %v4764 = vunpack.c.h.b16 %v4464
        %v4765 = vunpack.c.l.b16 %v4465
        %v4766 = vunpack.c.h.b16 %v4465
        %v4767 = vunpack.c.l.b16 %v4466
        %v4768 = vunpack.c.h.b16 %v4466
        %v4769 = vunpack.c.l.b16 %v4467
        %v4770 = vunpack.c.h.b16 %v4467
        %v4771 = vunpack.c.l.b16 %v4468
        %v4772 = vunpack.c.h.b16 %v4468
        %v4773 = vunpack.c.l.b16 %v4469
        %v4774 = vunpack.c.h.b16 %v4469
        %v4775 = vunpack.c.l.b16 %v4470
        %v4776 = vunpack.c.h.b16 %v4470
        %v4777 = vunpack.c.l.b16 %v4471
        %v4778 = vunpack.c.h.b16 %v4471
        %v4779 = vunpack.c.l.b16 %v4472
        %v4780 = vunpack.c.h.b16 %v4472
        %v4781 = vunpack.c.l.b16 %v4473
        %v4782 = vunpack.c.h.b16 %v4473
        %v4783 = vunpack.c.l.b16 %v4474
        %v4784 = vunpack.c.h.b16 %v4474
        %v4785 = vunpack.c.l.b16 %v4475
        %v4786 = vunpack.c.h.b16 %v4475
        %v4787 = vunpack.c.l.b16 %v4476
        %v4788 = vunpack.c.h.b16 %v4476
        %v4789 = vunpack.c.l.b16 %v4477
        %v4790 = vunpack.c.h.b16 %v4477
        %v4791 = vunpack.c.l.b16 %v4478
        %v4792 = vunpack.c.h.b16 %v4478
        %v4793 = vunpack.c.l.b16 %v4479
        %v4794 = vunpack.c.h.b16 %v4479
        %v4795 = vunpack.c.l.b16 %v4480
        %v4796 = vunpack.c.h.b16 %v4480
        %v4797 = vunpack.c.l.b16 %v4481
        %v4798 = vunpack.c.h.b16 %v4481
        %v4799 = vunpack.c.l.b16 %v4482
        %v4800 = vunpack.c.h.b16 %v4482
        %v4801 = vunpack.c.l.b16 %v4483
        %v4802 = vunpack.c.h.b16 %v4483
        %v4803 = vunpack.c.l.b16 %v4484
        %v4804 = vunpack.c.h.b16 %v4484
        %v4805 = vunpack.c.l.b16 %v4485
        %v4806 = vunpack.c.h.b16 %v4485
        %v4807 = vunpack.c.l.b16 %v4486
        %v4808 = vunpack.c.h.b16 %v4486
        %v4809 = vunpack.c.l.b16 %v4487
        %v4810 = vunpack.c.h.b16 %v4487
        %v4811 = vunpack.c.l.b16 %v4488
        %v4812 = vunpack.c.h.b16 %v4488
        %v4813 = vunpack.c.l.b16 %v4489
        %v4814 = vunpack.c.h.b16 %v4489
        %v4815 = vunpack.c.l.b16 %v4490
        %v4816 = vunpack.c.h.b16 %v4490
        %v4817 = vunpack.c.l.b16 %v4491
        %v4818 = vunpack.c.h.b16 %v4491
        %v4819 = vunpack.c.l.b16 %v4492
        %v4820 = vunpack.c.h.b16 %v4492
        %v4821 = vunpack.c.l.b16 %v4493
        %v4822 = vunpack.c.h.b16 %v4493
        %v4823 = vunpack.c.l.b16 %v4494
        %v4824 = vunpack.c.h.b16 %v4494
        %v4825 = vunpack.c.l.b16 %v4495
        %v4826 = vunpack.c.h.b16 %v4495
        %v4827 = vunpack.c.l.b16 %v4496
        %v4828 = vunpack.c.h.b16 %v4496
        %v4829 = vunpack.c.l.b16 %v4497
        %v4830 = vunpack.c.h.b16 %v4497
        %v4831 = vunpack.c.l.b16 %v4498
        %v4832 = vunpack.c.h.b16 %v4498
        %v4833 = vunpack.c.l.b16 %v4499
        %v4834 = vunpack.c.h.b16 %v4499
        %v4835 = vunpack.c.l.b16 %v4500
        %v4836 = vunpack.c.h.b16 %v4500
        %v4837 = vunpack.c.l.b16 %v4501
        %v4838 = vunpack.c.h.b16 %v4501
        %v4839 = vunpack.c.l.b16 %v4502
        %v4840 = vunpack.c.h.b16 %v4502
        %v4841 = vunpack.c.l.b16 %v4503
        %v4842 = vunpack.c.h.b16 %v4503
        %v4843 = vunpack.c.l.b16 %v4504
        %v4844 = vunpack.c.h.b16 %v4504
        %v4845 = vunpack.c.l.b16 %v4505
        %v4846 = vunpack.c.h.b16 %v4505
        %v4847 = vunpack.c.l.b16 %v4506
        %v4848 = vunpack.c.h.b16 %v4506
        %v4849 = vunpack.c.l.b16 %v4507
        %v4850 = vunpack.c.h.b16 %v4507
        %v4851 = vunpack.c.l.b16 %v4508
        %v4852 = vunpack.c.h.b16 %v4508
        %v4853 = vunpack.c.l.b16 %v4509
        %v4854 = vunpack.c.h.b16 %v4509
        %v4855 = vunpack.c.l.b16 %v4510
        %v4856 = vunpack.c.h.b16 %v4510
        %v4857 = vunpack.c.l.b16 %v4511
        %v4858 = vunpack.c.h.b16 %v4511
        %v4859 = vunpack.c.l.b16 %v4512
        %v4860 = vunpack.c.h.b16 %v4512
        %v4861 = vunpack.c.l.b16 %v4513
        %v4862 = vunpack.c.h.b16 %v4513
        %v4863 = vunpack.c.l.b16 %v4514
        %v4864 = vunpack.c.h.b16 %v4514
        %v4865 = vunpack.c.l.b16 %v4515
        %v4866 = vunpack.c.h.b16 %v4515
        %v4867 = vunpack.c.l.b16 %v4516
        %v4868 = vunpack.c.h.b16 %v4516
        %v4869 = vunpack.c.l.b16 %v4517
        %v4870 = vunpack.c.h.b16 %v4517
        %v4871 = vunpack.c.l.b16 %v4518
        %v4872 = vunpack.c.h.b16 %v4518
        %v4873 = vunpack.c.l.b16 %v4519
        %v4874 = vunpack.c.h.b16 %v4519
        %v4875 = vunpack.c.l.b16 %v4520
        %v4876 = vunpack.c.h.b16 %v4520
        %v4877 = vunpack.c.l.b16 %v4521
        %v4878 = vunpack.c.h.b16 %v4521
        %v4879 = vunpack.c.l.b16 %v4522
        %v4880 = vunpack.c.h.b16 %v4522
        %v4881 = vunpack.c.l.b16 %v4523
        %v4882 = vunpack.c.h.b16 %v4523
        %v4883 = vunpack.c.l.b16 %v4524
        %v4884 = vunpack.c.h.b16 %v4524
        %v4885 = vunpack.c.l.b16 %v4525
        %v4886 = vunpack.c.h.b16 %v4525
        %v4887 = vunpack.c.l.b16 %v4526
        %v4888 = vunpack.c.h.b16 %v4526
        %v4889 = vunpack.c.l.b16 %v4527
        %v4890 = vunpack.c.h.b16 %v4527
        %v4891 = vunpack.c.l.b16 %v4528
        %v4892 = vunpack.c.h.b16 %v4528
        %v4893 = vunpack.c.l.b16 %v4529
        %v4894 = vunpack.c.h.b16 %v4529
        %v4895 = vunpack.c.l.b16 %v4530
        %v4896 = vunpack.c.h.b16 %v4530
        %v4897 = vunpack.c.l.b16 %v4531
        %v4898 = vunpack.c.h.b16 %v4531
        %v4899 = vunpack.c.l.b16 %v4532
        %v4900 = vunpack.c.h.b16 %v4532
        %v4901 = vunpack.c.l.b16 %v4533
        %v4902 = vunpack.c.h.b16 %v4533
        %v4903 = vunpack.c.l.b16 %v4534
        %v4904 = vunpack.c.h.b16 %v4534
        %v4905 = vunpack.c.l.b16 %v4535
        %v4906 = vunpack.c.h.b16 %v4535
        %v4907 = vunpack.c.l.b16 %v4536
        %v4908 = vunpack.c.h.b16 %v4536
        %v4909 = vunpack.c.l.b16 %v4537
        %v4910 = vunpack.c.h.b16 %v4537
        %v4911 = vunpack.c.l.b16 %v4538
        %v4912 = vunpack.c.h.b16 %v4538
        %v4913 = vunpack.c.l.b16 %v4539
        %v4914 = vunpack.c.h.b16 %v4539
        %v4915 = vunpack.c.l.b16 %v4540
        %v4916 = vunpack.c.h.b16 %v4540
        %v4917 = vunpack.c.l.b16 %v4541
        %v4918 = vunpack.c.h.b16 %v4541
        %v4919 = vunpack.c.l.b16 %v4542
        %v4920 = vunpack.c.h.b16 %v4542
        %v4921 = vunpack.c.l.b16 %v4543
        %v4922 = vunpack.c.h.b16 %v4543
        %v4923 = vunpack.c.l.b16 %v4544
        %v4924 = vunpack.c.h.b16 %v4544
        %v4925 = vunpack.c.l.b16 %v4545
        %v4926 = vunpack.c.h.b16 %v4545
        %v4927 = vunpack.c.l.b16 %v4546
        %v4928 = vunpack.c.h.b16 %v4546
        %v4929 = vunpack.c.l.b16 %v4547
        %v4930 = vunpack.c.h.b16 %v4547
        %v4931 = vunpack.c.l.b16 %v4548
        %v4932 = vunpack.c.h.b16 %v4548
        %v4933 = vpack.c.b16 %v4681, %v4677
        %v4934 = vpack.c.b16 %v4682, %v4678
        %v4935 = vpack.c.b16 %v4683, %v4679
        %v4936 = vpack.c.b16 %v4684, %v4680
        %v4937 = vpack.c.b16 %v4689, %v4685
        %v4938 = vpack.c.b16 %v4690, %v4686
        %v4939 = vpack.c.b16 %v4691, %v4687
        %v4940 = vpack.c.b16 %v4692, %v4688
        %v4941 = vpack.c.b16 %v4697, %v4693
        %v4942 = vpack.c.b16 %v4698, %v4694
        %v4943 = vpack.c.b16 %v4699, %v4695
        %v4944 = vpack.c.b16 %v4700, %v4696
        %v4945 = vpack.c.b16 %v4705, %v4701
        %v4946 = vpack.c.b16 %v4706, %v4702
        %v4947 = vpack.c.b16 %v4707, %v4703
        %v4948 = vpack.c.b16 %v4708, %v4704
        %v4949 = vpack.c.b16 %v4713, %v4709
        %v4950 = vpack.c.b16 %v4714, %v4710
        %v4951 = vpack.c.b16 %v4715, %v4711
        %v4952 = vpack.c.b16 %v4716, %v4712
        %v4953 = vpack.c.b16 %v4721, %v4717
        %v4954 = vpack.c.b16 %v4722, %v4718
        %v4955 = vpack.c.b16 %v4723, %v4719
        %v4956 = vpack.c.b16 %v4724, %v4720
        %v4957 = vpack.c.b16 %v4729, %v4725
        %v4958 = vpack.c.b16 %v4730, %v4726
        %v4959 = vpack.c.b16 %v4731, %v4727
        %v4960 = vpack.c.b16 %v4732, %v4728
        %v4961 = vpack.c.b16 %v4737, %v4733
        %v4962 = vpack.c.b16 %v4738, %v4734
        %v4963 = vpack.c.b16 %v4739, %v4735
        %v4964 = vpack.c.b16 %v4740, %v4736
        %v4965 = vpack.c.b16 %v4745, %v4741
        %v4966 = vpack.c.b16 %v4746, %v4742
        %v4967 = vpack.c.b16 %v4747, %v4743
        %v4968 = vpack.c.b16 %v4748, %v4744
        %v4969 = vpack.c.b16 %v4753, %v4749
        %v4970 = vpack.c.b16 %v4754, %v4750
        %v4971 = vpack.c.b16 %v4755, %v4751
        %v4972 = vpack.c.b16 %v4756, %v4752
        %v4973 = vpack.c.b16 %v4761, %v4757
        %v4974 = vpack.c.b16 %v4762, %v4758
        %v4975 = vpack.c.b16 %v4763, %v4759
        %v4976 = vpack.c.b16 %v4764, %v4760
        %v4977 = vpack.c.b16 %v4769, %v4765
        %v4978 = vpack.c.b16 %v4770, %v4766
        %v4979 = vpack.c.b16 %v4771, %v4767
        %v4980 = vpack.c.b16 %v4772, %v4768
        %v4981 = vpack.c.b16 %v4777, %v4773
        %v4982 = vpack.c.b16 %v4778, %v4774
        %v4983 = vpack.c.b16 %v4779, %v4775
        %v4984 = vpack.c.b16 %v4780, %v4776
        %v4985 = vpack.c.b16 %v4785, %v4781
        %v4986 = vpack.c.b16 %v4786, %v4782
        %v4987 = vpack.c.b16 %v4787, %v4783
        %v4988 = vpack.c.b16 %v4788, %v4784
        %v4989 = vpack.c.b16 %v4793, %v4789
        %v4990 = vpack.c.b16 %v4794, %v4790
        %v4991 = vpack.c.b16 %v4795, %v4791
        %v4992 = vpack.c.b16 %v4796, %v4792
        %v4993 = vpack.c.b16 %v4801, %v4797
        %v4994 = vpack.c.b16 %v4802, %v4798
        %v4995 = vpack.c.b16 %v4803, %v4799
        %v4996 = vpack.c.b16 %v4804, %v4800
        %v4997 = vpack.c.b16 %v4809, %v4805
        %v4998 = vpack.c.b16 %v4810, %v4806
        %v4999 = vpack.c.b16 %v4811, %v4807
        %v5000 = vpack.c.b16 %v4812, %v4808
        %v5001 = vpack.c.b16 %v4817, %v4813
        %v5002 = vpack.c.b16 %v4818, %v4814
        %v5003 = vpack.c.b16 %v4819, %v4815
        %v5004 = vpack.c.b16 %v4820, %v4816
        %v5005 = vpack.c.b16 %v4825, %v4821
        %v5006 = vpack.c.b16 %v4826, %v4822
        %v5007 = vpack.c.b16 %v4827, %v4823
        %v5008 = vpack.c.b16 %v4828, %v4824
        %v5009 = vpack.c.b16 %v4833, %v4829
        %v5010 = vpack.c.b16 %v4834, %v4830
        %v5011 = vpack.c.b16 %v4835, %v4831
        %v5012 = vpack.c.b16 %v4836, %v4832
        %v5013 = vpack.c.b16 %v4841, %v4837
        %v5014 = vpack.c.b16 %v4842, %v4838
        %v5015 = vpack.c.b16 %v4843, %v4839
        %v5016 = vpack.c.b16 %v4844, %v4840
        %v5017 = vpack.c.b16 %v4849, %v4845
        %v5018 = vpack.c.b16 %v4850, %v4846
        %v5019 = vpack.c.b16 %v4851, %v4847
        %v5020 = vpack.c.b16 %v4852, %v4848
        %v5021 = vpack.c.b16 %v4857, %v4853
        %v5022 = vpack.c.b16 %v4858, %v4854
        %v5023 = vpack.c.b16 %v4859, %v4855
        %v5024 = vpack.c.b16 %v4860, %v4856
        %v5025 = vpack.c.b16 %v4865, %v4861
        %v5026 = vpack.c.b16 %v4866, %v4862
        %v5027 = vpack.c.b16 %v4867, %v4863
        %v5028 = vpack.c.b16 %v4868, %v4864
        %v5029 = vpack.c.b16 %v4873, %v4869
        %v5030 = vpack.c.b16 %v4874, %v4870
        %v5031 = vpack.c.b16 %v4875, %v4871
        %v5032 = vpack.c.b16 %v4876, %v4872
        %v5033 = vpack.c.b16 %v4881, %v4877
        %v5034 = vpack.c.b16 %v4882, %v4878
        %v5035 = vpack.c.b16 %v4883, %v4879
        %v5036 = vpack.c.b16 %v4884, %v4880
        %v5037 = vpack.c.b16 %v4889, %v4885
        %v5038 = vpack.c.b16 %v4890, %v4886
        %v5039 = vpack.c.b16 %v4891, %v4887
        %v5040 = vpack.c.b16 %v4892, %v4888
        %v5041 = vpack.c.b16 %v4897, %v4893
        %v5042 = vpack.c.b16 %v4898, %v4894
        %v5043 = vpack.c.b16 %v4899, %v4895
        %v5044 = vpack.c.b16 %v4900, %v4896
        %v5045 = vpack.c.b16 %v4905, %v4901
        %v5046 = vpack.c.b16 %v4906, %v4902
        %v5047 = vpack.c.b16 %v4907, %v4903
        %v5048 = vpack.c.b16 %v4908, %v4904
        %v5049 = vpack.c.b16 %v4913, %v4909
        %v5050 = vpack.c.b16 %v4914, %v4910
        %v5051 = vpack.c.b16 %v4915, %v4911
        %v5052 = vpack.c.b16 %v4916, %v4912
        %v5053 = vpack.c.b16 %v4921, %v4917
        %v5054 = vpack.c.b16 %v4922, %v4918
        %v5055 = vpack.c.b16 %v4923, %v4919
        %v5056 = vpack.c.b16 %v4924, %v4920
        %v5057 = vpack.c.b16 %v4929, %v4925
        %v5058 = vpack.c.b16 %v4930, %v4926
        %v5059 = vpack.c.b16 %v4931, %v4927
        %v5060 = vpack.c.b16 %v4932, %v4928
        %5189 = vmatprep.subr.bf16.mxu0 %v4934
        %5190 = vmatpush1.bf16.msra.mxu0 %v4933
        %5191 = vmatprep.subr.bf16.mxu0 %v4938
        %5192 = vmatpush1.bf16.msra.mxu0 %v4937
        %5193 = vmatprep.subr.bf16.mxu0 %v4942
        %5194 = vmatpush1.bf16.msra.mxu0 %v4941
        %5195 = vmatprep.subr.bf16.mxu0 %v4946
        %5196 = vmatpush1.bf16.msra.mxu0 %v4945
        %5197 = vmatprep.subr.bf16.mxu0 %v4950
        %5198 = vmatpush1.bf16.msra.mxu0 %v4949
        %5199 = vmatprep.subr.bf16.mxu0 %v4954
        %5200 = vmatpush1.bf16.msra.mxu0 %v4953
        %5201 = vmatprep.subr.bf16.mxu0 %v4958
        %5202 = vmatpush1.bf16.msra.mxu0 %v4957
        %5203 = vmatprep.subr.bf16.mxu0 %v4962
        %5204 = vmatpush1.bf16.msra.mxu0 %v4961
        %5205 = vmatprep.subr.bf16.mxu0 %v4966
        %5206 = vmatpush1.bf16.msra.mxu0 %v4965
        %5207 = vmatprep.subr.bf16.mxu0 %v4970
        %5208 = vmatpush1.bf16.msra.mxu0 %v4969
        %5209 = vmatprep.subr.bf16.mxu0 %v4974
        %5210 = vmatpush1.bf16.msra.mxu0 %v4973
        %5211 = vmatprep.subr.bf16.mxu0 %v4978
        %5212 = vmatpush1.bf16.msra.mxu0 %v4977
        %5213 = vmatprep.subr.bf16.mxu0 %v4982
        %5214 = vmatpush1.bf16.msra.mxu0 %v4981
        %5215 = vmatprep.subr.bf16.mxu0 %v4986
        %5216 = vmatpush1.bf16.msra.mxu0 %v4985
        %5217 = vmatprep.subr.bf16.mxu0 %v4990
        %5218 = vmatpush1.bf16.msra.mxu0 %v4989
        %5219 = vmatprep.subr.bf16.mxu0 %v4994
        %5220 = vmatpush1.bf16.msra.mxu0 %v4993
        %5221 = vmatprep.mubr.bf16.mxu0 %v4417
        %5222 = vmatmul.mubr.bf16.gmra.mrb[0].mxu0 %v4416
        %v5223 = vpop.f32.mrb[0].mxu0
        %v5224 = vadd.f32 0.0, %v5223
        %v5225 = vpop.f32.mrb[0].mxu0
        %v5226 = vadd.f32 0.0, %v5225
        %v5227 = vpop.f32.mrb[0].mxu0
        %v5228 = vpop.f32.mrb[0].mxu0
        %5229 = vdwg.mxu0
        %5230 = vmatprep.subr.bf16.mxu0 %v4998
        %5231 = vmatpush1.bf16.msra.mxu0 %v4997
        %5232 = vmatprep.subr.bf16.mxu0 %v5002
        %5233 = vmatpush1.bf16.msra.mxu0 %v5001
        %5234 = vmatprep.subr.bf16.mxu0 %v5006
        %5235 = vmatpush1.bf16.msra.mxu0 %v5005
        %5236 = vmatprep.subr.bf16.mxu0 %v5010
        %5237 = vmatpush1.bf16.msra.mxu0 %v5009
        %5238 = vmatprep.subr.bf16.mxu0 %v5014
        %5239 = vmatpush1.bf16.msra.mxu0 %v5013
        %5240 = vmatprep.subr.bf16.mxu0 %v5018
        %5241 = vmatpush1.bf16.msra.mxu0 %v5017
        %5242 = vmatprep.subr.bf16.mxu0 %v5022
        %5243 = vmatpush1.bf16.msra.mxu0 %v5021
        %5244 = vmatprep.subr.bf16.mxu0 %v5026
        %5245 = vmatpush1.bf16.msra.mxu0 %v5025
        %5246 = vmatprep.subr.bf16.mxu0 %v5030
        %5247 = vmatpush1.bf16.msra.mxu0 %v5029
        %5248 = vmatprep.subr.bf16.mxu0 %v5034
        %5249 = vmatpush1.bf16.msra.mxu0 %v5033
        %5250 = vmatprep.subr.bf16.mxu0 %v5038
        %5251 = vmatpush1.bf16.msra.mxu0 %v5037
        %5252 = vmatprep.subr.bf16.mxu0 %v5042
        %5253 = vmatpush1.bf16.msra.mxu0 %v5041
        %5254 = vmatprep.subr.bf16.mxu0 %v5046
        %5255 = vmatpush1.bf16.msra.mxu0 %v5045
        %5256 = vmatprep.subr.bf16.mxu0 %v5050
        %5257 = vmatpush1.bf16.msra.mxu0 %v5049
        %5258 = vmatprep.subr.bf16.mxu0 %v5054
        %5259 = vmatpush1.bf16.msra.mxu0 %v5053
        %5260 = vmatprep.subr.bf16.mxu0 %v5058
        %5261 = vmatpush1.bf16.msra.mxu0 %v5057
        %5262 = vmatprep.mubr.bf16.mxu0 %v4419
        %5263 = vmatmul.mubr.bf16.gmra.mrb[0].mxu0 %v4418
        %v5264 = vpop.f32.mrb[0].mxu0
        %v5265 = vadd.f32 %v5224, %v5264
        %v5266 = vpop.f32.mrb[0].mxu0
        %v5267 = vadd.f32 %v5226, %v5266
        %v5268 = vpop.f32.mrb[0].mxu0
        %v5269 = vpop.f32.mrb[0].mxu0
        %5270 = vdwg.mxu0
        %5271 = vmatprep.subr.bf16.mxu0 %v4936
        %5272 = vmatpush1.bf16.msra.mxu0 %v4935
        %5273 = vmatprep.subr.bf16.mxu0 %v4940
        %5274 = vmatpush1.bf16.msra.mxu0 %v4939
        %5275 = vmatprep.subr.bf16.mxu0 %v4944
        %5276 = vmatpush1.bf16.msra.mxu0 %v4943
        %5277 = vmatprep.subr.bf16.mxu0 %v4948
        %5278 = vmatpush1.bf16.msra.mxu0 %v4947
        %5279 = vmatprep.subr.bf16.mxu0 %v4952
        %5280 = vmatpush1.bf16.msra.mxu0 %v4951
        %5281 = vmatprep.subr.bf16.mxu0 %v4956
        %5282 = vmatpush1.bf16.msra.mxu0 %v4955
        %5283 = vmatprep.subr.bf16.mxu0 %v4960
        %5284 = vmatpush1.bf16.msra.mxu0 %v4959
        %5285 = vmatprep.subr.bf16.mxu0 %v4964
        %5286 = vmatpush1.bf16.msra.mxu0 %v4963
        %5287 = vmatprep.subr.bf16.mxu0 %v4968
        %5288 = vmatpush1.bf16.msra.mxu0 %v4967
        %5289 = vmatprep.subr.bf16.mxu0 %v4972
        %5290 = vmatpush1.bf16.msra.mxu0 %v4971
        %5291 = vmatprep.subr.bf16.mxu0 %v4976
        %5292 = vmatpush1.bf16.msra.mxu0 %v4975
        %5293 = vmatprep.subr.bf16.mxu0 %v4980
        %5294 = vmatpush1.bf16.msra.mxu0 %v4979
        %5295 = vmatprep.subr.bf16.mxu0 %v4984
        %5296 = vmatpush1.bf16.msra.mxu0 %v4983
        %5297 = vmatprep.subr.bf16.mxu0 %v4988
        %5298 = vmatpush1.bf16.msra.mxu0 %v4987
        %5299 = vmatprep.subr.bf16.mxu0 %v4992
        %5300 = vmatpush1.bf16.msra.mxu0 %v4991
        %5301 = vmatprep.subr.bf16.mxu0 %v4996
        %5302 = vmatpush1.bf16.msra.mxu0 %v4995
        %5303 = vmatprep.mubr.bf16.mxu0 %v4417
        %5304 = vmatmul.mubr.bf16.gmra.mrb[0].mxu0 %v4416
        %v5305 = vpop.f32.mrb[0].mxu0
        %v5306 = vadd.f32 0.0, %v5305
        %v5307 = vpop.f32.mrb[0].mxu0
        %v5308 = vadd.f32 0.0, %v5307
        %v5309 = vpop.f32.mrb[0].mxu0
        %v5310 = vpop.f32.mrb[0].mxu0
        %5311 = vdwg.mxu0
        %5312 = vmatprep.subr.bf16.mxu0 %v5000
        %5313 = vmatpush1.bf16.msra.mxu0 %v4999
        %5314 = vmatprep.subr.bf16.mxu0 %v5004
        %5315 = vmatpush1.bf16.msra.mxu0 %v5003
        %5316 = vmatprep.subr.bf16.mxu0 %v5008
        %5317 = vmatpush1.bf16.msra.mxu0 %v5007
        %5318 = vmatprep.subr.bf16.mxu0 %v5012
        %5319 = vmatpush1.bf16.msra.mxu0 %v5011
        %5320 = vmatprep.subr.bf16.mxu0 %v5016
        %5321 = vmatpush1.bf16.msra.mxu0 %v5015
        %5322 = vmatprep.subr.bf16.mxu0 %v5020
        %5323 = vmatpush1.bf16.msra.mxu0 %v5019
        %5324 = vmatprep.subr.bf16.mxu0 %v5024
        %5325 = vmatpush1.bf16.msra.mxu0 %v5023
        %5326 = vmatprep.subr.bf16.mxu0 %v5028
        %5327 = vmatpush1.bf16.msra.mxu0 %v5027
        %5328 = vmatprep.subr.bf16.mxu0 %v5032
        %5329 = vmatpush1.bf16.msra.mxu0 %v5031
        %5330 = vmatprep.subr.bf16.mxu0 %v5036
        %5331 = vmatpush1.bf16.msra.mxu0 %v5035
        %5332 = vmatprep.subr.bf16.mxu0 %v5040
        %5333 = vmatpush1.bf16.msra.mxu0 %v5039
        %5334 = vmatprep.subr.bf16.mxu0 %v5044
        %5335 = vmatpush1.bf16.msra.mxu0 %v5043
        %5336 = vmatprep.subr.bf16.mxu0 %v5048
        %5337 = vmatpush1.bf16.msra.mxu0 %v5047
        %5338 = vmatprep.subr.bf16.mxu0 %v5052
        %5339 = vmatpush1.bf16.msra.mxu0 %v5051
        %5340 = vmatprep.subr.bf16.mxu0 %v5056
        %5341 = vmatpush1.bf16.msra.mxu0 %v5055
        %5342 = vmatprep.subr.bf16.mxu0 %v5060
        %5343 = vmatpush1.bf16.msra.mxu0 %v5059
        %5344 = vmatprep.mubr.bf16.mxu0 %v4419
        %5345 = vmatmul.mubr.bf16.gmra.mrb[0].mxu0 %v4418
        %v5346 = vpop.f32.mrb[0].mxu0
        %v5347 = vadd.f32 %v5306, %v5346
        %v5348 = vpop.f32.mrb[0].mxu0
        %v5349 = vadd.f32 %v5308, %v5348
        %v5350 = vpop.f32.mrb[0].mxu0
        %v5351 = vpop.f32.mrb[0].mxu0
        %5352 = vdwg.mxu0
        %v5481 = vunpack.c.l.b16 %v4288
        %v5482 = vunpack.c.h.b16 %v4288
        %v5483 = vunpack.c.l.b16 %v4289
        %v5484 = vunpack.c.h.b16 %v4289
        %v5485 = vunpack.c.l.b16 %v4290
        %v5486 = vunpack.c.h.b16 %v4290
        %v5487 = vunpack.c.l.b16 %v4291
        %v5488 = vunpack.c.h.b16 %v4291
        %v5489 = vunpack.c.l.b16 %v4292
        %v5490 = vunpack.c.h.b16 %v4292
        %v5491 = vunpack.c.l.b16 %v4293
        %v5492 = vunpack.c.h.b16 %v4293
        %v5493 = vunpack.c.l.b16 %v4294
        %v5494 = vunpack.c.h.b16 %v4294
        %v5495 = vunpack.c.l.b16 %v4295
        %v5496 = vunpack.c.h.b16 %v4295
        %v5497 = vunpack.c.l.b16 %v4296
        %v5498 = vunpack.c.h.b16 %v4296
        %v5499 = vunpack.c.l.b16 %v4297
        %v5500 = vunpack.c.h.b16 %v4297
        %v5501 = vunpack.c.l.b16 %v4298
        %v5502 = vunpack.c.h.b16 %v4298
        %v5503 = vunpack.c.l.b16 %v4299
        %v5504 = vunpack.c.h.b16 %v4299
        %v5505 = vunpack.c.l.b16 %v4300
        %v5506 = vunpack.c.h.b16 %v4300
        %v5507 = vunpack.c.l.b16 %v4301
        %v5508 = vunpack.c.h.b16 %v4301
        %v5509 = vunpack.c.l.b16 %v4302
        %v5510 = vunpack.c.h.b16 %v4302
        %v5511 = vunpack.c.l.b16 %v4303
        %v5512 = vunpack.c.h.b16 %v4303
        %v5513 = vunpack.c.l.b16 %v4304
        %v5514 = vunpack.c.h.b16 %v4304
        %v5515 = vunpack.c.l.b16 %v4305
        %v5516 = vunpack.c.h.b16 %v4305
        %v5517 = vunpack.c.l.b16 %v4306
        %v5518 = vunpack.c.h.b16 %v4306
        %v5519 = vunpack.c.l.b16 %v4307
        %v5520 = vunpack.c.h.b16 %v4307
        %v5521 = vunpack.c.l.b16 %v4308
        %v5522 = vunpack.c.h.b16 %v4308
        %v5523 = vunpack.c.l.b16 %v4309
        %v5524 = vunpack.c.h.b16 %v4309
        %v5525 = vunpack.c.l.b16 %v4310
        %v5526 = vunpack.c.h.b16 %v4310
        %v5527 = vunpack.c.l.b16 %v4311
        %v5528 = vunpack.c.h.b16 %v4311
        %v5529 = vunpack.c.l.b16 %v4312
        %v5530 = vunpack.c.h.b16 %v4312
        %v5531 = vunpack.c.l.b16 %v4313
        %v5532 = vunpack.c.h.b16 %v4313
        %v5533 = vunpack.c.l.b16 %v4314
        %v5534 = vunpack.c.h.b16 %v4314
        %v5535 = vunpack.c.l.b16 %v4315
        %v5536 = vunpack.c.h.b16 %v4315
        %v5537 = vunpack.c.l.b16 %v4316
        %v5538 = vunpack.c.h.b16 %v4316
        %v5539 = vunpack.c.l.b16 %v4317
        %v5540 = vunpack.c.h.b16 %v4317
        %v5541 = vunpack.c.l.b16 %v4318
        %v5542 = vunpack.c.h.b16 %v4318
        %v5543 = vunpack.c.l.b16 %v4319
        %v5544 = vunpack.c.h.b16 %v4319
        %v5545 = vunpack.c.l.b16 %v4320
        %v5546 = vunpack.c.h.b16 %v4320
        %v5547 = vunpack.c.l.b16 %v4321
        %v5548 = vunpack.c.h.b16 %v4321
        %v5549 = vunpack.c.l.b16 %v4322
        %v5550 = vunpack.c.h.b16 %v4322
        %v5551 = vunpack.c.l.b16 %v4323
        %v5552 = vunpack.c.h.b16 %v4323
        %v5553 = vunpack.c.l.b16 %v4324
        %v5554 = vunpack.c.h.b16 %v4324
        %v5555 = vunpack.c.l.b16 %v4325
        %v5556 = vunpack.c.h.b16 %v4325
        %v5557 = vunpack.c.l.b16 %v4326
        %v5558 = vunpack.c.h.b16 %v4326
        %v5559 = vunpack.c.l.b16 %v4327
        %v5560 = vunpack.c.h.b16 %v4327
        %v5561 = vunpack.c.l.b16 %v4328
        %v5562 = vunpack.c.h.b16 %v4328
        %v5563 = vunpack.c.l.b16 %v4329
        %v5564 = vunpack.c.h.b16 %v4329
        %v5565 = vunpack.c.l.b16 %v4330
        %v5566 = vunpack.c.h.b16 %v4330
        %v5567 = vunpack.c.l.b16 %v4331
        %v5568 = vunpack.c.h.b16 %v4331
        %v5569 = vunpack.c.l.b16 %v4332
        %v5570 = vunpack.c.h.b16 %v4332
        %v5571 = vunpack.c.l.b16 %v4333
        %v5572 = vunpack.c.h.b16 %v4333
        %v5573 = vunpack.c.l.b16 %v4334
        %v5574 = vunpack.c.h.b16 %v4334
        %v5575 = vunpack.c.l.b16 %v4335
        %v5576 = vunpack.c.h.b16 %v4335
        %v5577 = vunpack.c.l.b16 %v4336
        %v5578 = vunpack.c.h.b16 %v4336
        %v5579 = vunpack.c.l.b16 %v4337
        %v5580 = vunpack.c.h.b16 %v4337
        %v5581 = vunpack.c.l.b16 %v4338
        %v5582 = vunpack.c.h.b16 %v4338
        %v5583 = vunpack.c.l.b16 %v4339
        %v5584 = vunpack.c.h.b16 %v4339
        %v5585 = vunpack.c.l.b16 %v4340
        %v5586 = vunpack.c.h.b16 %v4340
        %v5587 = vunpack.c.l.b16 %v4341
        %v5588 = vunpack.c.h.b16 %v4341
        %v5589 = vunpack.c.l.b16 %v4342
        %v5590 = vunpack.c.h.b16 %v4342
        %v5591 = vunpack.c.l.b16 %v4343
        %v5592 = vunpack.c.h.b16 %v4343
        %v5593 = vunpack.c.l.b16 %v4344
        %v5594 = vunpack.c.h.b16 %v4344
        %v5595 = vunpack.c.l.b16 %v4345
        %v5596 = vunpack.c.h.b16 %v4345
        %v5597 = vunpack.c.l.b16 %v4346
        %v5598 = vunpack.c.h.b16 %v4346
        %v5599 = vunpack.c.l.b16 %v4347
        %v5600 = vunpack.c.h.b16 %v4347
        %v5601 = vunpack.c.l.b16 %v4348
        %v5602 = vunpack.c.h.b16 %v4348
        %v5603 = vunpack.c.l.b16 %v4349
        %v5604 = vunpack.c.h.b16 %v4349
        %v5605 = vunpack.c.l.b16 %v4350
        %v5606 = vunpack.c.h.b16 %v4350
        %v5607 = vunpack.c.l.b16 %v4351
        %v5608 = vunpack.c.h.b16 %v4351
        %v5609 = vunpack.c.l.b16 %v4352
        %v5610 = vunpack.c.h.b16 %v4352
        %v5611 = vunpack.c.l.b16 %v4353
        %v5612 = vunpack.c.h.b16 %v4353
        %v5613 = vunpack.c.l.b16 %v4354
        %v5614 = vunpack.c.h.b16 %v4354
        %v5615 = vunpack.c.l.b16 %v4355
        %v5616 = vunpack.c.h.b16 %v4355
        %v5617 = vunpack.c.l.b16 %v4356
        %v5618 = vunpack.c.h.b16 %v4356
        %v5619 = vunpack.c.l.b16 %v4357
        %v5620 = vunpack.c.h.b16 %v4357
        %v5621 = vunpack.c.l.b16 %v4358
        %v5622 = vunpack.c.h.b16 %v4358
        %v5623 = vunpack.c.l.b16 %v4359
        %v5624 = vunpack.c.h.b16 %v4359
        %v5625 = vunpack.c.l.b16 %v4360
        %v5626 = vunpack.c.h.b16 %v4360
        %v5627 = vunpack.c.l.b16 %v4361
        %v5628 = vunpack.c.h.b16 %v4361
        %v5629 = vunpack.c.l.b16 %v4362
        %v5630 = vunpack.c.h.b16 %v4362
        %v5631 = vunpack.c.l.b16 %v4363
        %v5632 = vunpack.c.h.b16 %v4363
        %v5633 = vunpack.c.l.b16 %v4364
        %v5634 = vunpack.c.h.b16 %v4364
        %v5635 = vunpack.c.l.b16 %v4365
        %v5636 = vunpack.c.h.b16 %v4365
        %v5637 = vunpack.c.l.b16 %v4366
        %v5638 = vunpack.c.h.b16 %v4366
        %v5639 = vunpack.c.l.b16 %v4367
        %v5640 = vunpack.c.h.b16 %v4367
        %v5641 = vunpack.c.l.b16 %v4368
        %v5642 = vunpack.c.h.b16 %v4368
        %v5643 = vunpack.c.l.b16 %v4369
        %v5644 = vunpack.c.h.b16 %v4369
        %v5645 = vunpack.c.l.b16 %v4370
        %v5646 = vunpack.c.h.b16 %v4370
        %v5647 = vunpack.c.l.b16 %v4371
        %v5648 = vunpack.c.h.b16 %v4371
        %v5649 = vunpack.c.l.b16 %v4372
        %v5650 = vunpack.c.h.b16 %v4372
        %v5651 = vunpack.c.l.b16 %v4373
        %v5652 = vunpack.c.h.b16 %v4373
        %v5653 = vunpack.c.l.b16 %v4374
        %v5654 = vunpack.c.h.b16 %v4374
        %v5655 = vunpack.c.l.b16 %v4375
        %v5656 = vunpack.c.h.b16 %v4375
        %v5657 = vunpack.c.l.b16 %v4376
        %v5658 = vunpack.c.h.b16 %v4376
        %v5659 = vunpack.c.l.b16 %v4377
        %v5660 = vunpack.c.h.b16 %v4377
        %v5661 = vunpack.c.l.b16 %v4378
        %v5662 = vunpack.c.h.b16 %v4378
        %v5663 = vunpack.c.l.b16 %v4379
        %v5664 = vunpack.c.h.b16 %v4379
        %v5665 = vunpack.c.l.b16 %v4380
        %v5666 = vunpack.c.h.b16 %v4380
        %v5667 = vunpack.c.l.b16 %v4381
        %v5668 = vunpack.c.h.b16 %v4381
        %v5669 = vunpack.c.l.b16 %v4382
        %v5670 = vunpack.c.h.b16 %v4382
        %v5671 = vunpack.c.l.b16 %v4383
        %v5672 = vunpack.c.h.b16 %v4383
        %v5673 = vunpack.c.l.b16 %v4384
        %v5674 = vunpack.c.h.b16 %v4384
        %v5675 = vunpack.c.l.b16 %v4385
        %v5676 = vunpack.c.h.b16 %v4385
        %v5677 = vunpack.c.l.b16 %v4386
        %v5678 = vunpack.c.h.b16 %v4386
        %v5679 = vunpack.c.l.b16 %v4387
        %v5680 = vunpack.c.h.b16 %v4387
        %v5681 = vunpack.c.l.b16 %v4388
        %v5682 = vunpack.c.h.b16 %v4388
        %v5683 = vunpack.c.l.b16 %v4389
        %v5684 = vunpack.c.h.b16 %v4389
        %v5685 = vunpack.c.l.b16 %v4390
        %v5686 = vunpack.c.h.b16 %v4390
        %v5687 = vunpack.c.l.b16 %v4391
        %v5688 = vunpack.c.h.b16 %v4391
        %v5689 = vunpack.c.l.b16 %v4392
        %v5690 = vunpack.c.h.b16 %v4392
        %v5691 = vunpack.c.l.b16 %v4393
        %v5692 = vunpack.c.h.b16 %v4393
        %v5693 = vunpack.c.l.b16 %v4394
        %v5694 = vunpack.c.h.b16 %v4394
        %v5695 = vunpack.c.l.b16 %v4395
        %v5696 = vunpack.c.h.b16 %v4395
        %v5697 = vunpack.c.l.b16 %v4396
        %v5698 = vunpack.c.h.b16 %v4396
        %v5699 = vunpack.c.l.b16 %v4397
        %v5700 = vunpack.c.h.b16 %v4397
        %v5701 = vunpack.c.l.b16 %v4398
        %v5702 = vunpack.c.h.b16 %v4398
        %v5703 = vunpack.c.l.b16 %v4399
        %v5704 = vunpack.c.h.b16 %v4399
        %v5705 = vunpack.c.l.b16 %v4400
        %v5706 = vunpack.c.h.b16 %v4400
        %v5707 = vunpack.c.l.b16 %v4401
        %v5708 = vunpack.c.h.b16 %v4401
        %v5709 = vunpack.c.l.b16 %v4402
        %v5710 = vunpack.c.h.b16 %v4402
        %v5711 = vunpack.c.l.b16 %v4403
        %v5712 = vunpack.c.h.b16 %v4403
        %v5713 = vunpack.c.l.b16 %v4404
        %v5714 = vunpack.c.h.b16 %v4404
        %v5715 = vunpack.c.l.b16 %v4405
        %v5716 = vunpack.c.h.b16 %v4405
        %v5717 = vunpack.c.l.b16 %v4406
        %v5718 = vunpack.c.h.b16 %v4406
        %v5719 = vunpack.c.l.b16 %v4407
        %v5720 = vunpack.c.h.b16 %v4407
        %v5721 = vunpack.c.l.b16 %v4408
        %v5722 = vunpack.c.h.b16 %v4408
        %v5723 = vunpack.c.l.b16 %v4409
        %v5724 = vunpack.c.h.b16 %v4409
        %v5725 = vunpack.c.l.b16 %v4410
        %v5726 = vunpack.c.h.b16 %v4410
        %v5727 = vunpack.c.l.b16 %v4411
        %v5728 = vunpack.c.h.b16 %v4411
        %v5729 = vunpack.c.l.b16 %v4412
        %v5730 = vunpack.c.h.b16 %v4412
        %v5731 = vunpack.c.l.b16 %v4413
        %v5732 = vunpack.c.h.b16 %v4413
        %v5733 = vunpack.c.l.b16 %v4414
        %v5734 = vunpack.c.h.b16 %v4414
        %v5735 = vunpack.c.l.b16 %v4415
        %v5736 = vunpack.c.h.b16 %v4415
        %v5737 = vpack.c.b16 %v5485, %v5481
        %v5738 = vpack.c.b16 %v5486, %v5482
        %v5739 = vpack.c.b16 %v5487, %v5483
        %v5740 = vpack.c.b16 %v5488, %v5484
        %v5741 = vpack.c.b16 %v5493, %v5489
        %v5742 = vpack.c.b16 %v5494, %v5490
        %v5743 = vpack.c.b16 %v5495, %v5491
        %v5744 = vpack.c.b16 %v5496, %v5492
        %v5745 = vpack.c.b16 %v5501, %v5497
        %v5746 = vpack.c.b16 %v5502, %v5498
        %v5747 = vpack.c.b16 %v5503, %v5499
        %v5748 = vpack.c.b16 %v5504, %v5500
        %v5749 = vpack.c.b16 %v5509, %v5505
        %v5750 = vpack.c.b16 %v5510, %v5506
        %v5751 = vpack.c.b16 %v5511, %v5507
        %v5752 = vpack.c.b16 %v5512, %v5508
        %v5753 = vpack.c.b16 %v5517, %v5513
        %v5754 = vpack.c.b16 %v5518, %v5514
        %v5755 = vpack.c.b16 %v5519, %v5515
        %v5756 = vpack.c.b16 %v5520, %v5516
        %v5757 = vpack.c.b16 %v5525, %v5521
        %v5758 = vpack.c.b16 %v5526, %v5522
        %v5759 = vpack.c.b16 %v5527, %v5523
        %v5760 = vpack.c.b16 %v5528, %v5524
        %v5761 = vpack.c.b16 %v5533, %v5529
        %v5762 = vpack.c.b16 %v5534, %v5530
        %v5763 = vpack.c.b16 %v5535, %v5531
        %v5764 = vpack.c.b16 %v5536, %v5532
        %v5765 = vpack.c.b16 %v5541, %v5537
        %v5766 = vpack.c.b16 %v5542, %v5538
        %v5767 = vpack.c.b16 %v5543, %v5539
        %v5768 = vpack.c.b16 %v5544, %v5540
        %v5769 = vpack.c.b16 %v5549, %v5545
        %v5770 = vpack.c.b16 %v5550, %v5546
        %v5771 = vpack.c.b16 %v5551, %v5547
        %v5772 = vpack.c.b16 %v5552, %v5548
        %v5773 = vpack.c.b16 %v5557, %v5553
        %v5774 = vpack.c.b16 %v5558, %v5554
        %v5775 = vpack.c.b16 %v5559, %v5555
        %v5776 = vpack.c.b16 %v5560, %v5556
        %v5777 = vpack.c.b16 %v5565, %v5561
        %v5778 = vpack.c.b16 %v5566, %v5562
        %v5779 = vpack.c.b16 %v5567, %v5563
        %v5780 = vpack.c.b16 %v5568, %v5564
        %v5781 = vpack.c.b16 %v5573, %v5569
        %v5782 = vpack.c.b16 %v5574, %v5570
        %v5783 = vpack.c.b16 %v5575, %v5571
        %v5784 = vpack.c.b16 %v5576, %v5572
        %v5785 = vpack.c.b16 %v5581, %v5577
        %v5786 = vpack.c.b16 %v5582, %v5578
        %v5787 = vpack.c.b16 %v5583, %v5579
        %v5788 = vpack.c.b16 %v5584, %v5580
        %v5789 = vpack.c.b16 %v5589, %v5585
        %v5790 = vpack.c.b16 %v5590, %v5586
        %v5791 = vpack.c.b16 %v5591, %v5587
        %v5792 = vpack.c.b16 %v5592, %v5588
        %v5793 = vpack.c.b16 %v5597, %v5593
        %v5794 = vpack.c.b16 %v5598, %v5594
        %v5795 = vpack.c.b16 %v5599, %v5595
        %v5796 = vpack.c.b16 %v5600, %v5596
        %v5797 = vpack.c.b16 %v5605, %v5601
        %v5798 = vpack.c.b16 %v5606, %v5602
        %v5799 = vpack.c.b16 %v5607, %v5603
        %v5800 = vpack.c.b16 %v5608, %v5604
        %v5801 = vpack.c.b16 %v5613, %v5609
        %v5802 = vpack.c.b16 %v5614, %v5610
        %v5803 = vpack.c.b16 %v5615, %v5611
        %v5804 = vpack.c.b16 %v5616, %v5612
        %v5805 = vpack.c.b16 %v5621, %v5617
        %v5806 = vpack.c.b16 %v5622, %v5618
        %v5807 = vpack.c.b16 %v5623, %v5619
        %v5808 = vpack.c.b16 %v5624, %v5620
        %v5809 = vpack.c.b16 %v5629, %v5625
        %v5810 = vpack.c.b16 %v5630, %v5626
        %v5811 = vpack.c.b16 %v5631, %v5627
        %v5812 = vpack.c.b16 %v5632, %v5628
        %v5813 = vpack.c.b16 %v5637, %v5633
        %v5814 = vpack.c.b16 %v5638, %v5634
        %v5815 = vpack.c.b16 %v5639, %v5635
        %v5816 = vpack.c.b16 %v5640, %v5636
        %v5817 = vpack.c.b16 %v5645, %v5641
        %v5818 = vpack.c.b16 %v5646, %v5642
        %v5819 = vpack.c.b16 %v5647, %v5643
        %v5820 = vpack.c.b16 %v5648, %v5644
        %v5821 = vpack.c.b16 %v5653, %v5649
        %v5822 = vpack.c.b16 %v5654, %v5650
        %v5823 = vpack.c.b16 %v5655, %v5651
        %v5824 = vpack.c.b16 %v5656, %v5652
        %v5825 = vpack.c.b16 %v5661, %v5657
        %v5826 = vpack.c.b16 %v5662, %v5658
        %v5827 = vpack.c.b16 %v5663, %v5659
        %v5828 = vpack.c.b16 %v5664, %v5660
        %v5829 = vpack.c.b16 %v5669, %v5665
        %v5830 = vpack.c.b16 %v5670, %v5666
        %v5831 = vpack.c.b16 %v5671, %v5667
        %v5832 = vpack.c.b16 %v5672, %v5668
        %v5833 = vpack.c.b16 %v5677, %v5673
        %v5834 = vpack.c.b16 %v5678, %v5674
        %v5835 = vpack.c.b16 %v5679, %v5675
        %v5836 = vpack.c.b16 %v5680, %v5676
        %v5837 = vpack.c.b16 %v5685, %v5681
        %v5838 = vpack.c.b16 %v5686, %v5682
        %v5839 = vpack.c.b16 %v5687, %v5683
        %v5840 = vpack.c.b16 %v5688, %v5684
        %v5841 = vpack.c.b16 %v5693, %v5689
        %v5842 = vpack.c.b16 %v5694, %v5690
        %v5843 = vpack.c.b16 %v5695, %v5691
        %v5844 = vpack.c.b16 %v5696, %v5692
        %v5845 = vpack.c.b16 %v5701, %v5697
        %v5846 = vpack.c.b16 %v5702, %v5698
        %v5847 = vpack.c.b16 %v5703, %v5699
        %v5848 = vpack.c.b16 %v5704, %v5700
        %v5849 = vpack.c.b16 %v5709, %v5705
        %v5850 = vpack.c.b16 %v5710, %v5706
        %v5851 = vpack.c.b16 %v5711, %v5707
        %v5852 = vpack.c.b16 %v5712, %v5708
        %v5853 = vpack.c.b16 %v5717, %v5713
        %v5854 = vpack.c.b16 %v5718, %v5714
        %v5855 = vpack.c.b16 %v5719, %v5715
        %v5856 = vpack.c.b16 %v5720, %v5716
        %v5857 = vpack.c.b16 %v5725, %v5721
        %v5858 = vpack.c.b16 %v5726, %v5722
        %v5859 = vpack.c.b16 %v5727, %v5723
        %v5860 = vpack.c.b16 %v5728, %v5724
        %v5861 = vpack.c.b16 %v5733, %v5729
        %v5862 = vpack.c.b16 %v5734, %v5730
        %v5863 = vpack.c.b16 %v5735, %v5731
        %v5864 = vpack.c.b16 %v5736, %v5732
        %5993 = vmatprep.subr.bf16.mxu0 %v5738
        %5994 = vmatpush1.bf16.msra.mxu0 %v5737
        %5995 = vmatprep.subr.bf16.mxu0 %v5742
        %5996 = vmatpush1.bf16.msra.mxu0 %v5741
        %5997 = vmatprep.subr.bf16.mxu0 %v5746
        %5998 = vmatpush1.bf16.msra.mxu0 %v5745
        %5999 = vmatprep.subr.bf16.mxu0 %v5750
        %6000 = vmatpush1.bf16.msra.mxu0 %v5749
        %6001 = vmatprep.subr.bf16.mxu0 %v5754
        %6002 = vmatpush1.bf16.msra.mxu0 %v5753
        %6003 = vmatprep.subr.bf16.mxu0 %v5758
        %6004 = vmatpush1.bf16.msra.mxu0 %v5757
        %6005 = vmatprep.subr.bf16.mxu0 %v5762
        %6006 = vmatpush1.bf16.msra.mxu0 %v5761
        %6007 = vmatprep.subr.bf16.mxu0 %v5766
        %6008 = vmatpush1.bf16.msra.mxu0 %v5765
        %6009 = vmatprep.subr.bf16.mxu0 %v5770
        %6010 = vmatpush1.bf16.msra.mxu0 %v5769
        %6011 = vmatprep.subr.bf16.mxu0 %v5774
        %6012 = vmatpush1.bf16.msra.mxu0 %v5773
        %6013 = vmatprep.subr.bf16.mxu0 %v5778
        %6014 = vmatpush1.bf16.msra.mxu0 %v5777
        %6015 = vmatprep.subr.bf16.mxu0 %v5782
        %6016 = vmatpush1.bf16.msra.mxu0 %v5781
        %6017 = vmatprep.subr.bf16.mxu0 %v5786
        %6018 = vmatpush1.bf16.msra.mxu0 %v5785
        %6019 = vmatprep.subr.bf16.mxu0 %v5790
        %6020 = vmatpush1.bf16.msra.mxu0 %v5789
        %6021 = vmatprep.subr.bf16.mxu0 %v5794
        %6022 = vmatpush1.bf16.msra.mxu0 %v5793
        %6023 = vmatprep.subr.bf16.mxu0 %v5798
        %6024 = vmatpush1.bf16.msra.mxu0 %v5797
        %6025 = vmatprep.mubr.bf16.mxu0 %v4285
        %6026 = vmatmul.mubr.bf16.gmra.mrb[0].mxu0 %v4284
        %v6027 = vpop.f32.mrb[0].mxu0
        %v6028 = vadd.f32 %v5265, %v6027
        %v6029 = vpop.f32.mrb[0].mxu0
        %v6030 = vadd.f32 %v5267, %v6029
        %v6031 = vpop.f32.mrb[0].mxu0
        %v6032 = vpop.f32.mrb[0].mxu0
        %6033 = vdwg.mxu0
        %6034 = vmatprep.subr.bf16.mxu0 %v5802
        %6035 = vmatpush1.bf16.msra.mxu0 %v5801
        %6036 = vmatprep.subr.bf16.mxu0 %v5806
        %6037 = vmatpush1.bf16.msra.mxu0 %v5805
        %6038 = vmatprep.subr.bf16.mxu0 %v5810
        %6039 = vmatpush1.bf16.msra.mxu0 %v5809
        %6040 = vmatprep.subr.bf16.mxu0 %v5814
        %6041 = vmatpush1.bf16.msra.mxu0 %v5813
        %6042 = vmatprep.subr.bf16.mxu0 %v5818
        %6043 = vmatpush1.bf16.msra.mxu0 %v5817
        %6044 = vmatprep.subr.bf16.mxu0 %v5822
        %6045 = vmatpush1.bf16.msra.mxu0 %v5821
        %6046 = vmatprep.subr.bf16.mxu0 %v5826
        %6047 = vmatpush1.bf16.msra.mxu0 %v5825
        %6048 = vmatprep.subr.bf16.mxu0 %v5830
        %6049 = vmatpush1.bf16.msra.mxu0 %v5829
        %6050 = vmatprep.subr.bf16.mxu0 %v5834
        %6051 = vmatpush1.bf16.msra.mxu0 %v5833
        %6052 = vmatprep.subr.bf16.mxu0 %v5838
        %6053 = vmatpush1.bf16.msra.mxu0 %v5837
        %6054 = vmatprep.subr.bf16.mxu0 %v5842
        %6055 = vmatpush1.bf16.msra.mxu0 %v5841
        %6056 = vmatprep.subr.bf16.mxu0 %v5846
        %6057 = vmatpush1.bf16.msra.mxu0 %v5845
        %6058 = vmatprep.subr.bf16.mxu0 %v5850
        %6059 = vmatpush1.bf16.msra.mxu0 %v5849
        %6060 = vmatprep.subr.bf16.mxu0 %v5854
        %6061 = vmatpush1.bf16.msra.mxu0 %v5853
        %6062 = vmatprep.subr.bf16.mxu0 %v5858
        %6063 = vmatpush1.bf16.msra.mxu0 %v5857
        %6064 = vmatprep.subr.bf16.mxu0 %v5862
        %6065 = vmatpush1.bf16.msra.mxu0 %v5861
        %6066 = vmatprep.mubr.bf16.mxu0 %v4287
        %6067 = vmatmul.mubr.bf16.gmra.mrb[0].mxu0 %v4286
        %v6068 = vpop.f32.mrb[0].mxu0
        %v6069 = vadd.f32 %v6028, %v6068
        %v6070 = vpop.f32.mrb[0].mxu0
        %v6071 = vadd.f32 %v6030, %v6070
        %v6072 = vpop.f32.mrb[0].mxu0
        %v6073 = vpop.f32.mrb[0].mxu0
        %6074 = vdwg.mxu0
        %6075 = vmatprep.subr.bf16.mxu0 %v5740
        %6076 = vmatpush1.bf16.msra.mxu0 %v5739
        %6077 = vmatprep.subr.bf16.mxu0 %v5744
        %6078 = vmatpush1.bf16.msra.mxu0 %v5743
        %6079 = vmatprep.subr.bf16.mxu0 %v5748
        %6080 = vmatpush1.bf16.msra.mxu0 %v5747
        %6081 = vmatprep.subr.bf16.mxu0 %v5752
        %6082 = vmatpush1.bf16.msra.mxu0 %v5751
        %6083 = vmatprep.subr.bf16.mxu0 %v5756
        %6084 = vmatpush1.bf16.msra.mxu0 %v5755
        %6085 = vmatprep.subr.bf16.mxu0 %v5760
        %6086 = vmatpush1.bf16.msra.mxu0 %v5759
        %6087 = vmatprep.subr.bf16.mxu0 %v5764
        %6088 = vmatpush1.bf16.msra.mxu0 %v5763
        %6089 = vmatprep.subr.bf16.mxu0 %v5768
        %6090 = vmatpush1.bf16.msra.mxu0 %v5767
        %6091 = vmatprep.subr.bf16.mxu0 %v5772
        %6092 = vmatpush1.bf16.msra.mxu0 %v5771
        %6093 = vmatprep.subr.bf16.mxu0 %v5776
        %6094 = vmatpush1.bf16.msra.mxu0 %v5775
        %6095 = vmatprep.subr.bf16.mxu0 %v5780
        %6096 = vmatpush1.bf16.msra.mxu0 %v5779
        %6097 = vmatprep.subr.bf16.mxu0 %v5784
        %6098 = vmatpush1.bf16.msra.mxu0 %v5783
        %6099 = vmatprep.subr.bf16.mxu0 %v5788
        %6100 = vmatpush1.bf16.msra.mxu0 %v5787
        %6101 = vmatprep.subr.bf16.mxu0 %v5792
        %6102 = vmatpush1.bf16.msra.mxu0 %v5791
        %6103 = vmatprep.subr.bf16.mxu0 %v5796
        %6104 = vmatpush1.bf16.msra.mxu0 %v5795
        %6105 = vmatprep.subr.bf16.mxu0 %v5800
        %6106 = vmatpush1.bf16.msra.mxu0 %v5799
        %6107 = vmatprep.mubr.bf16.mxu0 %v4285
        %6108 = vmatmul.mubr.bf16.gmra.mrb[0].mxu0 %v4284
        %v6109 = vpop.f32.mrb[0].mxu0
        %v6110 = vadd.f32 %v5347, %v6109
        %v6111 = vpop.f32.mrb[0].mxu0
        %v6112 = vadd.f32 %v5349, %v6111
        %v6113 = vpop.f32.mrb[0].mxu0
        %v6114 = vpop.f32.mrb[0].mxu0
        %6115 = vdwg.mxu0
        %6116 = vmatprep.subr.bf16.mxu0 %v5804
        %6117 = vmatpush1.bf16.msra.mxu0 %v5803
        %6118 = vmatprep.subr.bf16.mxu0 %v5808
        %6119 = vmatpush1.bf16.msra.mxu0 %v5807
        %6120 = vmatprep.subr.bf16.mxu0 %v5812
        %6121 = vmatpush1.bf16.msra.mxu0 %v5811
        %6122 = vmatprep.subr.bf16.mxu0 %v5816
        %6123 = vmatpush1.bf16.msra.mxu0 %v5815
        %6124 = vmatprep.subr.bf16.mxu0 %v5820
        %6125 = vmatpush1.bf16.msra.mxu0 %v5819
        %6126 = vmatprep.subr.bf16.mxu0 %v5824
        %6127 = vmatpush1.bf16.msra.mxu0 %v5823
        %6128 = vmatprep.subr.bf16.mxu0 %v5828
        %6129 = vmatpush1.bf16.msra.mxu0 %v5827
        %6130 = vmatprep.subr.bf16.mxu0 %v5832
        %6131 = vmatpush1.bf16.msra.mxu0 %v5831
        %6132 = vmatprep.subr.bf16.mxu0 %v5836
        %6133 = vmatpush1.bf16.msra.mxu0 %v5835
        %6134 = vmatprep.subr.bf16.mxu0 %v5840
        %6135 = vmatpush1.bf16.msra.mxu0 %v5839
        %6136 = vmatprep.subr.bf16.mxu0 %v5844
        %6137 = vmatpush1.bf16.msra.mxu0 %v5843
        %6138 = vmatprep.subr.bf16.mxu0 %v5848
        %6139 = vmatpush1.bf16.msra.mxu0 %v5847
        %6140 = vmatprep.subr.bf16.mxu0 %v5852
        %6141 = vmatpush1.bf16.msra.mxu0 %v5851
        %6142 = vmatprep.subr.bf16.mxu0 %v5856
        %6143 = vmatpush1.bf16.msra.mxu0 %v5855
        %6144 = vmatprep.subr.bf16.mxu0 %v5860
        %6145 = vmatpush1.bf16.msra.mxu0 %v5859
        %6146 = vmatprep.subr.bf16.mxu0 %v5864
        %6147 = vmatpush1.bf16.msra.mxu0 %v5863
        %6148 = vmatprep.mubr.bf16.mxu0 %v4287
        %6149 = vmatmul.mubr.bf16.gmra.mrb[0].mxu0 %v4286
        %v6150 = vpop.f32.mrb[0].mxu0
        %v6151 = vadd.f32 %v6110, %v6150
        %v6152 = vpop.f32.mrb[0].mxu0
        %v6153 = vadd.f32 %v6112, %v6152
        %v6154 = vpop.f32.mrb[0].mxu0
        %v6155 = vpop.f32.mrb[0].mxu0
        %6156 = vdwg.mxu0
        %v6157 = vpack.c.bf16 %v4280, %v4280
        %v6158 = vpack.c.bf16 %v4281, %v4281
        %v6159 = vpack.c.bf16 %v4282, %v4282
        %v6160 = vpack.c.bf16 %v4283, %v4283
        %s6161 = scalar_lea.vmem [#allocation19], 2048
        %v6162 = vld [vmem:[%s6161] sm:$0xff]
        %v6163 = vld [vmem:[%s6161 + $0x8] sm:$0xff]
        %v6164 = vld [vmem:[%s6161 + $0x10] sm:$0xff]
        %v6165 = vld [vmem:[%s6161 + $0x18] sm:$0xff]
        %v6166 = vld [vmem:[%s6161 + $0x20] sm:$0xff]
        %v6167 = vld [vmem:[%s6161 + $0x28] sm:$0xff]
        %v6168 = vld [vmem:[%s6161 + $0x30] sm:$0xff]
        %v6169 = vld [vmem:[%s6161 + $0x38] sm:$0xff]
        %v6170 = vld [vmem:[%s6161 + $0x40] sm:$0xff]
        %v6171 = vld [vmem:[%s6161 + $0x48] sm:$0xff]
        %v6172 = vld [vmem:[%s6161 + $0x50] sm:$0xff]
        %v6173 = vld [vmem:[%s6161 + $0x58] sm:$0xff]
        %v6174 = vld [vmem:[%s6161 + $0x60] sm:$0xff]
        %v6175 = vld [vmem:[%s6161 + $0x68] sm:$0xff]
        %v6176 = vld [vmem:[%s6161 + $0x70] sm:$0xff]
        %v6177 = vld [vmem:[%s6161 + $0x78] sm:$0xff]
        %v6178 = vld [vmem:[%s6161 + $0x80] sm:$0xff]
        %v6179 = vld [vmem:[%s6161 + $0x88] sm:$0xff]
        %v6180 = vld [vmem:[%s6161 + $0x90] sm:$0xff]
        %v6181 = vld [vmem:[%s6161 + $0x98] sm:$0xff]
        %v6182 = vld [vmem:[%s6161 + $0xa0] sm:$0xff]
        %v6183 = vld [vmem:[%s6161 + $0xa8] sm:$0xff]
        %v6184 = vld [vmem:[%s6161 + $0xb0] sm:$0xff]
        %v6185 = vld [vmem:[%s6161 + $0xb8] sm:$0xff]
        %v6186 = vld [vmem:[%s6161 + $0xc0] sm:$0xff]
        %v6187 = vld [vmem:[%s6161 + $0xc8] sm:$0xff]
        %v6188 = vld [vmem:[%s6161 + $0xd0] sm:$0xff]
        %v6189 = vld [vmem:[%s6161 + $0xd8] sm:$0xff]
        %v6190 = vld [vmem:[%s6161 + $0xe0] sm:$0xff]
        %v6191 = vld [vmem:[%s6161 + $0xe8] sm:$0xff]
        %v6192 = vld [vmem:[%s6161 + $0xf0] sm:$0xff]
        %v6193 = vld [vmem:[%s6161 + $0xf8] sm:$0xff]
        %v6194 = vld [vmem:[%s6161 + $0x100] sm:$0xff]
        %v6195 = vld [vmem:[%s6161 + $0x108] sm:$0xff]
        %v6196 = vld [vmem:[%s6161 + $0x110] sm:$0xff]
        %v6197 = vld [vmem:[%s6161 + $0x118] sm:$0xff]
        %v6198 = vld [vmem:[%s6161 + $0x120] sm:$0xff]
        %v6199 = vld [vmem:[%s6161 + $0x128] sm:$0xff]
        %v6200 = vld [vmem:[%s6161 + $0x130] sm:$0xff]
        %v6201 = vld [vmem:[%s6161 + $0x138] sm:$0xff]
        %v6202 = vld [vmem:[%s6161 + $0x140] sm:$0xff]
        %v6203 = vld [vmem:[%s6161 + $0x148] sm:$0xff]
        %v6204 = vld [vmem:[%s6161 + $0x150] sm:$0xff]
        %v6205 = vld [vmem:[%s6161 + $0x158] sm:$0xff]
        %v6206 = vld [vmem:[%s6161 + $0x160] sm:$0xff]
        %v6207 = vld [vmem:[%s6161 + $0x168] sm:$0xff]
        %v6208 = vld [vmem:[%s6161 + $0x170] sm:$0xff]
        %v6209 = vld [vmem:[%s6161 + $0x178] sm:$0xff]
        %v6210 = vld [vmem:[%s6161 + $0x180] sm:$0xff]
        %v6211 = vld [vmem:[%s6161 + $0x188] sm:$0xff]
        %v6212 = vld [vmem:[%s6161 + $0x190] sm:$0xff]
        %v6213 = vld [vmem:[%s6161 + $0x198] sm:$0xff]
        %v6214 = vld [vmem:[%s6161 + $0x1a0] sm:$0xff]
        %v6215 = vld [vmem:[%s6161 + $0x1a8] sm:$0xff]
        %v6216 = vld [vmem:[%s6161 + $0x1b0] sm:$0xff]
        %v6217 = vld [vmem:[%s6161 + $0x1b8] sm:$0xff]
        %v6218 = vld [vmem:[%s6161 + $0x1c0] sm:$0xff]
        %v6219 = vld [vmem:[%s6161 + $0x1c8] sm:$0xff]
        %v6220 = vld [vmem:[%s6161 + $0x1d0] sm:$0xff]
        %v6221 = vld [vmem:[%s6161 + $0x1d8] sm:$0xff]
        %v6222 = vld [vmem:[%s6161 + $0x1e0] sm:$0xff]
        %v6223 = vld [vmem:[%s6161 + $0x1e8] sm:$0xff]
        %v6224 = vld [vmem:[%s6161 + $0x1f0] sm:$0xff]
        %v6225 = vld [vmem:[%s6161 + $0x1f8] sm:$0xff]
        %v6226 = vld [vmem:[%s6161 + $0x200] sm:$0xff]
        %v6227 = vld [vmem:[%s6161 + $0x208] sm:$0xff]
        %v6228 = vld [vmem:[%s6161 + $0x210] sm:$0xff]
        %v6229 = vld [vmem:[%s6161 + $0x218] sm:$0xff]
        %v6230 = vld [vmem:[%s6161 + $0x220] sm:$0xff]
        %v6231 = vld [vmem:[%s6161 + $0x228] sm:$0xff]
        %v6232 = vld [vmem:[%s6161 + $0x230] sm:$0xff]
        %v6233 = vld [vmem:[%s6161 + $0x238] sm:$0xff]
        %v6234 = vld [vmem:[%s6161 + $0x240] sm:$0xff]
        %v6235 = vld [vmem:[%s6161 + $0x248] sm:$0xff]
        %v6236 = vld [vmem:[%s6161 + $0x250] sm:$0xff]
        %v6237 = vld [vmem:[%s6161 + $0x258] sm:$0xff]
        %v6238 = vld [vmem:[%s6161 + $0x260] sm:$0xff]
        %v6239 = vld [vmem:[%s6161 + $0x268] sm:$0xff]
        %v6240 = vld [vmem:[%s6161 + $0x270] sm:$0xff]
        %v6241 = vld [vmem:[%s6161 + $0x278] sm:$0xff]
        %v6242 = vld [vmem:[%s6161 + $0x280] sm:$0xff]
        %v6243 = vld [vmem:[%s6161 + $0x288] sm:$0xff]
        %v6244 = vld [vmem:[%s6161 + $0x290] sm:$0xff]
        %v6245 = vld [vmem:[%s6161 + $0x298] sm:$0xff]
        %v6246 = vld [vmem:[%s6161 + $0x2a0] sm:$0xff]
        %v6247 = vld [vmem:[%s6161 + $0x2a8] sm:$0xff]
        %v6248 = vld [vmem:[%s6161 + $0x2b0] sm:$0xff]
        %v6249 = vld [vmem:[%s6161 + $0x2b8] sm:$0xff]
        %v6250 = vld [vmem:[%s6161 + $0x2c0] sm:$0xff]
        %v6251 = vld [vmem:[%s6161 + $0x2c8] sm:$0xff]
        %v6252 = vld [vmem:[%s6161 + $0x2d0] sm:$0xff]
        %v6253 = vld [vmem:[%s6161 + $0x2d8] sm:$0xff]
        %v6254 = vld [vmem:[%s6161 + $0x2e0] sm:$0xff]
        %v6255 = vld [vmem:[%s6161 + $0x2e8] sm:$0xff]
        %v6256 = vld [vmem:[%s6161 + $0x2f0] sm:$0xff]
        %v6257 = vld [vmem:[%s6161 + $0x2f8] sm:$0xff]
        %v6258 = vld [vmem:[%s6161 + $0x300] sm:$0xff]
        %v6259 = vld [vmem:[%s6161 + $0x308] sm:$0xff]
        %v6260 = vld [vmem:[%s6161 + $0x310] sm:$0xff]
        %v6261 = vld [vmem:[%s6161 + $0x318] sm:$0xff]
        %v6262 = vld [vmem:[%s6161 + $0x320] sm:$0xff]
        %v6263 = vld [vmem:[%s6161 + $0x328] sm:$0xff]
        %v6264 = vld [vmem:[%s6161 + $0x330] sm:$0xff]
        %v6265 = vld [vmem:[%s6161 + $0x338] sm:$0xff]
        %v6266 = vld [vmem:[%s6161 + $0x340] sm:$0xff]
        %v6267 = vld [vmem:[%s6161 + $0x348] sm:$0xff]
        %v6268 = vld [vmem:[%s6161 + $0x350] sm:$0xff]
        %v6269 = vld [vmem:[%s6161 + $0x358] sm:$0xff]
        %v6270 = vld [vmem:[%s6161 + $0x360] sm:$0xff]
        %v6271 = vld [vmem:[%s6161 + $0x368] sm:$0xff]
        %v6272 = vld [vmem:[%s6161 + $0x370] sm:$0xff]
        %v6273 = vld [vmem:[%s6161 + $0x378] sm:$0xff]
        %v6274 = vld [vmem:[%s6161 + $0x380] sm:$0xff]
        %v6275 = vld [vmem:[%s6161 + $0x388] sm:$0xff]
        %v6276 = vld [vmem:[%s6161 + $0x390] sm:$0xff]
        %v6277 = vld [vmem:[%s6161 + $0x398] sm:$0xff]
        %v6278 = vld [vmem:[%s6161 + $0x3a0] sm:$0xff]
        %v6279 = vld [vmem:[%s6161 + $0x3a8] sm:$0xff]
        %v6280 = vld [vmem:[%s6161 + $0x3b0] sm:$0xff]
        %v6281 = vld [vmem:[%s6161 + $0x3b8] sm:$0xff]
        %v6282 = vld [vmem:[%s6161 + $0x3c0] sm:$0xff]
        %v6283 = vld [vmem:[%s6161 + $0x3c8] sm:$0xff]
        %v6284 = vld [vmem:[%s6161 + $0x3d0] sm:$0xff]
        %v6285 = vld [vmem:[%s6161 + $0x3d8] sm:$0xff]
        %v6286 = vld [vmem:[%s6161 + $0x3e0] sm:$0xff]
        %v6287 = vld [vmem:[%s6161 + $0x3e8] sm:$0xff]
        %v6288 = vld [vmem:[%s6161 + $0x3f0] sm:$0xff]
        %v6289 = vld [vmem:[%s6161 + $0x3f8] sm:$0xff]
        %v6418 = vunpack.c.l.b16 %v6162
        %v6419 = vunpack.c.h.b16 %v6162
        %v6420 = vunpack.c.l.b16 %v6163
        %v6421 = vunpack.c.h.b16 %v6163
        %v6422 = vunpack.c.l.b16 %v6164
        %v6423 = vunpack.c.h.b16 %v6164
        %v6424 = vunpack.c.l.b16 %v6165
        %v6425 = vunpack.c.h.b16 %v6165
        %v6426 = vunpack.c.l.b16 %v6166
        %v6427 = vunpack.c.h.b16 %v6166
        %v6428 = vunpack.c.l.b16 %v6167
        %v6429 = vunpack.c.h.b16 %v6167
        %v6430 = vunpack.c.l.b16 %v6168
        %v6431 = vunpack.c.h.b16 %v6168
        %v6432 = vunpack.c.l.b16 %v6169
        %v6433 = vunpack.c.h.b16 %v6169
        %v6434 = vunpack.c.l.b16 %v6170
        %v6435 = vunpack.c.h.b16 %v6170
        %v6436 = vunpack.c.l.b16 %v6171
        %v6437 = vunpack.c.h.b16 %v6171
        %v6438 = vunpack.c.l.b16 %v6172
        %v6439 = vunpack.c.h.b16 %v6172
        %v6440 = vunpack.c.l.b16 %v6173
        %v6441 = vunpack.c.h.b16 %v6173
        %v6442 = vunpack.c.l.b16 %v6174
        %v6443 = vunpack.c.h.b16 %v6174
        %v6444 = vunpack.c.l.b16 %v6175
        %v6445 = vunpack.c.h.b16 %v6175
        %v6446 = vunpack.c.l.b16 %v6176
        %v6447 = vunpack.c.h.b16 %v6176
        %v6448 = vunpack.c.l.b16 %v6177
        %v6449 = vunpack.c.h.b16 %v6177
        %v6450 = vunpack.c.l.b16 %v6178
        %v6451 = vunpack.c.h.b16 %v6178
        %v6452 = vunpack.c.l.b16 %v6179
        %v6453 = vunpack.c.h.b16 %v6179
        %v6454 = vunpack.c.l.b16 %v6180
        %v6455 = vunpack.c.h.b16 %v6180
        %v6456 = vunpack.c.l.b16 %v6181
        %v6457 = vunpack.c.h.b16 %v6181
        %v6458 = vunpack.c.l.b16 %v6182
        %v6459 = vunpack.c.h.b16 %v6182
        %v6460 = vunpack.c.l.b16 %v6183
        %v6461 = vunpack.c.h.b16 %v6183
        %v6462 = vunpack.c.l.b16 %v6184
        %v6463 = vunpack.c.h.b16 %v6184
        %v6464 = vunpack.c.l.b16 %v6185
        %v6465 = vunpack.c.h.b16 %v6185
        %v6466 = vunpack.c.l.b16 %v6186
        %v6467 = vunpack.c.h.b16 %v6186
        %v6468 = vunpack.c.l.b16 %v6187
        %v6469 = vunpack.c.h.b16 %v6187
        %v6470 = vunpack.c.l.b16 %v6188
        %v6471 = vunpack.c.h.b16 %v6188
        %v6472 = vunpack.c.l.b16 %v6189
        %v6473 = vunpack.c.h.b16 %v6189
        %v6474 = vunpack.c.l.b16 %v6190
        %v6475 = vunpack.c.h.b16 %v6190
        %v6476 = vunpack.c.l.b16 %v6191
        %v6477 = vunpack.c.h.b16 %v6191
        %v6478 = vunpack.c.l.b16 %v6192
        %v6479 = vunpack.c.h.b16 %v6192
        %v6480 = vunpack.c.l.b16 %v6193
        %v6481 = vunpack.c.h.b16 %v6193
        %v6482 = vunpack.c.l.b16 %v6194
        %v6483 = vunpack.c.h.b16 %v6194
        %v6484 = vunpack.c.l.b16 %v6195
        %v6485 = vunpack.c.h.b16 %v6195
        %v6486 = vunpack.c.l.b16 %v6196
        %v6487 = vunpack.c.h.b16 %v6196
        %v6488 = vunpack.c.l.b16 %v6197
        %v6489 = vunpack.c.h.b16 %v6197
        %v6490 = vunpack.c.l.b16 %v6198
        %v6491 = vunpack.c.h.b16 %v6198
        %v6492 = vunpack.c.l.b16 %v6199
        %v6493 = vunpack.c.h.b16 %v6199
        %v6494 = vunpack.c.l.b16 %v6200
        %v6495 = vunpack.c.h.b16 %v6200
        %v6496 = vunpack.c.l.b16 %v6201
        %v6497 = vunpack.c.h.b16 %v6201
        %v6498 = vunpack.c.l.b16 %v6202
        %v6499 = vunpack.c.h.b16 %v6202
        %v6500 = vunpack.c.l.b16 %v6203
        %v6501 = vunpack.c.h.b16 %v6203
        %v6502 = vunpack.c.l.b16 %v6204
        %v6503 = vunpack.c.h.b16 %v6204
        %v6504 = vunpack.c.l.b16 %v6205
        %v6505 = vunpack.c.h.b16 %v6205
        %v6506 = vunpack.c.l.b16 %v6206
        %v6507 = vunpack.c.h.b16 %v6206
        %v6508 = vunpack.c.l.b16 %v6207
        %v6509 = vunpack.c.h.b16 %v6207
        %v6510 = vunpack.c.l.b16 %v6208
        %v6511 = vunpack.c.h.b16 %v6208
        %v6512 = vunpack.c.l.b16 %v6209
        %v6513 = vunpack.c.h.b16 %v6209
        %v6514 = vunpack.c.l.b16 %v6210
        %v6515 = vunpack.c.h.b16 %v6210
        %v6516 = vunpack.c.l.b16 %v6211
        %v6517 = vunpack.c.h.b16 %v6211
        %v6518 = vunpack.c.l.b16 %v6212
        %v6519 = vunpack.c.h.b16 %v6212
        %v6520 = vunpack.c.l.b16 %v6213
        %v6521 = vunpack.c.h.b16 %v6213
        %v6522 = vunpack.c.l.b16 %v6214
        %v6523 = vunpack.c.h.b16 %v6214
        %v6524 = vunpack.c.l.b16 %v6215
        %v6525 = vunpack.c.h.b16 %v6215
        %v6526 = vunpack.c.l.b16 %v6216
        %v6527 = vunpack.c.h.b16 %v6216
        %v6528 = vunpack.c.l.b16 %v6217
        %v6529 = vunpack.c.h.b16 %v6217
        %v6530 = vunpack.c.l.b16 %v6218
        %v6531 = vunpack.c.h.b16 %v6218
        %v6532 = vunpack.c.l.b16 %v6219
        %v6533 = vunpack.c.h.b16 %v6219
        %v6534 = vunpack.c.l.b16 %v6220
        %v6535 = vunpack.c.h.b16 %v6220
        %v6536 = vunpack.c.l.b16 %v6221
        %v6537 = vunpack.c.h.b16 %v6221
        %v6538 = vunpack.c.l.b16 %v6222
        %v6539 = vunpack.c.h.b16 %v6222
        %v6540 = vunpack.c.l.b16 %v6223
        %v6541 = vunpack.c.h.b16 %v6223
        %v6542 = vunpack.c.l.b16 %v6224
        %v6543 = vunpack.c.h.b16 %v6224
        %v6544 = vunpack.c.l.b16 %v6225
        %v6545 = vunpack.c.h.b16 %v6225
        %v6546 = vunpack.c.l.b16 %v6226
        %v6547 = vunpack.c.h.b16 %v6226
        %v6548 = vunpack.c.l.b16 %v6227
        %v6549 = vunpack.c.h.b16 %v6227
        %v6550 = vunpack.c.l.b16 %v6228
        %v6551 = vunpack.c.h.b16 %v6228
        %v6552 = vunpack.c.l.b16 %v6229
        %v6553 = vunpack.c.h.b16 %v6229
        %v6554 = vunpack.c.l.b16 %v6230
        %v6555 = vunpack.c.h.b16 %v6230
        %v6556 = vunpack.c.l.b16 %v6231
        %v6557 = vunpack.c.h.b16 %v6231
        %v6558 = vunpack.c.l.b16 %v6232
        %v6559 = vunpack.c.h.b16 %v6232
        %v6560 = vunpack.c.l.b16 %v6233
        %v6561 = vunpack.c.h.b16 %v6233
        %v6562 = vunpack.c.l.b16 %v6234
        %v6563 = vunpack.c.h.b16 %v6234
        %v6564 = vunpack.c.l.b16 %v6235
        %v6565 = vunpack.c.h.b16 %v6235
        %v6566 = vunpack.c.l.b16 %v6236
        %v6567 = vunpack.c.h.b16 %v6236
        %v6568 = vunpack.c.l.b16 %v6237
        %v6569 = vunpack.c.h.b16 %v6237
        %v6570 = vunpack.c.l.b16 %v6238
        %v6571 = vunpack.c.h.b16 %v6238
        %v6572 = vunpack.c.l.b16 %v6239
        %v6573 = vunpack.c.h.b16 %v6239
        %v6574 = vunpack.c.l.b16 %v6240
        %v6575 = vunpack.c.h.b16 %v6240
        %v6576 = vunpack.c.l.b16 %v6241
        %v6577 = vunpack.c.h.b16 %v6241
        %v6578 = vunpack.c.l.b16 %v6242
        %v6579 = vunpack.c.h.b16 %v6242
        %v6580 = vunpack.c.l.b16 %v6243
        %v6581 = vunpack.c.h.b16 %v6243
        %v6582 = vunpack.c.l.b16 %v6244
        %v6583 = vunpack.c.h.b16 %v6244
        %v6584 = vunpack.c.l.b16 %v6245
        %v6585 = vunpack.c.h.b16 %v6245
        %v6586 = vunpack.c.l.b16 %v6246
        %v6587 = vunpack.c.h.b16 %v6246
        %v6588 = vunpack.c.l.b16 %v6247
        %v6589 = vunpack.c.h.b16 %v6247
        %v6590 = vunpack.c.l.b16 %v6248
        %v6591 = vunpack.c.h.b16 %v6248
        %v6592 = vunpack.c.l.b16 %v6249
        %v6593 = vunpack.c.h.b16 %v6249
        %v6594 = vunpack.c.l.b16 %v6250
        %v6595 = vunpack.c.h.b16 %v6250
        %v6596 = vunpack.c.l.b16 %v6251
        %v6597 = vunpack.c.h.b16 %v6251
        %v6598 = vunpack.c.l.b16 %v6252
        %v6599 = vunpack.c.h.b16 %v6252
        %v6600 = vunpack.c.l.b16 %v6253
        %v6601 = vunpack.c.h.b16 %v6253
        %v6602 = vunpack.c.l.b16 %v6254
        %v6603 = vunpack.c.h.b16 %v6254
        %v6604 = vunpack.c.l.b16 %v6255
        %v6605 = vunpack.c.h.b16 %v6255
        %v6606 = vunpack.c.l.b16 %v6256
        %v6607 = vunpack.c.h.b16 %v6256
        %v6608 = vunpack.c.l.b16 %v6257
        %v6609 = vunpack.c.h.b16 %v6257
        %v6610 = vunpack.c.l.b16 %v6258
        %v6611 = vunpack.c.h.b16 %v6258
        %v6612 = vunpack.c.l.b16 %v6259
        %v6613 = vunpack.c.h.b16 %v6259
        %v6614 = vunpack.c.l.b16 %v6260
        %v6615 = vunpack.c.h.b16 %v6260
        %v6616 = vunpack.c.l.b16 %v6261
        %v6617 = vunpack.c.h.b16 %v6261
        %v6618 = vunpack.c.l.b16 %v6262
        %v6619 = vunpack.c.h.b16 %v6262
        %v6620 = vunpack.c.l.b16 %v6263
        %v6621 = vunpack.c.h.b16 %v6263
        %v6622 = vunpack.c.l.b16 %v6264
        %v6623 = vunpack.c.h.b16 %v6264
        %v6624 = vunpack.c.l.b16 %v6265
        %v6625 = vunpack.c.h.b16 %v6265
        %v6626 = vunpack.c.l.b16 %v6266
        %v6627 = vunpack.c.h.b16 %v6266
        %v6628 = vunpack.c.l.b16 %v6267
        %v6629 = vunpack.c.h.b16 %v6267
        %v6630 = vunpack.c.l.b16 %v6268
        %v6631 = vunpack.c.h.b16 %v6268
        %v6632 = vunpack.c.l.b16 %v6269
        %v6633 = vunpack.c.h.b16 %v6269
        %v6634 = vunpack.c.l.b16 %v6270
        %v6635 = vunpack.c.h.b16 %v6270
        %v6636 = vunpack.c.l.b16 %v6271
        %v6637 = vunpack.c.h.b16 %v6271
        %v6638 = vunpack.c.l.b16 %v6272
        %v6639 = vunpack.c.h.b16 %v6272
        %v6640 = vunpack.c.l.b16 %v6273
        %v6641 = vunpack.c.h.b16 %v6273
        %v6642 = vunpack.c.l.b16 %v6274
        %v6643 = vunpack.c.h.b16 %v6274
        %v6644 = vunpack.c.l.b16 %v6275
        %v6645 = vunpack.c.h.b16 %v6275
        %v6646 = vunpack.c.l.b16 %v6276
        %v6647 = vunpack.c.h.b16 %v6276
        %v6648 = vunpack.c.l.b16 %v6277
        %v6649 = vunpack.c.h.b16 %v6277
        %v6650 = vunpack.c.l.b16 %v6278
        %v6651 = vunpack.c.h.b16 %v6278
        %v6652 = vunpack.c.l.b16 %v6279
        %v6653 = vunpack.c.h.b16 %v6279
        %v6654 = vunpack.c.l.b16 %v6280
        %v6655 = vunpack.c.h.b16 %v6280
        %v6656 = vunpack.c.l.b16 %v6281
        %v6657 = vunpack.c.h.b16 %v6281
        %v6658 = vunpack.c.l.b16 %v6282
        %v6659 = vunpack.c.h.b16 %v6282
        %v6660 = vunpack.c.l.b16 %v6283
        %v6661 = vunpack.c.h.b16 %v6283
        %v6662 = vunpack.c.l.b16 %v6284
        %v6663 = vunpack.c.h.b16 %v6284
        %v6664 = vunpack.c.l.b16 %v6285
        %v6665 = vunpack.c.h.b16 %v6285
        %v6666 = vunpack.c.l.b16 %v6286
        %v6667 = vunpack.c.h.b16 %v6286
        %v6668 = vunpack.c.l.b16 %v6287
        %v6669 = vunpack.c.h.b16 %v6287
        %v6670 = vunpack.c.l.b16 %v6288
        %v6671 = vunpack.c.h.b16 %v6288
        %v6672 = vunpack.c.l.b16 %v6289
        %v6673 = vunpack.c.h.b16 %v6289
        %v6674 = vpack.c.b16 %v6422, %v6418
        %v6675 = vpack.c.b16 %v6423, %v6419
        %v6676 = vpack.c.b16 %v6424, %v6420
        %v6677 = vpack.c.b16 %v6425, %v6421
        %v6678 = vpack.c.b16 %v6430, %v6426
        %v6679 = vpack.c.b16 %v6431, %v6427
        %v6680 = vpack.c.b16 %v6432, %v6428
        %v6681 = vpack.c.b16 %v6433, %v6429
        %v6682 = vpack.c.b16 %v6438, %v6434
        %v6683 = vpack.c.b16 %v6439, %v6435
        %v6684 = vpack.c.b16 %v6440, %v6436
        %v6685 = vpack.c.b16 %v6441, %v6437
        %v6686 = vpack.c.b16 %v6446, %v6442
        %v6687 = vpack.c.b16 %v6447, %v6443
        %v6688 = vpack.c.b16 %v6448, %v6444
        %v6689 = vpack.c.b16 %v6449, %v6445
        %v6690 = vpack.c.b16 %v6454, %v6450
        %v6691 = vpack.c.b16 %v6455, %v6451
        %v6692 = vpack.c.b16 %v6456, %v6452
        %v6693 = vpack.c.b16 %v6457, %v6453
        %v6694 = vpack.c.b16 %v6462, %v6458
        %v6695 = vpack.c.b16 %v6463, %v6459
        %v6696 = vpack.c.b16 %v6464, %v6460
        %v6697 = vpack.c.b16 %v6465, %v6461
        %v6698 = vpack.c.b16 %v6470, %v6466
        %v6699 = vpack.c.b16 %v6471, %v6467
        %v6700 = vpack.c.b16 %v6472, %v6468
        %v6701 = vpack.c.b16 %v6473, %v6469
        %v6702 = vpack.c.b16 %v6478, %v6474
        %v6703 = vpack.c.b16 %v6479, %v6475
        %v6704 = vpack.c.b16 %v6480, %v6476
        %v6705 = vpack.c.b16 %v6481, %v6477
        %v6706 = vpack.c.b16 %v6486, %v6482
        %v6707 = vpack.c.b16 %v6487, %v6483
        %v6708 = vpack.c.b16 %v6488, %v6484
        %v6709 = vpack.c.b16 %v6489, %v6485
        %v6710 = vpack.c.b16 %v6494, %v6490
        %v6711 = vpack.c.b16 %v6495, %v6491
        %v6712 = vpack.c.b16 %v6496, %v6492
        %v6713 = vpack.c.b16 %v6497, %v6493
        %v6714 = vpack.c.b16 %v6502, %v6498
        %v6715 = vpack.c.b16 %v6503, %v6499
        %v6716 = vpack.c.b16 %v6504, %v6500
        %v6717 = vpack.c.b16 %v6505, %v6501
        %v6718 = vpack.c.b16 %v6510, %v6506
        %v6719 = vpack.c.b16 %v6511, %v6507
        %v6720 = vpack.c.b16 %v6512, %v6508
        %v6721 = vpack.c.b16 %v6513, %v6509
        %v6722 = vpack.c.b16 %v6518, %v6514
        %v6723 = vpack.c.b16 %v6519, %v6515
        %v6724 = vpack.c.b16 %v6520, %v6516
        %v6725 = vpack.c.b16 %v6521, %v6517
        %v6726 = vpack.c.b16 %v6526, %v6522
        %v6727 = vpack.c.b16 %v6527, %v6523
        %v6728 = vpack.c.b16 %v6528, %v6524
        %v6729 = vpack.c.b16 %v6529, %v6525
        %v6730 = vpack.c.b16 %v6534, %v6530
        %v6731 = vpack.c.b16 %v6535, %v6531
        %v6732 = vpack.c.b16 %v6536, %v6532
        %v6733 = vpack.c.b16 %v6537, %v6533
        %v6734 = vpack.c.b16 %v6542, %v6538
        %v6735 = vpack.c.b16 %v6543, %v6539
        %v6736 = vpack.c.b16 %v6544, %v6540
        %v6737 = vpack.c.b16 %v6545, %v6541
        %v6738 = vpack.c.b16 %v6550, %v6546
        %v6739 = vpack.c.b16 %v6551, %v6547
        %v6740 = vpack.c.b16 %v6552, %v6548
        %v6741 = vpack.c.b16 %v6553, %v6549
        %v6742 = vpack.c.b16 %v6558, %v6554
        %v6743 = vpack.c.b16 %v6559, %v6555
        %v6744 = vpack.c.b16 %v6560, %v6556
        %v6745 = vpack.c.b16 %v6561, %v6557
        %v6746 = vpack.c.b16 %v6566, %v6562
        %v6747 = vpack.c.b16 %v6567, %v6563
        %v6748 = vpack.c.b16 %v6568, %v6564
        %v6749 = vpack.c.b16 %v6569, %v6565
        %v6750 = vpack.c.b16 %v6574, %v6570
        %v6751 = vpack.c.b16 %v6575, %v6571
        %v6752 = vpack.c.b16 %v6576, %v6572
        %v6753 = vpack.c.b16 %v6577, %v6573
        %v6754 = vpack.c.b16 %v6582, %v6578
        %v6755 = vpack.c.b16 %v6583, %v6579
        %v6756 = vpack.c.b16 %v6584, %v6580
        %v6757 = vpack.c.b16 %v6585, %v6581
        %v6758 = vpack.c.b16 %v6590, %v6586
        %v6759 = vpack.c.b16 %v6591, %v6587
        %v6760 = vpack.c.b16 %v6592, %v6588
        %v6761 = vpack.c.b16 %v6593, %v6589
        %v6762 = vpack.c.b16 %v6598, %v6594
        %v6763 = vpack.c.b16 %v6599, %v6595
        %v6764 = vpack.c.b16 %v6600, %v6596
        %v6765 = vpack.c.b16 %v6601, %v6597
        %v6766 = vpack.c.b16 %v6606, %v6602
        %v6767 = vpack.c.b16 %v6607, %v6603
        %v6768 = vpack.c.b16 %v6608, %v6604
        %v6769 = vpack.c.b16 %v6609, %v6605
        %v6770 = vpack.c.b16 %v6614, %v6610
        %v6771 = vpack.c.b16 %v6615, %v6611
        %v6772 = vpack.c.b16 %v6616, %v6612
        %v6773 = vpack.c.b16 %v6617, %v6613
        %v6774 = vpack.c.b16 %v6622, %v6618
        %v6775 = vpack.c.b16 %v6623, %v6619
        %v6776 = vpack.c.b16 %v6624, %v6620
        %v6777 = vpack.c.b16 %v6625, %v6621
        %v6778 = vpack.c.b16 %v6630, %v6626
        %v6779 = vpack.c.b16 %v6631, %v6627
        %v6780 = vpack.c.b16 %v6632, %v6628
        %v6781 = vpack.c.b16 %v6633, %v6629
        %v6782 = vpack.c.b16 %v6638, %v6634
        %v6783 = vpack.c.b16 %v6639, %v6635
        %v6784 = vpack.c.b16 %v6640, %v6636
        %v6785 = vpack.c.b16 %v6641, %v6637
        %v6786 = vpack.c.b16 %v6646, %v6642
        %v6787 = vpack.c.b16 %v6647, %v6643
        %v6788 = vpack.c.b16 %v6648, %v6644
        %v6789 = vpack.c.b16 %v6649, %v6645
        %v6790 = vpack.c.b16 %v6654, %v6650
        %v6791 = vpack.c.b16 %v6655, %v6651
        %v6792 = vpack.c.b16 %v6656, %v6652
        %v6793 = vpack.c.b16 %v6657, %v6653
        %v6794 = vpack.c.b16 %v6662, %v6658
        %v6795 = vpack.c.b16 %v6663, %v6659
        %v6796 = vpack.c.b16 %v6664, %v6660
        %v6797 = vpack.c.b16 %v6665, %v6661
        %v6798 = vpack.c.b16 %v6670, %v6666
        %v6799 = vpack.c.b16 %v6671, %v6667
        %v6800 = vpack.c.b16 %v6672, %v6668
        %v6801 = vpack.c.b16 %v6673, %v6669
        %6930 = vmatprep.subr.bf16.mxu0 %v6675
        %6931 = vmatpush1.bf16.msra.mxu0 %v6674
        %6932 = vmatprep.subr.bf16.mxu0 %v6679
        %6933 = vmatpush1.bf16.msra.mxu0 %v6678
        %6934 = vmatprep.subr.bf16.mxu0 %v6683
        %6935 = vmatpush1.bf16.msra.mxu0 %v6682
        %6936 = vmatprep.subr.bf16.mxu0 %v6687
        %6937 = vmatpush1.bf16.msra.mxu0 %v6686
        %6938 = vmatprep.subr.bf16.mxu0 %v6691
        %6939 = vmatpush1.bf16.msra.mxu0 %v6690
        %6940 = vmatprep.subr.bf16.mxu0 %v6695
        %6941 = vmatpush1.bf16.msra.mxu0 %v6694
        %6942 = vmatprep.subr.bf16.mxu0 %v6699
        %6943 = vmatpush1.bf16.msra.mxu0 %v6698
        %6944 = vmatprep.subr.bf16.mxu0 %v6703
        %6945 = vmatpush1.bf16.msra.mxu0 %v6702
        %6946 = vmatprep.subr.bf16.mxu0 %v6707
        %6947 = vmatpush1.bf16.msra.mxu0 %v6706
        %6948 = vmatprep.subr.bf16.mxu0 %v6711
        %6949 = vmatpush1.bf16.msra.mxu0 %v6710
        %6950 = vmatprep.subr.bf16.mxu0 %v6715
        %6951 = vmatpush1.bf16.msra.mxu0 %v6714
        %6952 = vmatprep.subr.bf16.mxu0 %v6719
        %6953 = vmatpush1.bf16.msra.mxu0 %v6718
        %6954 = vmatprep.subr.bf16.mxu0 %v6723
        %6955 = vmatpush1.bf16.msra.mxu0 %v6722
        %6956 = vmatprep.subr.bf16.mxu0 %v6727
        %6957 = vmatpush1.bf16.msra.mxu0 %v6726
        %6958 = vmatprep.subr.bf16.mxu0 %v6731
        %6959 = vmatpush1.bf16.msra.mxu0 %v6730
        %6960 = vmatprep.subr.bf16.mxu0 %v6735
        %6961 = vmatpush1.bf16.msra.mxu0 %v6734
        %6962 = vmatprep.mubr.bf16.mxu0 %v6158
        %6963 = vmatmul.mubr.bf16.gmra.mrb[0].mxu0 %v6157
        %v6964 = vpop.f32.mrb[0].mxu0
        %v6965 = vadd.f32 0.0, %v6964
        %v6966 = vpop.f32.mrb[0].mxu0
        %v6967 = vadd.f32 0.0, %v6966
        %v6968 = vpop.f32.mrb[0].mxu0
        %v6969 = vpop.f32.mrb[0].mxu0
        %6970 = vdwg.mxu0
        %6971 = vmatprep.subr.bf16.mxu0 %v6739
        %6972 = vmatpush1.bf16.msra.mxu0 %v6738
        %6973 = vmatprep.subr.bf16.mxu0 %v6743
        %6974 = vmatpush1.bf16.msra.mxu0 %v6742
        %6975 = vmatprep.subr.bf16.mxu0 %v6747
        %6976 = vmatpush1.bf16.msra.mxu0 %v6746
        %6977 = vmatprep.subr.bf16.mxu0 %v6751
        %6978 = vmatpush1.bf16.msra.mxu0 %v6750
        %6979 = vmatprep.subr.bf16.mxu0 %v6755
        %6980 = vmatpush1.bf16.msra.mxu0 %v6754
        %6981 = vmatprep.subr.bf16.mxu0 %v6759
        %6982 = vmatpush1.bf16.msra.mxu0 %v6758
        %6983 = vmatprep.subr.bf16.mxu0 %v6763
        %6984 = vmatpush1.bf16.msra.mxu0 %v6762
        %6985 = vmatprep.subr.bf16.mxu0 %v6767
        %6986 = vmatpush1.bf16.msra.mxu0 %v6766
        %6987 = vmatprep.subr.bf16.mxu0 %v6771
        %6988 = vmatpush1.bf16.msra.mxu0 %v6770
        %6989 = vmatprep.subr.bf16.mxu0 %v6775
        %6990 = vmatpush1.bf16.msra.mxu0 %v6774
        %6991 = vmatprep.subr.bf16.mxu0 %v6779
        %6992 = vmatpush1.bf16.msra.mxu0 %v6778
        %6993 = vmatprep.subr.bf16.mxu0 %v6783
        %6994 = vmatpush1.bf16.msra.mxu0 %v6782
        %6995 = vmatprep.subr.bf16.mxu0 %v6787
        %6996 = vmatpush1.bf16.msra.mxu0 %v6786
        %6997 = vmatprep.subr.bf16.mxu0 %v6791
        %6998 = vmatpush1.bf16.msra.mxu0 %v6790
        %6999 = vmatprep.subr.bf16.mxu0 %v6795
        %7000 = vmatpush1.bf16.msra.mxu0 %v6794
        %7001 = vmatprep.subr.bf16.mxu0 %v6799
        %7002 = vmatpush1.bf16.msra.mxu0 %v6798
        %7003 = vmatprep.mubr.bf16.mxu0 %v6160
        %7004 = vmatmul.mubr.bf16.gmra.mrb[0].mxu0 %v6159
        %v7005 = vpop.f32.mrb[0].mxu0
        %v7006 = vadd.f32 %v6965, %v7005
        %v7007 = vpop.f32.mrb[0].mxu0
        %v7008 = vadd.f32 %v6967, %v7007
        %v7009 = vpop.f32.mrb[0].mxu0
        %v7010 = vpop.f32.mrb[0].mxu0
        %7011 = vdwg.mxu0
        %7012 = vmatprep.subr.bf16.mxu0 %v6677
        %7013 = vmatpush1.bf16.msra.mxu0 %v6676
        %7014 = vmatprep.subr.bf16.mxu0 %v6681
        %7015 = vmatpush1.bf16.msra.mxu0 %v6680
        %7016 = vmatprep.subr.bf16.mxu0 %v6685
        %7017 = vmatpush1.bf16.msra.mxu0 %v6684
        %7018 = vmatprep.subr.bf16.mxu0 %v6689
        %7019 = vmatpush1.bf16.msra.mxu0 %v6688
        %7020 = vmatprep.subr.bf16.mxu0 %v6693
        %7021 = vmatpush1.bf16.msra.mxu0 %v6692
        %7022 = vmatprep.subr.bf16.mxu0 %v6697
        %7023 = vmatpush1.bf16.msra.mxu0 %v6696
        %7024 = vmatprep.subr.bf16.mxu0 %v6701
        %7025 = vmatpush1.bf16.msra.mxu0 %v6700
        %7026 = vmatprep.subr.bf16.mxu0 %v6705
        %7027 = vmatpush1.bf16.msra.mxu0 %v6704
        %7028 = vmatprep.subr.bf16.mxu0 %v6709
        %7029 = vmatpush1.bf16.msra.mxu0 %v6708
        %7030 = vmatprep.subr.bf16.mxu0 %v6713
        %7031 = vmatpush1.bf16.msra.mxu0 %v6712
        %7032 = vmatprep.subr.bf16.mxu0 %v6717
        %7033 = vmatpush1.bf16.msra.mxu0 %v6716
        %7034 = vmatprep.subr.bf16.mxu0 %v6721
        %7035 = vmatpush1.bf16.msra.mxu0 %v6720
        %7036 = vmatprep.subr.bf16.mxu0 %v6725
        %7037 = vmatpush1.bf16.msra.mxu0 %v6724
        %7038 = vmatprep.subr.bf16.mxu0 %v6729
        %7039 = vmatpush1.bf16.msra.mxu0 %v6728
        %7040 = vmatprep.subr.bf16.mxu0 %v6733
        %7041 = vmatpush1.bf16.msra.mxu0 %v6732
        %7042 = vmatprep.subr.bf16.mxu0 %v6737
        %7043 = vmatpush1.bf16.msra.mxu0 %v6736
        %7044 = vmatprep.mubr.bf16.mxu0 %v6158
        %7045 = vmatmul.mubr.bf16.gmra.mrb[0].mxu0 %v6157
        %v7046 = vpop.f32.mrb[0].mxu0
        %v7047 = vadd.f32 0.0, %v7046
        %v7048 = vpop.f32.mrb[0].mxu0
        %v7049 = vadd.f32 0.0, %v7048
        %v7050 = vpop.f32.mrb[0].mxu0
        %v7051 = vpop.f32.mrb[0].mxu0
        %7052 = vdwg.mxu0
        %7053 = vmatprep.subr.bf16.mxu0 %v6741
        %7054 = vmatpush1.bf16.msra.mxu0 %v6740
        %7055 = vmatprep.subr.bf16.mxu0 %v6745
        %7056 = vmatpush1.bf16.msra.mxu0 %v6744
        %7057 = vmatprep.subr.bf16.mxu0 %v6749
        %7058 = vmatpush1.bf16.msra.mxu0 %v6748
        %7059 = vmatprep.subr.bf16.mxu0 %v6753
        %7060 = vmatpush1.bf16.msra.mxu0 %v6752
        %7061 = vmatprep.subr.bf16.mxu0 %v6757
        %7062 = vmatpush1.bf16.msra.mxu0 %v6756
        %7063 = vmatprep.subr.bf16.mxu0 %v6761
        %7064 = vmatpush1.bf16.msra.mxu0 %v6760
        %7065 = vmatprep.subr.bf16.mxu0 %v6765
        %7066 = vmatpush1.bf16.msra.mxu0 %v6764
        %7067 = vmatprep.subr.bf16.mxu0 %v6769
        %7068 = vmatpush1.bf16.msra.mxu0 %v6768
        %7069 = vmatprep.subr.bf16.mxu0 %v6773
        %7070 = vmatpush1.bf16.msra.mxu0 %v6772
        %7071 = vmatprep.subr.bf16.mxu0 %v6777
        %7072 = vmatpush1.bf16.msra.mxu0 %v6776
        %7073 = vmatprep.subr.bf16.mxu0 %v6781
        %7074 = vmatpush1.bf16.msra.mxu0 %v6780
        %7075 = vmatprep.subr.bf16.mxu0 %v6785
        %7076 = vmatpush1.bf16.msra.mxu0 %v6784
        %7077 = vmatprep.subr.bf16.mxu0 %v6789
        %7078 = vmatpush1.bf16.msra.mxu0 %v6788
        %7079 = vmatprep.subr.bf16.mxu0 %v6793
        %7080 = vmatpush1.bf16.msra.mxu0 %v6792
        %7081 = vmatprep.subr.bf16.mxu0 %v6797
        %7082 = vmatpush1.bf16.msra.mxu0 %v6796
        %7083 = vmatprep.subr.bf16.mxu0 %v6801
        %7084 = vmatpush1.bf16.msra.mxu0 %v6800
        %7085 = vmatprep.mubr.bf16.mxu0 %v6160
        %7086 = vmatmul.mubr.bf16.gmra.mrb[0].mxu0 %v6159
        %v7087 = vpop.f32.mrb[0].mxu0
        %v7088 = vadd.f32 %v7047, %v7087
        %v7089 = vpop.f32.mrb[0].mxu0
        %v7090 = vadd.f32 %v7049, %v7089
        %v7091 = vpop.f32.mrb[0].mxu0
        %v7092 = vpop.f32.mrb[0].mxu0
        %7093 = vdwg.mxu0
        %v7094 = vadd.f32 %v6069, %v7006
        %v7095 = vadd.f32 %v6071, %v7008
        %v7096 = vadd.f32 %v6151, %v7088
        %v7097 = vadd.f32 %v6153, %v7090
        %v7098 = vld [vmem:[#allocation20] sm:$0xf]
        %v7100 = vlaneseq
        %v7101 = vshrl.u32 %v7100, 7
        %v7102 = vsub.s32 0, %v7101
        %v7103 = vrot.slane %v7098, %v7102
        %v7104 = vlaneseq
        %v7105 = vshrl.u32 %v7104, 7
        %v7106 = vsub.s32 1, %v7105
        %v7107 = vrot.slane %v7098, %v7106
        %v7108 = vlaneseq
        %v7109 = vshrl.u32 %v7108, 7
        %v7110 = vsub.s32 2, %v7109
        %v7111 = vrot.slane %v7098, %v7110
        %v7112 = vlaneseq
        %v7113 = vshrl.u32 %v7112, 7
        %v7114 = vsub.s32 3, %v7113
        %v7115 = vrot.slane %v7098, %v7114
        %v7120 = vadd.f32 %v7094, %v7103
        %v7121 = vadd.f32 %v7095, %v7107
        %v7122 = vadd.f32 %v7096, %v7111
        %v7123 = vadd.f32 %v7097, %v7115
        %v7124 = vmax.f32 %v7120, 0.0
        %v7125 = vmax.f32 %v7121, 0.0
        %v7126 = vmax.f32 %v7122, 0.0
        %v7127 = vmax.f32 %v7123, 0.0
        %vm7128 = vcmask 31744
        %v7129 = vsel %vm7128, %v1625, 0
        %vm7131 = vcmask 1043456
        %v7133 = vsel %vm7131, %v7124, 0
        %v7136 = vsel %vm7131, %v7125, 0
        %v7139 = vsel %vm7131, %v7126, 0
        %v7142 = vsel %vm7131, %v7127, 0
        %7144 = vmatprep.subr.mxu0 %v7136
        %7145 = vmatpush1.msra.mxu0 %v7133
        %7146 = vmatprep.subr.mxu0 0.0
        %7147 = vmatpush1.msra.mxu0 0.0
        %7148 = vmatprep.subr.mxu0 0.0
        %7149 = vmatpush1.msra.mxu0 0.0
        %7150 = vmatprep.subr.mxu0 0.0
        %7151 = vmatpush1.msra.mxu0 0.0
        %7152 = vmatprep.subr.mxu0 0.0
        %7153 = vmatpush1.msra.mxu0 0.0
        %7154 = vmatprep.subr.mxu0 0.0
        %7155 = vmatpush1.msra.mxu0 0.0
        %7156 = vmatprep.subr.mxu0 0.0
        %7157 = vmatpush1.msra.mxu0 0.0
        %7158 = vmatprep.subr.mxu0 0.0
        %7159 = vmatpush1.msra.mxu0 0.0
        %7160 = vmatprep.subr.mxu0 0.0
        %7161 = vmatpush1.msra.mxu0 0.0
        %7162 = vmatprep.subr.mxu0 0.0
        %7163 = vmatpush1.msra.mxu0 0.0
        %7164 = vmatprep.subr.mxu0 0.0
        %7165 = vmatpush1.msra.mxu0 0.0
        %7166 = vmatprep.subr.mxu0 0.0
        %7167 = vmatpush1.msra.mxu0 0.0
        %7168 = vmatprep.subr.mxu0 0.0
        %7169 = vmatpush1.msra.mxu0 0.0
        %7170 = vmatprep.subr.mxu0 0.0
        %7171 = vmatpush1.msra.mxu0 0.0
        %7172 = vmatprep.subr.mxu0 0.0
        %7173 = vmatpush1.msra.mxu0 0.0
        %7174 = vmatprep.subr.mxu0 0.0
        %7175 = vmatpush1.msra.mxu0 0.0
        %7176 = vmatprep.subr.mxu0 0.0
        %7177 = vmatpush1.msra.mxu0 0.0
        %7178 = vmatprep.subr.mxu0 0.0
        %7179 = vmatpush1.msra.mxu0 0.0
        %7180 = vmatprep.subr.mxu0 0.0
        %7181 = vmatpush1.msra.mxu0 0.0
        %7182 = vmatprep.subr.mxu0 0.0
        %7183 = vmatpush1.msra.mxu0 0.0
        %7184 = vmatprep.subr.mxu0 0.0
        %7185 = vmatpush1.msra.mxu0 0.0
        %7186 = vmatprep.subr.mxu0 0.0
        %7187 = vmatpush1.msra.mxu0 0.0
        %7188 = vmatprep.subr.mxu0 0.0
        %7189 = vmatpush1.msra.mxu0 0.0
        %7190 = vmatprep.subr.mxu0 0.0
        %7191 = vmatpush1.msra.mxu0 0.0
        %7192 = vmatprep.subr.mxu0 0.0
        %7193 = vmatpush1.msra.mxu0 0.0
        %7194 = vmatprep.subr.mxu0 0.0
        %7195 = vmatpush1.msra.mxu0 0.0
        %7196 = vmatprep.subr.mxu0 0.0
        %7197 = vmatpush1.msra.mxu0 0.0
        %7198 = vmatprep.subr.mxu0 0.0
        %7199 = vmatpush1.msra.mxu0 0.0
        %7200 = vmatprep.subr.mxu0 0.0
        %7201 = vmatpush1.msra.mxu0 0.0
        %7202 = vmatprep.subr.mxu0 0.0
        %7203 = vmatpush1.msra.mxu0 0.0
        %7204 = vmatprep.subr.mxu0 0.0
        %7205 = vmatpush1.msra.mxu0 0.0
        %7206 = vmatprep.subr.mxu0 0.0
        %7207 = vmatpush1.msra.mxu0 0.0
        %7208 = vmatprep.mubr.f32.mxu0 0.0
        %7209 = vmatmul.mubr.f32.gmra.mrb[0].mxu0 %v7129
        %v7210 = vpop.f32.mrb[0].mxu0
        %v7211 = vadd.f32 0.0, %v7210
        %v7212 = vpop.f32.mrb[0].mxu0
        %v7213 = vadd.f32 0.0, %v7212
        %7214 = vdwg.mxu0
        %7215 = vmatprep.subr.mxu0 %v7142
        %7216 = vmatpush1.msra.mxu0 %v7139
        %7217 = vmatprep.subr.mxu0 0.0
        %7218 = vmatpush1.msra.mxu0 0.0
        %7219 = vmatprep.subr.mxu0 0.0
        %7220 = vmatpush1.msra.mxu0 0.0
        %7221 = vmatprep.subr.mxu0 0.0
        %7222 = vmatpush1.msra.mxu0 0.0
        %7223 = vmatprep.subr.mxu0 0.0
        %7224 = vmatpush1.msra.mxu0 0.0
        %7225 = vmatprep.subr.mxu0 0.0
        %7226 = vmatpush1.msra.mxu0 0.0
        %7227 = vmatprep.subr.mxu0 0.0
        %7228 = vmatpush1.msra.mxu0 0.0
        %7229 = vmatprep.subr.mxu0 0.0
        %7230 = vmatpush1.msra.mxu0 0.0
        %7231 = vmatprep.subr.mxu0 0.0
        %7232 = vmatpush1.msra.mxu0 0.0
        %7233 = vmatprep.subr.mxu0 0.0
        %7234 = vmatpush1.msra.mxu0 0.0
        %7235 = vmatprep.subr.mxu0 0.0
        %7236 = vmatpush1.msra.mxu0 0.0
        %7237 = vmatprep.subr.mxu0 0.0
        %7238 = vmatpush1.msra.mxu0 0.0
        %7239 = vmatprep.subr.mxu0 0.0
        %7240 = vmatpush1.msra.mxu0 0.0
        %7241 = vmatprep.subr.mxu0 0.0
        %7242 = vmatpush1.msra.mxu0 0.0
        %7243 = vmatprep.subr.mxu0 0.0
        %7244 = vmatpush1.msra.mxu0 0.0
        %7245 = vmatprep.subr.mxu0 0.0
        %7246 = vmatpush1.msra.mxu0 0.0
        %7247 = vmatprep.subr.mxu0 0.0
        %7248 = vmatpush1.msra.mxu0 0.0
        %7249 = vmatprep.subr.mxu0 0.0
        %7250 = vmatpush1.msra.mxu0 0.0
        %7251 = vmatprep.subr.mxu0 0.0
        %7252 = vmatpush1.msra.mxu0 0.0
        %7253 = vmatprep.subr.mxu0 0.0
        %7254 = vmatpush1.msra.mxu0 0.0
        %7255 = vmatprep.subr.mxu0 0.0
        %7256 = vmatpush1.msra.mxu0 0.0
        %7257 = vmatprep.subr.mxu0 0.0
        %7258 = vmatpush1.msra.mxu0 0.0
        %7259 = vmatprep.subr.mxu0 0.0
        %7260 = vmatpush1.msra.mxu0 0.0
        %7261 = vmatprep.subr.mxu0 0.0
        %7262 = vmatpush1.msra.mxu0 0.0
        %7263 = vmatprep.subr.mxu0 0.0
        %7264 = vmatpush1.msra.mxu0 0.0
        %7265 = vmatprep.subr.mxu0 0.0
        %7266 = vmatpush1.msra.mxu0 0.0
        %7267 = vmatprep.subr.mxu0 0.0
        %7268 = vmatpush1.msra.mxu0 0.0
        %7269 = vmatprep.subr.mxu0 0.0
        %7270 = vmatpush1.msra.mxu0 0.0
        %7271 = vmatprep.subr.mxu0 0.0
        %7272 = vmatpush1.msra.mxu0 0.0
        %7273 = vmatprep.subr.mxu0 0.0
        %7274 = vmatpush1.msra.mxu0 0.0
        %7275 = vmatprep.subr.mxu0 0.0
        %7276 = vmatpush1.msra.mxu0 0.0
        %7277 = vmatprep.subr.mxu0 0.0
        %7278 = vmatpush1.msra.mxu0 0.0
        %7279 = vmatprep.mubr.f32.mxu0 0.0
        %7280 = vmatmul.mubr.f32.gmra.mrb[0].mxu0 %v7129
        %v7281 = vpop.f32.mrb[0].mxu0
        %v7282 = vadd.f32 0.0, %v7281
        %v7283 = vpop.f32.mrb[0].mxu0
        %v7284 = vadd.f32 0.0, %v7283
        %7285 = vdwg.mxu0
        %vm7286 = vcmask 1041408
        %v7287 = vsel %vm7286, %v7211, 0.0
        %v7288 = vrot.slane %v7287, 4
        %v7289 = vadd.f32 %v7287, %v7288
        %v7290 = vrot.slane %v7289, 2
        %v7291 = vadd.f32 %v7289, %v7290
        %v7292 = vrot.slane %v7291, 1
        %v7293 = vadd.f32 %v7291, %v7292
        %v7294 = vsel %vm7286, %v7213, 0.0
        %v7295 = vrot.slane %v7294, 4
        %v7296 = vadd.f32 %v7294, %v7295
        %v7297 = vrot.slane %v7296, 2
        %v7298 = vadd.f32 %v7296, %v7297
        %v7299 = vrot.slane %v7298, 1
        %v7300 = vadd.f32 %v7298, %v7299
        %v7301 = vsel %vm7286, %v7282, 0.0
        %v7302 = vrot.slane %v7301, 4
        %v7303 = vadd.f32 %v7301, %v7302
        %v7304 = vrot.slane %v7303, 2
        %v7305 = vadd.f32 %v7303, %v7304
        %v7306 = vrot.slane %v7305, 1
        %v7307 = vadd.f32 %v7305, %v7306
        %v7308 = vsel %vm7286, %v7284, 0.0
        %v7309 = vrot.slane %v7308, 4
        %v7310 = vadd.f32 %v7308, %v7309
        %v7311 = vrot.slane %v7310, 2
        %v7312 = vadd.f32 %v7310, %v7311
        %v7313 = vrot.slane %v7312, 1
        %v7314 = vadd.f32 %v7312, %v7313
        %v7315 = vmul.f32 %v7293, 0.5
        %v7316 = vmul.f32 %v7300, 0.5
        %v7317 = vmul.f32 %v7307, 0.5
        %v7318 = vmul.f32 %v7314, 0.5
        %v7319 = vpack.c.bf16 %v7315, %v7315
        %v7320 = vpack.c.bf16 %v7316, %v7316
        %v7321 = vpack.c.bf16 %v7317, %v7317
        %v7322 = vpack.c.bf16 %v7318, %v7318
        %v7323 = vld [vmem:[%s14] sm:$0xf]
        %v7324 = vld [vmem:[%s14 + $0x4] sm:$0xf]
        %v7325 = vld [vmem:[%s14 + $0x8] sm:$0xf]
        %v7326 = vld [vmem:[%s14 + $0xc] sm:$0xf]
        %v7327 = vld [vmem:[%s14 + $0x10] sm:$0xf]
        %v7328 = vld [vmem:[%s14 + $0x14] sm:$0xf]
        %v7329 = vld [vmem:[%s14 + $0x18] sm:$0xf]
        %v7330 = vld [vmem:[%s14 + $0x1c] sm:$0xf]
        %v7331 = vld [vmem:[%s14 + $0x20] sm:$0xf]
        %v7332 = vld [vmem:[%s14 + $0x24] sm:$0xf]
        %v7333 = vld [vmem:[%s14 + $0x28] sm:$0xf]
        %v7334 = vld [vmem:[%s14 + $0x2c] sm:$0xf]
        %v7335 = vld [vmem:[%s14 + $0x30] sm:$0xf]
        %v7336 = vld [vmem:[%s14 + $0x34] sm:$0xf]
        %v7337 = vld [vmem:[%s14 + $0x38] sm:$0xf]
        %v7338 = vld [vmem:[%s14 + $0x3c] sm:$0xf]
        %v7339 = vld [vmem:[%s14 + $0x40] sm:$0xf]
        %v7340 = vld [vmem:[%s14 + $0x44] sm:$0xf]
        %v7341 = vld [vmem:[%s14 + $0x48] sm:$0xf]
        %v7342 = vld [vmem:[%s14 + $0x4c] sm:$0xf]
        %v7343 = vld [vmem:[%s14 + $0x50] sm:$0xf]
        %v7344 = vld [vmem:[%s14 + $0x54] sm:$0xf]
        %v7345 = vld [vmem:[%s14 + $0x58] sm:$0xf]
        %v7346 = vld [vmem:[%s14 + $0x5c] sm:$0xf]
        %v7347 = vld [vmem:[%s14 + $0x60] sm:$0xf]
        %v7348 = vld [vmem:[%s14 + $0x64] sm:$0xf]
        %v7349 = vld [vmem:[%s14 + $0x68] sm:$0xf]
        %v7350 = vld [vmem:[%s14 + $0x6c] sm:$0xf]
        %v7351 = vld [vmem:[%s14 + $0x70] sm:$0xf]
        %v7352 = vld [vmem:[%s14 + $0x74] sm:$0xf]
        %v7353 = vld [vmem:[%s14 + $0x78] sm:$0xf]
        %v7354 = vld [vmem:[%s14 + $0x7c] sm:$0xf]
        %v7355 = vld [vmem:[%s14 + $0x80] sm:$0xf]
        %v7356 = vld [vmem:[%s14 + $0x84] sm:$0xf]
        %v7357 = vld [vmem:[%s14 + $0x88] sm:$0xf]
        %v7358 = vld [vmem:[%s14 + $0x8c] sm:$0xf]
        %v7359 = vld [vmem:[%s14 + $0x90] sm:$0xf]
        %v7360 = vld [vmem:[%s14 + $0x94] sm:$0xf]
        %v7361 = vld [vmem:[%s14 + $0x98] sm:$0xf]
        %v7362 = vld [vmem:[%s14 + $0x9c] sm:$0xf]
        %v7363 = vld [vmem:[%s14 + $0xa0] sm:$0xf]
        %v7364 = vld [vmem:[%s14 + $0xa4] sm:$0xf]
        %v7365 = vld [vmem:[%s14 + $0xa8] sm:$0xf]
        %v7366 = vld [vmem:[%s14 + $0xac] sm:$0xf]
        %v7367 = vld [vmem:[%s14 + $0xb0] sm:$0xf]
        %v7368 = vld [vmem:[%s14 + $0xb4] sm:$0xf]
        %v7369 = vld [vmem:[%s14 + $0xb8] sm:$0xf]
        %v7370 = vld [vmem:[%s14 + $0xbc] sm:$0xf]
        %v7371 = vld [vmem:[%s14 + $0xc0] sm:$0xf]
        %v7372 = vld [vmem:[%s14 + $0xc4] sm:$0xf]
        %v7373 = vld [vmem:[%s14 + $0xc8] sm:$0xf]
        %v7374 = vld [vmem:[%s14 + $0xcc] sm:$0xf]
        %v7375 = vld [vmem:[%s14 + $0xd0] sm:$0xf]
        %v7376 = vld [vmem:[%s14 + $0xd4] sm:$0xf]
        %v7377 = vld [vmem:[%s14 + $0xd8] sm:$0xf]
        %v7378 = vld [vmem:[%s14 + $0xdc] sm:$0xf]
        %v7379 = vld [vmem:[%s14 + $0xe0] sm:$0xf]
        %v7380 = vld [vmem:[%s14 + $0xe4] sm:$0xf]
        %v7381 = vld [vmem:[%s14 + $0xe8] sm:$0xf]
        %v7382 = vld [vmem:[%s14 + $0xec] sm:$0xf]
        %v7383 = vld [vmem:[%s14 + $0xf0] sm:$0xf]
        %v7384 = vld [vmem:[%s14 + $0xf4] sm:$0xf]
        %v7385 = vld [vmem:[%s14 + $0xf8] sm:$0xf]
        %v7386 = vld [vmem:[%s14 + $0xfc] sm:$0xf]
        %v7387 = vld [vmem:[#allocation22] sm:$0x1]
        %v7452 = vunpack.c.l.b16 %v7323
        %v7453 = vunpack.c.l.b16 %v7324
        %v7454 = vunpack.c.l.b16 %v7325
        %v7455 = vunpack.c.l.b16 %v7326
        %v7456 = vunpack.c.l.b16 %v7327
        %v7457 = vunpack.c.l.b16 %v7328
        %v7458 = vunpack.c.l.b16 %v7329
        %v7459 = vunpack.c.l.b16 %v7330
        %v7460 = vunpack.c.l.b16 %v7331
        %v7461 = vunpack.c.l.b16 %v7332
        %v7462 = vunpack.c.l.b16 %v7333
        %v7463 = vunpack.c.l.b16 %v7334
        %v7464 = vunpack.c.l.b16 %v7335
        %v7465 = vunpack.c.l.b16 %v7336
        %v7466 = vunpack.c.l.b16 %v7337
        %v7467 = vunpack.c.l.b16 %v7338
        %v7468 = vunpack.c.l.b16 %v7339
        %v7469 = vunpack.c.l.b16 %v7340
        %v7470 = vunpack.c.l.b16 %v7341
        %v7471 = vunpack.c.l.b16 %v7342
        %v7472 = vunpack.c.l.b16 %v7343
        %v7473 = vunpack.c.l.b16 %v7344
        %v7474 = vunpack.c.l.b16 %v7345
        %v7475 = vunpack.c.l.b16 %v7346
        %v7476 = vunpack.c.l.b16 %v7347
        %v7477 = vunpack.c.l.b16 %v7348
        %v7478 = vunpack.c.l.b16 %v7349
        %v7479 = vunpack.c.l.b16 %v7350
        %v7480 = vunpack.c.l.b16 %v7351
        %v7481 = vunpack.c.l.b16 %v7352
        %v7482 = vunpack.c.l.b16 %v7353
        %v7483 = vunpack.c.l.b16 %v7354
        %v7484 = vunpack.c.l.b16 %v7355
        %v7485 = vunpack.c.l.b16 %v7356
        %v7486 = vunpack.c.l.b16 %v7357
        %v7487 = vunpack.c.l.b16 %v7358
        %v7488 = vunpack.c.l.b16 %v7359
        %v7489 = vunpack.c.l.b16 %v7360
        %v7490 = vunpack.c.l.b16 %v7361
        %v7491 = vunpack.c.l.b16 %v7362
        %v7492 = vunpack.c.l.b16 %v7363
        %v7493 = vunpack.c.l.b16 %v7364
        %v7494 = vunpack.c.l.b16 %v7365
        %v7495 = vunpack.c.l.b16 %v7366
        %v7496 = vunpack.c.l.b16 %v7367
        %v7497 = vunpack.c.l.b16 %v7368
        %v7498 = vunpack.c.l.b16 %v7369
        %v7499 = vunpack.c.l.b16 %v7370
        %v7500 = vunpack.c.l.b16 %v7371
        %v7501 = vunpack.c.l.b16 %v7372
        %v7502 = vunpack.c.l.b16 %v7373
        %v7503 = vunpack.c.l.b16 %v7374
        %v7504 = vunpack.c.l.b16 %v7375
        %v7505 = vunpack.c.l.b16 %v7376
        %v7506 = vunpack.c.l.b16 %v7377
        %v7507 = vunpack.c.l.b16 %v7378
        %v7508 = vunpack.c.l.b16 %v7379
        %v7509 = vunpack.c.l.b16 %v7380
        %v7510 = vunpack.c.l.b16 %v7381
        %v7511 = vunpack.c.l.b16 %v7382
        %v7512 = vunpack.c.l.b16 %v7383
        %v7513 = vunpack.c.l.b16 %v7384
        %v7514 = vunpack.c.l.b16 %v7385
        %v7515 = vunpack.c.l.b16 %v7386
        %v7516 = vpack.c.b16 %v7453, %v7452
        %v7517 = vpack.c.b16 %v7455, %v7454
        %v7518 = vpack.c.b16 %v7457, %v7456
        %v7519 = vpack.c.b16 %v7459, %v7458
        %v7520 = vpack.c.b16 %v7461, %v7460
        %v7521 = vpack.c.b16 %v7463, %v7462
        %v7522 = vpack.c.b16 %v7465, %v7464
        %v7523 = vpack.c.b16 %v7467, %v7466
        %v7524 = vpack.c.b16 %v7469, %v7468
        %v7525 = vpack.c.b16 %v7471, %v7470
        %v7526 = vpack.c.b16 %v7473, %v7472
        %v7527 = vpack.c.b16 %v7475, %v7474
        %v7528 = vpack.c.b16 %v7477, %v7476
        %v7529 = vpack.c.b16 %v7479, %v7478
        %v7530 = vpack.c.b16 %v7481, %v7480
        %v7531 = vpack.c.b16 %v7483, %v7482
        %v7532 = vpack.c.b16 %v7485, %v7484
        %v7533 = vpack.c.b16 %v7487, %v7486
        %v7534 = vpack.c.b16 %v7489, %v7488
        %v7535 = vpack.c.b16 %v7491, %v7490
        %v7536 = vpack.c.b16 %v7493, %v7492
        %v7537 = vpack.c.b16 %v7495, %v7494
        %v7538 = vpack.c.b16 %v7497, %v7496
        %v7539 = vpack.c.b16 %v7499, %v7498
        %v7540 = vpack.c.b16 %v7501, %v7500
        %v7541 = vpack.c.b16 %v7503, %v7502
        %v7542 = vpack.c.b16 %v7505, %v7504
        %v7543 = vpack.c.b16 %v7507, %v7506
        %v7544 = vpack.c.b16 %v7509, %v7508
        %v7545 = vpack.c.b16 %v7511, %v7510
        %v7546 = vpack.c.b16 %v7513, %v7512
        %v7547 = vpack.c.b16 %v7515, %v7514
        %7580 = vmatprep.subr.bf16.mxu0 0
        %7581 = vmatpush1.bf16.msra.mxu0 %v7516
        %7582 = vmatprep.subr.bf16.mxu0 0
        %7583 = vmatpush1.bf16.msra.mxu0 %v7517
        %7584 = vmatprep.subr.bf16.mxu0 0
        %7585 = vmatpush1.bf16.msra.mxu0 %v7518
        %7586 = vmatprep.subr.bf16.mxu0 0
        %7587 = vmatpush1.bf16.msra.mxu0 %v7519
        %7588 = vmatprep.subr.bf16.mxu0 0
        %7589 = vmatpush1.bf16.msra.mxu0 %v7520
        %7590 = vmatprep.subr.bf16.mxu0 0
        %7591 = vmatpush1.bf16.msra.mxu0 %v7521
        %7592 = vmatprep.subr.bf16.mxu0 0
        %7593 = vmatpush1.bf16.msra.mxu0 %v7522
        %7594 = vmatprep.subr.bf16.mxu0 0
        %7595 = vmatpush1.bf16.msra.mxu0 %v7523
        %7596 = vmatprep.subr.bf16.mxu0 0
        %7597 = vmatpush1.bf16.msra.mxu0 %v7524
        %7598 = vmatprep.subr.bf16.mxu0 0
        %7599 = vmatpush1.bf16.msra.mxu0 %v7525
        %7600 = vmatprep.subr.bf16.mxu0 0
        %7601 = vmatpush1.bf16.msra.mxu0 %v7526
        %7602 = vmatprep.subr.bf16.mxu0 0
        %7603 = vmatpush1.bf16.msra.mxu0 %v7527
        %7604 = vmatprep.subr.bf16.mxu0 0
        %7605 = vmatpush1.bf16.msra.mxu0 %v7528
        %7606 = vmatprep.subr.bf16.mxu0 0
        %7607 = vmatpush1.bf16.msra.mxu0 %v7529
        %7608 = vmatprep.subr.bf16.mxu0 0
        %7609 = vmatpush1.bf16.msra.mxu0 %v7530
        %7610 = vmatprep.subr.bf16.mxu0 0
        %7611 = vmatpush1.bf16.msra.mxu0 %v7531
        %7612 = vmatprep.mubr.bf16.mxu0 %v7320
        %7613 = vmatmul.mubr.bf16.gmra.mrb[0].mxu0 %v7319
        %v7614 = vpop.f32.mrb[0].mxu0
        %v7615 = vadd.f32 %v7387, %v7614
        %v7616 = vpop.f32.mrb[0].mxu0
        %v7617 = vpop.f32.mrb[0].mxu0
        %v7618 = vpop.f32.mrb[0].mxu0
        %7619 = vdwg.mxu0
        %7620 = vmatprep.subr.bf16.mxu0 0
        %7621 = vmatpush1.bf16.msra.mxu0 %v7532
        %7622 = vmatprep.subr.bf16.mxu0 0
        %7623 = vmatpush1.bf16.msra.mxu0 %v7533
        %7624 = vmatprep.subr.bf16.mxu0 0
        %7625 = vmatpush1.bf16.msra.mxu0 %v7534
        %7626 = vmatprep.subr.bf16.mxu0 0
        %7627 = vmatpush1.bf16.msra.mxu0 %v7535
        %7628 = vmatprep.subr.bf16.mxu0 0
        %7629 = vmatpush1.bf16.msra.mxu0 %v7536
        %7630 = vmatprep.subr.bf16.mxu0 0
        %7631 = vmatpush1.bf16.msra.mxu0 %v7537
        %7632 = vmatprep.subr.bf16.mxu0 0
        %7633 = vmatpush1.bf16.msra.mxu0 %v7538
        %7634 = vmatprep.subr.bf16.mxu0 0
        %7635 = vmatpush1.bf16.msra.mxu0 %v7539
        %7636 = vmatprep.subr.bf16.mxu0 0
        %7637 = vmatpush1.bf16.msra.mxu0 %v7540
        %7638 = vmatprep.subr.bf16.mxu0 0
        %7639 = vmatpush1.bf16.msra.mxu0 %v7541
        %7640 = vmatprep.subr.bf16.mxu0 0
        %7641 = vmatpush1.bf16.msra.mxu0 %v7542
        %7642 = vmatprep.subr.bf16.mxu0 0
        %7643 = vmatpush1.bf16.msra.mxu0 %v7543
        %7644 = vmatprep.subr.bf16.mxu0 0
        %7645 = vmatpush1.bf16.msra.mxu0 %v7544
        %7646 = vmatprep.subr.bf16.mxu0 0
        %7647 = vmatpush1.bf16.msra.mxu0 %v7545
        %7648 = vmatprep.subr.bf16.mxu0 0
        %7649 = vmatpush1.bf16.msra.mxu0 %v7546
        %7650 = vmatprep.subr.bf16.mxu0 0
        %7651 = vmatpush1.bf16.msra.mxu0 %v7547
        %7652 = vmatprep.mubr.bf16.mxu0 %v7322
        %7653 = vmatmul.mubr.bf16.gmra.mrb[0].mxu0 %v7321
        %v7654 = vpop.f32.mrb[0].mxu0
        %v7655 = vadd.f32 %v7615, %v7654
        %v7656 = vpop.f32.mrb[0].mxu0
        %v7657 = vpop.f32.mrb[0].mxu0
        %v7658 = vpop.f32.mrb[0].mxu0
        %7659 = vdwg.mxu0
        %vm7660 = vcmp.ge.f32.partialorder %v7655, 0.0
        %v7661 = vmul.f32 %v7655, 0.2
        %v7662 = vsel %vm7660, %v7655, %v7661
        %v7663 = vld [vmem:[%s608] sm:$0x1]
        %v7666 = vunpack.c.l.s4 1966171168
        %v7667 = vunpack.c.0.s8 %v7666
        %v7668 = vlaneseq
        %v7669 = vshrl.u32 %v7668, 7
        %v7670 = vsub.s32 %v7667, %v7669
        %v7671 = vrot.slane %v7662, %v7670
        %v7673 = vunpack.c.l.s4 1966171168
        %v7674 = vunpack.c.0.s8 %v7673
        %v7675 = vlaneseq
        %v7676 = vshrl.u32 %v7675, 7
        %v7677 = vsub.s32 %v7674, %v7676
        %v7678 = vrot.slane %v7671, %v7677
        %7679 = vrot.lane.b32.xlu0 %v7678, 112
        %v7680 = vpop.permute.xlu0 %7679
        %v7682 = vmul.f32 %v7663, %v7680
        %v7683 = vadd.f32 %v7682, %v7662
        %vm7684 = vcmask 122880
        %7685 = vst.msk [vmem:[%s707] sm:$0x1] %vm7684, %v7683
        %s7686 = sand.u32 %s393, 1
        %s7687 = scalar_lea.sflag [#allocation4], %s7686
        %s7688 = sand.u32 %s393, 1
        %s7689 = scalar_lea.vmem [#allocation23], %s7688
        // Predicated region
        $region137: #{speaker_encoder_forward.1} parent=83 // pred_check
          %p7690 = pneg %p403
        $region138: #{speaker_encoder_forward.1} parent=83 // pred_check_branch
          %7692 = sbr.rel (%p7690) target = $region140
        $region139: #{speaker_encoder_forward.1} parent=83 // pred_region
          %s7694 = ssub.s32 16, 16
          %7695 = vsyncadd %s7687, %s7694
          %s7696 = smul.addr %s39, 16
          %s7697 = scalar_lea.hbm %s16, %s7696
          %s7699 = sshll.u32 %s7689, 4
          %s7700 = int_to_ptr.vmem [resolvable:$true] %s7699
          %7702 = dma.vmem_to_hbm [thread:$0]  %s7700, 16, %s7697, %s7687
        $region140: #{speaker_encoder_forward.1} parent=83 // pred_fallthru
          _
      $region84: #{speaker_encoder_forward.1} parent=5 // pred_fallthru
        _
      %p7703 = scmp.le.s32.totalorder 2, %s34
      // Predicated region
      $region141: #{speaker_encoder_forward.1} parent=5 // pred_check
        %p7704 = pneg %p7703
      $region142: #{speaker_encoder_forward.1} parent=5 // pred_check_branch
        %7706 = sbr.rel (%p7704) target = $region144
      $region143: #{speaker_encoder_forward.1} parent=5 // pred_region
        %s7707 = ssub.s32 %s34, 2
        // Predicated region
        $region145: #{speaker_encoder_forward.1} parent=143 // pred_check
          %p7708 = pneg %p409
        $region146: #{speaker_encoder_forward.1} parent=143 // pred_check_branch
          %7710 = sbr.rel (%p7708) target = $region148
        $region147: #{speaker_encoder_forward.1} parent=143 // pred_region
          %s7711 = sand.u32 %s394, 1
          %s7712 = scalar_lea.sflag [#allocation4], %s7711
          %s7713 = sand.u32 %s394, 1
          %s7714 = scalar_lea.vmem [#allocation23], %s7713
          %7715 = dma.done %s7712, 16
        $region148: #{speaker_encoder_forward.1} parent=143 // pred_fallthru
          _
      $region144: #{speaker_encoder_forward.1} parent=5 // pred_fallthru
        _
    $region6: #{speaker_encoder_forward.1} parent=1 // loop_footer
      %s38 = sadd.s32 1, %s34
    $region7: #{speaker_encoder_forward.1} parent=1 // loop_footer_branch
      %33 = sbr.rel target = $region3
    $region8: #{speaker_encoder_forward.1} parent=1 // loop_exit
      _
    %7716 = vsyncpa [#allocation3], 1
    %s7717 = scalar_lea.sflag [#allocation3], 1
    %7718 = vsyncpa %s7717, 1
    %7719 = vsyncpa [#allocation6], 1
    %7720 = vsyncpa [#allocation9], 1
    %7721 = vsyncpa [#allocation12], 1
    %7722 = vsyncpa [#allocation15], 1
    %7723 = vsyncpa [#allocation18], 1
    %7724 = vsyncpa [#allocation21], 1
    %7725 = vsyncpa [#allocation4], 1
    %s7726 = scalar_lea.sflag [#allocation4], 1
    %7727 = vsyncpa %s7726, 1

</llo_original>
